<compile_context>
chip_gen: v5e
topology: v5e:2x2
jax: 0.10.0
libtpu: 0.0.40
codegen_flags: <defaults>
</compile_context>

<pallas_src>
import functools

import jax
import jax.numpy as jnp
from jax.experimental import pallas as pl
from jax.experimental.pallas import tpu as pltpu

EPS = 1e-5
N_MODULES = 1  # CONFIG.nModules


# ----------------------------- Pallas kernels ------------------------------

def _res_module_kernel(x_ref, s1_ref, o1_ref, w1_ref, b1_ref,
                       s2_ref, o2_ref, w3_ref, b3_ref,
                       s3_ref, o3_ref, wo_ref, bo_ref,
                       out_ref, *, H, W):
    """Fused ResModule on one batch element, channel-major (C, H*W) slabs:
       BN+ReLU+1x1(C->C/2) -> BN+ReLU+3x3(pad=1) -> BN+ReLU+1x1(C/2->C) + skip.
       The 3x3 conv is one im2col matmul with K = 9*C/2."""
    C, HW = x_ref.shape[1], x_ref.shape[2]
    C2 = w1_ref.shape[0]
    w_shift = W.bit_length() - 1            # W is a power of two

    x = x_ref[0]                            # (C, HW) f32, lane-dense
    # BN1 + ReLU, then 1x1 conv C -> C/2 on the MXU (bf16 in, f32 accumulate).
    a0 = jnp.maximum(x * s1_ref[...] + o1_ref[...], 0.0)
    h1 = jnp.dot(w1_ref[...].astype(jnp.bfloat16), a0.astype(jnp.bfloat16),
                 preferred_element_type=jnp.float32) + b1_ref[...]
    # BN2 + ReLU.
    a1 = jnp.maximum(h1 * s2_ref[...] + o2_ref[...], 0.0)        # (C2, HW)

    # 3x3 conv (padding=1): build the 9 shifted+masked taps, stack them along
    # the sublane axis (aligned concat) and do ONE K=9*C2 MXU contraction.
    if HW % 128 == 0:
        # lane rolls (XLU) + boundary masks
        pos = jax.lax.broadcasted_iota(jnp.int32, (C2, HW), 1)
        h_idx = pos >> w_shift
        w_idx = pos & (W - 1)

        def tap(dy, dx):
            shifted = pltpu.roll(a1, shift=(-(dy * W + dx)) % HW, axis=1)
            valid = ((h_idx + dy >= 0) & (h_idx + dy < H) &
                     (w_idx + dx >= 0) & (w_idx + dx < W))
            return jnp.where(valid, shifted, 0.0)
    else:
        # tiny level: exact 0/1 shift matrices (cheap at small HW)
        s_idx = jax.lax.broadcasted_iota(jnp.int32, (HW, HW), 0)
        p_idx = jax.lax.broadcasted_iota(jnp.int32, (HW, HW), 1)
        ph = p_idx >> w_shift
        pw = p_idx & (W - 1)

        def tap(dy, dx):
            valid = ((ph + dy >= 0) & (ph + dy < H) &
                     (pw + dx >= 0) & (pw + dx < W))
            sel = ((s_idx == (p_idx + dy * W + dx)) & valid).astype(jnp.float32)
            return jnp.dot(a1, sel, preferred_element_type=jnp.float32)

    taps = [a1 if (dy == 0 and dx == 0) else tap(dy, dx)
            for dy in (-1, 0, 1) for dx in (-1, 0, 1)]
    im = jnp.concatenate(taps, axis=0).astype(jnp.bfloat16)      # (9*C2, HW)
    h2 = jnp.dot(w3_ref[...].astype(jnp.bfloat16), im,
                 preferred_element_type=jnp.float32) + b3_ref[...]

    # BN3 + ReLU, final 1x1 conv C/2 -> C, bias, identity skip.
    a2 = jnp.maximum(h2 * s3_ref[...] + o3_ref[...], 0.0)
    out = jnp.dot(wo_ref[...].astype(jnp.bfloat16), a2.astype(jnp.bfloat16),
                  preferred_element_type=jnp.float32) + bo_ref[...] + x
    out_ref[0] = out


def res_module(p, x):
    N, C, H, W = x.shape
    assert (W & (W - 1)) == 0, "W must be a power of two"
    HW = H * W
    C2 = C // 2
    x3 = x.reshape(N, C, HW)                           # free metadata reshape
    # conv weight (out, in, ky, kx) -> (out, ky*kx*in) matching the tap order
    w3m = jnp.transpose(p['w3'], (0, 2, 3, 1)).reshape(C2, 9 * C2)

    def const(shape):
        return pl.BlockSpec(shape, lambda n, s=shape: (0,) * len(s))

    kernel = functools.partial(_res_module_kernel, H=H, W=W)
    out = pl.pallas_call(
        kernel,
        out_shape=jax.ShapeDtypeStruct((N, C, HW), jnp.float32),
        grid=(N,),
        in_specs=[pl.BlockSpec((1, C, HW), lambda n: (n, 0, 0)),
                  const((C, 1)), const((C, 1)),
                  const((C2, C)), const((C2, 1)),
                  const((C2, 1)), const((C2, 1)),
                  const((C2, 9 * C2)), const((C2, 1)),
                  const((C2, 1)), const((C2, 1)),
                  const((C, C2)), const((C, 1))],
        out_specs=pl.BlockSpec((1, C, HW), lambda n: (n, 0, 0)),
        compiler_params=pltpu.CompilerParams(
            dimension_semantics=("parallel",),
            vmem_limit_bytes=32 * 1024 * 1024),
    )(x3, p['s1'], p['o1'], p['w1'], p['b1'],
      p['s2'], p['o2'], w3m, p['b3'],
      p['s3'], p['o3'], p['wo'], p['bo'])
    return out.reshape(N, C, H, W)


def _maxpool_kernel(x_ref, o_ref, *, H, W):
    """MaxPool2d(2,2): horizontal+vertical neighbour max via lane rolls, then an
       exact 0/1 subsample matmul (keeps the layout lane-dense, single HBM read)."""
    HW = H * W
    Ho, Wo = H // 2, W // 2
    wo_shift = Wo.bit_length() - 1
    x = x_ref[0]                                                  # (C, HW)
    m1 = jnp.maximum(x, pltpu.roll(x, shift=HW - 1, axis=1))      # w, w+1
    m2 = jnp.maximum(m1, pltpu.roll(m1, shift=HW - W, axis=1))    # h, h+1
    p = jax.lax.broadcasted_iota(jnp.int32, (HW, Ho * Wo), 0)
    q = jax.lax.broadcasted_iota(jnp.int32, (HW, Ho * Wo), 1)
    sel = (p == 2 * (q >> wo_shift) * W + 2 * (q & (Wo - 1))).astype(jnp.float32)
    o_ref[0] = jnp.dot(m2, sel, preferred_element_type=jnp.float32)


def maxpool2x2(x):
    N, C, H, W = x.shape
    assert (W & (W - 1)) == 0
    Ho, Wo = H // 2, W // 2
    kernel = functools.partial(_maxpool_kernel, H=H, W=W)
    out = pl.pallas_call(
        kernel,
        out_shape=jax.ShapeDtypeStruct((N, C, Ho * Wo), jnp.float32),
        grid=(N,),
        in_specs=[pl.BlockSpec((1, C, H * W), lambda n: (n, 0, 0))],
        out_specs=pl.BlockSpec((1, C, Ho * Wo), lambda n: (n, 0, 0)),
        compiler_params=pltpu.CompilerParams(dimension_semantics=("parallel",)),
    )(x.reshape(N, C, H * W))
    return out.reshape(N, C, Ho, Wo)


def _upsample_add_kernel(up_ref, low_ref, o_ref, *, H, W):
    """UpsamplingNearest2d(scale=2) fused with the skip add: the 2x expansion is
       an exact 0/1 matmul, so the 4x-sized tensor never goes back to HBM."""
    HW = H * W
    Ho, Wo = H // 2, W // 2
    w_shift = W.bit_length() - 1
    low = low_ref[0]                                              # (C, Ho*Wo)
    q = jax.lax.broadcasted_iota(jnp.int32, (Ho * Wo, HW), 0)
    p = jax.lax.broadcasted_iota(jnp.int32, (Ho * Wo, HW), 1)
    src = ((p >> w_shift) >> 1) * Wo + ((p & (W - 1)) >> 1)
    expand = (q == src).astype(jnp.float32)
    o_ref[0] = up_ref[0] + jnp.dot(low, expand,
                                   preferred_element_type=jnp.float32)


def upsample_add(up, low):
    N, C, H, W = up.shape
    assert (W & (W - 1)) == 0
    Ho, Wo = low.shape[2], low.shape[3]
    kernel = functools.partial(_upsample_add_kernel, H=H, W=W)
    out = pl.pallas_call(
        kernel,
        out_shape=jax.ShapeDtypeStruct((N, C, H * W), jnp.float32),
        grid=(N,),
        in_specs=[pl.BlockSpec((1, C, H * W), lambda n: (n, 0, 0)),
                  pl.BlockSpec((1, C, Ho * Wo), lambda n: (n, 0, 0))],
        out_specs=pl.BlockSpec((1, C, H * W), lambda n: (n, 0, 0)),
        compiler_params=pltpu.CompilerParams(dimension_semantics=("parallel",)),
    )(up.reshape(N, C, H * W), low.reshape(N, C, Ho * Wo))
    return out.reshape(N, C, H, W)


# --------------------------- parameter initialization ----------------------

def _init_bn(key, c):
    k1, k2, k3, k4 = jax.random.split(key, 4)
    gamma = 1.0 + 0.1 * jax.random.normal(k1, (c,))
    beta = 0.1 * jax.random.normal(k2, (c,))
    mean = 0.1 * jax.random.normal(k3, (c,))
    var = 1.0 + 0.1 * jax.random.uniform(k4, (c,))
    scale = gamma / jnp.sqrt(var + EPS)
    offset = beta - mean * scale
    return (scale.reshape(c, 1).astype(jnp.float32),
            offset.reshape(c, 1).astype(jnp.float32))


def _init_res_module(key, c):
    c2 = c // 2
    ks = jax.random.split(key, 9)
    s1, o1 = _init_bn(ks[0], c)
    s2, o2 = _init_bn(ks[1], c2)
    s3, o3 = _init_bn(ks[2], c2)
    std = 0.05
    w1 = (std * jax.random.normal(ks[3], (c2, c))).astype(jnp.float32)       # 1x1, (out,in)
    b1 = (std * jax.random.normal(ks[4], (c2, 1))).astype(jnp.float32)
    w3 = (std * jax.random.normal(ks[5], (c2, c2, 3, 3))).astype(jnp.float32)  # OIHW
    b3 = (std * jax.random.normal(ks[6], (c2, 1))).astype(jnp.float32)
    wo = (std * jax.random.normal(ks[7], (c, c2))).astype(jnp.float32)       # 1x1, (out,in)
    bo = (std * jax.random.normal(ks[8], (c, 1))).astype(jnp.float32)
    return dict(s1=s1, o1=o1, w1=w1, b1=b1, s2=s2, o2=o2,
                w3=w3, b3=b3, s3=s3, o3=o3, wo=wo, bo=bo)


def init_hourglass(key, depth, c):
    keys = jax.random.split(key, 5)
    params = {
        'res1': [_init_res_module(k, c) for k in jax.random.split(keys[0], N_MODULES)],
        'res2': [_init_res_module(k, c) for k in jax.random.split(keys[1], N_MODULES)],
        'res3': [_init_res_module(k, c) for k in jax.random.split(keys[2], N_MODULES)],
    }
    if depth > 1:
        params['sub'] = init_hourglass(keys[3], depth - 1, c)
    else:
        params['waist'] = [_init_res_module(k, c)
                           for k in jax.random.split(keys[4], N_MODULES)]
    return params


# ------------------------------ forward pass --------------------------------

def hourglass_forward(params, x, depth, res_fn, up_add_fn, pool_fn):
    up = x
    for p in params['res1']:
        up = res_fn(p, up)
    low1 = pool_fn(x)
    for p in params['res2']:
        low1 = res_fn(p, low1)
    if depth > 1:
        low2 = hourglass_forward(params['sub'], low1, depth - 1,
                                 res_fn, up_add_fn, pool_fn)
    else:
        low2 = low1
        for p in params['waist']:
            low2 = res_fn(p, low2)
    low3 = low2
    for p in params['res3']:
        low3 = res_fn(p, low3)
    return up_add_fn(up, low3)


# --------------------------- pure-JAX reference ------------------------------

def _res_module_ref(p, x):
    N, C, H, W = x.shape
    C2 = C // 2
    hi = jax.lax.Precision.HIGHEST

    def bn_relu(t, s, o):
        return jnp.maximum(t * s.reshape(1, -1, 1, 1) + o.reshape(1, -1, 1, 1), 0.0)

    h = bn_relu(x, p['s1'], p['o1'])
    h = jnp.einsum('nchw,dc->ndhw', h, p['w1'], precision=hi) + p['b1'].reshape(1, C2, 1, 1)
    h = bn_relu(h, p['s2'], p['o2'])
    hp = jnp.pad(h, ((0, 0), (0, 0), (1, 1), (1, 1)))
    acc = jnp.zeros((N, C2, H, W), jnp.float32)
    for ky in range(3):
        for kx in range(3):
            acc = acc + jnp.einsum('nchw,dc->ndhw',
                                   hp[:, :, ky:ky + H, kx:kx + W],
                                   p['w3'][:, :, ky, kx], precision=hi)
    acc = acc + p['b3'].reshape(1, C2, 1, 1)
    h = bn_relu(acc, p['s3'], p['o3'])
    return jnp.einsum('nchw,dc->ndhw', h, p['wo'], precision=hi) + p['bo'].reshape(1, C, 1, 1) + x


def _maxpool_ref(x):
    N, C, H, W = x.shape
    return x.reshape(N, C, H // 2, 2, W // 2, 2).max(axis=(3, 5))


def _upsample_add_ref(up, low):
    return up + jnp.repeat(jnp.repeat(low, 2, axis=2), 2, axis=3)


# ----------------------------------- main ------------------------------------

if __name__ == "__main__":
    HG_DEPTH = 2        # Hourglass(hg_depth=2, ...)
    N_FEATURES = 16     # small stand-in for CONFIG.nFeatures = 256
    BATCH, H, W = 2, 32, 32

    key = jax.random.PRNGKey(0)
    pkey, xkey = jax.random.split(key)
    params = init_hourglass(pkey, HG_DEPTH, N_FEATURES)
    # NCHW input, matching the PyTorch module.
    x = jax.random.normal(xkey, (BATCH, N_FEATURES, H, W), dtype=jnp.float32)

    fwd = jax.jit(lambda p, t: hourglass_forward(
        p, t, HG_DEPTH, res_module, upsample_add, maxpool2x2))
    out = jax.block_until_ready(fwd(params, x))
    assert out.shape == (BATCH, N_FEATURES, H, W)
    assert out.dtype == jnp.float32

    ref_fwd = jax.jit(lambda p, t: hourglass_forward(
        p, t, HG_DEPTH, _res_module_ref, _upsample_add_ref, _maxpool_ref))
    ref = jax.block_until_ready(ref_fwd(params, x))

    if not jnp.allclose(out, ref, atol=3e-2, rtol=3e-2):
        max_err = float(jnp.max(jnp.abs(out - ref)))
        raise SystemExit(f"mismatch vs reference: max abs err {max_err}")

    print("KERNEL_OK")
</pallas_src>

<mosaic_0001>
module attributes {stable_mosaic.version = 11 : i64} {
  func.func @_maxpool_kernel(%arg0: i32, %arg1: memref<1x16x1024xf32, #tpu.memory_space<vmem>>, %arg2: memref<1x16x256xf32, #tpu.memory_space<vmem>>) attributes {dimension_semantics = [#tpu.dimension_semantics<parallel>], iteration_bounds = array<i64: 2>, scalar_prefetch = 0 : i64, scratch_operands = 0 : i64, tpu.core_type = #tpu.core_type<tc>, window_params = [{transform_indices = @transform_0, window_bounds = array<i64: 1, 16, 1024>}, {transform_indices = @transform_1, window_bounds = array<i64: 1, 16, 256>}]} {
    %c0 = arith.constant 0 : index
    %c0_0 = arith.constant 0 : index
    %c0_1 = arith.constant 0 : index
    %0 = vector.load %arg1[%c0, %c0_0, %c0_1] : memref<1x16x1024xf32, #tpu.memory_space<vmem>>, vector<1x16x1024xf32>
    %1 = vector.shape_cast %0 : vector<1x16x1024xf32> to vector<16x1024xf32>
    %c1023_i32 = arith.constant 1023 : i32
    %2 = tpu.dynamic_rotate %1 by %c1023_i32 dim 1 : vector<16x1024xf32>, i32 -> vector<16x1024xf32>
    %3 = arith.maximumf %1, %2 : vector<16x1024xf32>
    %c992_i32 = arith.constant 992 : i32
    %4 = tpu.dynamic_rotate %3 by %c992_i32 dim 1 : vector<16x1024xf32>, i32 -> vector<16x1024xf32>
    %5 = arith.maximumf %3, %4 : vector<16x1024xf32>
    %6 = tpu.iota {dimensions = array<i32: 0>} : vector<1024x256xi32>
    %7 = tpu.iota {dimensions = array<i32: 1>} : vector<1024x256xi32>
    %c4_i32 = arith.constant 4 : i32
    %8 = vector.broadcast %c4_i32 : i32 to vector<1024x256xi32>
    %9 = arith.shrsi %7, %8 : vector<1024x256xi32>
    %c2_i32 = arith.constant 2 : i32
    %10 = vector.broadcast %c2_i32 : i32 to vector<1024x256xi32>
    %11 = arith.muli %10, %9 : vector<1024x256xi32>
    %c32_i32 = arith.constant 32 : i32
    %12 = vector.broadcast %c32_i32 : i32 to vector<1024x256xi32>
    %13 = arith.muli %11, %12 : vector<1024x256xi32>
    %c15_i32 = arith.constant 15 : i32
    %14 = vector.broadcast %c15_i32 : i32 to vector<1024x256xi32>
    %15 = arith.andi %7, %14 : vector<1024x256xi32>
    %c2_i32_2 = arith.constant 2 : i32
    %16 = vector.broadcast %c2_i32_2 : i32 to vector<1024x256xi32>
    %17 = arith.muli %16, %15 : vector<1024x256xi32>
    %18 = arith.addi %13, %17 : vector<1024x256xi32>
    %19 = arith.cmpi eq, %6, %18 : vector<1024x256xi32>
    %20 = arith.extui %19 : vector<1024x256xi1> to vector<1024x256xi32>
    %21 = arith.sitofp %20 : vector<1024x256xi32> to vector<1024x256xf32>
    %cst = arith.constant dense<0.000000e+00> : vector<16x256xf32>
    %22 = tpu.matmul %5, %21, %cst {dimension_numbers = #tpu.dot_dimension_numbers<[1], [0], [0], [1], [0, 0, 1, 1], [], []>} : vector<16x1024xf32>, vector<1024x256xf32>, vector<16x256xf32> -> vector<16x256xf32>
    %c0_3 = arith.constant 0 : index
    %c0_4 = arith.constant 0 : index
    %c0_5 = arith.constant 0 : index
    %23 = vector.load %arg2[%c0_3, %c0_4, %c0_5] : memref<1x16x256xf32, #tpu.memory_space<vmem>>, vector<1x16x256xf32>
    %24 = vector.shape_cast %23 : vector<1x16x256xf32> to vector<16x256xf32>
    %25 = vector.shape_cast %22 : vector<16x256xf32> to vector<1x16x256xf32>
    tpu.vector_store %arg2[%c0_3, %c0_4, %c0_5], %25 {strides = array<i32>} : memref<1x16x256xf32, #tpu.memory_space<vmem>>, vector<1x16x256xf32>,
    return
  }
  func.func @transform_0(%arg0: i32) -> (i32, i32, i32) {
    %c0_i32 = arith.constant 0 : i32
    %c0_i32_0 = arith.constant 0 : i32
    %c0_i32_1 = arith.constant 0 : i32
    return %arg0, %c0_i32, %c0_i32_0 : i32, i32, i32
  }
  func.func @transform_1(%arg0: i32) -> (i32, i32, i32) {
    %c0_i32 = arith.constant 0 : i32
    %c0_i32_0 = arith.constant 0 : i32
    %c0_i32_1 = arith.constant 0 : i32
    return %arg0, %c0_i32, %c0_i32_0 : i32, i32, i32
  }
}

module attributes {stable_mosaic.version = 11 : i64} {
  func.func @_maxpool_kernel(%arg0: i32, %arg1: memref<1x16x256xf32, #tpu.memory_space<vmem>>, %arg2: memref<1x16x64xf32, #tpu.memory_space<vmem>>) attributes {dimension_semantics = [#tpu.dimension_semantics<parallel>], iteration_bounds = array<i64: 2>, scalar_prefetch = 0 : i64, scratch_operands = 0 : i64, tpu.core_type = #tpu.core_type<tc>, window_params = [{transform_indices = @transform_0, window_bounds = array<i64: 1, 16, 256>}, {transform_indices = @transform_1, window_bounds = array<i64: 1, 16, 64>}]} {
    %c0 = arith.constant 0 : index
    %c0_0 = arith.constant 0 : index
    %c0_1 = arith.constant 0 : index
    %0 = vector.load %arg1[%c0, %c0_0, %c0_1] : memref<1x16x256xf32, #tpu.memory_space<vmem>>, vector<1x16x256xf32>
    %1 = vector.shape_cast %0 : vector<1x16x256xf32> to vector<16x256xf32>
    %c255_i32 = arith.constant 255 : i32
    %2 = tpu.dynamic_rotate %1 by %c255_i32 dim 1 : vector<16x256xf32>, i32 -> vector<16x256xf32>
    %3 = arith.maximumf %1, %2 : vector<16x256xf32>
    %c240_i32 = arith.constant 240 : i32
    %4 = tpu.dynamic_rotate %3 by %c240_i32 dim 1 : vector<16x256xf32>, i32 -> vector<16x256xf32>
    %5 = arith.maximumf %3, %4 : vector<16x256xf32>
    %6 = tpu.iota {dimensions = array<i32: 0>} : vector<256x64xi32>
    %7 = tpu.iota {dimensions = array<i32: 1>} : vector<256x64xi32>
    %c3_i32 = arith.constant 3 : i32
    %8 = vector.broadcast %c3_i32 : i32 to vector<256x64xi32>
    %9 = arith.shrsi %7, %8 : vector<256x64xi32>
    %c2_i32 = arith.constant 2 : i32
    %10 = vector.broadcast %c2_i32 : i32 to vector<256x64xi32>
    %11 = arith.muli %10, %9 : vector<256x64xi32>
    %c16_i32 = arith.constant 16 : i32
    %12 = vector.broadcast %c16_i32 : i32 to vector<256x64xi32>
    %13 = arith.muli %11, %12 : vector<256x64xi32>
    %c7_i32 = arith.constant 7 : i32
    %14 = vector.broadcast %c7_i32 : i32 to vector<256x64xi32>
    %15 = arith.andi %7, %14 : vector<256x64xi32>
    %c2_i32_2 = arith.constant 2 : i32
    %16 = vector.broadcast %c2_i32_2 : i32 to vector<256x64xi32>
    %17 = arith.muli %16, %15 : vector<256x64xi32>
    %18 = arith.addi %13, %17 : vector<256x64xi32>
    %19 = arith.cmpi eq, %6, %18 : vector<256x64xi32>
    %20 = arith.extui %19 : vector<256x64xi1> to vector<256x64xi32>
    %21 = arith.sitofp %20 : vector<256x64xi32> to vector<256x64xf32>
    %cst = arith.constant dense<0.000000e+00> : vector<16x64xf32>
    %22 = tpu.matmul %5, %21, %cst {dimension_numbers = #tpu.dot_dimension_numbers<[1], [0], [0], [1], [0, 0, 1, 1], [], []>} : vector<16x256xf32>, vector<256x64xf32>, vector<16x64xf32> -> vector<16x64xf32>
    %c0_3 = arith.constant 0 : index
    %c0_4 = arith.constant 0 : index
    %c0_5 = arith.constant 0 : index
    %23 = vector.load %arg2[%c0_3, %c0_4, %c0_5] : memref<1x16x64xf32, #tpu.memory_space<vmem>>, vector<1x16x64xf32>
    %24 = vector.shape_cast %23 : vector<1x16x64xf32> to vector<16x64xf32>
    %25 = vector.shape_cast %22 : vector<16x64xf32> to vector<1x16x64xf32>
    tpu.vector_store %arg2[%c0_3, %c0_4, %c0_5], %25 {strides = array<i32>} : memref<1x16x64xf32, #tpu.memory_space<vmem>>, vector<1x16x64xf32>,
    return
  }
  func.func @transform_0(%arg0: i32) -> (i32, i32, i32) {
    %c0_i32 = arith.constant 0 : i32
    %c0_i32_0 = arith.constant 0 : i32
    %c0_i32_1 = arith.constant 0 : i32
    return %arg0, %c0_i32, %c0_i32_0 : i32, i32, i32
  }
  func.func @transform_1(%arg0: i32) -> (i32, i32, i32) {
    %c0_i32 = arith.constant 0 : i32
    %c0_i32_0 = arith.constant 0 : i32
    %c0_i32_1 = arith.constant 0 : i32
    return %arg0, %c0_i32, %c0_i32_0 : i32, i32, i32
  }
}

module attributes {stable_mosaic.version = 11 : i64} {
  func.func @_res_module_kernel(%arg0: i32, %arg1: memref<1x16x256xf32, #tpu.memory_space<vmem>>, %arg2: memref<16x1xf32, #tpu.memory_space<vmem>>, %arg3: memref<16x1xf32, #tpu.memory_space<vmem>>, %arg4: memref<8x16xf32, #tpu.memory_space<vmem>>, %arg5: memref<8x1xf32, #tpu.memory_space<vmem>>, %arg6: memref<8x1xf32, #tpu.memory_space<vmem>>, %arg7: memref<8x1xf32, #tpu.memory_space<vmem>>, %arg8: memref<8x72xf32, #tpu.memory_space<vmem>>, %arg9: memref<8x1xf32, #tpu.memory_space<vmem>>, %arg10: memref<8x1xf32, #tpu.memory_space<vmem>>, %arg11: memref<8x1xf32, #tpu.memory_space<vmem>>, %arg12: memref<16x8xf32, #tpu.memory_space<vmem>>, %arg13: memref<16x1xf32, #tpu.memory_space<vmem>>, %arg14: memref<1x16x256xf32, #tpu.memory_space<vmem>>) attributes {dimension_semantics = [#tpu.dimension_semantics<parallel>], iteration_bounds = array<i64: 2>, scalar_prefetch = 0 : i64, scratch_operands = 0 : i64, tpu.core_type = #tpu.core_type<tc>, window_params = [{transform_indices = @transform_0, window_bounds = array<i64: 1, 16, 256>}, {pipeline_mode = #tpu.pipeline_mode<synchronous>, transform_indices = @transform_1, window_bounds = array<i64: 16, 1>}, {pipeline_mode = #tpu.pipeline_mode<synchronous>, transform_indices = @transform_2, window_bounds = array<i64: 16, 1>}, {pipeline_mode = #tpu.pipeline_mode<synchronous>, transform_indices = @transform_3, window_bounds = array<i64: 8, 16>}, {pipeline_mode = #tpu.pipeline_mode<synchronous>, transform_indices = @transform_4, window_bounds = array<i64: 8, 1>}, {pipeline_mode = #tpu.pipeline_mode<synchronous>, transform_indices = @transform_5, window_bounds = array<i64: 8, 1>}, {pipeline_mode = #tpu.pipeline_mode<synchronous>, transform_indices = @transform_6, window_bounds = array<i64: 8, 1>}, {pipeline_mode = #tpu.pipeline_mode<synchronous>, transform_indices = @transform_7, window_bounds = array<i64: 8, 72>}, {pipeline_mode = #tpu.pipeline_mode<synchronous>, transform_indices = @transform_8, window_bounds = array<i64: 8, 1>}, {pipeline_mode = #tpu.pipeline_mode<synchronous>, transform_indices = @transform_9, window_bounds = array<i64: 8, 1>}, {pipeline_mode = #tpu.pipeline_mode<synchronous>, transform_indices = @transform_10, window_bounds = array<i64: 8, 1>}, {pipeline_mode = #tpu.pipeline_mode<synchronous>, transform_indices = @transform_11, window_bounds = array<i64: 16, 8>}, {pipeline_mode = #tpu.pipeline_mode<synchronous>, transform_indices = @transform_12, window_bounds = array<i64: 16, 1>}, {transform_indices = @transform_13, window_bounds = array<i64: 1, 16, 256>}]} {
    %c0 = arith.constant 0 : index
    %c0_0 = arith.constant 0 : index
    %c0_1 = arith.constant 0 : index
    %0 = vector.load %arg1[%c0, %c0_0, %c0_1] : memref<1x16x256xf32, #tpu.memory_space<vmem>>, vector<1x16x256xf32>
    %1 = vector.shape_cast %0 : vector<1x16x256xf32> to vector<16x256xf32>
    %c0_2 = arith.constant 0 : index
    %c0_3 = arith.constant 0 : index
    %2 = vector.load %arg2[%c0_2, %c0_3] : memref<16x1xf32, #tpu.memory_space<vmem>>, vector<16x1xf32>
    %3 = vector.broadcast %2 : vector<16x1xf32> to vector<16x256xf32>
    %4 = arith.mulf %1, %3 : vector<16x256xf32>
    %c0_4 = arith.constant 0 : index
    %c0_5 = arith.constant 0 : index
    %5 = vector.load %arg3[%c0_4, %c0_5] : memref<16x1xf32, #tpu.memory_space<vmem>>, vector<16x1xf32>
    %6 = vector.broadcast %5 : vector<16x1xf32> to vector<16x256xf32>
    %7 = arith.addf %4, %6 : vector<16x256xf32>
    %cst = arith.constant 0.000000e+00 : f32
    %8 = vector.broadcast %cst : f32 to vector<16x256xf32>
    %9 = arith.maximumf %7, %8 : vector<16x256xf32>
    %c0_6 = arith.constant 0 : index
    %c0_7 = arith.constant 0 : index
    %10 = vector.load %arg4[%c0_6, %c0_7] : memref<8x16xf32, #tpu.memory_space<vmem>>, vector<8x16xf32>
    %11 = arith.truncf %10 : vector<8x16xf32> to vector<8x16xbf16>
    %12 = arith.truncf %9 : vector<16x256xf32> to vector<16x256xbf16>
    %cst_8 = arith.constant dense<0.000000e+00> : vector<8x256xf32>
    %13 = tpu.matmul %11, %12, %cst_8 {dimension_numbers = #tpu.dot_dimension_numbers<[1], [0], [0], [1], [0, 0, 1, 1], [], []>} : vector<8x16xbf16>, vector<16x256xbf16>, vector<8x256xf32> -> vector<8x256xf32>
    %c0_9 = arith.constant 0 : index
    %c0_10 = arith.constant 0 : index
    %14 = vector.load %arg5[%c0_9, %c0_10] : memref<8x1xf32, #tpu.memory_space<vmem>>, vector<8x1xf32>
    %15 = vector.broadcast %14 : vector<8x1xf32> to vector<8x256xf32>
    %16 = arith.addf %13, %15 : vector<8x256xf32>
    %c0_11 = arith.constant 0 : index
    %c0_12 = arith.constant 0 : index
    %17 = vector.load %arg6[%c0_11, %c0_12] : memref<8x1xf32, #tpu.memory_space<vmem>>, vector<8x1xf32>
    %18 = vector.broadcast %17 : vector<8x1xf32> to vector<8x256xf32>
    %19 = arith.mulf %16, %18 : vector<8x256xf32>
    %c0_13 = arith.constant 0 : index
    %c0_14 = arith.constant 0 : index
    %20 = vector.load %arg7[%c0_13, %c0_14] : memref<8x1xf32, #tpu.memory_space<vmem>>, vector<8x1xf32>
    %21 = vector.broadcast %20 : vector<8x1xf32> to vector<8x256xf32>
    %22 = arith.addf %19, %21 : vector<8x256xf32>
    %cst_15 = arith.constant 0.000000e+00 : f32
    %23 = vector.broadcast %cst_15 : f32 to vector<8x256xf32>
    %24 = arith.maximumf %22, %23 : vector<8x256xf32>
    %25 = tpu.iota {dimensions = array<i32: 1>} : vector<8x256xi32>
    %c4_i32 = arith.constant 4 : i32
    %26 = vector.broadcast %c4_i32 : i32 to vector<8x256xi32>
    %27 = arith.shrsi %25, %26 : vector<8x256xi32>
    %c15_i32 = arith.constant 15 : i32
    %28 = vector.broadcast %c15_i32 : i32 to vector<8x256xi32>
    %29 = arith.andi %25, %28 : vector<8x256xi32>
    %c17_i32 = arith.constant 17 : i32
    %30 = tpu.dynamic_rotate %24 by %c17_i32 dim 1 : vector<8x256xf32>, i32 -> vector<8x256xf32>
    %c-1_i32 = arith.constant -1 : i32
    %31 = vector.broadcast %c-1_i32 : i32 to vector<8x256xi32>
    %32 = arith.addi %27, %31 : vector<8x256xi32>
    %c0_i32 = arith.constant 0 : i32
    %33 = vector.broadcast %c0_i32 : i32 to vector<8x256xi32>
    %34 = arith.cmpi sge, %32, %33 : vector<8x256xi32>
    %c-1_i32_16 = arith.constant -1 : i32
    %35 = vector.broadcast %c-1_i32_16 : i32 to vector<8x256xi32>
    %36 = arith.addi %27, %35 : vector<8x256xi32>
    %c16_i32 = arith.constant 16 : i32
    %37 = vector.broadcast %c16_i32 : i32 to vector<8x256xi32>
    %38 = arith.cmpi slt, %36, %37 : vector<8x256xi32>
    %39 = arith.andi %34, %38 : vector<8x256xi1>
    %c-1_i32_17 = arith.constant -1 : i32
    %40 = vector.broadcast %c-1_i32_17 : i32 to vector<8x256xi32>
    %41 = arith.addi %29, %40 : vector<8x256xi32>
    %c0_i32_18 = arith.constant 0 : i32
    %42 = vector.broadcast %c0_i32_18 : i32 to vector<8x256xi32>
    %43 = arith.cmpi sge, %41, %42 : vector<8x256xi32>
    %44 = arith.andi %39, %43 : vector<8x256xi1>
    %c-1_i32_19 = arith.constant -1 : i32
    %45 = vector.broadcast %c-1_i32_19 : i32 to vector<8x256xi32>
    %46 = arith.addi %29, %45 : vector<8x256xi32>
    %c16_i32_20 = arith.constant 16 : i32
    %47 = vector.broadcast %c16_i32_20 : i32 to vector<8x256xi32>
    %48 = arith.cmpi slt, %46, %47 : vector<8x256xi32>
    %49 = arith.andi %44, %48 : vector<8x256xi1>
    %cst_21 = arith.constant 0.000000e+00 : f32
    %50 = vector.broadcast %cst_21 : f32 to vector<8x256xf32>
    %51 = arith.select %49, %30, %50 : vector<8x256xi1>, vector<8x256xf32>
    %c16_i32_22 = arith.constant 16 : i32
    %52 = tpu.dynamic_rotate %24 by %c16_i32_22 dim 1 : vector<8x256xf32>, i32 -> vector<8x256xf32>
    %c-1_i32_23 = arith.constant -1 : i32
    %53 = vector.broadcast %c-1_i32_23 : i32 to vector<8x256xi32>
    %54 = arith.addi %27, %53 : vector<8x256xi32>
    %c0_i32_24 = arith.constant 0 : i32
    %55 = vector.broadcast %c0_i32_24 : i32 to vector<8x256xi32>
    %56 = arith.cmpi sge, %54, %55 : vector<8x256xi32>
    %c-1_i32_25 = arith.constant -1 : i32
    %57 = vector.broadcast %c-1_i32_25 : i32 to vector<8x256xi32>
    %58 = arith.addi %27, %57 : vector<8x256xi32>
    %c16_i32_26 = arith.constant 16 : i32
    %59 = vector.broadcast %c16_i32_26 : i32 to vector<8x256xi32>
    %60 = arith.cmpi slt, %58, %59 : vector<8x256xi32>
    %61 = arith.andi %56, %60 : vector<8x256xi1>
    %c0_i32_27 = arith.constant 0 : i32
    %62 = vector.broadcast %c0_i32_27 : i32 to vector<8x256xi32>
    %63 = arith.addi %29, %62 : vector<8x256xi32>
    %c0_i32_28 = arith.constant 0 : i32
    %64 = vector.broadcast %c0_i32_28 : i32 to vector<8x256xi32>
    %65 = arith.cmpi sge, %63, %64 : vector<8x256xi32>
    %66 = arith.andi %61, %65 : vector<8x256xi1>
    %c0_i32_29 = arith.constant 0 : i32
    %67 = vector.broadcast %c0_i32_29 : i32 to vector<8x256xi32>
    %68 = arith.addi %29, %67 : vector<8x256xi32>
    %c16_i32_30 = arith.constant 16 : i32
    %69 = vector.broadcast %c16_i32_30 : i32 to vector<8x256xi32>
    %70 = arith.cmpi slt, %68, %69 : vector<8x256xi32>
    %71 = arith.andi %66, %70 : vector<8x256xi1>
    %cst_31 = arith.constant 0.000000e+00 : f32
    %72 = vector.broadcast %cst_31 : f32 to vector<8x256xf32>
    %73 = arith.select %71, %52, %72 : vector<8x256xi1>, vector<8x256xf32>
    %c15_i32_32 = arith.constant 15 : i32
    %74 = tpu.dynamic_rotate %24 by %c15_i32_32 dim 1 : vector<8x256xf32>, i32 -> vector<8x256xf32>
    %c-1_i32_33 = arith.constant -1 : i32
    %75 = vector.broadcast %c-1_i32_33 : i32 to vector<8x256xi32>
    %76 = arith.addi %27, %75 : vector<8x256xi32>
    %c0_i32_34 = arith.constant 0 : i32
    %77 = vector.broadcast %c0_i32_34 : i32 to vector<8x256xi32>
    %78 = arith.cmpi sge, %76, %77 : vector<8x256xi32>
    %c-1_i32_35 = arith.constant -1 : i32
    %79 = vector.broadcast %c-1_i32_35 : i32 to vector<8x256xi32>
    %80 = arith.addi %27, %79 : vector<8x256xi32>
    %c16_i32_36 = arith.constant 16 : i32
    %81 = vector.broadcast %c16_i32_36 : i32 to vector<8x256xi32>
    %82 = arith.cmpi slt, %80, %81 : vector<8x256xi32>
    %83 = arith.andi %78, %82 : vector<8x256xi1>
    %c1_i32 = arith.constant 1 : i32
    %84 = vector.broadcast %c1_i32 : i32 to vector<8x256xi32>
    %85 = arith.addi %29, %84 : vector<8x256xi32>
    %c0_i32_37 = arith.constant 0 : i32
    %86 = vector.broadcast %c0_i32_37 : i32 to vector<8x256xi32>
    %87 = arith.cmpi sge, %85, %86 : vector<8x256xi32>
    %88 = arith.andi %83, %87 : vector<8x256xi1>
    %c1_i32_38 = arith.constant 1 : i32
    %89 = vector.broadcast %c1_i32_38 : i32 to vector<8x256xi32>
    %90 = arith.addi %29, %89 : vector<8x256xi32>
    %c16_i32_39 = arith.constant 16 : i32
    %91 = vector.broadcast %c16_i32_39 : i32 to vector<8x256xi32>
    %92 = arith.cmpi slt, %90, %91 : vector<8x256xi32>
    %93 = arith.andi %88, %92 : vector<8x256xi1>
    %cst_40 = arith.constant 0.000000e+00 : f32
    %94 = vector.broadcast %cst_40 : f32 to vector<8x256xf32>
    %95 = arith.select %93, %74, %94 : vector<8x256xi1>, vector<8x256xf32>
    %c1_i32_41 = arith.constant 1 : i32
    %96 = tpu.dynamic_rotate %24 by %c1_i32_41 dim 1 : vector<8x256xf32>, i32 -> vector<8x256xf32>
    %c0_i32_42 = arith.constant 0 : i32
    %97 = vector.broadcast %c0_i32_42 : i32 to vector<8x256xi32>
    %98 = arith.addi %27, %97 : vector<8x256xi32>
    %c0_i32_43 = arith.constant 0 : i32
    %99 = vector.broadcast %c0_i32_43 : i32 to vector<8x256xi32>
    %100 = arith.cmpi sge, %98, %99 : vector<8x256xi32>
    %c0_i32_44 = arith.constant 0 : i32
    %101 = vector.broadcast %c0_i32_44 : i32 to vector<8x256xi32>
    %102 = arith.addi %27, %101 : vector<8x256xi32>
    %c16_i32_45 = arith.constant 16 : i32
    %103 = vector.broadcast %c16_i32_45 : i32 to vector<8x256xi32>
    %104 = arith.cmpi slt, %102, %103 : vector<8x256xi32>
    %105 = arith.andi %100, %104 : vector<8x256xi1>
    %c-1_i32_46 = arith.constant -1 : i32
    %106 = vector.broadcast %c-1_i32_46 : i32 to vector<8x256xi32>
    %107 = arith.addi %29, %106 : vector<8x256xi32>
    %c0_i32_47 = arith.constant 0 : i32
    %108 = vector.broadcast %c0_i32_47 : i32 to vector<8x256xi32>
    %109 = arith.cmpi sge, %107, %108 : vector<8x256xi32>
    %110 = arith.andi %105, %109 : vector<8x256xi1>
    %c-1_i32_48 = arith.constant -1 : i32
    %111 = vector.broadcast %c-1_i32_48 : i32 to vector<8x256xi32>
    %112 = arith.addi %29, %111 : vector<8x256xi32>
    %c16_i32_49 = arith.constant 16 : i32
    %113 = vector.broadcast %c16_i32_49 : i32 to vector<8x256xi32>
    %114 = arith.cmpi slt, %112, %113 : vector<8x256xi32>
    %115 = arith.andi %110, %114 : vector<8x256xi1>
    %cst_50 = arith.constant 0.000000e+00 : f32
    %116 = vector.broadcast %cst_50 : f32 to vector<8x256xf32>
    %117 = arith.select %115, %96, %116 : vector<8x256xi1>, vector<8x256xf32>
    %c255_i32 = arith.constant 255 : i32
    %118 = tpu.dynamic_rotate %24 by %c255_i32 dim 1 : vector<8x256xf32>, i32 -> vector<8x256xf32>
    %c0_i32_51 = arith.constant 0 : i32
    %119 = vector.broadcast %c0_i32_51 : i32 to vector<8x256xi32>
    %120 = arith.addi %27, %119 : vector<8x256xi32>
    %c0_i32_52 = arith.constant 0 : i32
    %121 = vector.broadcast %c0_i32_52 : i32 to vector<8x256xi32>
    %122 = arith.cmpi sge, %120, %121 : vector<8x256xi32>
    %c0_i32_53 = arith.constant 0 : i32
    %123 = vector.broadcast %c0_i32_53 : i32 to vector<8x256xi32>
    %124 = arith.addi %27, %123 : vector<8x256xi32>
    %c16_i32_54 = arith.constant 16 : i32
    %125 = vector.broadcast %c16_i32_54 : i32 to vector<8x256xi32>
    %126 = arith.cmpi slt, %124, %125 : vector<8x256xi32>
    %127 = arith.andi %122, %126 : vector<8x256xi1>
    %c1_i32_55 = arith.constant 1 : i32
    %128 = vector.broadcast %c1_i32_55 : i32 to vector<8x256xi32>
    %129 = arith.addi %29, %128 : vector<8x256xi32>
    %c0_i32_56 = arith.constant 0 : i32
    %130 = vector.broadcast %c0_i32_56 : i32 to vector<8x256xi32>
    %131 = arith.cmpi sge, %129, %130 : vector<8x256xi32>
    %132 = arith.andi %127, %131 : vector<8x256xi1>
    %c1_i32_57 = arith.constant 1 : i32
    %133 = vector.broadcast %c1_i32_57 : i32 to vector<8x256xi32>
    %134 = arith.addi %29, %133 : vector<8x256xi32>
    %c16_i32_58 = arith.constant 16 : i32
    %135 = vector.broadcast %c16_i32_58 : i32 to vector<8x256xi32>
    %136 = arith.cmpi slt, %134, %135 : vector<8x256xi32>
    %137 = arith.andi %132, %136 : vector<8x256xi1>
    %cst_59 = arith.constant 0.000000e+00 : f32
    %138 = vector.broadcast %cst_59 : f32 to vector<8x256xf32>
    %139 = arith.select %137, %118, %138 : vector<8x256xi1>, vector<8x256xf32>
    %c241_i32 = arith.constant 241 : i32
    %140 = tpu.dynamic_rotate %24 by %c241_i32 dim 1 : vector<8x256xf32>, i32 -> vector<8x256xf32>
    %c1_i32_60 = arith.constant 1 : i32
    %141 = vector.broadcast %c1_i32_60 : i32 to vector<8x256xi32>
    %142 = arith.addi %27, %141 : vector<8x256xi32>
    %c0_i32_61 = arith.constant 0 : i32
    %143 = vector.broadcast %c0_i32_61 : i32 to vector<8x256xi32>
    %144 = arith.cmpi sge, %142, %143 : vector<8x256xi32>
    %c1_i32_62 = arith.constant 1 : i32
    %145 = vector.broadcast %c1_i32_62 : i32 to vector<8x256xi32>
    %146 = arith.addi %27, %145 : vector<8x256xi32>
    %c16_i32_63 = arith.constant 16 : i32
    %147 = vector.broadcast %c16_i32_63 : i32 to vector<8x256xi32>
    %148 = arith.cmpi slt, %146, %147 : vector<8x256xi32>
    %149 = arith.andi %144, %148 : vector<8x256xi1>
    %c-1_i32_64 = arith.constant -1 : i32
    %150 = vector.broadcast %c-1_i32_64 : i32 to vector<8x256xi32>
    %151 = arith.addi %29, %150 : vector<8x256xi32>
    %c0_i32_65 = arith.constant 0 : i32
    %152 = vector.broadcast %c0_i32_65 : i32 to vector<8x256xi32>
    %153 = arith.cmpi sge, %151, %152 : vector<8x256xi32>
    %154 = arith.andi %149, %153 : vector<8x256xi1>
    %c-1_i32_66 = arith.constant -1 : i32
    %155 = vector.broadcast %c-1_i32_66 : i32 to vector<8x256xi32>
    %156 = arith.addi %29, %155 : vector<8x256xi32>
    %c16_i32_67 = arith.constant 16 : i32
    %157 = vector.broadcast %c16_i32_67 : i32 to vector<8x256xi32>
    %158 = arith.cmpi slt, %156, %157 : vector<8x256xi32>
    %159 = arith.andi %154, %158 : vector<8x256xi1>
    %cst_68 = arith.constant 0.000000e+00 : f32
    %160 = vector.broadcast %cst_68 : f32 to vector<8x256xf32>
    %161 = arith.select %159, %140, %160 : vector<8x256xi1>, vector<8x256xf32>
    %c240_i32 = arith.constant 240 : i32
    %162 = tpu.dynamic_rotate %24 by %c240_i32 dim 1 : vector<8x256xf32>, i32 -> vector<8x256xf32>
    %c1_i32_69 = arith.constant 1 : i32
    %163 = vector.broadcast %c1_i32_69 : i32 to vector<8x256xi32>
    %164 = arith.addi %27, %163 : vector<8x256xi32>
    %c0_i32_70 = arith.constant 0 : i32
    %165 = vector.broadcast %c0_i32_70 : i32 to vector<8x256xi32>
    %166 = arith.cmpi sge, %164, %165 : vector<8x256xi32>
    %c1_i32_71 = arith.constant 1 : i32
    %167 = vector.broadcast %c1_i32_71 : i32 to vector<8x256xi32>
    %168 = arith.addi %27, %167 : vector<8x256xi32>
    %c16_i32_72 = arith.constant 16 : i32
    %169 = vector.broadcast %c16_i32_72 : i32 to vector<8x256xi32>
    %170 = arith.cmpi slt, %168, %169 : vector<8x256xi32>
    %171 = arith.andi %166, %170 : vector<8x256xi1>
    %c0_i32_73 = arith.constant 0 : i32
    %172 = vector.broadcast %c0_i32_73 : i32 to vector<8x256xi32>
    %173 = arith.addi %29, %172 : vector<8x256xi32>
    %c0_i32_74 = arith.constant 0 : i32
    %174 = vector.broadcast %c0_i32_74 : i32 to vector<8x256xi32>
    %175 = arith.cmpi sge, %173, %174 : vector<8x256xi32>
    %176 = arith.andi %171, %175 : vector<8x256xi1>
    %c0_i32_75 = arith.constant 0 : i32
    %177 = vector.broadcast %c0_i32_75 : i32 to vector<8x256xi32>
    %178 = arith.addi %29, %177 : vector<8x256xi32>
    %c16_i32_76 = arith.constant 16 : i32
    %179 = vector.broadcast %c16_i32_76 : i32 to vector<8x256xi32>
    %180 = arith.cmpi slt, %178, %179 : vector<8x256xi32>
    %181 = arith.andi %176, %180 : vector<8x256xi1>
    %cst_77 = arith.constant 0.000000e+00 : f32
    %182 = vector.broadcast %cst_77 : f32 to vector<8x256xf32>
    %183 = arith.select %181, %162, %182 : vector<8x256xi1>, vector<8x256xf32>
    %c239_i32 = arith.constant 239 : i32
    %184 = tpu.dynamic_rotate %24 by %c239_i32 dim 1 : vector<8x256xf32>, i32 -> vector<8x256xf32>
    %c1_i32_78 = arith.constant 1 : i32
    %185 = vector.broadcast %c1_i32_78 : i32 to vector<8x256xi32>
    %186 = arith.addi %27, %185 : vector<8x256xi32>
    %c0_i32_79 = arith.constant 0 : i32
    %187 = vector.broadcast %c0_i32_79 : i32 to vector<8x256xi32>
    %188 = arith.cmpi sge, %186, %187 : vector<8x256xi32>
    %c1_i32_80 = arith.constant 1 : i32
    %189 = vector.broadcast %c1_i32_80 : i32 to vector<8x256xi32>
    %190 = arith.addi %27, %189 : vector<8x256xi32>
    %c16_i32_81 = arith.constant 16 : i32
    %191 = vector.broadcast %c16_i32_81 : i32 to vector<8x256xi32>
    %192 = arith.cmpi slt, %190, %191 : vector<8x256xi32>
    %193 = arith.andi %188, %192 : vector<8x256xi1>
    %c1_i32_82 = arith.constant 1 : i32
    %194 = vector.broadcast %c1_i32_82 : i32 to vector<8x256xi32>
    %195 = arith.addi %29, %194 : vector<8x256xi32>
    %c0_i32_83 = arith.constant 0 : i32
    %196 = vector.broadcast %c0_i32_83 : i32 to vector<8x256xi32>
    %197 = arith.cmpi sge, %195, %196 : vector<8x256xi32>
    %198 = arith.andi %193, %197 : vector<8x256xi1>
    %c1_i32_84 = arith.constant 1 : i32
    %199 = vector.broadcast %c1_i32_84 : i32 to vector<8x256xi32>
    %200 = arith.addi %29, %199 : vector<8x256xi32>
    %c16_i32_85 = arith.constant 16 : i32
    %201 = vector.broadcast %c16_i32_85 : i32 to vector<8x256xi32>
    %202 = arith.cmpi slt, %200, %201 : vector<8x256xi32>
    %203 = arith.andi %198, %202 : vector<8x256xi1>
    %cst_86 = arith.constant 0.000000e+00 : f32
    %204 = vector.broadcast %cst_86 : f32 to vector<8x256xf32>
    %205 = arith.select %203, %184, %204 : vector<8x256xi1>, vector<8x256xf32>
    %206 = tpu.concatenate %51, %73, %95, %117, %24, %139, %161, %183, %205 in 0 : vector<8x256xf32>, vector<8x256xf32>, vector<8x256xf32>, vector<8x256xf32>, vector<8x256xf32>, vector<8x256xf32>, vector<8x256xf32>, vector<8x256xf32>, vector<8x256xf32> -> vector<72x256xf32>
    %207 = arith.truncf %206 : vector<72x256xf32> to vector<72x256xbf16>
    %c0_87 = arith.constant 0 : index
    %c0_88 = arith.constant 0 : index
    %208 = vector.load %arg8[%c0_87, %c0_88] : memref<8x72xf32, #tpu.memory_space<vmem>>, vector<8x72xf32>
    %209 = arith.truncf %208 : vector<8x72xf32> to vector<8x72xbf16>
    %cst_89 = arith.constant dense<0.000000e+00> : vector<8x256xf32>
    %210 = tpu.matmul %209, %207, %cst_89 {dimension_numbers = #tpu.dot_dimension_numbers<[1], [0], [0], [1], [0, 0, 1, 1], [], []>} : vector<8x72xbf16>, vector<72x256xbf16>, vector<8x256xf32> -> vector<8x256xf32>
    %c0_90 = arith.constant 0 : index
    %c0_91 = arith.constant 0 : index
    %211 = vector.load %arg9[%c0_90, %c0_91] : memref<8x1xf32, #tpu.memory_space<vmem>>, vector<8x1xf32>
    %212 = vector.broadcast %211 : vector<8x1xf32> to vector<8x256xf32>
    %213 = arith.addf %210, %212 : vector<8x256xf32>
    %c0_92 = arith.constant 0 : index
    %c0_93 = arith.constant 0 : index
    %214 = vector.load %arg10[%c0_92, %c0_93] : memref<8x1xf32, #tpu.memory_space<vmem>>, vector<8x1xf32>
    %215 = vector.broadcast %214 : vector<8x1xf32> to vector<8x256xf32>
    %216 = arith.mulf %213, %215 : vector<8x256xf32>
    %c0_94 = arith.constant 0 : index
    %c0_95 = arith.constant 0 : index
    %217 = vector.load %arg11[%c0_94, %c0_95] : memref<8x1xf32, #tpu.memory_space<vmem>>, vector<8x1xf32>
    %218 = vector.broadcast %217 : vector<8x1xf32> to vector<8x256xf32>
    %219 = arith.addf %216, %218 : vector<8x256xf32>
    %cst_96 = arith.constant 0.000000e+00 : f32
    %220 = vector.broadcast %cst_96 : f32 to vector<8x256xf32>
    %221 = arith.maximumf %219, %220 : vector<8x256xf32>
    %c0_97 = arith.constant 0 : index
    %c0_98 = arith.constant 0 : index
    %222 = vector.load %arg12[%c0_97, %c0_98] : memref<16x8xf32, #tpu.memory_space<vmem>>, vector<16x8xf32>
    %223 = arith.truncf %222 : vector<16x8xf32> to vector<16x8xbf16>
    %224 = arith.truncf %221 : vector<8x256xf32> to vector<8x256xbf16>
    %cst_99 = arith.constant dense<0.000000e+00> : vector<16x256xf32>
    %225 = tpu.matmul %223, %224, %cst_99 {dimension_numbers = #tpu.dot_dimension_numbers<[1], [0], [0], [1], [0, 0, 1, 1], [], []>} : vector<16x8xbf16>, vector<8x256xbf16>, vector<16x256xf32> -> vector<16x256xf32>
    %c0_100 = arith.constant 0 : index
    %c0_101 = arith.constant 0 : index
    %226 = vector.load %arg13[%c0_100, %c0_101] : memref<16x1xf32, #tpu.memory_space<vmem>>, vector<16x1xf32>
    %227 = vector.broadcast %226 : vector<16x1xf32> to vector<16x256xf32>
    %228 = arith.addf %225, %227 : vector<16x256xf32>
    %229 = arith.addf %228, %1 : vector<16x256xf32>
    %c0_102 = arith.constant 0 : index
    %c0_103 = arith.constant 0 : index
    %c0_104 = arith.constant 0 : index
    %230 = vector.load %arg14[%c0_102, %c0_103, %c0_104] : memref<1x16x256xf32, #tpu.memory_space<vmem>>, vector<1x16x256xf32>
    %231 = vector.shape_cast %230 : vector<1x16x256xf32> to vector<16x256xf32>
    %232 = vector.shape_cast %229 : vector<16x256xf32> to vector<1x16x256xf32>
    tpu.vector_store %arg14[%c0_102, %c0_103, %c0_104], %232 {strides = array<i32>} : memref<1x16x256xf32, #tpu.memory_space<vmem>>, vector<1x16x256xf32>,
    return
  }
  func.func @transform_0(%arg0: i32) -> (i32, i32, i32) {
    %c0_i32 = arith.constant 0 : i32
    %c0_i32_0 = arith.constant 0 : i32
    %c0_i32_1 = arith.constant 0 : i32
    return %arg0, %c0_i32, %c0_i32_0 : i32, i32, i32
  }
  func.func @transform_1(%arg0: i32) -> (i32, i32) {
    %c0_i32 = arith.constant 0 : i32
    %c0_i32_0 = arith.constant 0 : i32
    %c0_i32_1 = arith.constant 0 : i32
    return %c0_i32, %c0_i32_0 : i32, i32
  }
  func.func @transform_2(%arg0: i32) -> (i32, i32) {
    %c0_i32 = arith.constant 0 : i32
    %c0_i32_0 = arith.constant 0 : i32
    %c0_i32_1 = arith.constant 0 : i32
    return %c0_i32, %c0_i32_0 : i32, i32
  }
  func.func @transform_3(%arg0: i32) -> (i32, i32) {
    %c0_i32 = arith.constant 0 : i32
    %c0_i32_0 = arith.constant 0 : i32
    %c0_i32_1 = arith.constant 0 : i32
    return %c0_i32, %c0_i32_0 : i32, i32
  }
  func.func @transform_4(%arg0: i32) -> (i32, i32) {
    %c0_i32 = arith.constant 0 : i32
    %c0_i32_0 = arith.constant 0 : i32
    %c0_i32_1 = arith.constant 0 : i32
    return %c0_i32, %c0_i32_0 : i32, i32
  }
  func.func @transform_5(%arg0: i32) -> (i32, i32) {
    %c0_i32 = arith.constant 0 : i32
    %c0_i32_0 = arith.constant 0 : i32
    %c0_i32_1 = arith.constant 0 : i32
    return %c0_i32, %c0_i32_0 : i32, i32
  }
  func.func @transform_6(%arg0: i32) -> (i32, i32) {
    %c0_i32 = arith.constant 0 : i32
    %c0_i32_0 = arith.constant 0 : i32
    %c0_i32_1 = arith.constant 0 : i32
    return %c0_i32, %c0_i32_0 : i32, i32
  }
  func.func @transform_7(%arg0: i32) -> (i32, i32) {
    %c0_i32 = arith.constant 0 : i32
    %c0_i32_0 = arith.constant 0 : i32
    %c0_i32_1 = arith.constant 0 : i32
    return %c0_i32, %c0_i32_0 : i32, i32
  }
  func.func @transform_8(%arg0: i32) -> (i32, i32) {
    %c0_i32 = arith.constant 0 : i32
    %c0_i32_0 = arith.constant 0 : i32
    %c0_i32_1 = arith.constant 0 : i32
    return %c0_i32, %c0_i32_0 : i32, i32
  }
  func.func @transform_9(%arg0: i32) -> (i32, i32) {
    %c0_i32 = arith.constant 0 : i32
    %c0_i32_0 = arith.constant 0 : i32
    %c0_i32_1 = arith.constant 0 : i32
    return %c0_i32, %c0_i32_0 : i32, i32
  }
  func.func @transform_10(%arg0: i32) -> (i32, i32) {
    %c0_i32 = arith.constant 0 : i32
    %c0_i32_0 = arith.constant 0 : i32
    %c0_i32_1 = arith.constant 0 : i32
    return %c0_i32, %c0_i32_0 : i32, i32
  }
  func.func @transform_11(%arg0: i32) -> (i32, i32) {
    %c0_i32 = arith.constant 0 : i32
    %c0_i32_0 = arith.constant 0 : i32
    %c0_i32_1 = arith.constant 0 : i32
    return %c0_i32, %c0_i32_0 : i32, i32
  }
  func.func @transform_12(%arg0: i32) -> (i32, i32) {
    %c0_i32 = arith.constant 0 : i32
    %c0_i32_0 = arith.constant 0 : i32
    %c0_i32_1 = arith.constant 0 : i32
    return %c0_i32, %c0_i32_0 : i32, i32
  }
  func.func @transform_13(%arg0: i32) -> (i32, i32, i32) {
    %c0_i32 = arith.constant 0 : i32
    %c0_i32_0 = arith.constant 0 : i32
    %c0_i32_1 = arith.constant 0 : i32
    return %arg0, %c0_i32, %c0_i32_0 : i32, i32, i32
  }
}

module attributes {stable_mosaic.version = 11 : i64} {
  func.func @_upsample_add_kernel(%arg0: i32, %arg1: memref<1x16x256xf32, #tpu.memory_space<vmem>>, %arg2: memref<1x16x64xf32, #tpu.memory_space<vmem>>, %arg3: memref<1x16x256xf32, #tpu.memory_space<vmem>>) attributes {dimension_semantics = [#tpu.dimension_semantics<parallel>], iteration_bounds = array<i64: 2>, scalar_prefetch = 0 : i64, scratch_operands = 0 : i64, tpu.core_type = #tpu.core_type<tc>, window_params = [{transform_indices = @transform_0, window_bounds = array<i64: 1, 16, 256>}, {transform_indices = @transform_1, window_bounds = array<i64: 1, 16, 64>}, {transform_indices = @transform_2, window_bounds = array<i64: 1, 16, 256>}]} {
    %c0 = arith.constant 0 : index
    %c0_0 = arith.constant 0 : index
    %c0_1 = arith.constant 0 : index
    %0 = vector.load %arg2[%c0, %c0_0, %c0_1] : memref<1x16x64xf32, #tpu.memory_space<vmem>>, vector<1x16x64xf32>
    %1 = vector.shape_cast %0 : vector<1x16x64xf32> to vector<16x64xf32>
    %2 = tpu.iota {dimensions = array<i32: 0>} : vector<64x256xi32>
    %3 = tpu.iota {dimensions = array<i32: 1>} : vector<64x256xi32>
    %c4_i32 = arith.constant 4 : i32
    %4 = vector.broadcast %c4_i32 : i32 to vector<64x256xi32>
    %5 = arith.shrsi %3, %4 : vector<64x256xi32>
    %c1_i32 = arith.constant 1 : i32
    %6 = vector.broadcast %c1_i32 : i32 to vector<64x256xi32>
    %7 = arith.shrsi %5, %6 : vector<64x256xi32>
    %c8_i32 = arith.constant 8 : i32
    %8 = vector.broadcast %c8_i32 : i32 to vector<64x256xi32>
    %9 = arith.muli %7, %8 : vector<64x256xi32>
    %c15_i32 = arith.constant 15 : i32
    %10 = vector.broadcast %c15_i32 : i32 to vector<64x256xi32>
    %11 = arith.andi %3, %10 : vector<64x256xi32>
    %c1_i32_2 = arith.constant 1 : i32
    %12 = vector.broadcast %c1_i32_2 : i32 to vector<64x256xi32>
    %13 = arith.shrsi %11, %12 : vector<64x256xi32>
    %14 = arith.addi %9, %13 : vector<64x256xi32>
    %15 = arith.cmpi eq, %2, %14 : vector<64x256xi32>
    %16 = arith.extui %15 : vector<64x256xi1> to vector<64x256xi32>
    %17 = arith.sitofp %16 : vector<64x256xi32> to vector<64x256xf32>
    %c0_3 = arith.constant 0 : index
    %c0_4 = arith.constant 0 : index
    %c0_5 = arith.constant 0 : index
    %18 = vector.load %arg1[%c0_3, %c0_4, %c0_5] : memref<1x16x256xf32, #tpu.memory_space<vmem>>, vector<1x16x256xf32>
    %19 = vector.shape_cast %18 : vector<1x16x256xf32> to vector<16x256xf32>
    %cst = arith.constant dense<0.000000e+00> : vector<16x256xf32>
    %20 = tpu.matmul %1, %17, %cst {dimension_numbers = #tpu.dot_dimension_numbers<[1], [0], [0], [1], [0, 0, 1, 1], [], []>} : vector<16x64xf32>, vector<64x256xf32>, vector<16x256xf32> -> vector<16x256xf32>
    %21 = arith.addf %19, %20 : vector<16x256xf32>
    %c0_6 = arith.constant 0 : index
    %c0_7 = arith.constant 0 : index
    %c0_8 = arith.constant 0 : index
    %22 = vector.load %arg3[%c0_6, %c0_7, %c0_8] : memref<1x16x256xf32, #tpu.memory_space<vmem>>, vector<1x16x256xf32>
    %23 = vector.shape_cast %22 : vector<1x16x256xf32> to vector<16x256xf32>
    %24 = vector.shape_cast %21 : vector<16x256xf32> to vector<1x16x256xf32>
    tpu.vector_store %arg3[%c0_6, %c0_7, %c0_8], %24 {strides = array<i32>} : memref<1x16x256xf32, #tpu.memory_space<vmem>>, vector<1x16x256xf32>,
    return
  }
  func.func @transform_0(%arg0: i32) -> (i32, i32, i32) {
    %c0_i32 = arith.constant 0 : i32
    %c0_i32_0 = arith.constant 0 : i32
    %c0_i32_1 = arith.constant 0 : i32
    return %arg0, %c0_i32, %c0_i32_0 : i32, i32, i32
  }
  func.func @transform_1(%arg0: i32) -> (i32, i32, i32) {
    %c0_i32 = arith.constant 0 : i32
    %c0_i32_0 = arith.constant 0 : i32
    %c0_i32_1 = arith.constant 0 : i32
    return %arg0, %c0_i32, %c0_i32_0 : i32, i32, i32
  }
  func.func @transform_2(%arg0: i32) -> (i32, i32, i32) {
    %c0_i32 = arith.constant 0 : i32
    %c0_i32_0 = arith.constant 0 : i32
    %c0_i32_1 = arith.constant 0 : i32
    return %arg0, %c0_i32, %c0_i32_0 : i32, i32, i32
  }
}

module attributes {stable_mosaic.version = 11 : i64} {
  func.func @_res_module_kernel(%arg0: i32, %arg1: memref<1x16x64xf32, #tpu.memory_space<vmem>>, %arg2: memref<16x1xf32, #tpu.memory_space<vmem>>, %arg3: memref<16x1xf32, #tpu.memory_space<vmem>>, %arg4: memref<8x16xf32, #tpu.memory_space<vmem>>, %arg5: memref<8x1xf32, #tpu.memory_space<vmem>>, %arg6: memref<8x1xf32, #tpu.memory_space<vmem>>, %arg7: memref<8x1xf32, #tpu.memory_space<vmem>>, %arg8: memref<8x72xf32, #tpu.memory_space<vmem>>, %arg9: memref<8x1xf32, #tpu.memory_space<vmem>>, %arg10: memref<8x1xf32, #tpu.memory_space<vmem>>, %arg11: memref<8x1xf32, #tpu.memory_space<vmem>>, %arg12: memref<16x8xf32, #tpu.memory_space<vmem>>, %arg13: memref<16x1xf32, #tpu.memory_space<vmem>>, %arg14: memref<1x16x64xf32, #tpu.memory_space<vmem>>) attributes {dimension_semantics = [#tpu.dimension_semantics<parallel>], iteration_bounds = array<i64: 2>, scalar_prefetch = 0 : i64, scratch_operands = 0 : i64, tpu.core_type = #tpu.core_type<tc>, window_params = [{transform_indices = @transform_0, window_bounds = array<i64: 1, 16, 64>}, {pipeline_mode = #tpu.pipeline_mode<synchronous>, transform_indices = @transform_1, window_bounds = array<i64: 16, 1>}, {pipeline_mode = #tpu.pipeline_mode<synchronous>, transform_indices = @transform_2, window_bounds = array<i64: 16, 1>}, {pipeline_mode = #tpu.pipeline_mode<synchronous>, transform_indices = @transform_3, window_bounds = array<i64: 8, 16>}, {pipeline_mode = #tpu.pipeline_mode<synchronous>, transform_indices = @transform_4, window_bounds = array<i64: 8, 1>}, {pipeline_mode = #tpu.pipeline_mode<synchronous>, transform_indices = @transform_5, window_bounds = array<i64: 8, 1>}, {pipeline_mode = #tpu.pipeline_mode<synchronous>, transform_indices = @transform_6, window_bounds = array<i64: 8, 1>}, {pipeline_mode = #tpu.pipeline_mode<synchronous>, transform_indices = @transform_7, window_bounds = array<i64: 8, 72>}, {pipeline_mode = #tpu.pipeline_mode<synchronous>, transform_indices = @transform_8, window_bounds = array<i64: 8, 1>}, {pipeline_mode = #tpu.pipeline_mode<synchronous>, transform_indices = @transform_9, window_bounds = array<i64: 8, 1>}, {pipeline_mode = #tpu.pipeline_mode<synchronous>, transform_indices = @transform_10, window_bounds = array<i64: 8, 1>}, {pipeline_mode = #tpu.pipeline_mode<synchronous>, transform_indices = @transform_11, window_bounds = array<i64: 16, 8>}, {pipeline_mode = #tpu.pipeline_mode<synchronous>, transform_indices = @transform_12, window_bounds = array<i64: 16, 1>}, {transform_indices = @transform_13, window_bounds = array<i64: 1, 16, 64>}]} {
    %c0 = arith.constant 0 : index
    %c0_0 = arith.constant 0 : index
    %c0_1 = arith.constant 0 : index
    %0 = vector.load %arg1[%c0, %c0_0, %c0_1] : memref<1x16x64xf32, #tpu.memory_space<vmem>>, vector<1x16x64xf32>
    %1 = vector.shape_cast %0 : vector<1x16x64xf32> to vector<16x64xf32>
    %c0_2 = arith.constant 0 : index
    %c0_3 = arith.constant 0 : index
    %2 = vector.load %arg2[%c0_2, %c0_3] : memref<16x1xf32, #tpu.memory_space<vmem>>, vector<16x1xf32>
    %3 = vector.broadcast %2 : vector<16x1xf32> to vector<16x64xf32>
    %4 = arith.mulf %1, %3 : vector<16x64xf32>
    %c0_4 = arith.constant 0 : index
    %c0_5 = arith.constant 0 : index
    %5 = vector.load %arg3[%c0_4, %c0_5] : memref<16x1xf32, #tpu.memory_space<vmem>>, vector<16x1xf32>
    %6 = vector.broadcast %5 : vector<16x1xf32> to vector<16x64xf32>
    %7 = arith.addf %4, %6 : vector<16x64xf32>
    %cst = arith.constant 0.000000e+00 : f32
    %8 = vector.broadcast %cst : f32 to vector<16x64xf32>
    %9 = arith.maximumf %7, %8 : vector<16x64xf32>
    %c0_6 = arith.constant 0 : index
    %c0_7 = arith.constant 0 : index
    %10 = vector.load %arg4[%c0_6, %c0_7] : memref<8x16xf32, #tpu.memory_space<vmem>>, vector<8x16xf32>
    %11 = arith.truncf %10 : vector<8x16xf32> to vector<8x16xbf16>
    %12 = arith.truncf %9 : vector<16x64xf32> to vector<16x64xbf16>
    %cst_8 = arith.constant dense<0.000000e+00> : vector<8x64xf32>
    %13 = tpu.matmul %11, %12, %cst_8 {dimension_numbers = #tpu.dot_dimension_numbers<[1], [0], [0], [1], [0, 0, 1, 1], [], []>} : vector<8x16xbf16>, vector<16x64xbf16>, vector<8x64xf32> -> vector<8x64xf32>
    %c0_9 = arith.constant 0 : index
    %c0_10 = arith.constant 0 : index
    %14 = vector.load %arg5[%c0_9, %c0_10] : memref<8x1xf32, #tpu.memory_space<vmem>>, vector<8x1xf32>
    %15 = vector.broadcast %14 : vector<8x1xf32> to vector<8x64xf32>
    %16 = arith.addf %13, %15 : vector<8x64xf32>
    %c0_11 = arith.constant 0 : index
    %c0_12 = arith.constant 0 : index
    %17 = vector.load %arg6[%c0_11, %c0_12] : memref<8x1xf32, #tpu.memory_space<vmem>>, vector<8x1xf32>
    %18 = vector.broadcast %17 : vector<8x1xf32> to vector<8x64xf32>
    %19 = arith.mulf %16, %18 : vector<8x64xf32>
    %c0_13 = arith.constant 0 : index
    %c0_14 = arith.constant 0 : index
    %20 = vector.load %arg7[%c0_13, %c0_14] : memref<8x1xf32, #tpu.memory_space<vmem>>, vector<8x1xf32>
    %21 = vector.broadcast %20 : vector<8x1xf32> to vector<8x64xf32>
    %22 = arith.addf %19, %21 : vector<8x64xf32>
    %cst_15 = arith.constant 0.000000e+00 : f32
    %23 = vector.broadcast %cst_15 : f32 to vector<8x64xf32>
    %24 = arith.maximumf %22, %23 : vector<8x64xf32>
    %25 = tpu.iota {dimensions = array<i32: 0>} : vector<64x64xi32>
    %26 = tpu.iota {dimensions = array<i32: 1>} : vector<64x64xi32>
    %c3_i32 = arith.constant 3 : i32
    %27 = vector.broadcast %c3_i32 : i32 to vector<64x64xi32>
    %28 = arith.shrsi %26, %27 : vector<64x64xi32>
    %c7_i32 = arith.constant 7 : i32
    %29 = vector.broadcast %c7_i32 : i32 to vector<64x64xi32>
    %30 = arith.andi %26, %29 : vector<64x64xi32>
    %c-1_i32 = arith.constant -1 : i32
    %31 = vector.broadcast %c-1_i32 : i32 to vector<64x64xi32>
    %32 = arith.addi %28, %31 : vector<64x64xi32>
    %c0_i32 = arith.constant 0 : i32
    %33 = vector.broadcast %c0_i32 : i32 to vector<64x64xi32>
    %34 = arith.cmpi sge, %32, %33 : vector<64x64xi32>
    %c-1_i32_16 = arith.constant -1 : i32
    %35 = vector.broadcast %c-1_i32_16 : i32 to vector<64x64xi32>
    %36 = arith.addi %28, %35 : vector<64x64xi32>
    %c8_i32 = arith.constant 8 : i32
    %37 = vector.broadcast %c8_i32 : i32 to vector<64x64xi32>
    %38 = arith.cmpi slt, %36, %37 : vector<64x64xi32>
    %39 = arith.andi %34, %38 : vector<64x64xi1>
    %c-1_i32_17 = arith.constant -1 : i32
    %40 = vector.broadcast %c-1_i32_17 : i32 to vector<64x64xi32>
    %41 = arith.addi %30, %40 : vector<64x64xi32>
    %c0_i32_18 = arith.constant 0 : i32
    %42 = vector.broadcast %c0_i32_18 : i32 to vector<64x64xi32>
    %43 = arith.cmpi sge, %41, %42 : vector<64x64xi32>
    %44 = arith.andi %39, %43 : vector<64x64xi1>
    %c-1_i32_19 = arith.constant -1 : i32
    %45 = vector.broadcast %c-1_i32_19 : i32 to vector<64x64xi32>
    %46 = arith.addi %30, %45 : vector<64x64xi32>
    %c8_i32_20 = arith.constant 8 : i32
    %47 = vector.broadcast %c8_i32_20 : i32 to vector<64x64xi32>
    %48 = arith.cmpi slt, %46, %47 : vector<64x64xi32>
    %49 = arith.andi %44, %48 : vector<64x64xi1>
    %c-8_i32 = arith.constant -8 : i32
    %50 = vector.broadcast %c-8_i32 : i32 to vector<64x64xi32>
    %51 = arith.addi %26, %50 : vector<64x64xi32>
    %c-1_i32_21 = arith.constant -1 : i32
    %52 = vector.broadcast %c-1_i32_21 : i32 to vector<64x64xi32>
    %53 = arith.addi %51, %52 : vector<64x64xi32>
    %54 = arith.cmpi eq, %25, %53 : vector<64x64xi32>
    %55 = arith.andi %54, %49 : vector<64x64xi1>
    %56 = arith.extui %55 : vector<64x64xi1> to vector<64x64xi32>
    %57 = arith.sitofp %56 : vector<64x64xi32> to vector<64x64xf32>
    %cst_22 = arith.constant dense<0.000000e+00> : vector<8x64xf32>
    %58 = tpu.matmul %24, %57, %cst_22 {dimension_numbers = #tpu.dot_dimension_numbers<[1], [0], [0], [1], [0, 0, 1, 1], [], []>} : vector<8x64xf32>, vector<64x64xf32>, vector<8x64xf32> -> vector<8x64xf32>
    %c-1_i32_23 = arith.constant -1 : i32
    %59 = vector.broadcast %c-1_i32_23 : i32 to vector<64x64xi32>
    %60 = arith.addi %28, %59 : vector<64x64xi32>
    %c0_i32_24 = arith.constant 0 : i32
    %61 = vector.broadcast %c0_i32_24 : i32 to vector<64x64xi32>
    %62 = arith.cmpi sge, %60, %61 : vector<64x64xi32>
    %c-1_i32_25 = arith.constant -1 : i32
    %63 = vector.broadcast %c-1_i32_25 : i32 to vector<64x64xi32>
    %64 = arith.addi %28, %63 : vector<64x64xi32>
    %c8_i32_26 = arith.constant 8 : i32
    %65 = vector.broadcast %c8_i32_26 : i32 to vector<64x64xi32>
    %66 = arith.cmpi slt, %64, %65 : vector<64x64xi32>
    %67 = arith.andi %62, %66 : vector<64x64xi1>
    %c0_i32_27 = arith.constant 0 : i32
    %68 = vector.broadcast %c0_i32_27 : i32 to vector<64x64xi32>
    %69 = arith.addi %30, %68 : vector<64x64xi32>
    %c0_i32_28 = arith.constant 0 : i32
    %70 = vector.broadcast %c0_i32_28 : i32 to vector<64x64xi32>
    %71 = arith.cmpi sge, %69, %70 : vector<64x64xi32>
    %72 = arith.andi %67, %71 : vector<64x64xi1>
    %c0_i32_29 = arith.constant 0 : i32
    %73 = vector.broadcast %c0_i32_29 : i32 to vector<64x64xi32>
    %74 = arith.addi %30, %73 : vector<64x64xi32>
    %c8_i32_30 = arith.constant 8 : i32
    %75 = vector.broadcast %c8_i32_30 : i32 to vector<64x64xi32>
    %76 = arith.cmpi slt, %74, %75 : vector<64x64xi32>
    %77 = arith.andi %72, %76 : vector<64x64xi1>
    %c-8_i32_31 = arith.constant -8 : i32
    %78 = vector.broadcast %c-8_i32_31 : i32 to vector<64x64xi32>
    %79 = arith.addi %26, %78 : vector<64x64xi32>
    %c0_i32_32 = arith.constant 0 : i32
    %80 = vector.broadcast %c0_i32_32 : i32 to vector<64x64xi32>
    %81 = arith.addi %79, %80 : vector<64x64xi32>
    %82 = arith.cmpi eq, %25, %81 : vector<64x64xi32>
    %83 = arith.andi %82, %77 : vector<64x64xi1>
    %84 = arith.extui %83 : vector<64x64xi1> to vector<64x64xi32>
    %85 = arith.sitofp %84 : vector<64x64xi32> to vector<64x64xf32>
    %cst_33 = arith.constant dense<0.000000e+00> : vector<8x64xf32>
    %86 = tpu.matmul %24, %85, %cst_33 {dimension_numbers = #tpu.dot_dimension_numbers<[1], [0], [0], [1], [0, 0, 1, 1], [], []>} : vector<8x64xf32>, vector<64x64xf32>, vector<8x64xf32> -> vector<8x64xf32>
    %c-1_i32_34 = arith.constant -1 : i32
    %87 = vector.broadcast %c-1_i32_34 : i32 to vector<64x64xi32>
    %88 = arith.addi %28, %87 : vector<64x64xi32>
    %c0_i32_35 = arith.constant 0 : i32
    %89 = vector.broadcast %c0_i32_35 : i32 to vector<64x64xi32>
    %90 = arith.cmpi sge, %88, %89 : vector<64x64xi32>
    %c-1_i32_36 = arith.constant -1 : i32
    %91 = vector.broadcast %c-1_i32_36 : i32 to vector<64x64xi32>
    %92 = arith.addi %28, %91 : vector<64x64xi32>
    %c8_i32_37 = arith.constant 8 : i32
    %93 = vector.broadcast %c8_i32_37 : i32 to vector<64x64xi32>
    %94 = arith.cmpi slt, %92, %93 : vector<64x64xi32>
    %95 = arith.andi %90, %94 : vector<64x64xi1>
    %c1_i32 = arith.constant 1 : i32
    %96 = vector.broadcast %c1_i32 : i32 to vector<64x64xi32>
    %97 = arith.addi %30, %96 : vector<64x64xi32>
    %c0_i32_38 = arith.constant 0 : i32
    %98 = vector.broadcast %c0_i32_38 : i32 to vector<64x64xi32>
    %99 = arith.cmpi sge, %97, %98 : vector<64x64xi32>
    %100 = arith.andi %95, %99 : vector<64x64xi1>
    %c1_i32_39 = arith.constant 1 : i32
    %101 = vector.broadcast %c1_i32_39 : i32 to vector<64x64xi32>
    %102 = arith.addi %30, %101 : vector<64x64xi32>
    %c8_i32_40 = arith.constant 8 : i32
    %103 = vector.broadcast %c8_i32_40 : i32 to vector<64x64xi32>
    %104 = arith.cmpi slt, %102, %103 : vector<64x64xi32>
    %105 = arith.andi %100, %104 : vector<64x64xi1>
    %c-8_i32_41 = arith.constant -8 : i32
    %106 = vector.broadcast %c-8_i32_41 : i32 to vector<64x64xi32>
    %107 = arith.addi %26, %106 : vector<64x64xi32>
    %c1_i32_42 = arith.constant 1 : i32
    %108 = vector.broadcast %c1_i32_42 : i32 to vector<64x64xi32>
    %109 = arith.addi %107, %108 : vector<64x64xi32>
    %110 = arith.cmpi eq, %25, %109 : vector<64x64xi32>
    %111 = arith.andi %110, %105 : vector<64x64xi1>
    %112 = arith.extui %111 : vector<64x64xi1> to vector<64x64xi32>
    %113 = arith.sitofp %112 : vector<64x64xi32> to vector<64x64xf32>
    %cst_43 = arith.constant dense<0.000000e+00> : vector<8x64xf32>
    %114 = tpu.matmul %24, %113, %cst_43 {dimension_numbers = #tpu.dot_dimension_numbers<[1], [0], [0], [1], [0, 0, 1, 1], [], []>} : vector<8x64xf32>, vector<64x64xf32>, vector<8x64xf32> -> vector<8x64xf32>
    %c0_i32_44 = arith.constant 0 : i32
    %115 = vector.broadcast %c0_i32_44 : i32 to vector<64x64xi32>
    %116 = arith.addi %28, %115 : vector<64x64xi32>
    %c0_i32_45 = arith.constant 0 : i32
    %117 = vector.broadcast %c0_i32_45 : i32 to vector<64x64xi32>
    %118 = arith.cmpi sge, %116, %117 : vector<64x64xi32>
    %c0_i32_46 = arith.constant 0 : i32
    %119 = vector.broadcast %c0_i32_46 : i32 to vector<64x64xi32>
    %120 = arith.addi %28, %119 : vector<64x64xi32>
    %c8_i32_47 = arith.constant 8 : i32
    %121 = vector.broadcast %c8_i32_47 : i32 to vector<64x64xi32>
    %122 = arith.cmpi slt, %120, %121 : vector<64x64xi32>
    %123 = arith.andi %118, %122 : vector<64x64xi1>
    %c-1_i32_48 = arith.constant -1 : i32
    %124 = vector.broadcast %c-1_i32_48 : i32 to vector<64x64xi32>
    %125 = arith.addi %30, %124 : vector<64x64xi32>
    %c0_i32_49 = arith.constant 0 : i32
    %126 = vector.broadcast %c0_i32_49 : i32 to vector<64x64xi32>
    %127 = arith.cmpi sge, %125, %126 : vector<64x64xi32>
    %128 = arith.andi %123, %127 : vector<64x64xi1>
    %c-1_i32_50 = arith.constant -1 : i32
    %129 = vector.broadcast %c-1_i32_50 : i32 to vector<64x64xi32>
    %130 = arith.addi %30, %129 : vector<64x64xi32>
    %c8_i32_51 = arith.constant 8 : i32
    %131 = vector.broadcast %c8_i32_51 : i32 to vector<64x64xi32>
    %132 = arith.cmpi slt, %130, %131 : vector<64x64xi32>
    %133 = arith.andi %128, %132 : vector<64x64xi1>
    %c0_i32_52 = arith.constant 0 : i32
    %134 = vector.broadcast %c0_i32_52 : i32 to vector<64x64xi32>
    %135 = arith.addi %26, %134 : vector<64x64xi32>
    %c-1_i32_53 = arith.constant -1 : i32
    %136 = vector.broadcast %c-1_i32_53 : i32 to vector<64x64xi32>
    %137 = arith.addi %135, %136 : vector<64x64xi32>
    %138 = arith.cmpi eq, %25, %137 : vector<64x64xi32>
    %139 = arith.andi %138, %133 : vector<64x64xi1>
    %140 = arith.extui %139 : vector<64x64xi1> to vector<64x64xi32>
    %141 = arith.sitofp %140 : vector<64x64xi32> to vector<64x64xf32>
    %cst_54 = arith.constant dense<0.000000e+00> : vector<8x64xf32>
    %142 = tpu.matmul %24, %141, %cst_54 {dimension_numbers = #tpu.dot_dimension_numbers<[1], [0], [0], [1], [0, 0, 1, 1], [], []>} : vector<8x64xf32>, vector<64x64xf32>, vector<8x64xf32> -> vector<8x64xf32>
    %c0_i32_55 = arith.constant 0 : i32
    %143 = vector.broadcast %c0_i32_55 : i32 to vector<64x64xi32>
    %144 = arith.addi %28, %143 : vector<64x64xi32>
    %c0_i32_56 = arith.constant 0 : i32
    %145 = vector.broadcast %c0_i32_56 : i32 to vector<64x64xi32>
    %146 = arith.cmpi sge, %144, %145 : vector<64x64xi32>
    %c0_i32_57 = arith.constant 0 : i32
    %147 = vector.broadcast %c0_i32_57 : i32 to vector<64x64xi32>
    %148 = arith.addi %28, %147 : vector<64x64xi32>
    %c8_i32_58 = arith.constant 8 : i32
    %149 = vector.broadcast %c8_i32_58 : i32 to vector<64x64xi32>
    %150 = arith.cmpi slt, %148, %149 : vector<64x64xi32>
    %151 = arith.andi %146, %150 : vector<64x64xi1>
    %c1_i32_59 = arith.constant 1 : i32
    %152 = vector.broadcast %c1_i32_59 : i32 to vector<64x64xi32>
    %153 = arith.addi %30, %152 : vector<64x64xi32>
    %c0_i32_60 = arith.constant 0 : i32
    %154 = vector.broadcast %c0_i32_60 : i32 to vector<64x64xi32>
    %155 = arith.cmpi sge, %153, %154 : vector<64x64xi32>
    %156 = arith.andi %151, %155 : vector<64x64xi1>
    %c1_i32_61 = arith.constant 1 : i32
    %157 = vector.broadcast %c1_i32_61 : i32 to vector<64x64xi32>
    %158 = arith.addi %30, %157 : vector<64x64xi32>
    %c8_i32_62 = arith.constant 8 : i32
    %159 = vector.broadcast %c8_i32_62 : i32 to vector<64x64xi32>
    %160 = arith.cmpi slt, %158, %159 : vector<64x64xi32>
    %161 = arith.andi %156, %160 : vector<64x64xi1>
    %c0_i32_63 = arith.constant 0 : i32
    %162 = vector.broadcast %c0_i32_63 : i32 to vector<64x64xi32>
    %163 = arith.addi %26, %162 : vector<64x64xi32>
    %c1_i32_64 = arith.constant 1 : i32
    %164 = vector.broadcast %c1_i32_64 : i32 to vector<64x64xi32>
    %165 = arith.addi %163, %164 : vector<64x64xi32>
    %166 = arith.cmpi eq, %25, %165 : vector<64x64xi32>
    %167 = arith.andi %166, %161 : vector<64x64xi1>
    %168 = arith.extui %167 : vector<64x64xi1> to vector<64x64xi32>
    %169 = arith.sitofp %168 : vector<64x64xi32> to vector<64x64xf32>
    %cst_65 = arith.constant dense<0.000000e+00> : vector<8x64xf32>
    %170 = tpu.matmul %24, %169, %cst_65 {dimension_numbers = #tpu.dot_dimension_numbers<[1], [0], [0], [1], [0, 0, 1, 1], [], []>} : vector<8x64xf32>, vector<64x64xf32>, vector<8x64xf32> -> vector<8x64xf32>
    %c1_i32_66 = arith.constant 1 : i32
    %171 = vector.broadcast %c1_i32_66 : i32 to vector<64x64xi32>
    %172 = arith.addi %28, %171 : vector<64x64xi32>
    %c0_i32_67 = arith.constant 0 : i32
    %173 = vector.broadcast %c0_i32_67 : i32 to vector<64x64xi32>
    %174 = arith.cmpi sge, %172, %173 : vector<64x64xi32>
    %c1_i32_68 = arith.constant 1 : i32
    %175 = vector.broadcast %c1_i32_68 : i32 to vector<64x64xi32>
    %176 = arith.addi %28, %175 : vector<64x64xi32>
    %c8_i32_69 = arith.constant 8 : i32
    %177 = vector.broadcast %c8_i32_69 : i32 to vector<64x64xi32>
    %178 = arith.cmpi slt, %176, %177 : vector<64x64xi32>
    %179 = arith.andi %174, %178 : vector<64x64xi1>
    %c-1_i32_70 = arith.constant -1 : i32
    %180 = vector.broadcast %c-1_i32_70 : i32 to vector<64x64xi32>
    %181 = arith.addi %30, %180 : vector<64x64xi32>
    %c0_i32_71 = arith.constant 0 : i32
    %182 = vector.broadcast %c0_i32_71 : i32 to vector<64x64xi32>
    %183 = arith.cmpi sge, %181, %182 : vector<64x64xi32>
    %184 = arith.andi %179, %183 : vector<64x64xi1>
    %c-1_i32_72 = arith.constant -1 : i32
    %185 = vector.broadcast %c-1_i32_72 : i32 to vector<64x64xi32>
    %186 = arith.addi %30, %185 : vector<64x64xi32>
    %c8_i32_73 = arith.constant 8 : i32
    %187 = vector.broadcast %c8_i32_73 : i32 to vector<64x64xi32>
    %188 = arith.cmpi slt, %186, %187 : vector<64x64xi32>
    %189 = arith.andi %184, %188 : vector<64x64xi1>
    %c8_i32_74 = arith.constant 8 : i32
    %190 = vector.broadcast %c8_i32_74 : i32 to vector<64x64xi32>
    %191 = arith.addi %26, %190 : vector<64x64xi32>
    %c-1_i32_75 = arith.constant -1 : i32
    %192 = vector.broadcast %c-1_i32_75 : i32 to vector<64x64xi32>
    %193 = arith.addi %191, %192 : vector<64x64xi32>
    %194 = arith.cmpi eq, %25, %193 : vector<64x64xi32>
    %195 = arith.andi %194, %189 : vector<64x64xi1>
    %196 = arith.extui %195 : vector<64x64xi1> to vector<64x64xi32>
    %197 = arith.sitofp %196 : vector<64x64xi32> to vector<64x64xf32>
    %cst_76 = arith.constant dense<0.000000e+00> : vector<8x64xf32>
    %198 = tpu.matmul %24, %197, %cst_76 {dimension_numbers = #tpu.dot_dimension_numbers<[1], [0], [0], [1], [0, 0, 1, 1], [], []>} : vector<8x64xf32>, vector<64x64xf32>, vector<8x64xf32> -> vector<8x64xf32>
    %c1_i32_77 = arith.constant 1 : i32
    %199 = vector.broadcast %c1_i32_77 : i32 to vector<64x64xi32>
    %200 = arith.addi %28, %199 : vector<64x64xi32>
    %c0_i32_78 = arith.constant 0 : i32
    %201 = vector.broadcast %c0_i32_78 : i32 to vector<64x64xi32>
    %202 = arith.cmpi sge, %200, %201 : vector<64x64xi32>
    %c1_i32_79 = arith.constant 1 : i32
    %203 = vector.broadcast %c1_i32_79 : i32 to vector<64x64xi32>
    %204 = arith.addi %28, %203 : vector<64x64xi32>
    %c8_i32_80 = arith.constant 8 : i32
    %205 = vector.broadcast %c8_i32_80 : i32 to vector<64x64xi32>
    %206 = arith.cmpi slt, %204, %205 : vector<64x64xi32>
    %207 = arith.andi %202, %206 : vector<64x64xi1>
    %c0_i32_81 = arith.constant 0 : i32
    %208 = vector.broadcast %c0_i32_81 : i32 to vector<64x64xi32>
    %209 = arith.addi %30, %208 : vector<64x64xi32>
    %c0_i32_82 = arith.constant 0 : i32
    %210 = vector.broadcast %c0_i32_82 : i32 to vector<64x64xi32>
    %211 = arith.cmpi sge, %209, %210 : vector<64x64xi32>
    %212 = arith.andi %207, %211 : vector<64x64xi1>
    %c0_i32_83 = arith.constant 0 : i32
    %213 = vector.broadcast %c0_i32_83 : i32 to vector<64x64xi32>
    %214 = arith.addi %30, %213 : vector<64x64xi32>
    %c8_i32_84 = arith.constant 8 : i32
    %215 = vector.broadcast %c8_i32_84 : i32 to vector<64x64xi32>
    %216 = arith.cmpi slt, %214, %215 : vector<64x64xi32>
    %217 = arith.andi %212, %216 : vector<64x64xi1>
    %c8_i32_85 = arith.constant 8 : i32
    %218 = vector.broadcast %c8_i32_85 : i32 to vector<64x64xi32>
    %219 = arith.addi %26, %218 : vector<64x64xi32>
    %c0_i32_86 = arith.constant 0 : i32
    %220 = vector.broadcast %c0_i32_86 : i32 to vector<64x64xi32>
    %221 = arith.addi %219, %220 : vector<64x64xi32>
    %222 = arith.cmpi eq, %25, %221 : vector<64x64xi32>
    %223 = arith.andi %222, %217 : vector<64x64xi1>
    %224 = arith.extui %223 : vector<64x64xi1> to vector<64x64xi32>
    %225 = arith.sitofp %224 : vector<64x64xi32> to vector<64x64xf32>
    %cst_87 = arith.constant dense<0.000000e+00> : vector<8x64xf32>
    %226 = tpu.matmul %24, %225, %cst_87 {dimension_numbers = #tpu.dot_dimension_numbers<[1], [0], [0], [1], [0, 0, 1, 1], [], []>} : vector<8x64xf32>, vector<64x64xf32>, vector<8x64xf32> -> vector<8x64xf32>
    %c1_i32_88 = arith.constant 1 : i32
    %227 = vector.broadcast %c1_i32_88 : i32 to vector<64x64xi32>
    %228 = arith.addi %28, %227 : vector<64x64xi32>
    %c0_i32_89 = arith.constant 0 : i32
    %229 = vector.broadcast %c0_i32_89 : i32 to vector<64x64xi32>
    %230 = arith.cmpi sge, %228, %229 : vector<64x64xi32>
    %c1_i32_90 = arith.constant 1 : i32
    %231 = vector.broadcast %c1_i32_90 : i32 to vector<64x64xi32>
    %232 = arith.addi %28, %231 : vector<64x64xi32>
    %c8_i32_91 = arith.constant 8 : i32
    %233 = vector.broadcast %c8_i32_91 : i32 to vector<64x64xi32>
    %234 = arith.cmpi slt, %232, %233 : vector<64x64xi32>
    %235 = arith.andi %230, %234 : vector<64x64xi1>
    %c1_i32_92 = arith.constant 1 : i32
    %236 = vector.broadcast %c1_i32_92 : i32 to vector<64x64xi32>
    %237 = arith.addi %30, %236 : vector<64x64xi32>
    %c0_i32_93 = arith.constant 0 : i32
    %238 = vector.broadcast %c0_i32_93 : i32 to vector<64x64xi32>
    %239 = arith.cmpi sge, %237, %238 : vector<64x64xi32>
    %240 = arith.andi %235, %239 : vector<64x64xi1>
    %c1_i32_94 = arith.constant 1 : i32
    %241 = vector.broadcast %c1_i32_94 : i32 to vector<64x64xi32>
    %242 = arith.addi %30, %241 : vector<64x64xi32>
    %c8_i32_95 = arith.constant 8 : i32
    %243 = vector.broadcast %c8_i32_95 : i32 to vector<64x64xi32>
    %244 = arith.cmpi slt, %242, %243 : vector<64x64xi32>
    %245 = arith.andi %240, %244 : vector<64x64xi1>
    %c8_i32_96 = arith.constant 8 : i32
    %246 = vector.broadcast %c8_i32_96 : i32 to vector<64x64xi32>
    %247 = arith.addi %26, %246 : vector<64x64xi32>
    %c1_i32_97 = arith.constant 1 : i32
    %248 = vector.broadcast %c1_i32_97 : i32 to vector<64x64xi32>
    %249 = arith.addi %247, %248 : vector<64x64xi32>
    %250 = arith.cmpi eq, %25, %249 : vector<64x64xi32>
    %251 = arith.andi %250, %245 : vector<64x64xi1>
    %252 = arith.extui %251 : vector<64x64xi1> to vector<64x64xi32>
    %253 = arith.sitofp %252 : vector<64x64xi32> to vector<64x64xf32>
    %cst_98 = arith.constant dense<0.000000e+00> : vector<8x64xf32>
    %254 = tpu.matmul %24, %253, %cst_98 {dimension_numbers = #tpu.dot_dimension_numbers<[1], [0], [0], [1], [0, 0, 1, 1], [], []>} : vector<8x64xf32>, vector<64x64xf32>, vector<8x64xf32> -> vector<8x64xf32>
    %255 = tpu.concatenate %58, %86, %114, %142, %24, %170, %198, %226, %254 in 0 : vector<8x64xf32>, vector<8x64xf32>, vector<8x64xf32>, vector<8x64xf32>, vector<8x64xf32>, vector<8x64xf32>, vector<8x64xf32>, vector<8x64xf32>, vector<8x64xf32> -> vector<72x64xf32>
    %256 = arith.truncf %255 : vector<72x64xf32> to vector<72x64xbf16>
    %c0_99 = arith.constant 0 : index
    %c0_100 = arith.constant 0 : index
    %257 = vector.load %arg8[%c0_99, %c0_100] : memref<8x72xf32, #tpu.memory_space<vmem>>, vector<8x72xf32>
    %258 = arith.truncf %257 : vector<8x72xf32> to vector<8x72xbf16>
    %cst_101 = arith.constant dense<0.000000e+00> : vector<8x64xf32>
    %259 = tpu.matmul %258, %256, %cst_101 {dimension_numbers = #tpu.dot_dimension_numbers<[1], [0], [0], [1], [0, 0, 1, 1], [], []>} : vector<8x72xbf16>, vector<72x64xbf16>, vector<8x64xf32> -> vector<8x64xf32>
    %c0_102 = arith.constant 0 : index
    %c0_103 = arith.constant 0 : index
    %260 = vector.load %arg9[%c0_102, %c0_103] : memref<8x1xf32, #tpu.memory_space<vmem>>, vector<8x1xf32>
    %261 = vector.broadcast %260 : vector<8x1xf32> to vector<8x64xf32>
    %262 = arith.addf %259, %261 : vector<8x64xf32>
    %c0_104 = arith.constant 0 : index
    %c0_105 = arith.constant 0 : index
    %263 = vector.load %arg10[%c0_104, %c0_105] : memref<8x1xf32, #tpu.memory_space<vmem>>, vector<8x1xf32>
    %264 = vector.broadcast %263 : vector<8x1xf32> to vector<8x64xf32>
    %265 = arith.mulf %262, %264 : vector<8x64xf32>
    %c0_106 = arith.constant 0 : index
    %c0_107 = arith.constant 0 : index
    %266 = vector.load %arg11[%c0_106, %c0_107] : memref<8x1xf32, #tpu.memory_space<vmem>>, vector<8x1xf32>
    %267 = vector.broadcast %266 : vector<8x1xf32> to vector<8x64xf32>
    %268 = arith.addf %265, %267 : vector<8x64xf32>
    %cst_108 = arith.constant 0.000000e+00 : f32
    %269 = vector.broadcast %cst_108 : f32 to vector<8x64xf32>
    %270 = arith.maximumf %268, %269 : vector<8x64xf32>
    %c0_109 = arith.constant 0 : index
    %c0_110 = arith.constant 0 : index
    %271 = vector.load %arg12[%c0_109, %c0_110] : memref<16x8xf32, #tpu.memory_space<vmem>>, vector<16x8xf32>
    %272 = arith.truncf %271 : vector<16x8xf32> to vector<16x8xbf16>
    %273 = arith.truncf %270 : vector<8x64xf32> to vector<8x64xbf16>
    %cst_111 = arith.constant dense<0.000000e+00> : vector<16x64xf32>
    %274 = tpu.matmul %272, %273, %cst_111 {dimension_numbers = #tpu.dot_dimension_numbers<[1], [0], [0], [1], [0, 0, 1, 1], [], []>} : vector<16x8xbf16>, vector<8x64xbf16>, vector<16x64xf32> -> vector<16x64xf32>
    %c0_112 = arith.constant 0 : index
    %c0_113 = arith.constant 0 : index
    %275 = vector.load %arg13[%c0_112, %c0_113] : memref<16x1xf32, #tpu.memory_space<vmem>>, vector<16x1xf32>
    %276 = vector.broadcast %275 : vector<16x1xf32> to vector<16x64xf32>
    %277 = arith.addf %274, %276 : vector<16x64xf32>
    %278 = arith.addf %277, %1 : vector<16x64xf32>
    %c0_114 = arith.constant 0 : index
    %c0_115 = arith.constant 0 : index
    %c0_116 = arith.constant 0 : index
    %279 = vector.load %arg14[%c0_114, %c0_115, %c0_116] : memref<1x16x64xf32, #tpu.memory_space<vmem>>, vector<1x16x64xf32>
    %280 = vector.shape_cast %279 : vector<1x16x64xf32> to vector<16x64xf32>
    %281 = vector.shape_cast %278 : vector<16x64xf32> to vector<1x16x64xf32>
    tpu.vector_store %arg14[%c0_114, %c0_115, %c0_116], %281 {strides = array<i32>} : memref<1x16x64xf32, #tpu.memory_space<vmem>>, vector<1x16x64xf32>,
    return
  }
  func.func @transform_0(%arg0: i32) -> (i32, i32, i32) {
    %c0_i32 = arith.constant 0 : i32
    %c0_i32_0 = arith.constant 0 : i32
    %c0_i32_1 = arith.constant 0 : i32
    return %arg0, %c0_i32, %c0_i32_0 : i32, i32, i32
  }
  func.func @transform_1(%arg0: i32) -> (i32, i32) {
    %c0_i32 = arith.constant 0 : i32
    %c0_i32_0 = arith.constant 0 : i32
    %c0_i32_1 = arith.constant 0 : i32
    return %c0_i32, %c0_i32_0 : i32, i32
  }
  func.func @transform_2(%arg0: i32) -> (i32, i32) {
    %c0_i32 = arith.constant 0 : i32
    %c0_i32_0 = arith.constant 0 : i32
    %c0_i32_1 = arith.constant 0 : i32
    return %c0_i32, %c0_i32_0 : i32, i32
  }
  func.func @transform_3(%arg0: i32) -> (i32, i32) {
    %c0_i32 = arith.constant 0 : i32
    %c0_i32_0 = arith.constant 0 : i32
    %c0_i32_1 = arith.constant 0 : i32
    return %c0_i32, %c0_i32_0 : i32, i32
  }
  func.func @transform_4(%arg0: i32) -> (i32, i32) {
    %c0_i32 = arith.constant 0 : i32
    %c0_i32_0 = arith.constant 0 : i32
    %c0_i32_1 = arith.constant 0 : i32
    return %c0_i32, %c0_i32_0 : i32, i32
  }
  func.func @transform_5(%arg0: i32) -> (i32, i32) {
    %c0_i32 = arith.constant 0 : i32
    %c0_i32_0 = arith.constant 0 : i32
    %c0_i32_1 = arith.constant 0 : i32
    return %c0_i32, %c0_i32_0 : i32, i32
  }
  func.func @transform_6(%arg0: i32) -> (i32, i32) {
    %c0_i32 = arith.constant 0 : i32
    %c0_i32_0 = arith.constant 0 : i32
    %c0_i32_1 = arith.constant 0 : i32
    return %c0_i32, %c0_i32_0 : i32, i32
  }
  func.func @transform_7(%arg0: i32) -> (i32, i32) {
    %c0_i32 = arith.constant 0 : i32
    %c0_i32_0 = arith.constant 0 : i32
    %c0_i32_1 = arith.constant 0 : i32
    return %c0_i32, %c0_i32_0 : i32, i32
  }
  func.func @transform_8(%arg0: i32) -> (i32, i32) {
    %c0_i32 = arith.constant 0 : i32
    %c0_i32_0 = arith.constant 0 : i32
    %c0_i32_1 = arith.constant 0 : i32
    return %c0_i32, %c0_i32_0 : i32, i32
  }
  func.func @transform_9(%arg0: i32) -> (i32, i32) {
    %c0_i32 = arith.constant 0 : i32
    %c0_i32_0 = arith.constant 0 : i32
    %c0_i32_1 = arith.constant 0 : i32
    return %c0_i32, %c0_i32_0 : i32, i32
  }
  func.func @transform_10(%arg0: i32) -> (i32, i32) {
    %c0_i32 = arith.constant 0 : i32
    %c0_i32_0 = arith.constant 0 : i32
    %c0_i32_1 = arith.constant 0 : i32
    return %c0_i32, %c0_i32_0 : i32, i32
  }
  func.func @transform_11(%arg0: i32) -> (i32, i32) {
    %c0_i32 = arith.constant 0 : i32
    %c0_i32_0 = arith.constant 0 : i32
    %c0_i32_1 = arith.constant 0 : i32
    return %c0_i32, %c0_i32_0 : i32, i32
  }
  func.func @transform_12(%arg0: i32) -> (i32, i32) {
    %c0_i32 = arith.constant 0 : i32
    %c0_i32_0 = arith.constant 0 : i32
    %c0_i32_1 = arith.constant 0 : i32
    return %c0_i32, %c0_i32_0 : i32, i32
  }
  func.func @transform_13(%arg0: i32) -> (i32, i32, i32) {
    %c0_i32 = arith.constant 0 : i32
    %c0_i32_0 = arith.constant 0 : i32
    %c0_i32_1 = arith.constant 0 : i32
    return %arg0, %c0_i32, %c0_i32_0 : i32, i32, i32
  }
}

module attributes {stable_mosaic.version = 11 : i64} {
  func.func @_res_module_kernel(%arg0: i32, %arg1: memref<1x16x1024xf32, #tpu.memory_space<vmem>>, %arg2: memref<16x1xf32, #tpu.memory_space<vmem>>, %arg3: memref<16x1xf32, #tpu.memory_space<vmem>>, %arg4: memref<8x16xf32, #tpu.memory_space<vmem>>, %arg5: memref<8x1xf32, #tpu.memory_space<vmem>>, %arg6: memref<8x1xf32, #tpu.memory_space<vmem>>, %arg7: memref<8x1xf32, #tpu.memory_space<vmem>>, %arg8: memref<8x72xf32, #tpu.memory_space<vmem>>, %arg9: memref<8x1xf32, #tpu.memory_space<vmem>>, %arg10: memref<8x1xf32, #tpu.memory_space<vmem>>, %arg11: memref<8x1xf32, #tpu.memory_space<vmem>>, %arg12: memref<16x8xf32, #tpu.memory_space<vmem>>, %arg13: memref<16x1xf32, #tpu.memory_space<vmem>>, %arg14: memref<1x16x1024xf32, #tpu.memory_space<vmem>>) attributes {dimension_semantics = [#tpu.dimension_semantics<parallel>], iteration_bounds = array<i64: 2>, scalar_prefetch = 0 : i64, scratch_operands = 0 : i64, tpu.core_type = #tpu.core_type<tc>, window_params = [{transform_indices = @transform_0, window_bounds = array<i64: 1, 16, 1024>}, {pipeline_mode = #tpu.pipeline_mode<synchronous>, transform_indices = @transform_1, window_bounds = array<i64: 16, 1>}, {pipeline_mode = #tpu.pipeline_mode<synchronous>, transform_indices = @transform_2, window_bounds = array<i64: 16, 1>}, {pipeline_mode = #tpu.pipeline_mode<synchronous>, transform_indices = @transform_3, window_bounds = array<i64: 8, 16>}, {pipeline_mode = #tpu.pipeline_mode<synchronous>, transform_indices = @transform_4, window_bounds = array<i64: 8, 1>}, {pipeline_mode = #tpu.pipeline_mode<synchronous>, transform_indices = @transform_5, window_bounds = array<i64: 8, 1>}, {pipeline_mode = #tpu.pipeline_mode<synchronous>, transform_indices = @transform_6, window_bounds = array<i64: 8, 1>}, {pipeline_mode = #tpu.pipeline_mode<synchronous>, transform_indices = @transform_7, window_bounds = array<i64: 8, 72>}, {pipeline_mode = #tpu.pipeline_mode<synchronous>, transform_indices = @transform_8, window_bounds = array<i64: 8, 1>}, {pipeline_mode = #tpu.pipeline_mode<synchronous>, transform_indices = @transform_9, window_bounds = array<i64: 8, 1>}, {pipeline_mode = #tpu.pipeline_mode<synchronous>, transform_indices = @transform_10, window_bounds = array<i64: 8, 1>}, {pipeline_mode = #tpu.pipeline_mode<synchronous>, transform_indices = @transform_11, window_bounds = array<i64: 16, 8>}, {pipeline_mode = #tpu.pipeline_mode<synchronous>, transform_indices = @transform_12, window_bounds = array<i64: 16, 1>}, {transform_indices = @transform_13, window_bounds = array<i64: 1, 16, 1024>}]} {
    %c0 = arith.constant 0 : index
    %c0_0 = arith.constant 0 : index
    %c0_1 = arith.constant 0 : index
    %0 = vector.load %arg1[%c0, %c0_0, %c0_1] : memref<1x16x1024xf32, #tpu.memory_space<vmem>>, vector<1x16x1024xf32>
    %1 = vector.shape_cast %0 : vector<1x16x1024xf32> to vector<16x1024xf32>
    %c0_2 = arith.constant 0 : index
    %c0_3 = arith.constant 0 : index
    %2 = vector.load %arg2[%c0_2, %c0_3] : memref<16x1xf32, #tpu.memory_space<vmem>>, vector<16x1xf32>
    %3 = vector.broadcast %2 : vector<16x1xf32> to vector<16x1024xf32>
    %4 = arith.mulf %1, %3 : vector<16x1024xf32>
    %c0_4 = arith.constant 0 : index
    %c0_5 = arith.constant 0 : index
    %5 = vector.load %arg3[%c0_4, %c0_5] : memref<16x1xf32, #tpu.memory_space<vmem>>, vector<16x1xf32>
    %6 = vector.broadcast %5 : vector<16x1xf32> to vector<16x1024xf32>
    %7 = arith.addf %4, %6 : vector<16x1024xf32>
    %cst = arith.constant 0.000000e+00 : f32
    %8 = vector.broadcast %cst : f32 to vector<16x1024xf32>
    %9 = arith.maximumf %7, %8 : vector<16x1024xf32>
    %c0_6 = arith.constant 0 : index
    %c0_7 = arith.constant 0 : index
    %10 = vector.load %arg4[%c0_6, %c0_7] : memref<8x16xf32, #tpu.memory_space<vmem>>, vector<8x16xf32>
    %11 = arith.truncf %10 : vector<8x16xf32> to vector<8x16xbf16>
    %12 = arith.truncf %9 : vector<16x1024xf32> to vector<16x1024xbf16>
    %cst_8 = arith.constant dense<0.000000e+00> : vector<8x1024xf32>
    %13 = tpu.matmul %11, %12, %cst_8 {dimension_numbers = #tpu.dot_dimension_numbers<[1], [0], [0], [1], [0, 0, 1, 1], [], []>} : vector<8x16xbf16>, vector<16x1024xbf16>, vector<8x1024xf32> -> vector<8x1024xf32>
    %c0_9 = arith.constant 0 : index
    %c0_10 = arith.constant 0 : index
    %14 = vector.load %arg5[%c0_9, %c0_10] : memref<8x1xf32, #tpu.memory_space<vmem>>, vector<8x1xf32>
    %15 = vector.broadcast %14 : vector<8x1xf32> to vector<8x1024xf32>
    %16 = arith.addf %13, %15 : vector<8x1024xf32>
    %c0_11 = arith.constant 0 : index
    %c0_12 = arith.constant 0 : index
    %17 = vector.load %arg6[%c0_11, %c0_12] : memref<8x1xf32, #tpu.memory_space<vmem>>, vector<8x1xf32>
    %18 = vector.broadcast %17 : vector<8x1xf32> to vector<8x1024xf32>
    %19 = arith.mulf %16, %18 : vector<8x1024xf32>
    %c0_13 = arith.constant 0 : index
    %c0_14 = arith.constant 0 : index
    %20 = vector.load %arg7[%c0_13, %c0_14] : memref<8x1xf32, #tpu.memory_space<vmem>>, vector<8x1xf32>
    %21 = vector.broadcast %20 : vector<8x1xf32> to vector<8x1024xf32>
    %22 = arith.addf %19, %21 : vector<8x1024xf32>
    %cst_15 = arith.constant 0.000000e+00 : f32
    %23 = vector.broadcast %cst_15 : f32 to vector<8x1024xf32>
    %24 = arith.maximumf %22, %23 : vector<8x1024xf32>
    %25 = tpu.iota {dimensions = array<i32: 1>} : vector<8x1024xi32>
    %c5_i32 = arith.constant 5 : i32
    %26 = vector.broadcast %c5_i32 : i32 to vector<8x1024xi32>
    %27 = arith.shrsi %25, %26 : vector<8x1024xi32>
    %c31_i32 = arith.constant 31 : i32
    %28 = vector.broadcast %c31_i32 : i32 to vector<8x1024xi32>
    %29 = arith.andi %25, %28 : vector<8x1024xi32>
    %c33_i32 = arith.constant 33 : i32
    %30 = tpu.dynamic_rotate %24 by %c33_i32 dim 1 : vector<8x1024xf32>, i32 -> vector<8x1024xf32>
    %c-1_i32 = arith.constant -1 : i32
    %31 = vector.broadcast %c-1_i32 : i32 to vector<8x1024xi32>
    %32 = arith.addi %27, %31 : vector<8x1024xi32>
    %c0_i32 = arith.constant 0 : i32
    %33 = vector.broadcast %c0_i32 : i32 to vector<8x1024xi32>
    %34 = arith.cmpi sge, %32, %33 : vector<8x1024xi32>
    %c-1_i32_16 = arith.constant -1 : i32
    %35 = vector.broadcast %c-1_i32_16 : i32 to vector<8x1024xi32>
    %36 = arith.addi %27, %35 : vector<8x1024xi32>
    %c32_i32 = arith.constant 32 : i32
    %37 = vector.broadcast %c32_i32 : i32 to vector<8x1024xi32>
    %38 = arith.cmpi slt, %36, %37 : vector<8x1024xi32>
    %39 = arith.andi %34, %38 : vector<8x1024xi1>
    %c-1_i32_17 = arith.constant -1 : i32
    %40 = vector.broadcast %c-1_i32_17 : i32 to vector<8x1024xi32>
    %41 = arith.addi %29, %40 : vector<8x1024xi32>
    %c0_i32_18 = arith.constant 0 : i32
    %42 = vector.broadcast %c0_i32_18 : i32 to vector<8x1024xi32>
    %43 = arith.cmpi sge, %41, %42 : vector<8x1024xi32>
    %44 = arith.andi %39, %43 : vector<8x1024xi1>
    %c-1_i32_19 = arith.constant -1 : i32
    %45 = vector.broadcast %c-1_i32_19 : i32 to vector<8x1024xi32>
    %46 = arith.addi %29, %45 : vector<8x1024xi32>
    %c32_i32_20 = arith.constant 32 : i32
    %47 = vector.broadcast %c32_i32_20 : i32 to vector<8x1024xi32>
    %48 = arith.cmpi slt, %46, %47 : vector<8x1024xi32>
    %49 = arith.andi %44, %48 : vector<8x1024xi1>
    %cst_21 = arith.constant 0.000000e+00 : f32
    %50 = vector.broadcast %cst_21 : f32 to vector<8x1024xf32>
    %51 = arith.select %49, %30, %50 : vector<8x1024xi1>, vector<8x1024xf32>
    %c32_i32_22 = arith.constant 32 : i32
    %52 = tpu.dynamic_rotate %24 by %c32_i32_22 dim 1 : vector<8x1024xf32>, i32 -> vector<8x1024xf32>
    %c-1_i32_23 = arith.constant -1 : i32
    %53 = vector.broadcast %c-1_i32_23 : i32 to vector<8x1024xi32>
    %54 = arith.addi %27, %53 : vector<8x1024xi32>
    %c0_i32_24 = arith.constant 0 : i32
    %55 = vector.broadcast %c0_i32_24 : i32 to vector<8x1024xi32>
    %56 = arith.cmpi sge, %54, %55 : vector<8x1024xi32>
    %c-1_i32_25 = arith.constant -1 : i32
    %57 = vector.broadcast %c-1_i32_25 : i32 to vector<8x1024xi32>
    %58 = arith.addi %27, %57 : vector<8x1024xi32>
    %c32_i32_26 = arith.constant 32 : i32
    %59 = vector.broadcast %c32_i32_26 : i32 to vector<8x1024xi32>
    %60 = arith.cmpi slt, %58, %59 : vector<8x1024xi32>
    %61 = arith.andi %56, %60 : vector<8x1024xi1>
    %c0_i32_27 = arith.constant 0 : i32
    %62 = vector.broadcast %c0_i32_27 : i32 to vector<8x1024xi32>
    %63 = arith.addi %29, %62 : vector<8x1024xi32>
    %c0_i32_28 = arith.constant 0 : i32
    %64 = vector.broadcast %c0_i32_28 : i32 to vector<8x1024xi32>
    %65 = arith.cmpi sge, %63, %64 : vector<8x1024xi32>
    %66 = arith.andi %61, %65 : vector<8x1024xi1>
    %c0_i32_29 = arith.constant 0 : i32
    %67 = vector.broadcast %c0_i32_29 : i32 to vector<8x1024xi32>
    %68 = arith.addi %29, %67 : vector<8x1024xi32>
    %c32_i32_30 = arith.constant 32 : i32
    %69 = vector.broadcast %c32_i32_30 : i32 to vector<8x1024xi32>
    %70 = arith.cmpi slt, %68, %69 : vector<8x1024xi32>
    %71 = arith.andi %66, %70 : vector<8x1024xi1>
    %cst_31 = arith.constant 0.000000e+00 : f32
    %72 = vector.broadcast %cst_31 : f32 to vector<8x1024xf32>
    %73 = arith.select %71, %52, %72 : vector<8x1024xi1>, vector<8x1024xf32>
    %c31_i32_32 = arith.constant 31 : i32
    %74 = tpu.dynamic_rotate %24 by %c31_i32_32 dim 1 : vector<8x1024xf32>, i32 -> vector<8x1024xf32>
    %c-1_i32_33 = arith.constant -1 : i32
    %75 = vector.broadcast %c-1_i32_33 : i32 to vector<8x1024xi32>
    %76 = arith.addi %27, %75 : vector<8x1024xi32>
    %c0_i32_34 = arith.constant 0 : i32
    %77 = vector.broadcast %c0_i32_34 : i32 to vector<8x1024xi32>
    %78 = arith.cmpi sge, %76, %77 : vector<8x1024xi32>
    %c-1_i32_35 = arith.constant -1 : i32
    %79 = vector.broadcast %c-1_i32_35 : i32 to vector<8x1024xi32>
    %80 = arith.addi %27, %79 : vector<8x1024xi32>
    %c32_i32_36 = arith.constant 32 : i32
    %81 = vector.broadcast %c32_i32_36 : i32 to vector<8x1024xi32>
    %82 = arith.cmpi slt, %80, %81 : vector<8x1024xi32>
    %83 = arith.andi %78, %82 : vector<8x1024xi1>
    %c1_i32 = arith.constant 1 : i32
    %84 = vector.broadcast %c1_i32 : i32 to vector<8x1024xi32>
    %85 = arith.addi %29, %84 : vector<8x1024xi32>
    %c0_i32_37 = arith.constant 0 : i32
    %86 = vector.broadcast %c0_i32_37 : i32 to vector<8x1024xi32>
    %87 = arith.cmpi sge, %85, %86 : vector<8x1024xi32>
    %88 = arith.andi %83, %87 : vector<8x1024xi1>
    %c1_i32_38 = arith.constant 1 : i32
    %89 = vector.broadcast %c1_i32_38 : i32 to vector<8x1024xi32>
    %90 = arith.addi %29, %89 : vector<8x1024xi32>
    %c32_i32_39 = arith.constant 32 : i32
    %91 = vector.broadcast %c32_i32_39 : i32 to vector<8x1024xi32>
    %92 = arith.cmpi slt, %90, %91 : vector<8x1024xi32>
    %93 = arith.andi %88, %92 : vector<8x1024xi1>
    %cst_40 = arith.constant 0.000000e+00 : f32
    %94 = vector.broadcast %cst_40 : f32 to vector<8x1024xf32>
    %95 = arith.select %93, %74, %94 : vector<8x1024xi1>, vector<8x1024xf32>
    %c1_i32_41 = arith.constant 1 : i32
    %96 = tpu.dynamic_rotate %24 by %c1_i32_41 dim 1 : vector<8x1024xf32>, i32 -> vector<8x1024xf32>
    %c0_i32_42 = arith.constant 0 : i32
    %97 = vector.broadcast %c0_i32_42 : i32 to vector<8x1024xi32>
    %98 = arith.addi %27, %97 : vector<8x1024xi32>
    %c0_i32_43 = arith.constant 0 : i32
    %99 = vector.broadcast %c0_i32_43 : i32 to vector<8x1024xi32>
    %100 = arith.cmpi sge, %98, %99 : vector<8x1024xi32>
    %c0_i32_44 = arith.constant 0 : i32
    %101 = vector.broadcast %c0_i32_44 : i32 to vector<8x1024xi32>
    %102 = arith.addi %27, %101 : vector<8x1024xi32>
    %c32_i32_45 = arith.constant 32 : i32
    %103 = vector.broadcast %c32_i32_45 : i32 to vector<8x1024xi32>
    %104 = arith.cmpi slt, %102, %103 : vector<8x1024xi32>
    %105 = arith.andi %100, %104 : vector<8x1024xi1>
    %c-1_i32_46 = arith.constant -1 : i32
    %106 = vector.broadcast %c-1_i32_46 : i32 to vector<8x1024xi32>
    %107 = arith.addi %29, %106 : vector<8x1024xi32>
    %c0_i32_47 = arith.constant 0 : i32
    %108 = vector.broadcast %c0_i32_47 : i32 to vector<8x1024xi32>
    %109 = arith.cmpi sge, %107, %108 : vector<8x1024xi32>
    %110 = arith.andi %105, %109 : vector<8x1024xi1>
    %c-1_i32_48 = arith.constant -1 : i32
    %111 = vector.broadcast %c-1_i32_48 : i32 to vector<8x1024xi32>
    %112 = arith.addi %29, %111 : vector<8x1024xi32>
    %c32_i32_49 = arith.constant 32 : i32
    %113 = vector.broadcast %c32_i32_49 : i32 to vector<8x1024xi32>
    %114 = arith.cmpi slt, %112, %113 : vector<8x1024xi32>
    %115 = arith.andi %110, %114 : vector<8x1024xi1>
    %cst_50 = arith.constant 0.000000e+00 : f32
    %116 = vector.broadcast %cst_50 : f32 to vector<8x1024xf32>
    %117 = arith.select %115, %96, %116 : vector<8x1024xi1>, vector<8x1024xf32>
    %c1023_i32 = arith.constant 1023 : i32
    %118 = tpu.dynamic_rotate %24 by %c1023_i32 dim 1 : vector<8x1024xf32>, i32 -> vector<8x1024xf32>
    %c0_i32_51 = arith.constant 0 : i32
    %119 = vector.broadcast %c0_i32_51 : i32 to vector<8x1024xi32>
    %120 = arith.addi %27, %119 : vector<8x1024xi32>
    %c0_i32_52 = arith.constant 0 : i32
    %121 = vector.broadcast %c0_i32_52 : i32 to vector<8x1024xi32>
    %122 = arith.cmpi sge, %120, %121 : vector<8x1024xi32>
    %c0_i32_53 = arith.constant 0 : i32
    %123 = vector.broadcast %c0_i32_53 : i32 to vector<8x1024xi32>
    %124 = arith.addi %27, %123 : vector<8x1024xi32>
    %c32_i32_54 = arith.constant 32 : i32
    %125 = vector.broadcast %c32_i32_54 : i32 to vector<8x1024xi32>
    %126 = arith.cmpi slt, %124, %125 : vector<8x1024xi32>
    %127 = arith.andi %122, %126 : vector<8x1024xi1>
    %c1_i32_55 = arith.constant 1 : i32
    %128 = vector.broadcast %c1_i32_55 : i32 to vector<8x1024xi32>
    %129 = arith.addi %29, %128 : vector<8x1024xi32>
    %c0_i32_56 = arith.constant 0 : i32
    %130 = vector.broadcast %c0_i32_56 : i32 to vector<8x1024xi32>
    %131 = arith.cmpi sge, %129, %130 : vector<8x1024xi32>
    %132 = arith.andi %127, %131 : vector<8x1024xi1>
    %c1_i32_57 = arith.constant 1 : i32
    %133 = vector.broadcast %c1_i32_57 : i32 to vector<8x1024xi32>
    %134 = arith.addi %29, %133 : vector<8x1024xi32>
    %c32_i32_58 = arith.constant 32 : i32
    %135 = vector.broadcast %c32_i32_58 : i32 to vector<8x1024xi32>
    %136 = arith.cmpi slt, %134, %135 : vector<8x1024xi32>
    %137 = arith.andi %132, %136 : vector<8x1024xi1>
    %cst_59 = arith.constant 0.000000e+00 : f32
    %138 = vector.broadcast %cst_59 : f32 to vector<8x1024xf32>
    %139 = arith.select %137, %118, %138 : vector<8x1024xi1>, vector<8x1024xf32>
    %c993_i32 = arith.constant 993 : i32
    %140 = tpu.dynamic_rotate %24 by %c993_i32 dim 1 : vector<8x1024xf32>, i32 -> vector<8x1024xf32>
    %c1_i32_60 = arith.constant 1 : i32
    %141 = vector.broadcast %c1_i32_60 : i32 to vector<8x1024xi32>
    %142 = arith.addi %27, %141 : vector<8x1024xi32>
    %c0_i32_61 = arith.constant 0 : i32
    %143 = vector.broadcast %c0_i32_61 : i32 to vector<8x1024xi32>
    %144 = arith.cmpi sge, %142, %143 : vector<8x1024xi32>
    %c1_i32_62 = arith.constant 1 : i32
    %145 = vector.broadcast %c1_i32_62 : i32 to vector<8x1024xi32>
    %146 = arith.addi %27, %145 : vector<8x1024xi32>
    %c32_i32_63 = arith.constant 32 : i32
    %147 = vector.broadcast %c32_i32_63 : i32 to vector<8x1024xi32>
    %148 = arith.cmpi slt, %146, %147 : vector<8x1024xi32>
    %149 = arith.andi %144, %148 : vector<8x1024xi1>
    %c-1_i32_64 = arith.constant -1 : i32
    %150 = vector.broadcast %c-1_i32_64 : i32 to vector<8x1024xi32>
    %151 = arith.addi %29, %150 : vector<8x1024xi32>
    %c0_i32_65 = arith.constant 0 : i32
    %152 = vector.broadcast %c0_i32_65 : i32 to vector<8x1024xi32>
    %153 = arith.cmpi sge, %151, %152 : vector<8x1024xi32>
    %154 = arith.andi %149, %153 : vector<8x1024xi1>
    %c-1_i32_66 = arith.constant -1 : i32
    %155 = vector.broadcast %c-1_i32_66 : i32 to vector<8x1024xi32>
    %156 = arith.addi %29, %155 : vector<8x1024xi32>
    %c32_i32_67 = arith.constant 32 : i32
    %157 = vector.broadcast %c32_i32_67 : i32 to vector<8x1024xi32>
    %158 = arith.cmpi slt, %156, %157 : vector<8x1024xi32>
    %159 = arith.andi %154, %158 : vector<8x1024xi1>
    %cst_68 = arith.constant 0.000000e+00 : f32
    %160 = vector.broadcast %cst_68 : f32 to vector<8x1024xf32>
    %161 = arith.select %159, %140, %160 : vector<8x1024xi1>, vector<8x1024xf32>
    %c992_i32 = arith.constant 992 : i32
    %162 = tpu.dynamic_rotate %24 by %c992_i32 dim 1 : vector<8x1024xf32>, i32 -> vector<8x1024xf32>
    %c1_i32_69 = arith.constant 1 : i32
    %163 = vector.broadcast %c1_i32_69 : i32 to vector<8x1024xi32>
    %164 = arith.addi %27, %163 : vector<8x1024xi32>
    %c0_i32_70 = arith.constant 0 : i32
    %165 = vector.broadcast %c0_i32_70 : i32 to vector<8x1024xi32>
    %166 = arith.cmpi sge, %164, %165 : vector<8x1024xi32>
    %c1_i32_71 = arith.constant 1 : i32
    %167 = vector.broadcast %c1_i32_71 : i32 to vector<8x1024xi32>
    %168 = arith.addi %27, %167 : vector<8x1024xi32>
    %c32_i32_72 = arith.constant 32 : i32
    %169 = vector.broadcast %c32_i32_72 : i32 to vector<8x1024xi32>
    %170 = arith.cmpi slt, %168, %169 : vector<8x1024xi32>
    %171 = arith.andi %166, %170 : vector<8x1024xi1>
    %c0_i32_73 = arith.constant 0 : i32
    %172 = vector.broadcast %c0_i32_73 : i32 to vector<8x1024xi32>
    %173 = arith.addi %29, %172 : vector<8x1024xi32>
    %c0_i32_74 = arith.constant 0 : i32
    %174 = vector.broadcast %c0_i32_74 : i32 to vector<8x1024xi32>
    %175 = arith.cmpi sge, %173, %174 : vector<8x1024xi32>
    %176 = arith.andi %171, %175 : vector<8x1024xi1>
    %c0_i32_75 = arith.constant 0 : i32
    %177 = vector.broadcast %c0_i32_75 : i32 to vector<8x1024xi32>
    %178 = arith.addi %29, %177 : vector<8x1024xi32>
    %c32_i32_76 = arith.constant 32 : i32
    %179 = vector.broadcast %c32_i32_76 : i32 to vector<8x1024xi32>
    %180 = arith.cmpi slt, %178, %179 : vector<8x1024xi32>
    %181 = arith.andi %176, %180 : vector<8x1024xi1>
    %cst_77 = arith.constant 0.000000e+00 : f32
    %182 = vector.broadcast %cst_77 : f32 to vector<8x1024xf32>
    %183 = arith.select %181, %162, %182 : vector<8x1024xi1>, vector<8x1024xf32>
    %c991_i32 = arith.constant 991 : i32
    %184 = tpu.dynamic_rotate %24 by %c991_i32 dim 1 : vector<8x1024xf32>, i32 -> vector<8x1024xf32>
    %c1_i32_78 = arith.constant 1 : i32
    %185 = vector.broadcast %c1_i32_78 : i32 to vector<8x1024xi32>
    %186 = arith.addi %27, %185 : vector<8x1024xi32>
    %c0_i32_79 = arith.constant 0 : i32
    %187 = vector.broadcast %c0_i32_79 : i32 to vector<8x1024xi32>
    %188 = arith.cmpi sge, %186, %187 : vector<8x1024xi32>
    %c1_i32_80 = arith.constant 1 : i32
    %189 = vector.broadcast %c1_i32_80 : i32 to vector<8x1024xi32>
    %190 = arith.addi %27, %189 : vector<8x1024xi32>
    %c32_i32_81 = arith.constant 32 : i32
    %191 = vector.broadcast %c32_i32_81 : i32 to vector<8x1024xi32>
    %192 = arith.cmpi slt, %190, %191 : vector<8x1024xi32>
    %193 = arith.andi %188, %192 : vector<8x1024xi1>
    %c1_i32_82 = arith.constant 1 : i32
    %194 = vector.broadcast %c1_i32_82 : i32 to vector<8x1024xi32>
    %195 = arith.addi %29, %194 : vector<8x1024xi32>
    %c0_i32_83 = arith.constant 0 : i32
    %196 = vector.broadcast %c0_i32_83 : i32 to vector<8x1024xi32>
    %197 = arith.cmpi sge, %195, %196 : vector<8x1024xi32>
    %198 = arith.andi %193, %197 : vector<8x1024xi1>
    %c1_i32_84 = arith.constant 1 : i32
    %199 = vector.broadcast %c1_i32_84 : i32 to vector<8x1024xi32>
    %200 = arith.addi %29, %199 : vector<8x1024xi32>
    %c32_i32_85 = arith.constant 32 : i32
    %201 = vector.broadcast %c32_i32_85 : i32 to vector<8x1024xi32>
    %202 = arith.cmpi slt, %200, %201 : vector<8x1024xi32>
    %203 = arith.andi %198, %202 : vector<8x1024xi1>
    %cst_86 = arith.constant 0.000000e+00 : f32
    %204 = vector.broadcast %cst_86 : f32 to vector<8x1024xf32>
    %205 = arith.select %203, %184, %204 : vector<8x1024xi1>, vector<8x1024xf32>
    %206 = tpu.concatenate %51, %73, %95, %117, %24, %139, %161, %183, %205 in 0 : vector<8x1024xf32>, vector<8x1024xf32>, vector<8x1024xf32>, vector<8x1024xf32>, vector<8x1024xf32>, vector<8x1024xf32>, vector<8x1024xf32>, vector<8x1024xf32>, vector<8x1024xf32> -> vector<72x1024xf32>
    %207 = arith.truncf %206 : vector<72x1024xf32> to vector<72x1024xbf16>
    %c0_87 = arith.constant 0 : index
    %c0_88 = arith.constant 0 : index
    %208 = vector.load %arg8[%c0_87, %c0_88] : memref<8x72xf32, #tpu.memory_space<vmem>>, vector<8x72xf32>
    %209 = arith.truncf %208 : vector<8x72xf32> to vector<8x72xbf16>
    %cst_89 = arith.constant dense<0.000000e+00> : vector<8x1024xf32>
    %210 = tpu.matmul %209, %207, %cst_89 {dimension_numbers = #tpu.dot_dimension_numbers<[1], [0], [0], [1], [0, 0, 1, 1], [], []>} : vector<8x72xbf16>, vector<72x1024xbf16>, vector<8x1024xf32> -> vector<8x1024xf32>
    %c0_90 = arith.constant 0 : index
    %c0_91 = arith.constant 0 : index
    %211 = vector.load %arg9[%c0_90, %c0_91] : memref<8x1xf32, #tpu.memory_space<vmem>>, vector<8x1xf32>
    %212 = vector.broadcast %211 : vector<8x1xf32> to vector<8x1024xf32>
    %213 = arith.addf %210, %212 : vector<8x1024xf32>
    %c0_92 = arith.constant 0 : index
    %c0_93 = arith.constant 0 : index
    %214 = vector.load %arg10[%c0_92, %c0_93] : memref<8x1xf32, #tpu.memory_space<vmem>>, vector<8x1xf32>
    %215 = vector.broadcast %214 : vector<8x1xf32> to vector<8x1024xf32>
    %216 = arith.mulf %213, %215 : vector<8x1024xf32>
    %c0_94 = arith.constant 0 : index
    %c0_95 = arith.constant 0 : index
    %217 = vector.load %arg11[%c0_94, %c0_95] : memref<8x1xf32, #tpu.memory_space<vmem>>, vector<8x1xf32>
    %218 = vector.broadcast %217 : vector<8x1xf32> to vector<8x1024xf32>
    %219 = arith.addf %216, %218 : vector<8x1024xf32>
    %cst_96 = arith.constant 0.000000e+00 : f32
    %220 = vector.broadcast %cst_96 : f32 to vector<8x1024xf32>
    %221 = arith.maximumf %219, %220 : vector<8x1024xf32>
    %c0_97 = arith.constant 0 : index
    %c0_98 = arith.constant 0 : index
    %222 = vector.load %arg12[%c0_97, %c0_98] : memref<16x8xf32, #tpu.memory_space<vmem>>, vector<16x8xf32>
    %223 = arith.truncf %222 : vector<16x8xf32> to vector<16x8xbf16>
    %224 = arith.truncf %221 : vector<8x1024xf32> to vector<8x1024xbf16>
    %cst_99 = arith.constant dense<0.000000e+00> : vector<16x1024xf32>
    %225 = tpu.matmul %223, %224, %cst_99 {dimension_numbers = #tpu.dot_dimension_numbers<[1], [0], [0], [1], [0, 0, 1, 1], [], []>} : vector<16x8xbf16>, vector<8x1024xbf16>, vector<16x1024xf32> -> vector<16x1024xf32>
    %c0_100 = arith.constant 0 : index
    %c0_101 = arith.constant 0 : index
    %226 = vector.load %arg13[%c0_100, %c0_101] : memref<16x1xf32, #tpu.memory_space<vmem>>, vector<16x1xf32>
    %227 = vector.broadcast %226 : vector<16x1xf32> to vector<16x1024xf32>
    %228 = arith.addf %225, %227 : vector<16x1024xf32>
    %229 = arith.addf %228, %1 : vector<16x1024xf32>
    %c0_102 = arith.constant 0 : index
    %c0_103 = arith.constant 0 : index
    %c0_104 = arith.constant 0 : index
    %230 = vector.load %arg14[%c0_102, %c0_103, %c0_104] : memref<1x16x1024xf32, #tpu.memory_space<vmem>>, vector<1x16x1024xf32>
    %231 = vector.shape_cast %230 : vector<1x16x1024xf32> to vector<16x1024xf32>
    %232 = vector.shape_cast %229 : vector<16x1024xf32> to vector<1x16x1024xf32>
    tpu.vector_store %arg14[%c0_102, %c0_103, %c0_104], %232 {strides = array<i32>} : memref<1x16x1024xf32, #tpu.memory_space<vmem>>, vector<1x16x1024xf32>,
    return
  }
  func.func @transform_0(%arg0: i32) -> (i32, i32, i32) {
    %c0_i32 = arith.constant 0 : i32
    %c0_i32_0 = arith.constant 0 : i32
    %c0_i32_1 = arith.constant 0 : i32
    return %arg0, %c0_i32, %c0_i32_0 : i32, i32, i32
  }
  func.func @transform_1(%arg0: i32) -> (i32, i32) {
    %c0_i32 = arith.constant 0 : i32
    %c0_i32_0 = arith.constant 0 : i32
    %c0_i32_1 = arith.constant 0 : i32
    return %c0_i32, %c0_i32_0 : i32, i32
  }
  func.func @transform_2(%arg0: i32) -> (i32, i32) {
    %c0_i32 = arith.constant 0 : i32
    %c0_i32_0 = arith.constant 0 : i32
    %c0_i32_1 = arith.constant 0 : i32
    return %c0_i32, %c0_i32_0 : i32, i32
  }
  func.func @transform_3(%arg0: i32) -> (i32, i32) {
    %c0_i32 = arith.constant 0 : i32
    %c0_i32_0 = arith.constant 0 : i32
    %c0_i32_1 = arith.constant 0 : i32
    return %c0_i32, %c0_i32_0 : i32, i32
  }
  func.func @transform_4(%arg0: i32) -> (i32, i32) {
    %c0_i32 = arith.constant 0 : i32
    %c0_i32_0 = arith.constant 0 : i32
    %c0_i32_1 = arith.constant 0 : i32
    return %c0_i32, %c0_i32_0 : i32, i32
  }
  func.func @transform_5(%arg0: i32) -> (i32, i32) {
    %c0_i32 = arith.constant 0 : i32
    %c0_i32_0 = arith.constant 0 : i32
    %c0_i32_1 = arith.constant 0 : i32
    return %c0_i32, %c0_i32_0 : i32, i32
  }
  func.func @transform_6(%arg0: i32) -> (i32, i32) {
    %c0_i32 = arith.constant 0 : i32
    %c0_i32_0 = arith.constant 0 : i32
    %c0_i32_1 = arith.constant 0 : i32
    return %c0_i32, %c0_i32_0 : i32, i32
  }
  func.func @transform_7(%arg0: i32) -> (i32, i32) {
    %c0_i32 = arith.constant 0 : i32
    %c0_i32_0 = arith.constant 0 : i32
    %c0_i32_1 = arith.constant 0 : i32
    return %c0_i32, %c0_i32_0 : i32, i32
  }
  func.func @transform_8(%arg0: i32) -> (i32, i32) {
    %c0_i32 = arith.constant 0 : i32
    %c0_i32_0 = arith.constant 0 : i32
    %c0_i32_1 = arith.constant 0 : i32
    return %c0_i32, %c0_i32_0 : i32, i32
  }
  func.func @transform_9(%arg0: i32) -> (i32, i32) {
    %c0_i32 = arith.constant 0 : i32
    %c0_i32_0 = arith.constant 0 : i32
    %c0_i32_1 = arith.constant 0 : i32
    return %c0_i32, %c0_i32_0 : i32, i32
  }
  func.func @transform_10(%arg0: i32) -> (i32, i32) {
    %c0_i32 = arith.constant 0 : i32
    %c0_i32_0 = arith.constant 0 : i32
    %c0_i32_1 = arith.constant 0 : i32
    return %c0_i32, %c0_i32_0 : i32, i32
  }
  func.func @transform_11(%arg0: i32) -> (i32, i32) {
    %c0_i32 = arith.constant 0 : i32
    %c0_i32_0 = arith.constant 0 : i32
    %c0_i32_1 = arith.constant 0 : i32
    return %c0_i32, %c0_i32_0 : i32, i32
  }
  func.func @transform_12(%arg0: i32) -> (i32, i32) {
    %c0_i32 = arith.constant 0 : i32
    %c0_i32_0 = arith.constant 0 : i32
    %c0_i32_1 = arith.constant 0 : i32
    return %c0_i32, %c0_i32_0 : i32, i32
  }
  func.func @transform_13(%arg0: i32) -> (i32, i32, i32) {
    %c0_i32 = arith.constant 0 : i32
    %c0_i32_0 = arith.constant 0 : i32
    %c0_i32_1 = arith.constant 0 : i32
    return %arg0, %c0_i32, %c0_i32_0 : i32, i32, i32
  }
}

module attributes {stable_mosaic.version = 11 : i64} {
  func.func @_upsample_add_kernel(%arg0: i32, %arg1: memref<1x16x1024xf32, #tpu.memory_space<vmem>>, %arg2: memref<1x16x256xf32, #tpu.memory_space<vmem>>, %arg3: memref<1x16x1024xf32, #tpu.memory_space<vmem>>) attributes {dimension_semantics = [#tpu.dimension_semantics<parallel>], iteration_bounds = array<i64: 2>, scalar_prefetch = 0 : i64, scratch_operands = 0 : i64, tpu.core_type = #tpu.core_type<tc>, window_params = [{transform_indices = @transform_0, window_bounds = array<i64: 1, 16, 1024>}, {transform_indices = @transform_1, window_bounds = array<i64: 1, 16, 256>}, {transform_indices = @transform_2, window_bounds = array<i64: 1, 16, 1024>}]} {
    %c0 = arith.constant 0 : index
    %c0_0 = arith.constant 0 : index
    %c0_1 = arith.constant 0 : index
    %0 = vector.load %arg2[%c0, %c0_0, %c0_1] : memref<1x16x256xf32, #tpu.memory_space<vmem>>, vector<1x16x256xf32>
    %1 = vector.shape_cast %0 : vector<1x16x256xf32> to vector<16x256xf32>
    %2 = tpu.iota {dimensions = array<i32: 0>} : vector<256x1024xi32>
    %3 = tpu.iota {dimensions = array<i32: 1>} : vector<256x1024xi32>
    %c5_i32 = arith.constant 5 : i32
    %4 = vector.broadcast %c5_i32 : i32 to vector<256x1024xi32>
    %5 = arith.shrsi %3, %4 : vector<256x1024xi32>
    %c1_i32 = arith.constant 1 : i32
    %6 = vector.broadcast %c1_i32 : i32 to vector<256x1024xi32>
    %7 = arith.shrsi %5, %6 : vector<256x1024xi32>
    %c16_i32 = arith.constant 16 : i32
    %8 = vector.broadcast %c16_i32 : i32 to vector<256x1024xi32>
    %9 = arith.muli %7, %8 : vector<256x1024xi32>
    %c31_i32 = arith.constant 31 : i32
    %10 = vector.broadcast %c31_i32 : i32 to vector<256x1024xi32>
    %11 = arith.andi %3, %10 : vector<256x1024xi32>
    %c1_i32_2 = arith.constant 1 : i32
    %12 = vector.broadcast %c1_i32_2 : i32 to vector<256x1024xi32>
    %13 = arith.shrsi %11, %12 : vector<256x1024xi32>
    %14 = arith.addi %9, %13 : vector<256x1024xi32>
    %15 = arith.cmpi eq, %2, %14 : vector<256x1024xi32>
    %16 = arith.extui %15 : vector<256x1024xi1> to vector<256x1024xi32>
    %17 = arith.sitofp %16 : vector<256x1024xi32> to vector<256x1024xf32>
    %c0_3 = arith.constant 0 : index
    %c0_4 = arith.constant 0 : index
    %c0_5 = arith.constant 0 : index
    %18 = vector.load %arg1[%c0_3, %c0_4, %c0_5] : memref<1x16x1024xf32, #tpu.memory_space<vmem>>, vector<1x16x1024xf32>
    %19 = vector.shape_cast %18 : vector<1x16x1024xf32> to vector<16x1024xf32>
    %cst = arith.constant dense<0.000000e+00> : vector<16x1024xf32>
    %20 = tpu.matmul %1, %17, %cst {dimension_numbers = #tpu.dot_dimension_numbers<[1], [0], [0], [1], [0, 0, 1, 1], [], []>} : vector<16x256xf32>, vector<256x1024xf32>, vector<16x1024xf32> -> vector<16x1024xf32>
    %21 = arith.addf %19, %20 : vector<16x1024xf32>
    %c0_6 = arith.constant 0 : index
    %c0_7 = arith.constant 0 : index
    %c0_8 = arith.constant 0 : index
    %22 = vector.load %arg3[%c0_6, %c0_7, %c0_8] : memref<1x16x1024xf32, #tpu.memory_space<vmem>>, vector<1x16x1024xf32>
    %23 = vector.shape_cast %22 : vector<1x16x1024xf32> to vector<16x1024xf32>
    %24 = vector.shape_cast %21 : vector<16x1024xf32> to vector<1x16x1024xf32>
    tpu.vector_store %arg3[%c0_6, %c0_7, %c0_8], %24 {strides = array<i32>} : memref<1x16x1024xf32, #tpu.memory_space<vmem>>, vector<1x16x1024xf32>,
    return
  }
  func.func @transform_0(%arg0: i32) -> (i32, i32, i32) {
    %c0_i32 = arith.constant 0 : i32
    %c0_i32_0 = arith.constant 0 : i32
    %c0_i32_1 = arith.constant 0 : i32
    return %arg0, %c0_i32, %c0_i32_0 : i32, i32, i32
  }
  func.func @transform_1(%arg0: i32) -> (i32, i32, i32) {
    %c0_i32 = arith.constant 0 : i32
    %c0_i32_0 = arith.constant 0 : i32
    %c0_i32_1 = arith.constant 0 : i32
    return %arg0, %c0_i32, %c0_i32_0 : i32, i32, i32
  }
  func.func @transform_2(%arg0: i32) -> (i32, i32, i32) {
    %c0_i32 = arith.constant 0 : i32
    %c0_i32_0 = arith.constant 0 : i32
    %c0_i32_1 = arith.constant 0 : i32
    return %arg0, %c0_i32, %c0_i32_0 : i32, i32, i32
  }
}

</mosaic_0001>

<llo_original>
// kernel: _lambda_.12
$region0: #{_lambda_.12}
  #allocation0 [shape = 'u32[]', space=smem, size = 0x4, offset = 0x4, fixed_abs, tag = 'smem constant byte address 0x4 - core index']
  #allocation1 [shape = 'u32[72,128]{1,0:T(1,128)}', space=vmem, size = 0x9000, scoped, tag = 'internal scratch']
  %s0 = inlined_call_operand.vmem [shape: f32[2,16,1024], index: 0, kind: input, shape index: {}]
  %s1 = inlined_call_operand.vmem [shape: f32[2,16,256], index: 1, kind: output, shape index: {}]
  %s2 = sld [smem:[#allocation0]]
  $region37: #{_lambda_.12} parent=0
    _
  %s4 = ssub.s32 1, %s2
  %s5 = scalar_select 0, %s4, %s2
  loop: start=0, step=1, limit=4
  $region2: #{_lambda_.12} parent=0 // loop_pre_header
    _
  $region3: #{_lambda_.12} parent=0 // loop_header
    %s7 = sphi 0, %s11
    %p8 = scmp.ge.s32.totalorder %s7, 4
    %s17 = sphi 0, %s19
    %s20 = sphi 0, %s17
    %s21 = sphi 0, %s20
    %s37 = sphi 0, %s21
    %s43 = sphi 0, %s45
    %s46 = sphi 0, %s43
    %s47 = sphi 0, %s46
    %s63 = sphi 0, %s47
  $region4: #{_lambda_.12} parent=0 // loop_header_branch
    %10 = sbr.rel (%p8) target = $region8
  $region5: #{_lambda_.12} parent=0 // loop_body
    %s12 = ssub.s32 %s7, 1
    %s13 = ssub.s32 %s7, 2
    %s14 = sadd.s32 %s7, 1
    %s15 = ssub.s32 %s7, %s14
    %p16 = scmp.eq.s32.totalorder %s15, 0
    %s18 = sadd.s32 %s17, 1
    %s19 = scalar_select %p16, %s17, %s18
    %p22 = pneg %p16
    %p23 = scmp.eq.s32.totalorder %s7, 1
    %p24 = por %p22, %p23
    %p25 = scmp.ne.s32.totalorder %s17, %s20
    %p26 = scmp.eq.s32.totalorder %s7, 0
    %p27 = por %p25, %p26
    %p28 = scmp.ne.s32.totalorder %s17, %s20
    %p29 = scmp.eq.s32.totalorder %s12, 1
    %p30 = por %p28, %p29
    %p31 = scmp.ne.s32.totalorder %s20, %s21
    %p32 = scmp.eq.s32.totalorder %s12, 0
    %p33 = por %p31, %p32
    %p34 = scmp.ne.s32.totalorder %s20, %s21
    %p35 = scmp.eq.s32.totalorder %s13, 1
    %p36 = por %p34, %p35
    %p38 = scmp.ne.s32.totalorder %s21, %s37
    %p39 = scmp.eq.s32.totalorder %s13, 0
    %p40 = por %p38, %p39
    %s41 = ssub.s32 %s7, %s14
    %p42 = scmp.eq.s32.totalorder %s41, 0
    %s44 = sadd.s32 %s43, 1
    %s45 = scalar_select %p42, %s43, %s44
    %p48 = pneg %p42
    %p49 = scmp.eq.s32.totalorder %s7, 1
    %p50 = por %p48, %p49
    %p51 = scmp.ne.s32.totalorder %s43, %s46
    %p52 = scmp.eq.s32.totalorder %s7, 0
    %p53 = por %p51, %p52
    %p54 = scmp.ne.s32.totalorder %s43, %s46
    %p55 = scmp.eq.s32.totalorder %s12, 1
    %p56 = por %p54, %p55
    %p57 = scmp.ne.s32.totalorder %s46, %s47
    %p58 = scmp.eq.s32.totalorder %s12, 0
    %p59 = por %p57, %p58
    %p60 = scmp.ne.s32.totalorder %s46, %s47
    %p61 = scmp.eq.s32.totalorder %s13, 1
    %p62 = por %p60, %p61
    %p64 = scmp.ne.s32.totalorder %s47, %s63
    %p65 = scmp.eq.s32.totalorder %s13, 0
    %p66 = por %p64, %p65
    %p67 = scmp.le.s32.totalorder 1, %s7
    %p68 = scmp.lt.s32.totalorder %s7, 3
    %p69 = pnand %p67, %p68
    %p70 = pneg %p69
    // Predicated region
    $region9: #{_lambda_.12} parent=5 // pred_check
      _
    $region10: #{_lambda_.12} parent=5 // pred_check_branch
      %72 = sbr.rel (%p69) target = $region12
    $region11: #{_lambda_.12} parent=5 // pred_region
      %s73 = ssub.s32 %s7, 1
    $region12: #{_lambda_.12} parent=5 // pred_fallthru
      _
    %p74 = scmp.lt.s32.totalorder %s7, 2
    // Predicated region
    $region13: #{_lambda_.12} parent=5 // pred_check
      %p75 = pneg %p74
    $region14: #{_lambda_.12} parent=5 // pred_check_branch
      %77 = sbr.rel (%p75) target = $region16
    $region15: #{_lambda_.12} parent=5 // pred_region
      // Predicated region
      $region17: #{_lambda_.12} parent=15 // pred_check
        %p78 = pneg %p27
      $region18: #{_lambda_.12} parent=15 // pred_check_branch
        %80 = sbr.rel (%p78) target = $region20
      $region19: #{_lambda_.12} parent=15 // pred_region
        %p81 = scmp.lt.s32.totalorder %s7, 1
        %s82 = scalar_select %p81, %s7, 1
        %s83 = smul.addr %s82, 16
        %s84 = smul.addr %s83, 8
        %s85 = scalar_lea.vmem %s0, %s84
      $region20: #{_lambda_.12} parent=15 // pred_fallthru
        _
    $region16: #{_lambda_.12} parent=5 // pred_fallthru
      _
    %p86 = scmp.le.s32.totalorder 1, %s7
    %p87 = scmp.lt.s32.totalorder %s7, 3
    %p88 = pnand %p86, %p87
    %p89 = pneg %p88
    // Predicated region
    $region21: #{_lambda_.12} parent=5 // pred_check
      _
    $region22: #{_lambda_.12} parent=5 // pred_check_branch
      %91 = sbr.rel (%p88) target = $region24
    $region23: #{_lambda_.12} parent=5 // pred_region
      %s92 = ssub.s32 %s7, 1
      %p93 = scmp.lt.s32.totalorder %s12, 1
      %s94 = scalar_select %p93, %s12, 1
      %s95 = smul.addr %s94, 16
      %s96 = smul.addr %s95, 8
      %s97 = scalar_lea.vmem %s0, %s96
      %p98 = pneg %p33
      %p99 = pneg %p30
      %p100 = pneg %p59
      %p101 = pneg %p56
      %p102 = scmp.lt.s32.totalorder %s12, 1
      %s103 = scalar_select %p102, %s12, 1
      %s104 = smul.addr %s103, 4
      %s105 = smul.addr %s104, 8
      %s106 = scalar_lea.vmem %s1, %s105
      %p107 = scmp.lt.s32.totalorder %s12, 1
      %s108 = scalar_select %p107, %s12, 1
      %s109 = smul.addr %s108, 16
      %s110 = smul.addr %s109, 8
      %s111 = scalar_lea.vmem %s0, %s110
      %p112 = scmp.lt.s32.totalorder %s12, 1
      %s113 = scalar_select %p112, %s12, 1
      %s114 = smul.addr %s113, 4
      %s115 = smul.addr %s114, 8
      %s116 = scalar_lea.vmem %s1, %s115
      %v117 = vld [vmem:[%s111] sm:$0xff]
      %v118 = vld [vmem:[%s111 + $0x8] sm:$0xff]
      %v119 = vld [vmem:[%s111 + $0x10] sm:$0xff]
      %v120 = vld [vmem:[%s111 + $0x18] sm:$0xff]
      %v121 = vld [vmem:[%s111 + $0x20] sm:$0xff]
      %v122 = vld [vmem:[%s111 + $0x28] sm:$0xff]
      %v123 = vld [vmem:[%s111 + $0x30] sm:$0xff]
      %v124 = vld [vmem:[%s111 + $0x38] sm:$0xff]
      %v125 = vld [vmem:[%s111 + $0x40] sm:$0xff]
      %v126 = vld [vmem:[%s111 + $0x48] sm:$0xff]
      %v127 = vld [vmem:[%s111 + $0x50] sm:$0xff]
      %v128 = vld [vmem:[%s111 + $0x58] sm:$0xff]
      %v129 = vld [vmem:[%s111 + $0x60] sm:$0xff]
      %v130 = vld [vmem:[%s111 + $0x68] sm:$0xff]
      %v131 = vld [vmem:[%s111 + $0x70] sm:$0xff]
      %v132 = vld [vmem:[%s111 + $0x78] sm:$0xff]
      %133 = vrot.lane.b32.xlu0 %v117, 127
      %v134 = vpop.permute.xlu0 %133
      %135 = vrot.lane.b32.xlu0 %v125, 127
      %v136 = vpop.permute.xlu0 %135
      %137 = vrot.lane.b32.xlu0 %v118, 127
      %v138 = vpop.permute.xlu0 %137
      %139 = vrot.lane.b32.xlu0 %v126, 127
      %v140 = vpop.permute.xlu0 %139
      %141 = vrot.lane.b32.xlu0 %v119, 127
      %v142 = vpop.permute.xlu0 %141
      %143 = vrot.lane.b32.xlu0 %v127, 127
      %v144 = vpop.permute.xlu0 %143
      %145 = vrot.lane.b32.xlu0 %v120, 127
      %v146 = vpop.permute.xlu0 %145
      %147 = vrot.lane.b32.xlu0 %v128, 127
      %v148 = vpop.permute.xlu0 %147
      %149 = vrot.lane.b32.xlu0 %v121, 127
      %v150 = vpop.permute.xlu0 %149
      %151 = vrot.lane.b32.xlu0 %v129, 127
      %v152 = vpop.permute.xlu0 %151
      %153 = vrot.lane.b32.xlu0 %v122, 127
      %v154 = vpop.permute.xlu0 %153
      %155 = vrot.lane.b32.xlu0 %v130, 127
      %v156 = vpop.permute.xlu0 %155
      %157 = vrot.lane.b32.xlu0 %v123, 127
      %v158 = vpop.permute.xlu0 %157
      %159 = vrot.lane.b32.xlu0 %v131, 127
      %v160 = vpop.permute.xlu0 %159
      %161 = vrot.lane.b32.xlu0 %v124, 127
      %v162 = vpop.permute.xlu0 %161
      %163 = vrot.lane.b32.xlu0 %v132, 127
      %v164 = vpop.permute.xlu0 %163
      %v165 = vlaneseq
      %v166 = vand.u32 %v165, 127
      %vm167 = vcmp.lt.s32.totalorder %v166, 127
      %v168 = vsel %vm167, %v158, %v162
      %v169 = vsel %vm167, %v160, %v164
      %v170 = vsel %vm167, %v154, %v158
      %v171 = vsel %vm167, %v156, %v160
      %v172 = vsel %vm167, %v150, %v154
      %v173 = vsel %vm167, %v152, %v156
      %v174 = vsel %vm167, %v146, %v150
      %v175 = vsel %vm167, %v148, %v152
      %v176 = vsel %vm167, %v142, %v146
      %v177 = vsel %vm167, %v144, %v148
      %v178 = vsel %vm167, %v138, %v142
      %v179 = vsel %vm167, %v140, %v144
      %v180 = vsel %vm167, %v134, %v138
      %v181 = vsel %vm167, %v136, %v140
      %v182 = vsel %vm167, %v162, %v134
      %v183 = vsel %vm167, %v164, %v136
      %v184 = vmax.f32 %v117, %v180
      %v185 = vmax.f32 %v118, %v178
      %v186 = vmax.f32 %v119, %v176
      %v187 = vmax.f32 %v120, %v174
      %v188 = vmax.f32 %v121, %v172
      %v189 = vmax.f32 %v122, %v170
      %v190 = vmax.f32 %v123, %v168
      %v191 = vmax.f32 %v124, %v182
      %v192 = vmax.f32 %v125, %v181
      %v193 = vmax.f32 %v126, %v179
      %v194 = vmax.f32 %v127, %v177
      %v195 = vmax.f32 %v128, %v175
      %v196 = vmax.f32 %v129, %v173
      %v197 = vmax.f32 %v130, %v171
      %v198 = vmax.f32 %v131, %v169
      %v199 = vmax.f32 %v132, %v183
      %200 = vrot.lane.b32.xlu0 %v184, 96
      %v201 = vpop.permute.xlu0 %200
      %202 = vrot.lane.b32.xlu0 %v192, 96
      %v203 = vpop.permute.xlu0 %202
      %204 = vrot.lane.b32.xlu0 %v185, 96
      %v205 = vpop.permute.xlu0 %204
      %206 = vrot.lane.b32.xlu0 %v193, 96
      %v207 = vpop.permute.xlu0 %206
      %208 = vrot.lane.b32.xlu0 %v186, 96
      %v209 = vpop.permute.xlu0 %208
      %210 = vrot.lane.b32.xlu0 %v194, 96
      %v211 = vpop.permute.xlu0 %210
      %212 = vrot.lane.b32.xlu0 %v187, 96
      %v213 = vpop.permute.xlu0 %212
      %214 = vrot.lane.b32.xlu0 %v195, 96
      %v215 = vpop.permute.xlu0 %214
      %216 = vrot.lane.b32.xlu0 %v188, 96
      %v217 = vpop.permute.xlu0 %216
      %218 = vrot.lane.b32.xlu0 %v196, 96
      %v219 = vpop.permute.xlu0 %218
      %220 = vrot.lane.b32.xlu0 %v189, 96
      %v221 = vpop.permute.xlu0 %220
      %222 = vrot.lane.b32.xlu0 %v197, 96
      %v223 = vpop.permute.xlu0 %222
      %224 = vrot.lane.b32.xlu0 %v190, 96
      %v225 = vpop.permute.xlu0 %224
      %226 = vrot.lane.b32.xlu0 %v198, 96
      %v227 = vpop.permute.xlu0 %226
      %228 = vrot.lane.b32.xlu0 %v191, 96
      %v229 = vpop.permute.xlu0 %228
      %230 = vrot.lane.b32.xlu0 %v199, 96
      %v231 = vpop.permute.xlu0 %230
      %vm232 = vcmp.lt.s32.totalorder %v166, 96
      %v233 = vsel %vm232, %v225, %v229
      %v234 = vsel %vm232, %v227, %v231
      %v235 = vsel %vm232, %v221, %v225
      %v236 = vsel %vm232, %v223, %v227
      %v237 = vsel %vm232, %v217, %v221
      %v238 = vsel %vm232, %v219, %v223
      %v239 = vsel %vm232, %v213, %v217
      %v240 = vsel %vm232, %v215, %v219
      %v241 = vsel %vm232, %v209, %v213
      %v242 = vsel %vm232, %v211, %v215
      %v243 = vsel %vm232, %v205, %v209
      %v244 = vsel %vm232, %v207, %v211
      %v245 = vsel %vm232, %v201, %v205
      %v246 = vsel %vm232, %v203, %v207
      %v247 = vsel %vm232, %v229, %v201
      %v248 = vsel %vm232, %v231, %v203
      %v249 = vmax.f32 %v184, %v245
      %v250 = vmax.f32 %v185, %v243
      %v251 = vmax.f32 %v186, %v241
      %v252 = vmax.f32 %v187, %v239
      %v253 = vmax.f32 %v188, %v237
      %v254 = vmax.f32 %v189, %v235
      %v255 = vmax.f32 %v190, %v233
      %v256 = vmax.f32 %v191, %v247
      %v257 = vmax.f32 %v192, %v246
      %v258 = vmax.f32 %v193, %v244
      %v259 = vmax.f32 %v194, %v242
      %v260 = vmax.f32 %v195, %v240
      %v261 = vmax.f32 %v196, %v238
      %v262 = vmax.f32 %v197, %v236
      %v263 = vmax.f32 %v198, %v234
      %v264 = vmax.f32 %v199, %v248
      %v265 = vlaneseq
      %v266 = vshrl.u32 %v265, 7
      %v267 = vadd.s32 %v266, 8
      %v268 = vadd.s32 %v266, 16
      %v269 = vadd.s32 %v266, 24
      %v270 = vadd.s32 %v266, 32
      %v271 = vadd.s32 %v266, 40
      %v272 = vadd.s32 %v266, 48
      %v273 = vadd.s32 %v266, 56
      %v274 = vadd.s32 %v266, 64
      %v275 = vadd.s32 %v266, 72
      %v276 = vadd.s32 %v266, 80
      %v277 = vadd.s32 %v266, 88
      %v278 = vadd.s32 %v266, 96
      %v279 = vadd.s32 %v266, 104
      %v280 = vadd.s32 %v266, 112
      %v281 = vadd.s32 %v266, 120
      %v282 = vadd.s32 %v266, 128
      %v283 = vadd.s32 %v266, 136
      %v284 = vadd.s32 %v266, 144
      %v285 = vadd.s32 %v266, 152
      %v286 = vadd.s32 %v266, 160
      %v287 = vadd.s32 %v266, 168
      %v288 = vadd.s32 %v266, 176
      %v289 = vadd.s32 %v266, 184
      %v290 = vadd.s32 %v266, 192
      %v291 = vadd.s32 %v266, 200
      %v292 = vadd.s32 %v266, 208
      %v293 = vadd.s32 %v266, 216
      %v294 = vadd.s32 %v266, 224
      %v295 = vadd.s32 %v266, 232
      %v296 = vadd.s32 %v266, 240
      %v297 = vadd.s32 %v266, 248
      %v298 = vadd.s32 %v266, 256
      %v299 = vadd.s32 %v266, 264
      %v300 = vadd.s32 %v266, 272
      %v301 = vadd.s32 %v266, 280
      %v302 = vadd.s32 %v266, 288
      %v303 = vadd.s32 %v266, 296
      %v304 = vadd.s32 %v266, 304
      %v305 = vadd.s32 %v266, 312
      %v306 = vadd.s32 %v266, 320
      %v307 = vadd.s32 %v266, 328
      %v308 = vadd.s32 %v266, 336
      %v309 = vadd.s32 %v266, 344
      %v310 = vadd.s32 %v266, 352
      %v311 = vadd.s32 %v266, 360
      %v312 = vadd.s32 %v266, 368
      %v313 = vadd.s32 %v266, 376
      %v314 = vadd.s32 %v266, 384
      %v315 = vadd.s32 %v266, 392
      %v316 = vadd.s32 %v266, 400
      %v317 = vadd.s32 %v266, 408
      %v318 = vadd.s32 %v266, 416
      %v319 = vadd.s32 %v266, 424
      %v320 = vadd.s32 %v266, 432
      %v321 = vadd.s32 %v266, 440
      %v322 = vadd.s32 %v266, 448
      %v323 = vadd.s32 %v266, 456
      %v324 = vadd.s32 %v266, 464
      %v325 = vadd.s32 %v266, 472
      %v326 = vadd.s32 %v266, 480
      %v327 = vadd.s32 %v266, 488
      %v328 = vadd.s32 %v266, 496
      %v329 = vadd.s32 %v266, 504
      %v330 = vadd.s32 %v266, 512
      %v331 = vadd.s32 %v266, 520
      %v332 = vadd.s32 %v266, 528
      %v333 = vadd.s32 %v266, 536
      %v334 = vadd.s32 %v266, 544
      %v335 = vadd.s32 %v266, 552
      %v336 = vadd.s32 %v266, 560
      %v337 = vadd.s32 %v266, 568
      %v338 = vadd.s32 %v266, 576
      %v339 = vadd.s32 %v266, 584
      %v340 = vadd.s32 %v266, 592
      %v341 = vadd.s32 %v266, 600
      %v342 = vadd.s32 %v266, 608
      %v343 = vadd.s32 %v266, 616
      %v344 = vadd.s32 %v266, 624
      %v345 = vadd.s32 %v266, 632
      %v346 = vadd.s32 %v266, 640
      %v347 = vadd.s32 %v266, 648
      %v348 = vadd.s32 %v266, 656
      %v349 = vadd.s32 %v266, 664
      %v350 = vadd.s32 %v266, 672
      %v351 = vadd.s32 %v266, 680
      %v352 = vadd.s32 %v266, 688
      %v353 = vadd.s32 %v266, 696
      %v354 = vadd.s32 %v266, 704
      %v355 = vadd.s32 %v266, 712
      %v356 = vadd.s32 %v266, 720
      %v357 = vadd.s32 %v266, 728
      %v358 = vadd.s32 %v266, 736
      %v359 = vadd.s32 %v266, 744
      %v360 = vadd.s32 %v266, 752
      %v361 = vadd.s32 %v266, 760
      %v362 = vadd.s32 %v266, 768
      %v363 = vadd.s32 %v266, 776
      %v364 = vadd.s32 %v266, 784
      %v365 = vadd.s32 %v266, 792
      %v366 = vadd.s32 %v266, 800
      %v367 = vadd.s32 %v266, 808
      %v368 = vadd.s32 %v266, 816
      %v369 = vadd.s32 %v266, 824
      %v370 = vadd.s32 %v266, 832
      %v371 = vadd.s32 %v266, 840
      %v372 = vadd.s32 %v266, 848
      %v373 = vadd.s32 %v266, 856
      %v374 = vadd.s32 %v266, 864
      %v375 = vadd.s32 %v266, 872
      %v376 = vadd.s32 %v266, 880
      %v377 = vadd.s32 %v266, 888
      %v378 = vadd.s32 %v266, 896
      %v379 = vadd.s32 %v266, 904
      %v380 = vadd.s32 %v266, 912
      %v381 = vadd.s32 %v266, 920
      %v382 = vadd.s32 %v266, 928
      %v383 = vadd.s32 %v266, 936
      %v384 = vadd.s32 %v266, 944
      %v385 = vadd.s32 %v266, 952
      %v386 = vadd.s32 %v266, 960
      %v387 = vadd.s32 %v266, 968
      %v388 = vadd.s32 %v266, 976
      %v389 = vadd.s32 %v266, 984
      %v390 = vadd.s32 %v266, 992
      %v391 = vadd.s32 %v266, 1000
      %v392 = vadd.s32 %v266, 1008
      %v393 = vadd.s32 %v266, 1016
      %v394 = vadd.s32 %v166, 128
      %v395 = vshra.s32 %v166, 4
      %v396 = vshra.s32 %v394, 4
      %v397 = vmul.u32 %v395, 2
      %v398 = vmul.u32 %v396, 2
      %v399 = vmul.u32 %v397, 32
      %v400 = vmul.u32 %v398, 32
      %v401 = vand.u32 %v166, 15
      %v402 = vand.u32 %v394, 15
      %v403 = vmul.u32 %v401, 2
      %v404 = vmul.u32 %v402, 2
      %v405 = vadd.s32 %v399, %v403
      %v406 = vadd.s32 %v400, %v404
      %vm407 = vcmp.eq.s32.totalorder %v266, %v405
      %vm408 = vcmp.eq.s32.totalorder %v266, %v406
      %vm409 = vcmp.eq.s32.totalorder %v267, %v405
      %vm410 = vcmp.eq.s32.totalorder %v267, %v406
      %vm411 = vcmp.eq.s32.totalorder %v268, %v405
      %vm412 = vcmp.eq.s32.totalorder %v268, %v406
      %vm413 = vcmp.eq.s32.totalorder %v269, %v405
      %vm414 = vcmp.eq.s32.totalorder %v269, %v406
      %vm415 = vcmp.eq.s32.totalorder %v270, %v405
      %vm416 = vcmp.eq.s32.totalorder %v270, %v406
      %vm417 = vcmp.eq.s32.totalorder %v271, %v405
      %vm418 = vcmp.eq.s32.totalorder %v271, %v406
      %vm419 = vcmp.eq.s32.totalorder %v272, %v405
      %vm420 = vcmp.eq.s32.totalorder %v272, %v406
      %vm421 = vcmp.eq.s32.totalorder %v273, %v405
      %vm422 = vcmp.eq.s32.totalorder %v273, %v406
      %vm423 = vcmp.eq.s32.totalorder %v274, %v405
      %vm424 = vcmp.eq.s32.totalorder %v274, %v406
      %vm425 = vcmp.eq.s32.totalorder %v275, %v405
      %vm426 = vcmp.eq.s32.totalorder %v275, %v406
      %vm427 = vcmp.eq.s32.totalorder %v276, %v405
      %vm428 = vcmp.eq.s32.totalorder %v276, %v406
      %vm429 = vcmp.eq.s32.totalorder %v277, %v405
      %vm430 = vcmp.eq.s32.totalorder %v277, %v406
      %vm431 = vcmp.eq.s32.totalorder %v278, %v405
      %vm432 = vcmp.eq.s32.totalorder %v278, %v406
      %vm433 = vcmp.eq.s32.totalorder %v279, %v405
      %vm434 = vcmp.eq.s32.totalorder %v279, %v406
      %vm435 = vcmp.eq.s32.totalorder %v280, %v405
      %vm436 = vcmp.eq.s32.totalorder %v280, %v406
      %vm437 = vcmp.eq.s32.totalorder %v281, %v405
      %vm438 = vcmp.eq.s32.totalorder %v281, %v406
      %vm439 = vcmp.eq.s32.totalorder %v282, %v405
      %vm440 = vcmp.eq.s32.totalorder %v282, %v406
      %vm441 = vcmp.eq.s32.totalorder %v283, %v405
      %vm442 = vcmp.eq.s32.totalorder %v283, %v406
      %vm443 = vcmp.eq.s32.totalorder %v284, %v405
      %vm444 = vcmp.eq.s32.totalorder %v284, %v406
      %vm445 = vcmp.eq.s32.totalorder %v285, %v405
      %vm446 = vcmp.eq.s32.totalorder %v285, %v406
      %vm447 = vcmp.eq.s32.totalorder %v286, %v405
      %vm448 = vcmp.eq.s32.totalorder %v286, %v406
      %vm449 = vcmp.eq.s32.totalorder %v287, %v405
      %vm450 = vcmp.eq.s32.totalorder %v287, %v406
      %vm451 = vcmp.eq.s32.totalorder %v288, %v405
      %vm452 = vcmp.eq.s32.totalorder %v288, %v406
      %vm453 = vcmp.eq.s32.totalorder %v289, %v405
      %vm454 = vcmp.eq.s32.totalorder %v289, %v406
      %vm455 = vcmp.eq.s32.totalorder %v290, %v405
      %vm456 = vcmp.eq.s32.totalorder %v290, %v406
      %vm457 = vcmp.eq.s32.totalorder %v291, %v405
      %vm458 = vcmp.eq.s32.totalorder %v291, %v406
      %vm459 = vcmp.eq.s32.totalorder %v292, %v405
      %vm460 = vcmp.eq.s32.totalorder %v292, %v406
      %vm461 = vcmp.eq.s32.totalorder %v293, %v405
      %vm462 = vcmp.eq.s32.totalorder %v293, %v406
      %vm463 = vcmp.eq.s32.totalorder %v294, %v405
      %vm464 = vcmp.eq.s32.totalorder %v294, %v406
      %vm465 = vcmp.eq.s32.totalorder %v295, %v405
      %vm466 = vcmp.eq.s32.totalorder %v295, %v406
      %vm467 = vcmp.eq.s32.totalorder %v296, %v405
      %vm468 = vcmp.eq.s32.totalorder %v296, %v406
      %vm469 = vcmp.eq.s32.totalorder %v297, %v405
      %vm470 = vcmp.eq.s32.totalorder %v297, %v406
      %vm471 = vcmp.eq.s32.totalorder %v298, %v405
      %vm472 = vcmp.eq.s32.totalorder %v298, %v406
      %vm473 = vcmp.eq.s32.totalorder %v299, %v405
      %vm474 = vcmp.eq.s32.totalorder %v299, %v406
      %vm475 = vcmp.eq.s32.totalorder %v300, %v405
      %vm476 = vcmp.eq.s32.totalorder %v300, %v406
      %vm477 = vcmp.eq.s32.totalorder %v301, %v405
      %vm478 = vcmp.eq.s32.totalorder %v301, %v406
      %vm479 = vcmp.eq.s32.totalorder %v302, %v405
      %vm480 = vcmp.eq.s32.totalorder %v302, %v406
      %vm481 = vcmp.eq.s32.totalorder %v303, %v405
      %vm482 = vcmp.eq.s32.totalorder %v303, %v406
      %vm483 = vcmp.eq.s32.totalorder %v304, %v405
      %vm484 = vcmp.eq.s32.totalorder %v304, %v406
      %vm485 = vcmp.eq.s32.totalorder %v305, %v405
      %vm486 = vcmp.eq.s32.totalorder %v305, %v406
      %vm487 = vcmp.eq.s32.totalorder %v306, %v405
      %vm488 = vcmp.eq.s32.totalorder %v306, %v406
      %vm489 = vcmp.eq.s32.totalorder %v307, %v405
      %vm490 = vcmp.eq.s32.totalorder %v307, %v406
      %vm491 = vcmp.eq.s32.totalorder %v308, %v405
      %vm492 = vcmp.eq.s32.totalorder %v308, %v406
      %vm493 = vcmp.eq.s32.totalorder %v309, %v405
      %vm494 = vcmp.eq.s32.totalorder %v309, %v406
      %vm495 = vcmp.eq.s32.totalorder %v310, %v405
      %vm496 = vcmp.eq.s32.totalorder %v310, %v406
      %vm497 = vcmp.eq.s32.totalorder %v311, %v405
      %vm498 = vcmp.eq.s32.totalorder %v311, %v406
      %vm499 = vcmp.eq.s32.totalorder %v312, %v405
      %vm500 = vcmp.eq.s32.totalorder %v312, %v406
      %vm501 = vcmp.eq.s32.totalorder %v313, %v405
      %vm502 = vcmp.eq.s32.totalorder %v313, %v406
      %vm503 = vcmp.eq.s32.totalorder %v314, %v405
      %vm504 = vcmp.eq.s32.totalorder %v314, %v406
      %vm505 = vcmp.eq.s32.totalorder %v315, %v405
      %vm506 = vcmp.eq.s32.totalorder %v315, %v406
      %vm507 = vcmp.eq.s32.totalorder %v316, %v405
      %vm508 = vcmp.eq.s32.totalorder %v316, %v406
      %vm509 = vcmp.eq.s32.totalorder %v317, %v405
      %vm510 = vcmp.eq.s32.totalorder %v317, %v406
      %vm511 = vcmp.eq.s32.totalorder %v318, %v405
      %vm512 = vcmp.eq.s32.totalorder %v318, %v406
      %vm513 = vcmp.eq.s32.totalorder %v319, %v405
      %vm514 = vcmp.eq.s32.totalorder %v319, %v406
      %vm515 = vcmp.eq.s32.totalorder %v320, %v405
      %vm516 = vcmp.eq.s32.totalorder %v320, %v406
      %vm517 = vcmp.eq.s32.totalorder %v321, %v405
      %vm518 = vcmp.eq.s32.totalorder %v321, %v406
      %vm519 = vcmp.eq.s32.totalorder %v322, %v405
      %vm520 = vcmp.eq.s32.totalorder %v322, %v406
      %vm521 = vcmp.eq.s32.totalorder %v323, %v405
      %vm522 = vcmp.eq.s32.totalorder %v323, %v406
      %vm523 = vcmp.eq.s32.totalorder %v324, %v405
      %vm524 = vcmp.eq.s32.totalorder %v324, %v406
      %vm525 = vcmp.eq.s32.totalorder %v325, %v405
      %vm526 = vcmp.eq.s32.totalorder %v325, %v406
      %vm527 = vcmp.eq.s32.totalorder %v326, %v405
      %vm528 = vcmp.eq.s32.totalorder %v326, %v406
      %vm529 = vcmp.eq.s32.totalorder %v327, %v405
      %vm530 = vcmp.eq.s32.totalorder %v327, %v406
      %vm531 = vcmp.eq.s32.totalorder %v328, %v405
      %vm532 = vcmp.eq.s32.totalorder %v328, %v406
      %vm533 = vcmp.eq.s32.totalorder %v329, %v405
      %vm534 = vcmp.eq.s32.totalorder %v329, %v406
      %vm535 = vcmp.eq.s32.totalorder %v330, %v405
      %vm536 = vcmp.eq.s32.totalorder %v330, %v406
      %vm537 = vcmp.eq.s32.totalorder %v331, %v405
      %vm538 = vcmp.eq.s32.totalorder %v331, %v406
      %vm539 = vcmp.eq.s32.totalorder %v332, %v405
      %vm540 = vcmp.eq.s32.totalorder %v332, %v406
      %vm541 = vcmp.eq.s32.totalorder %v333, %v405
      %vm542 = vcmp.eq.s32.totalorder %v333, %v406
      %vm543 = vcmp.eq.s32.totalorder %v334, %v405
      %vm544 = vcmp.eq.s32.totalorder %v334, %v406
      %vm545 = vcmp.eq.s32.totalorder %v335, %v405
      %vm546 = vcmp.eq.s32.totalorder %v335, %v406
      %vm547 = vcmp.eq.s32.totalorder %v336, %v405
      %vm548 = vcmp.eq.s32.totalorder %v336, %v406
      %vm549 = vcmp.eq.s32.totalorder %v337, %v405
      %vm550 = vcmp.eq.s32.totalorder %v337, %v406
      %vm551 = vcmp.eq.s32.totalorder %v338, %v405
      %vm552 = vcmp.eq.s32.totalorder %v338, %v406
      %vm553 = vcmp.eq.s32.totalorder %v339, %v405
      %vm554 = vcmp.eq.s32.totalorder %v339, %v406
      %vm555 = vcmp.eq.s32.totalorder %v340, %v405
      %vm556 = vcmp.eq.s32.totalorder %v340, %v406
      %vm557 = vcmp.eq.s32.totalorder %v341, %v405
      %vm558 = vcmp.eq.s32.totalorder %v341, %v406
      %vm559 = vcmp.eq.s32.totalorder %v342, %v405
      %vm560 = vcmp.eq.s32.totalorder %v342, %v406
      %vm561 = vcmp.eq.s32.totalorder %v343, %v405
      %vm562 = vcmp.eq.s32.totalorder %v343, %v406
      %vm563 = vcmp.eq.s32.totalorder %v344, %v405
      %vm564 = vcmp.eq.s32.totalorder %v344, %v406
      %vm565 = vcmp.eq.s32.totalorder %v345, %v405
      %vm566 = vcmp.eq.s32.totalorder %v345, %v406
      %vm567 = vcmp.eq.s32.totalorder %v346, %v405
      %vm568 = vcmp.eq.s32.totalorder %v346, %v406
      %vm569 = vcmp.eq.s32.totalorder %v347, %v405
      %vm570 = vcmp.eq.s32.totalorder %v347, %v406
      %vm571 = vcmp.eq.s32.totalorder %v348, %v405
      %vm572 = vcmp.eq.s32.totalorder %v348, %v406
      %vm573 = vcmp.eq.s32.totalorder %v349, %v405
      %vm574 = vcmp.eq.s32.totalorder %v349, %v406
      %vm575 = vcmp.eq.s32.totalorder %v350, %v405
      %vm576 = vcmp.eq.s32.totalorder %v350, %v406
      %vm577 = vcmp.eq.s32.totalorder %v351, %v405
      %vm578 = vcmp.eq.s32.totalorder %v351, %v406
      %vm579 = vcmp.eq.s32.totalorder %v352, %v405
      %vm580 = vcmp.eq.s32.totalorder %v352, %v406
      %vm581 = vcmp.eq.s32.totalorder %v353, %v405
      %vm582 = vcmp.eq.s32.totalorder %v353, %v406
      %vm583 = vcmp.eq.s32.totalorder %v354, %v405
      %vm584 = vcmp.eq.s32.totalorder %v354, %v406
      %vm585 = vcmp.eq.s32.totalorder %v355, %v405
      %vm586 = vcmp.eq.s32.totalorder %v355, %v406
      %vm587 = vcmp.eq.s32.totalorder %v356, %v405
      %vm588 = vcmp.eq.s32.totalorder %v356, %v406
      %vm589 = vcmp.eq.s32.totalorder %v357, %v405
      %vm590 = vcmp.eq.s32.totalorder %v357, %v406
      %vm591 = vcmp.eq.s32.totalorder %v358, %v405
      %vm592 = vcmp.eq.s32.totalorder %v358, %v406
      %vm593 = vcmp.eq.s32.totalorder %v359, %v405
      %vm594 = vcmp.eq.s32.totalorder %v359, %v406
      %vm595 = vcmp.eq.s32.totalorder %v360, %v405
      %vm596 = vcmp.eq.s32.totalorder %v360, %v406
      %vm597 = vcmp.eq.s32.totalorder %v361, %v405
      %vm598 = vcmp.eq.s32.totalorder %v361, %v406
      %vm599 = vcmp.eq.s32.totalorder %v362, %v405
      %vm600 = vcmp.eq.s32.totalorder %v362, %v406
      %vm601 = vcmp.eq.s32.totalorder %v363, %v405
      %vm602 = vcmp.eq.s32.totalorder %v363, %v406
      %vm603 = vcmp.eq.s32.totalorder %v364, %v405
      %vm604 = vcmp.eq.s32.totalorder %v364, %v406
      %vm605 = vcmp.eq.s32.totalorder %v365, %v405
      %vm606 = vcmp.eq.s32.totalorder %v365, %v406
      %vm607 = vcmp.eq.s32.totalorder %v366, %v405
      %vm608 = vcmp.eq.s32.totalorder %v366, %v406
      %vm609 = vcmp.eq.s32.totalorder %v367, %v405
      %vm610 = vcmp.eq.s32.totalorder %v367, %v406
      %vm611 = vcmp.eq.s32.totalorder %v368, %v405
      %vm612 = vcmp.eq.s32.totalorder %v368, %v406
      %vm613 = vcmp.eq.s32.totalorder %v369, %v405
      %vm614 = vcmp.eq.s32.totalorder %v369, %v406
      %vm615 = vcmp.eq.s32.totalorder %v370, %v405
      %vm616 = vcmp.eq.s32.totalorder %v370, %v406
      %vm617 = vcmp.eq.s32.totalorder %v371, %v405
      %vm618 = vcmp.eq.s32.totalorder %v371, %v406
      %vm619 = vcmp.eq.s32.totalorder %v372, %v405
      %vm620 = vcmp.eq.s32.totalorder %v372, %v406
      %vm621 = vcmp.eq.s32.totalorder %v373, %v405
      %vm622 = vcmp.eq.s32.totalorder %v373, %v406
      %vm623 = vcmp.eq.s32.totalorder %v374, %v405
      %vm624 = vcmp.eq.s32.totalorder %v374, %v406
      %vm625 = vcmp.eq.s32.totalorder %v375, %v405
      %vm626 = vcmp.eq.s32.totalorder %v375, %v406
      %vm627 = vcmp.eq.s32.totalorder %v376, %v405
      %vm628 = vcmp.eq.s32.totalorder %v376, %v406
      %vm629 = vcmp.eq.s32.totalorder %v377, %v405
      %vm630 = vcmp.eq.s32.totalorder %v377, %v406
      %vm631 = vcmp.eq.s32.totalorder %v378, %v405
      %vm632 = vcmp.eq.s32.totalorder %v378, %v406
      %vm633 = vcmp.eq.s32.totalorder %v379, %v405
      %vm634 = vcmp.eq.s32.totalorder %v379, %v406
      %vm635 = vcmp.eq.s32.totalorder %v380, %v405
      %vm636 = vcmp.eq.s32.totalorder %v380, %v406
      %vm637 = vcmp.eq.s32.totalorder %v381, %v405
      %vm638 = vcmp.eq.s32.totalorder %v381, %v406
      %vm639 = vcmp.eq.s32.totalorder %v382, %v405
      %vm640 = vcmp.eq.s32.totalorder %v382, %v406
      %vm641 = vcmp.eq.s32.totalorder %v383, %v405
      %vm642 = vcmp.eq.s32.totalorder %v383, %v406
      %vm643 = vcmp.eq.s32.totalorder %v384, %v405
      %vm644 = vcmp.eq.s32.totalorder %v384, %v406
      %vm645 = vcmp.eq.s32.totalorder %v385, %v405
      %vm646 = vcmp.eq.s32.totalorder %v385, %v406
      %vm647 = vcmp.eq.s32.totalorder %v386, %v405
      %vm648 = vcmp.eq.s32.totalorder %v386, %v406
      %vm649 = vcmp.eq.s32.totalorder %v387, %v405
      %vm650 = vcmp.eq.s32.totalorder %v387, %v406
      %vm651 = vcmp.eq.s32.totalorder %v388, %v405
      %vm652 = vcmp.eq.s32.totalorder %v388, %v406
      %vm653 = vcmp.eq.s32.totalorder %v389, %v405
      %vm654 = vcmp.eq.s32.totalorder %v389, %v406
      %vm655 = vcmp.eq.s32.totalorder %v390, %v405
      %vm656 = vcmp.eq.s32.totalorder %v390, %v406
      %vm657 = vcmp.eq.s32.totalorder %v391, %v405
      %vm658 = vcmp.eq.s32.totalorder %v391, %v406
      %vm659 = vcmp.eq.s32.totalorder %v392, %v405
      %vm660 = vcmp.eq.s32.totalorder %v392, %v406
      %vm661 = vcmp.eq.s32.totalorder %v393, %v405
      %vm662 = vcmp.eq.s32.totalorder %v393, %v406
      %v663 = vsel %vm407, 1, 0
      %v664 = vsel %vm408, 1, 0
      %v665 = vsel %vm409, 1, 0
      %v666 = vsel %vm410, 1, 0
      %v667 = vsel %vm411, 1, 0
      %v668 = vsel %vm412, 1, 0
      %v669 = vsel %vm413, 1, 0
      %v670 = vsel %vm414, 1, 0
      %v671 = vsel %vm415, 1, 0
      %v672 = vsel %vm416, 1, 0
      %v673 = vsel %vm417, 1, 0
      %v674 = vsel %vm418, 1, 0
      %v675 = vsel %vm419, 1, 0
      %v676 = vsel %vm420, 1, 0
      %v677 = vsel %vm421, 1, 0
      %v678 = vsel %vm422, 1, 0
      %v679 = vsel %vm423, 1, 0
      %v680 = vsel %vm424, 1, 0
      %v681 = vsel %vm425, 1, 0
      %v682 = vsel %vm426, 1, 0
      %v683 = vsel %vm427, 1, 0
      %v684 = vsel %vm428, 1, 0
      %v685 = vsel %vm429, 1, 0
      %v686 = vsel %vm430, 1, 0
      %v687 = vsel %vm431, 1, 0
      %v688 = vsel %vm432, 1, 0
      %v689 = vsel %vm433, 1, 0
      %v690 = vsel %vm434, 1, 0
      %v691 = vsel %vm435, 1, 0
      %v692 = vsel %vm436, 1, 0
      %v693 = vsel %vm437, 1, 0
      %v694 = vsel %vm438, 1, 0
      %v695 = vsel %vm439, 1, 0
      %v696 = vsel %vm440, 1, 0
      %v697 = vsel %vm441, 1, 0
      %v698 = vsel %vm442, 1, 0
      %v699 = vsel %vm443, 1, 0
      %v700 = vsel %vm444, 1, 0
      %v701 = vsel %vm445, 1, 0
      %v702 = vsel %vm446, 1, 0
      %v703 = vsel %vm447, 1, 0
      %v704 = vsel %vm448, 1, 0
      %v705 = vsel %vm449, 1, 0
      %v706 = vsel %vm450, 1, 0
      %v707 = vsel %vm451, 1, 0
      %v708 = vsel %vm452, 1, 0
      %v709 = vsel %vm453, 1, 0
      %v710 = vsel %vm454, 1, 0
      %v711 = vsel %vm455, 1, 0
      %v712 = vsel %vm456, 1, 0
      %v713 = vsel %vm457, 1, 0
      %v714 = vsel %vm458, 1, 0
      %v715 = vsel %vm459, 1, 0
      %v716 = vsel %vm460, 1, 0
      %v717 = vsel %vm461, 1, 0
      %v718 = vsel %vm462, 1, 0
      %v719 = vsel %vm463, 1, 0
      %v720 = vsel %vm464, 1, 0
      %v721 = vsel %vm465, 1, 0
      %v722 = vsel %vm466, 1, 0
      %v723 = vsel %vm467, 1, 0
      %v724 = vsel %vm468, 1, 0
      %v725 = vsel %vm469, 1, 0
      %v726 = vsel %vm470, 1, 0
      %v727 = vsel %vm471, 1, 0
      %v728 = vsel %vm472, 1, 0
      %v729 = vsel %vm473, 1, 0
      %v730 = vsel %vm474, 1, 0
      %v731 = vsel %vm475, 1, 0
      %v732 = vsel %vm476, 1, 0
      %v733 = vsel %vm477, 1, 0
      %v734 = vsel %vm478, 1, 0
      %v735 = vsel %vm479, 1, 0
      %v736 = vsel %vm480, 1, 0
      %v737 = vsel %vm481, 1, 0
      %v738 = vsel %vm482, 1, 0
      %v739 = vsel %vm483, 1, 0
      %v740 = vsel %vm484, 1, 0
      %v741 = vsel %vm485, 1, 0
      %v742 = vsel %vm486, 1, 0
      %v743 = vsel %vm487, 1, 0
      %v744 = vsel %vm488, 1, 0
      %v745 = vsel %vm489, 1, 0
      %v746 = vsel %vm490, 1, 0
      %v747 = vsel %vm491, 1, 0
      %v748 = vsel %vm492, 1, 0
      %v749 = vsel %vm493, 1, 0
      %v750 = vsel %vm494, 1, 0
      %v751 = vsel %vm495, 1, 0
      %v752 = vsel %vm496, 1, 0
      %v753 = vsel %vm497, 1, 0
      %v754 = vsel %vm498, 1, 0
      %v755 = vsel %vm499, 1, 0
      %v756 = vsel %vm500, 1, 0
      %v757 = vsel %vm501, 1, 0
      %v758 = vsel %vm502, 1, 0
      %v759 = vsel %vm503, 1, 0
      %v760 = vsel %vm504, 1, 0
      %v761 = vsel %vm505, 1, 0
      %v762 = vsel %vm506, 1, 0
      %v763 = vsel %vm507, 1, 0
      %v764 = vsel %vm508, 1, 0
      %v765 = vsel %vm509, 1, 0
      %v766 = vsel %vm510, 1, 0
      %v767 = vsel %vm511, 1, 0
      %v768 = vsel %vm512, 1, 0
      %v769 = vsel %vm513, 1, 0
      %v770 = vsel %vm514, 1, 0
      %v771 = vsel %vm515, 1, 0
      %v772 = vsel %vm516, 1, 0
      %v773 = vsel %vm517, 1, 0
      %v774 = vsel %vm518, 1, 0
      %v775 = vsel %vm519, 1, 0
      %v776 = vsel %vm520, 1, 0
      %v777 = vsel %vm521, 1, 0
      %v778 = vsel %vm522, 1, 0
      %v779 = vsel %vm523, 1, 0
      %v780 = vsel %vm524, 1, 0
      %v781 = vsel %vm525, 1, 0
      %v782 = vsel %vm526, 1, 0
      %v783 = vsel %vm527, 1, 0
      %v784 = vsel %vm528, 1, 0
      %v785 = vsel %vm529, 1, 0
      %v786 = vsel %vm530, 1, 0
      %v787 = vsel %vm531, 1, 0
      %v788 = vsel %vm532, 1, 0
      %v789 = vsel %vm533, 1, 0
      %v790 = vsel %vm534, 1, 0
      %v791 = vsel %vm535, 1, 0
      %v792 = vsel %vm536, 1, 0
      %v793 = vsel %vm537, 1, 0
      %v794 = vsel %vm538, 1, 0
      %v795 = vsel %vm539, 1, 0
      %v796 = vsel %vm540, 1, 0
      %v797 = vsel %vm541, 1, 0
      %v798 = vsel %vm542, 1, 0
      %v799 = vsel %vm543, 1, 0
      %v800 = vsel %vm544, 1, 0
      %v801 = vsel %vm545, 1, 0
      %v802 = vsel %vm546, 1, 0
      %v803 = vsel %vm547, 1, 0
      %v804 = vsel %vm548, 1, 0
      %v805 = vsel %vm549, 1, 0
      %v806 = vsel %vm550, 1, 0
      %v807 = vsel %vm551, 1, 0
      %v808 = vsel %vm552, 1, 0
      %v809 = vsel %vm553, 1, 0
      %v810 = vsel %vm554, 1, 0
      %v811 = vsel %vm555, 1, 0
      %v812 = vsel %vm556, 1, 0
      %v813 = vsel %vm557, 1, 0
      %v814 = vsel %vm558, 1, 0
      %v815 = vsel %vm559, 1, 0
      %v816 = vsel %vm560, 1, 0
      %v817 = vsel %vm561, 1, 0
      %v818 = vsel %vm562, 1, 0
      %v819 = vsel %vm563, 1, 0
      %v820 = vsel %vm564, 1, 0
      %v821 = vsel %vm565, 1, 0
      %v822 = vsel %vm566, 1, 0
      %v823 = vsel %vm567, 1, 0
      %v824 = vsel %vm568, 1, 0
      %v825 = vsel %vm569, 1, 0
      %v826 = vsel %vm570, 1, 0
      %v827 = vsel %vm571, 1, 0
      %v828 = vsel %vm572, 1, 0
      %v829 = vsel %vm573, 1, 0
      %v830 = vsel %vm574, 1, 0
      %v831 = vsel %vm575, 1, 0
      %v832 = vsel %vm576, 1, 0
      %v833 = vsel %vm577, 1, 0
      %v834 = vsel %vm578, 1, 0
      %v835 = vsel %vm579, 1, 0
      %v836 = vsel %vm580, 1, 0
      %v837 = vsel %vm581, 1, 0
      %v838 = vsel %vm582, 1, 0
      %v839 = vsel %vm583, 1, 0
      %v840 = vsel %vm584, 1, 0
      %v841 = vsel %vm585, 1, 0
      %v842 = vsel %vm586, 1, 0
      %v843 = vsel %vm587, 1, 0
      %v844 = vsel %vm588, 1, 0
      %v845 = vsel %vm589, 1, 0
      %v846 = vsel %vm590, 1, 0
      %v847 = vsel %vm591, 1, 0
      %v848 = vsel %vm592, 1, 0
      %v849 = vsel %vm593, 1, 0
      %v850 = vsel %vm594, 1, 0
      %v851 = vsel %vm595, 1, 0
      %v852 = vsel %vm596, 1, 0
      %v853 = vsel %vm597, 1, 0
      %v854 = vsel %vm598, 1, 0
      %v855 = vsel %vm599, 1, 0
      %v856 = vsel %vm600, 1, 0
      %v857 = vsel %vm601, 1, 0
      %v858 = vsel %vm602, 1, 0
      %v859 = vsel %vm603, 1, 0
      %v860 = vsel %vm604, 1, 0
      %v861 = vsel %vm605, 1, 0
      %v862 = vsel %vm606, 1, 0
      %v863 = vsel %vm607, 1, 0
      %v864 = vsel %vm608, 1, 0
      %v865 = vsel %vm609, 1, 0
      %v866 = vsel %vm610, 1, 0
      %v867 = vsel %vm611, 1, 0
      %v868 = vsel %vm612, 1, 0
      %v869 = vsel %vm613, 1, 0
      %v870 = vsel %vm614, 1, 0
      %v871 = vsel %vm615, 1, 0
      %v872 = vsel %vm616, 1, 0
      %v873 = vsel %vm617, 1, 0
      %v874 = vsel %vm618, 1, 0
      %v875 = vsel %vm619, 1, 0
      %v876 = vsel %vm620, 1, 0
      %v877 = vsel %vm621, 1, 0
      %v878 = vsel %vm622, 1, 0
      %v879 = vsel %vm623, 1, 0
      %v880 = vsel %vm624, 1, 0
      %v881 = vsel %vm625, 1, 0
      %v882 = vsel %vm626, 1, 0
      %v883 = vsel %vm627, 1, 0
      %v884 = vsel %vm628, 1, 0
      %v885 = vsel %vm629, 1, 0
      %v886 = vsel %vm630, 1, 0
      %v887 = vsel %vm631, 1, 0
      %v888 = vsel %vm632, 1, 0
      %v889 = vsel %vm633, 1, 0
      %v890 = vsel %vm634, 1, 0
      %v891 = vsel %vm635, 1, 0
      %v892 = vsel %vm636, 1, 0
      %v893 = vsel %vm637, 1, 0
      %v894 = vsel %vm638, 1, 0
      %v895 = vsel %vm639, 1, 0
      %v896 = vsel %vm640, 1, 0
      %v897 = vsel %vm641, 1, 0
      %v898 = vsel %vm642, 1, 0
      %v899 = vsel %vm643, 1, 0
      %v900 = vsel %vm644, 1, 0
      %v901 = vsel %vm645, 1, 0
      %v902 = vsel %vm646, 1, 0
      %v903 = vsel %vm647, 1, 0
      %v904 = vsel %vm648, 1, 0
      %v905 = vsel %vm649, 1, 0
      %v906 = vsel %vm650, 1, 0
      %v907 = vsel %vm651, 1, 0
      %v908 = vsel %vm652, 1, 0
      %v909 = vsel %vm653, 1, 0
      %v910 = vsel %vm654, 1, 0
      %v911 = vsel %vm655, 1, 0
      %v912 = vsel %vm656, 1, 0
      %v913 = vsel %vm657, 1, 0
      %v914 = vsel %vm658, 1, 0
      %v915 = vsel %vm659, 1, 0
      %v916 = vsel %vm660, 1, 0
      %v917 = vsel %vm661, 1, 0
      %v918 = vsel %vm662, 1, 0
      %v919 = vcvt.s32.f32 %v663
      %v920 = vcvt.s32.f32 %v664
      %v921 = vcvt.s32.f32 %v665
      %v922 = vcvt.s32.f32 %v666
      %v923 = vcvt.s32.f32 %v667
      %v924 = vcvt.s32.f32 %v668
      %v925 = vcvt.s32.f32 %v669
      %v926 = vcvt.s32.f32 %v670
      %v927 = vcvt.s32.f32 %v671
      %v928 = vcvt.s32.f32 %v672
      %v929 = vcvt.s32.f32 %v673
      %v930 = vcvt.s32.f32 %v674
      %v931 = vcvt.s32.f32 %v675
      %v932 = vcvt.s32.f32 %v676
      %v933 = vcvt.s32.f32 %v677
      %v934 = vcvt.s32.f32 %v678
      %v935 = vcvt.s32.f32 %v679
      %v936 = vcvt.s32.f32 %v680
      %v937 = vcvt.s32.f32 %v681
      %v938 = vcvt.s32.f32 %v682
      %v939 = vcvt.s32.f32 %v683
      %v940 = vcvt.s32.f32 %v684
      %v941 = vcvt.s32.f32 %v685
      %v942 = vcvt.s32.f32 %v686
      %v943 = vcvt.s32.f32 %v687
      %v944 = vcvt.s32.f32 %v688
      %v945 = vcvt.s32.f32 %v689
      %v946 = vcvt.s32.f32 %v690
      %v947 = vcvt.s32.f32 %v691
      %v948 = vcvt.s32.f32 %v692
      %v949 = vcvt.s32.f32 %v693
      %v950 = vcvt.s32.f32 %v694
      %v951 = vcvt.s32.f32 %v695
      %v952 = vcvt.s32.f32 %v696
      %v953 = vcvt.s32.f32 %v697
      %v954 = vcvt.s32.f32 %v698
      %v955 = vcvt.s32.f32 %v699
      %v956 = vcvt.s32.f32 %v700
      %v957 = vcvt.s32.f32 %v701
      %v958 = vcvt.s32.f32 %v702
      %v959 = vcvt.s32.f32 %v703
      %v960 = vcvt.s32.f32 %v704
      %v961 = vcvt.s32.f32 %v705
      %v962 = vcvt.s32.f32 %v706
      %v963 = vcvt.s32.f32 %v707
      %v964 = vcvt.s32.f32 %v708
      %v965 = vcvt.s32.f32 %v709
      %v966 = vcvt.s32.f32 %v710
      %v967 = vcvt.s32.f32 %v711
      %v968 = vcvt.s32.f32 %v712
      %v969 = vcvt.s32.f32 %v713
      %v970 = vcvt.s32.f32 %v714
      %v971 = vcvt.s32.f32 %v715
      %v972 = vcvt.s32.f32 %v716
      %v973 = vcvt.s32.f32 %v717
      %v974 = vcvt.s32.f32 %v718
      %v975 = vcvt.s32.f32 %v719
      %v976 = vcvt.s32.f32 %v720
      %v977 = vcvt.s32.f32 %v721
      %v978 = vcvt.s32.f32 %v722
      %v979 = vcvt.s32.f32 %v723
      %v980 = vcvt.s32.f32 %v724
      %v981 = vcvt.s32.f32 %v725
      %v982 = vcvt.s32.f32 %v726
      %v983 = vcvt.s32.f32 %v727
      %v984 = vcvt.s32.f32 %v728
      %v985 = vcvt.s32.f32 %v729
      %v986 = vcvt.s32.f32 %v730
      %v987 = vcvt.s32.f32 %v731
      %v988 = vcvt.s32.f32 %v732
      %v989 = vcvt.s32.f32 %v733
      %v990 = vcvt.s32.f32 %v734
      %v991 = vcvt.s32.f32 %v735
      %v992 = vcvt.s32.f32 %v736
      %v993 = vcvt.s32.f32 %v737
      %v994 = vcvt.s32.f32 %v738
      %v995 = vcvt.s32.f32 %v739
      %v996 = vcvt.s32.f32 %v740
      %v997 = vcvt.s32.f32 %v741
      %v998 = vcvt.s32.f32 %v742
      %v999 = vcvt.s32.f32 %v743
      %v1000 = vcvt.s32.f32 %v744
      %v1001 = vcvt.s32.f32 %v745
      %v1002 = vcvt.s32.f32 %v746
      %v1003 = vcvt.s32.f32 %v747
      %v1004 = vcvt.s32.f32 %v748
      %v1005 = vcvt.s32.f32 %v749
      %v1006 = vcvt.s32.f32 %v750
      %v1007 = vcvt.s32.f32 %v751
      %v1008 = vcvt.s32.f32 %v752
      %v1009 = vcvt.s32.f32 %v753
      %v1010 = vcvt.s32.f32 %v754
      %v1011 = vcvt.s32.f32 %v755
      %v1012 = vcvt.s32.f32 %v756
      %v1013 = vcvt.s32.f32 %v757
      %v1014 = vcvt.s32.f32 %v758
      %v1015 = vcvt.s32.f32 %v759
      %v1016 = vcvt.s32.f32 %v760
      %v1017 = vcvt.s32.f32 %v761
      %v1018 = vcvt.s32.f32 %v762
      %v1019 = vcvt.s32.f32 %v763
      %v1020 = vcvt.s32.f32 %v764
      %v1021 = vcvt.s32.f32 %v765
      %v1022 = vcvt.s32.f32 %v766
      %v1023 = vcvt.s32.f32 %v767
      %v1024 = vcvt.s32.f32 %v768
      %v1025 = vcvt.s32.f32 %v769
      %v1026 = vcvt.s32.f32 %v770
      %v1027 = vcvt.s32.f32 %v771
      %v1028 = vcvt.s32.f32 %v772
      %v1029 = vcvt.s32.f32 %v773
      %v1030 = vcvt.s32.f32 %v774
      %v1031 = vcvt.s32.f32 %v775
      %v1032 = vcvt.s32.f32 %v776
      %v1033 = vcvt.s32.f32 %v777
      %v1034 = vcvt.s32.f32 %v778
      %v1035 = vcvt.s32.f32 %v779
      %v1036 = vcvt.s32.f32 %v780
      %v1037 = vcvt.s32.f32 %v781
      %v1038 = vcvt.s32.f32 %v782
      %v1039 = vcvt.s32.f32 %v783
      %v1040 = vcvt.s32.f32 %v784
      %v1041 = vcvt.s32.f32 %v785
      %v1042 = vcvt.s32.f32 %v786
      %v1043 = vcvt.s32.f32 %v787
      %v1044 = vcvt.s32.f32 %v788
      %v1045 = vcvt.s32.f32 %v789
      %v1046 = vcvt.s32.f32 %v790
      %v1047 = vcvt.s32.f32 %v791
      %v1048 = vcvt.s32.f32 %v792
      %v1049 = vcvt.s32.f32 %v793
      %v1050 = vcvt.s32.f32 %v794
      %v1051 = vcvt.s32.f32 %v795
      %v1052 = vcvt.s32.f32 %v796
      %v1053 = vcvt.s32.f32 %v797
      %v1054 = vcvt.s32.f32 %v798
      %v1055 = vcvt.s32.f32 %v799
      %v1056 = vcvt.s32.f32 %v800
      %v1057 = vcvt.s32.f32 %v801
      %v1058 = vcvt.s32.f32 %v802
      %v1059 = vcvt.s32.f32 %v803
      %v1060 = vcvt.s32.f32 %v804
      %v1061 = vcvt.s32.f32 %v805
      %v1062 = vcvt.s32.f32 %v806
      %v1063 = vcvt.s32.f32 %v807
      %v1064 = vcvt.s32.f32 %v808
      %v1065 = vcvt.s32.f32 %v809
      %v1066 = vcvt.s32.f32 %v810
      %v1067 = vcvt.s32.f32 %v811
      %v1068 = vcvt.s32.f32 %v812
      %v1069 = vcvt.s32.f32 %v813
      %v1070 = vcvt.s32.f32 %v814
      %v1071 = vcvt.s32.f32 %v815
      %v1072 = vcvt.s32.f32 %v816
      %v1073 = vcvt.s32.f32 %v817
      %v1074 = vcvt.s32.f32 %v818
      %v1075 = vcvt.s32.f32 %v819
      %v1076 = vcvt.s32.f32 %v820
      %v1077 = vcvt.s32.f32 %v821
      %v1078 = vcvt.s32.f32 %v822
      %v1079 = vcvt.s32.f32 %v823
      %v1080 = vcvt.s32.f32 %v824
      %v1081 = vcvt.s32.f32 %v825
      %v1082 = vcvt.s32.f32 %v826
      %v1083 = vcvt.s32.f32 %v827
      %v1084 = vcvt.s32.f32 %v828
      %v1085 = vcvt.s32.f32 %v829
      %v1086 = vcvt.s32.f32 %v830
      %v1087 = vcvt.s32.f32 %v831
      %v1088 = vcvt.s32.f32 %v832
      %v1089 = vcvt.s32.f32 %v833
      %v1090 = vcvt.s32.f32 %v834
      %v1091 = vcvt.s32.f32 %v835
      %v1092 = vcvt.s32.f32 %v836
      %v1093 = vcvt.s32.f32 %v837
      %v1094 = vcvt.s32.f32 %v838
      %v1095 = vcvt.s32.f32 %v839
      %v1096 = vcvt.s32.f32 %v840
      %v1097 = vcvt.s32.f32 %v841
      %v1098 = vcvt.s32.f32 %v842
      %v1099 = vcvt.s32.f32 %v843
      %v1100 = vcvt.s32.f32 %v844
      %v1101 = vcvt.s32.f32 %v845
      %v1102 = vcvt.s32.f32 %v846
      %v1103 = vcvt.s32.f32 %v847
      %v1104 = vcvt.s32.f32 %v848
      %v1105 = vcvt.s32.f32 %v849
      %v1106 = vcvt.s32.f32 %v850
      %v1107 = vcvt.s32.f32 %v851
      %v1108 = vcvt.s32.f32 %v852
      %v1109 = vcvt.s32.f32 %v853
      %v1110 = vcvt.s32.f32 %v854
      %v1111 = vcvt.s32.f32 %v855
      %v1112 = vcvt.s32.f32 %v856
      %v1113 = vcvt.s32.f32 %v857
      %v1114 = vcvt.s32.f32 %v858
      %v1115 = vcvt.s32.f32 %v859
      %v1116 = vcvt.s32.f32 %v860
      %v1117 = vcvt.s32.f32 %v861
      %v1118 = vcvt.s32.f32 %v862
      %v1119 = vcvt.s32.f32 %v863
      %v1120 = vcvt.s32.f32 %v864
      %v1121 = vcvt.s32.f32 %v865
      %v1122 = vcvt.s32.f32 %v866
      %v1123 = vcvt.s32.f32 %v867
      %v1124 = vcvt.s32.f32 %v868
      %v1125 = vcvt.s32.f32 %v869
      %v1126 = vcvt.s32.f32 %v870
      %v1127 = vcvt.s32.f32 %v871
      %v1128 = vcvt.s32.f32 %v872
      %v1129 = vcvt.s32.f32 %v873
      %v1130 = vcvt.s32.f32 %v874
      %v1131 = vcvt.s32.f32 %v875
      %v1132 = vcvt.s32.f32 %v876
      %v1133 = vcvt.s32.f32 %v877
      %v1134 = vcvt.s32.f32 %v878
      %v1135 = vcvt.s32.f32 %v879
      %v1136 = vcvt.s32.f32 %v880
      %v1137 = vcvt.s32.f32 %v881
      %v1138 = vcvt.s32.f32 %v882
      %v1139 = vcvt.s32.f32 %v883
      %v1140 = vcvt.s32.f32 %v884
      %v1141 = vcvt.s32.f32 %v885
      %v1142 = vcvt.s32.f32 %v886
      %v1143 = vcvt.s32.f32 %v887
      %v1144 = vcvt.s32.f32 %v888
      %v1145 = vcvt.s32.f32 %v889
      %v1146 = vcvt.s32.f32 %v890
      %v1147 = vcvt.s32.f32 %v891
      %v1148 = vcvt.s32.f32 %v892
      %v1149 = vcvt.s32.f32 %v893
      %v1150 = vcvt.s32.f32 %v894
      %v1151 = vcvt.s32.f32 %v895
      %v1152 = vcvt.s32.f32 %v896
      %v1153 = vcvt.s32.f32 %v897
      %v1154 = vcvt.s32.f32 %v898
      %v1155 = vcvt.s32.f32 %v899
      %v1156 = vcvt.s32.f32 %v900
      %v1157 = vcvt.s32.f32 %v901
      %v1158 = vcvt.s32.f32 %v902
      %v1159 = vcvt.s32.f32 %v903
      %v1160 = vcvt.s32.f32 %v904
      %v1161 = vcvt.s32.f32 %v905
      %v1162 = vcvt.s32.f32 %v906
      %v1163 = vcvt.s32.f32 %v907
      %v1164 = vcvt.s32.f32 %v908
      %v1165 = vcvt.s32.f32 %v909
      %v1166 = vcvt.s32.f32 %v910
      %v1167 = vcvt.s32.f32 %v911
      %v1168 = vcvt.s32.f32 %v912
      %v1169 = vcvt.s32.f32 %v913
      %v1170 = vcvt.s32.f32 %v914
      %v1171 = vcvt.s32.f32 %v915
      %v1172 = vcvt.s32.f32 %v916
      %v1173 = vcvt.s32.f32 %v917
      %v1174 = vcvt.s32.f32 %v918
      %1175 = vmatpush.msra.mxu0 %v949
      %1176 = vmatpush.msra.mxu0 %v947
      %1177 = vmatpush.msra.mxu0 %v945
      %1178 = vmatpush.msra.mxu0 %v943
      %1179 = vmatpush.msra.mxu0 %v941
      %1180 = vmatpush.msra.mxu0 %v939
      %1181 = vmatpush.msra.mxu0 %v937
      %1182 = vmatpush.msra.mxu0 %v935
      %1183 = vmatpush.msra.mxu0 %v933
      %1184 = vmatpush.msra.mxu0 %v931
      %1185 = vmatpush.msra.mxu0 %v929
      %1186 = vmatpush.msra.mxu0 %v927
      %1187 = vmatpush.msra.mxu0 %v925
      %1188 = vmatpush.msra.mxu0 %v923
      %1189 = vmatpush.msra.mxu0 %v921
      %1190 = vmatpush.msra.mxu0 %v919
      %1191 = vmatmul.f32.gmra.mxu0 %v249
      %v1192 = vpop.f32.mrf.mxu0
      %v1193 = vadd.f32 0.0, %v1192
      %1194 = vmatmul.f32.gmra.mxu0 %v257
      %v1195 = vpop.f32.mrf.mxu0
      %v1196 = vadd.f32 0.0, %v1195
      %1197 = vdwg.mxu0
      %1198 = vmatpush.msra.mxu0 %v981
      %1199 = vmatpush.msra.mxu0 %v979
      %1200 = vmatpush.msra.mxu0 %v977
      %1201 = vmatpush.msra.mxu0 %v975
      %1202 = vmatpush.msra.mxu0 %v973
      %1203 = vmatpush.msra.mxu0 %v971
      %1204 = vmatpush.msra.mxu0 %v969
      %1205 = vmatpush.msra.mxu0 %v967
      %1206 = vmatpush.msra.mxu0 %v965
      %1207 = vmatpush.msra.mxu0 %v963
      %1208 = vmatpush.msra.mxu0 %v961
      %1209 = vmatpush.msra.mxu0 %v959
      %1210 = vmatpush.msra.mxu0 %v957
      %1211 = vmatpush.msra.mxu0 %v955
      %1212 = vmatpush.msra.mxu0 %v953
      %1213 = vmatpush.msra.mxu0 %v951
      %1214 = vmatmul.f32.gmra.mxu0 %v250
      %v1215 = vpop.f32.mrf.mxu0
      %v1216 = vadd.f32 %v1193, %v1215
      %1217 = vmatmul.f32.gmra.mxu0 %v258
      %v1218 = vpop.f32.mrf.mxu0
      %v1219 = vadd.f32 %v1196, %v1218
      %1220 = vdwg.mxu0
      %1221 = vmatpush.msra.mxu0 %v1013
      %1222 = vmatpush.msra.mxu0 %v1011
      %1223 = vmatpush.msra.mxu0 %v1009
      %1224 = vmatpush.msra.mxu0 %v1007
      %1225 = vmatpush.msra.mxu0 %v1005
      %1226 = vmatpush.msra.mxu0 %v1003
      %1227 = vmatpush.msra.mxu0 %v1001
      %1228 = vmatpush.msra.mxu0 %v999
      %1229 = vmatpush.msra.mxu0 %v997
      %1230 = vmatpush.msra.mxu0 %v995
      %1231 = vmatpush.msra.mxu0 %v993
      %1232 = vmatpush.msra.mxu0 %v991
      %1233 = vmatpush.msra.mxu0 %v989
      %1234 = vmatpush.msra.mxu0 %v987
      %1235 = vmatpush.msra.mxu0 %v985
      %1236 = vmatpush.msra.mxu0 %v983
      %1237 = vmatmul.f32.gmra.mxu0 %v251
      %v1238 = vpop.f32.mrf.mxu0
      %v1239 = vadd.f32 %v1216, %v1238
      %1240 = vmatmul.f32.gmra.mxu0 %v259
      %v1241 = vpop.f32.mrf.mxu0
      %v1242 = vadd.f32 %v1219, %v1241
      %1243 = vdwg.mxu0
      %1244 = vmatpush.msra.mxu0 %v1045
      %1245 = vmatpush.msra.mxu0 %v1043
      %1246 = vmatpush.msra.mxu0 %v1041
      %1247 = vmatpush.msra.mxu0 %v1039
      %1248 = vmatpush.msra.mxu0 %v1037
      %1249 = vmatpush.msra.mxu0 %v1035
      %1250 = vmatpush.msra.mxu0 %v1033
      %1251 = vmatpush.msra.mxu0 %v1031
      %1252 = vmatpush.msra.mxu0 %v1029
      %1253 = vmatpush.msra.mxu0 %v1027
      %1254 = vmatpush.msra.mxu0 %v1025
      %1255 = vmatpush.msra.mxu0 %v1023
      %1256 = vmatpush.msra.mxu0 %v1021
      %1257 = vmatpush.msra.mxu0 %v1019
      %1258 = vmatpush.msra.mxu0 %v1017
      %1259 = vmatpush.msra.mxu0 %v1015
      %1260 = vmatmul.f32.gmra.mxu0 %v252
      %v1261 = vpop.f32.mrf.mxu0
      %v1262 = vadd.f32 %v1239, %v1261
      %1263 = vmatmul.f32.gmra.mxu0 %v260
      %v1264 = vpop.f32.mrf.mxu0
      %v1265 = vadd.f32 %v1242, %v1264
      %1266 = vdwg.mxu0
      %1267 = vmatpush.msra.mxu0 %v1077
      %1268 = vmatpush.msra.mxu0 %v1075
      %1269 = vmatpush.msra.mxu0 %v1073
      %1270 = vmatpush.msra.mxu0 %v1071
      %1271 = vmatpush.msra.mxu0 %v1069
      %1272 = vmatpush.msra.mxu0 %v1067
      %1273 = vmatpush.msra.mxu0 %v1065
      %1274 = vmatpush.msra.mxu0 %v1063
      %1275 = vmatpush.msra.mxu0 %v1061
      %1276 = vmatpush.msra.mxu0 %v1059
      %1277 = vmatpush.msra.mxu0 %v1057
      %1278 = vmatpush.msra.mxu0 %v1055
      %1279 = vmatpush.msra.mxu0 %v1053
      %1280 = vmatpush.msra.mxu0 %v1051
      %1281 = vmatpush.msra.mxu0 %v1049
      %1282 = vmatpush.msra.mxu0 %v1047
      %1283 = vmatmul.f32.gmra.mxu0 %v253
      %v1284 = vpop.f32.mrf.mxu0
      %v1285 = vadd.f32 %v1262, %v1284
      %1286 = vmatmul.f32.gmra.mxu0 %v261
      %v1287 = vpop.f32.mrf.mxu0
      %v1288 = vadd.f32 %v1265, %v1287
      %1289 = vdwg.mxu0
      %1290 = vmatpush.msra.mxu0 %v1109
      %1291 = vmatpush.msra.mxu0 %v1107
      %1292 = vmatpush.msra.mxu0 %v1105
      %1293 = vmatpush.msra.mxu0 %v1103
      %1294 = vmatpush.msra.mxu0 %v1101
      %1295 = vmatpush.msra.mxu0 %v1099
      %1296 = vmatpush.msra.mxu0 %v1097
      %1297 = vmatpush.msra.mxu0 %v1095
      %1298 = vmatpush.msra.mxu0 %v1093
      %1299 = vmatpush.msra.mxu0 %v1091
      %1300 = vmatpush.msra.mxu0 %v1089
      %1301 = vmatpush.msra.mxu0 %v1087
      %1302 = vmatpush.msra.mxu0 %v1085
      %1303 = vmatpush.msra.mxu0 %v1083
      %1304 = vmatpush.msra.mxu0 %v1081
      %1305 = vmatpush.msra.mxu0 %v1079
      %1306 = vmatmul.f32.gmra.mxu0 %v254
      %v1307 = vpop.f32.mrf.mxu0
      %v1308 = vadd.f32 %v1285, %v1307
      %1309 = vmatmul.f32.gmra.mxu0 %v262
      %v1310 = vpop.f32.mrf.mxu0
      %v1311 = vadd.f32 %v1288, %v1310
      %1312 = vdwg.mxu0
      %1313 = vmatpush.msra.mxu0 %v1141
      %1314 = vmatpush.msra.mxu0 %v1139
      %1315 = vmatpush.msra.mxu0 %v1137
      %1316 = vmatpush.msra.mxu0 %v1135
      %1317 = vmatpush.msra.mxu0 %v1133
      %1318 = vmatpush.msra.mxu0 %v1131
      %1319 = vmatpush.msra.mxu0 %v1129
      %1320 = vmatpush.msra.mxu0 %v1127
      %1321 = vmatpush.msra.mxu0 %v1125
      %1322 = vmatpush.msra.mxu0 %v1123
      %1323 = vmatpush.msra.mxu0 %v1121
      %1324 = vmatpush.msra.mxu0 %v1119
      %1325 = vmatpush.msra.mxu0 %v1117
      %1326 = vmatpush.msra.mxu0 %v1115
      %1327 = vmatpush.msra.mxu0 %v1113
      %1328 = vmatpush.msra.mxu0 %v1111
      %1329 = vmatmul.f32.gmra.mxu0 %v255
      %v1330 = vpop.f32.mrf.mxu0
      %v1331 = vadd.f32 %v1308, %v1330
      %1332 = vmatmul.f32.gmra.mxu0 %v263
      %v1333 = vpop.f32.mrf.mxu0
      %v1334 = vadd.f32 %v1311, %v1333
      %1335 = vdwg.mxu0
      %1336 = vmatpush.msra.mxu0 %v1173
      %1337 = vmatpush.msra.mxu0 %v1171
      %1338 = vmatpush.msra.mxu0 %v1169
      %1339 = vmatpush.msra.mxu0 %v1167
      %1340 = vmatpush.msra.mxu0 %v1165
      %1341 = vmatpush.msra.mxu0 %v1163
      %1342 = vmatpush.msra.mxu0 %v1161
      %1343 = vmatpush.msra.mxu0 %v1159
      %1344 = vmatpush.msra.mxu0 %v1157
      %1345 = vmatpush.msra.mxu0 %v1155
      %1346 = vmatpush.msra.mxu0 %v1153
      %1347 = vmatpush.msra.mxu0 %v1151
      %1348 = vmatpush.msra.mxu0 %v1149
      %1349 = vmatpush.msra.mxu0 %v1147
      %1350 = vmatpush.msra.mxu0 %v1145
      %1351 = vmatpush.msra.mxu0 %v1143
      %1352 = vmatmul.f32.gmra.mxu0 %v256
      %v1353 = vpop.f32.mrf.mxu0
      %v1354 = vadd.f32 %v1331, %v1353
      %1355 = vmatmul.f32.gmra.mxu0 %v264
      %v1356 = vpop.f32.mrf.mxu0
      %v1357 = vadd.f32 %v1334, %v1356
      %1358 = vdwg.mxu0
      %1359 = vmatpush.msra.mxu0 %v950
      %1360 = vmatpush.msra.mxu0 %v948
      %1361 = vmatpush.msra.mxu0 %v946
      %1362 = vmatpush.msra.mxu0 %v944
      %1363 = vmatpush.msra.mxu0 %v942
      %1364 = vmatpush.msra.mxu0 %v940
      %1365 = vmatpush.msra.mxu0 %v938
      %1366 = vmatpush.msra.mxu0 %v936
      %1367 = vmatpush.msra.mxu0 %v934
      %1368 = vmatpush.msra.mxu0 %v932
      %1369 = vmatpush.msra.mxu0 %v930
      %1370 = vmatpush.msra.mxu0 %v928
      %1371 = vmatpush.msra.mxu0 %v926
      %1372 = vmatpush.msra.mxu0 %v924
      %1373 = vmatpush.msra.mxu0 %v922
      %1374 = vmatpush.msra.mxu0 %v920
      %1375 = vmatmul.f32.gmra.mxu0 %v249
      %v1376 = vpop.f32.mrf.mxu0
      %v1377 = vadd.f32 0.0, %v1376
      %1378 = vmatmul.f32.gmra.mxu0 %v257
      %v1379 = vpop.f32.mrf.mxu0
      %v1380 = vadd.f32 0.0, %v1379
      %1381 = vdwg.mxu0
      %1382 = vmatpush.msra.mxu0 %v982
      %1383 = vmatpush.msra.mxu0 %v980
      %1384 = vmatpush.msra.mxu0 %v978
      %1385 = vmatpush.msra.mxu0 %v976
      %1386 = vmatpush.msra.mxu0 %v974
      %1387 = vmatpush.msra.mxu0 %v972
      %1388 = vmatpush.msra.mxu0 %v970
      %1389 = vmatpush.msra.mxu0 %v968
      %1390 = vmatpush.msra.mxu0 %v966
      %1391 = vmatpush.msra.mxu0 %v964
      %1392 = vmatpush.msra.mxu0 %v962
      %1393 = vmatpush.msra.mxu0 %v960
      %1394 = vmatpush.msra.mxu0 %v958
      %1395 = vmatpush.msra.mxu0 %v956
      %1396 = vmatpush.msra.mxu0 %v954
      %1397 = vmatpush.msra.mxu0 %v952
      %1398 = vmatmul.f32.gmra.mxu0 %v250
      %v1399 = vpop.f32.mrf.mxu0
      %v1400 = vadd.f32 %v1377, %v1399
      %1401 = vmatmul.f32.gmra.mxu0 %v258
      %v1402 = vpop.f32.mrf.mxu0
      %v1403 = vadd.f32 %v1380, %v1402
      %1404 = vdwg.mxu0
      %1405 = vmatpush.msra.mxu0 %v1014
      %1406 = vmatpush.msra.mxu0 %v1012
      %1407 = vmatpush.msra.mxu0 %v1010
      %1408 = vmatpush.msra.mxu0 %v1008
      %1409 = vmatpush.msra.mxu0 %v1006
      %1410 = vmatpush.msra.mxu0 %v1004
      %1411 = vmatpush.msra.mxu0 %v1002
      %1412 = vmatpush.msra.mxu0 %v1000
      %1413 = vmatpush.msra.mxu0 %v998
      %1414 = vmatpush.msra.mxu0 %v996
      %1415 = vmatpush.msra.mxu0 %v994
      %1416 = vmatpush.msra.mxu0 %v992
      %1417 = vmatpush.msra.mxu0 %v990
      %1418 = vmatpush.msra.mxu0 %v988
      %1419 = vmatpush.msra.mxu0 %v986
      %1420 = vmatpush.msra.mxu0 %v984
      %1421 = vmatmul.f32.gmra.mxu0 %v251
      %v1422 = vpop.f32.mrf.mxu0
      %v1423 = vadd.f32 %v1400, %v1422
      %1424 = vmatmul.f32.gmra.mxu0 %v259
      %v1425 = vpop.f32.mrf.mxu0
      %v1426 = vadd.f32 %v1403, %v1425
      %1427 = vdwg.mxu0
      %1428 = vmatpush.msra.mxu0 %v1046
      %1429 = vmatpush.msra.mxu0 %v1044
      %1430 = vmatpush.msra.mxu0 %v1042
      %1431 = vmatpush.msra.mxu0 %v1040
      %1432 = vmatpush.msra.mxu0 %v1038
      %1433 = vmatpush.msra.mxu0 %v1036
      %1434 = vmatpush.msra.mxu0 %v1034
      %1435 = vmatpush.msra.mxu0 %v1032
      %1436 = vmatpush.msra.mxu0 %v1030
      %1437 = vmatpush.msra.mxu0 %v1028
      %1438 = vmatpush.msra.mxu0 %v1026
      %1439 = vmatpush.msra.mxu0 %v1024
      %1440 = vmatpush.msra.mxu0 %v1022
      %1441 = vmatpush.msra.mxu0 %v1020
      %1442 = vmatpush.msra.mxu0 %v1018
      %1443 = vmatpush.msra.mxu0 %v1016
      %1444 = vmatmul.f32.gmra.mxu0 %v252
      %v1445 = vpop.f32.mrf.mxu0
      %v1446 = vadd.f32 %v1423, %v1445
      %1447 = vmatmul.f32.gmra.mxu0 %v260
      %v1448 = vpop.f32.mrf.mxu0
      %v1449 = vadd.f32 %v1426, %v1448
      %1450 = vdwg.mxu0
      %1451 = vmatpush.msra.mxu0 %v1078
      %1452 = vmatpush.msra.mxu0 %v1076
      %1453 = vmatpush.msra.mxu0 %v1074
      %1454 = vmatpush.msra.mxu0 %v1072
      %1455 = vmatpush.msra.mxu0 %v1070
      %1456 = vmatpush.msra.mxu0 %v1068
      %1457 = vmatpush.msra.mxu0 %v1066
      %1458 = vmatpush.msra.mxu0 %v1064
      %1459 = vmatpush.msra.mxu0 %v1062
      %1460 = vmatpush.msra.mxu0 %v1060
      %1461 = vmatpush.msra.mxu0 %v1058
      %1462 = vmatpush.msra.mxu0 %v1056
      %1463 = vmatpush.msra.mxu0 %v1054
      %1464 = vmatpush.msra.mxu0 %v1052
      %1465 = vmatpush.msra.mxu0 %v1050
      %1466 = vmatpush.msra.mxu0 %v1048
      %1467 = vmatmul.f32.gmra.mxu0 %v253
      %v1468 = vpop.f32.mrf.mxu0
      %v1469 = vadd.f32 %v1446, %v1468
      %1470 = vmatmul.f32.gmra.mxu0 %v261
      %v1471 = vpop.f32.mrf.mxu0
      %v1472 = vadd.f32 %v1449, %v1471
      %1473 = vdwg.mxu0
      %1474 = vmatpush.msra.mxu0 %v1110
      %1475 = vmatpush.msra.mxu0 %v1108
      %1476 = vmatpush.msra.mxu0 %v1106
      %1477 = vmatpush.msra.mxu0 %v1104
      %1478 = vmatpush.msra.mxu0 %v1102
      %1479 = vmatpush.msra.mxu0 %v1100
      %1480 = vmatpush.msra.mxu0 %v1098
      %1481 = vmatpush.msra.mxu0 %v1096
      %1482 = vmatpush.msra.mxu0 %v1094
      %1483 = vmatpush.msra.mxu0 %v1092
      %1484 = vmatpush.msra.mxu0 %v1090
      %1485 = vmatpush.msra.mxu0 %v1088
      %1486 = vmatpush.msra.mxu0 %v1086
      %1487 = vmatpush.msra.mxu0 %v1084
      %1488 = vmatpush.msra.mxu0 %v1082
      %1489 = vmatpush.msra.mxu0 %v1080
      %1490 = vmatmul.f32.gmra.mxu0 %v254
      %v1491 = vpop.f32.mrf.mxu0
      %v1492 = vadd.f32 %v1469, %v1491
      %1493 = vmatmul.f32.gmra.mxu0 %v262
      %v1494 = vpop.f32.mrf.mxu0
      %v1495 = vadd.f32 %v1472, %v1494
      %1496 = vdwg.mxu0
      %1497 = vmatpush.msra.mxu0 %v1142
      %1498 = vmatpush.msra.mxu0 %v1140
      %1499 = vmatpush.msra.mxu0 %v1138
      %1500 = vmatpush.msra.mxu0 %v1136
      %1501 = vmatpush.msra.mxu0 %v1134
      %1502 = vmatpush.msra.mxu0 %v1132
      %1503 = vmatpush.msra.mxu0 %v1130
      %1504 = vmatpush.msra.mxu0 %v1128
      %1505 = vmatpush.msra.mxu0 %v1126
      %1506 = vmatpush.msra.mxu0 %v1124
      %1507 = vmatpush.msra.mxu0 %v1122
      %1508 = vmatpush.msra.mxu0 %v1120
      %1509 = vmatpush.msra.mxu0 %v1118
      %1510 = vmatpush.msra.mxu0 %v1116
      %1511 = vmatpush.msra.mxu0 %v1114
      %1512 = vmatpush.msra.mxu0 %v1112
      %1513 = vmatmul.f32.gmra.mxu0 %v255
      %v1514 = vpop.f32.mrf.mxu0
      %v1515 = vadd.f32 %v1492, %v1514
      %1516 = vmatmul.f32.gmra.mxu0 %v263
      %v1517 = vpop.f32.mrf.mxu0
      %v1518 = vadd.f32 %v1495, %v1517
      %1519 = vdwg.mxu0
      %1520 = vmatpush.msra.mxu0 %v1174
      %1521 = vmatpush.msra.mxu0 %v1172
      %1522 = vmatpush.msra.mxu0 %v1170
      %1523 = vmatpush.msra.mxu0 %v1168
      %1524 = vmatpush.msra.mxu0 %v1166
      %1525 = vmatpush.msra.mxu0 %v1164
      %1526 = vmatpush.msra.mxu0 %v1162
      %1527 = vmatpush.msra.mxu0 %v1160
      %1528 = vmatpush.msra.mxu0 %v1158
      %1529 = vmatpush.msra.mxu0 %v1156
      %1530 = vmatpush.msra.mxu0 %v1154
      %1531 = vmatpush.msra.mxu0 %v1152
      %1532 = vmatpush.msra.mxu0 %v1150
      %1533 = vmatpush.msra.mxu0 %v1148
      %1534 = vmatpush.msra.mxu0 %v1146
      %1535 = vmatpush.msra.mxu0 %v1144
      %1536 = vmatmul.f32.gmra.mxu0 %v256
      %v1537 = vpop.f32.mrf.mxu0
      %v1538 = vadd.f32 %v1515, %v1537
      %1539 = vmatmul.f32.gmra.mxu0 %v264
      %v1540 = vpop.f32.mrf.mxu0
      %v1541 = vadd.f32 %v1518, %v1540
      %1542 = vdwg.mxu0
      %1543 = vst [vmem:[%s116] sm:$0xff] %v1354
      %1544 = vst [vmem:[%s116 + $0x8] sm:$0xff] %v1538
      %1545 = vst [vmem:[%s116 + $0x10] sm:$0xff] %v1357
      %1546 = vst [vmem:[%s116 + $0x18] sm:$0xff] %v1541
      %p1547 = scmp.lt.s32.totalorder %s12, 1
      %s1548 = scalar_select %p1547, %s12, 1
      %s1549 = smul.addr %s1548, 4
      %s1550 = smul.addr %s1549, 8
      %s1551 = scalar_lea.vmem %s1, %s1550
      // Predicated region
      $region25: #{_lambda_.12} parent=23 // pred_check
        %p1552 = pneg %p56
      $region26: #{_lambda_.12} parent=23 // pred_check_branch
        %1554 = sbr.rel (%p1552) target = $region28
      $region27: #{_lambda_.12} parent=23 // pred_region
        _
      $region28: #{_lambda_.12} parent=23 // pred_fallthru
        _
    $region24: #{_lambda_.12} parent=5 // pred_fallthru
      _
    %p1555 = scmp.le.s32.totalorder 2, %s7
    // Predicated region
    $region29: #{_lambda_.12} parent=5 // pred_check
      %p1556 = pneg %p1555
    $region30: #{_lambda_.12} parent=5 // pred_check_branch
      %1558 = sbr.rel (%p1556) target = $region32
    $region31: #{_lambda_.12} parent=5 // pred_region
      %s1559 = ssub.s32 %s7, 2
      // Predicated region
      $region33: #{_lambda_.12} parent=31 // pred_check
        %p1560 = pneg %p62
      $region34: #{_lambda_.12} parent=31 // pred_check_branch
        %1562 = sbr.rel (%p1560) target = $region36
      $region35: #{_lambda_.12} parent=31 // pred_region
        %p1563 = scmp.lt.s32.totalorder %s13, 1
        %s1564 = scalar_select %p1563, %s13, 1
        %s1565 = smul.addr %s1564, 4
        %s1566 = smul.addr %s1565, 8
        %s1567 = scalar_lea.vmem %s1, %s1566
      $region36: #{_lambda_.12} parent=31 // pred_fallthru
        _
    $region32: #{_lambda_.12} parent=5 // pred_fallthru
      _
  $region6: #{_lambda_.12} parent=0 // loop_footer
    %s11 = sadd.s32 1, %s7
  $region7: #{_lambda_.12} parent=0 // loop_footer_branch
    %6 = sbr.rel target = $region3
  $region8: #{_lambda_.12} parent=0 // loop_exit
    _

// kernel: _lambda_.15
$region0: #{_lambda_.15}
  #allocation0 [shape = 'u32[]', space=smem, size = 0x4, offset = 0x4, fixed_abs, tag = 'smem constant byte address 0x4 - core index']
  #allocation1 [shape = 'u32[72,128]{1,0:T(1,128)}', space=vmem, size = 0x9000, scoped, tag = 'internal scratch']
  %s0 = inlined_call_operand.vmem [shape: f32[2,16,256], index: 0, kind: input, shape index: {}]
  %s1 = inlined_call_operand.vmem [shape: f32[2,16,64], index: 1, kind: output, shape index: {}]
  %s2 = sld [smem:[#allocation0]]
  $region37: #{_lambda_.15} parent=0
    _
  %s4 = ssub.s32 1, %s2
  %s5 = scalar_select 0, %s4, %s2
  loop: start=0, step=1, limit=4
  $region2: #{_lambda_.15} parent=0 // loop_pre_header
    _
  $region3: #{_lambda_.15} parent=0 // loop_header
    %s7 = sphi 0, %s11
    %p8 = scmp.ge.s32.totalorder %s7, 4
    %s17 = sphi 0, %s19
    %s20 = sphi 0, %s17
    %s21 = sphi 0, %s20
    %s37 = sphi 0, %s21
    %s43 = sphi 0, %s45
    %s46 = sphi 0, %s43
    %s47 = sphi 0, %s46
    %s63 = sphi 0, %s47
  $region4: #{_lambda_.15} parent=0 // loop_header_branch
    %10 = sbr.rel (%p8) target = $region8
  $region5: #{_lambda_.15} parent=0 // loop_body
    %s12 = ssub.s32 %s7, 1
    %s13 = ssub.s32 %s7, 2
    %s14 = sadd.s32 %s7, 1
    %s15 = ssub.s32 %s7, %s14
    %p16 = scmp.eq.s32.totalorder %s15, 0
    %s18 = sadd.s32 %s17, 1
    %s19 = scalar_select %p16, %s17, %s18
    %p22 = pneg %p16
    %p23 = scmp.eq.s32.totalorder %s7, 1
    %p24 = por %p22, %p23
    %p25 = scmp.ne.s32.totalorder %s17, %s20
    %p26 = scmp.eq.s32.totalorder %s7, 0
    %p27 = por %p25, %p26
    %p28 = scmp.ne.s32.totalorder %s17, %s20
    %p29 = scmp.eq.s32.totalorder %s12, 1
    %p30 = por %p28, %p29
    %p31 = scmp.ne.s32.totalorder %s20, %s21
    %p32 = scmp.eq.s32.totalorder %s12, 0
    %p33 = por %p31, %p32
    %p34 = scmp.ne.s32.totalorder %s20, %s21
    %p35 = scmp.eq.s32.totalorder %s13, 1
    %p36 = por %p34, %p35
    %p38 = scmp.ne.s32.totalorder %s21, %s37
    %p39 = scmp.eq.s32.totalorder %s13, 0
    %p40 = por %p38, %p39
    %s41 = ssub.s32 %s7, %s14
    %p42 = scmp.eq.s32.totalorder %s41, 0
    %s44 = sadd.s32 %s43, 1
    %s45 = scalar_select %p42, %s43, %s44
    %p48 = pneg %p42
    %p49 = scmp.eq.s32.totalorder %s7, 1
    %p50 = por %p48, %p49
    %p51 = scmp.ne.s32.totalorder %s43, %s46
    %p52 = scmp.eq.s32.totalorder %s7, 0
    %p53 = por %p51, %p52
    %p54 = scmp.ne.s32.totalorder %s43, %s46
    %p55 = scmp.eq.s32.totalorder %s12, 1
    %p56 = por %p54, %p55
    %p57 = scmp.ne.s32.totalorder %s46, %s47
    %p58 = scmp.eq.s32.totalorder %s12, 0
    %p59 = por %p57, %p58
    %p60 = scmp.ne.s32.totalorder %s46, %s47
    %p61 = scmp.eq.s32.totalorder %s13, 1
    %p62 = por %p60, %p61
    %p64 = scmp.ne.s32.totalorder %s47, %s63
    %p65 = scmp.eq.s32.totalorder %s13, 0
    %p66 = por %p64, %p65
    %p67 = scmp.le.s32.totalorder 1, %s7
    %p68 = scmp.lt.s32.totalorder %s7, 3
    %p69 = pnand %p67, %p68
    %p70 = pneg %p69
    // Predicated region
    $region9: #{_lambda_.15} parent=5 // pred_check
      _
    $region10: #{_lambda_.15} parent=5 // pred_check_branch
      %72 = sbr.rel (%p69) target = $region12
    $region11: #{_lambda_.15} parent=5 // pred_region
      %s73 = ssub.s32 %s7, 1
    $region12: #{_lambda_.15} parent=5 // pred_fallthru
      _
    %p74 = scmp.lt.s32.totalorder %s7, 2
    // Predicated region
    $region13: #{_lambda_.15} parent=5 // pred_check
      %p75 = pneg %p74
    $region14: #{_lambda_.15} parent=5 // pred_check_branch
      %77 = sbr.rel (%p75) target = $region16
    $region15: #{_lambda_.15} parent=5 // pred_region
      // Predicated region
      $region17: #{_lambda_.15} parent=15 // pred_check
        %p78 = pneg %p27
      $region18: #{_lambda_.15} parent=15 // pred_check_branch
        %80 = sbr.rel (%p78) target = $region20
      $region19: #{_lambda_.15} parent=15 // pred_region
        %p81 = scmp.lt.s32.totalorder %s7, 1
        %s82 = scalar_select %p81, %s7, 1
        %s83 = smul.addr %s82, 4
        %s84 = smul.addr %s83, 8
        %s85 = scalar_lea.vmem %s0, %s84
      $region20: #{_lambda_.15} parent=15 // pred_fallthru
        _
    $region16: #{_lambda_.15} parent=5 // pred_fallthru
      _
    %p86 = scmp.le.s32.totalorder 1, %s7
    %p87 = scmp.lt.s32.totalorder %s7, 3
    %p88 = pnand %p86, %p87
    %p89 = pneg %p88
    // Predicated region
    $region21: #{_lambda_.15} parent=5 // pred_check
      _
    $region22: #{_lambda_.15} parent=5 // pred_check_branch
      %91 = sbr.rel (%p88) target = $region24
    $region23: #{_lambda_.15} parent=5 // pred_region
      %s92 = ssub.s32 %s7, 1
      %p93 = scmp.lt.s32.totalorder %s12, 1
      %s94 = scalar_select %p93, %s12, 1
      %s95 = smul.addr %s94, 4
      %s96 = smul.addr %s95, 8
      %s97 = scalar_lea.vmem %s0, %s96
      %p98 = pneg %p33
      %p99 = pneg %p30
      %p100 = pneg %p59
      %p101 = pneg %p56
      %p102 = scmp.lt.s32.totalorder %s12, 1
      %s103 = scalar_select %p102, %s12, 1
      %s104 = smul.addr %s103, 2
      %s105 = smul.addr %s104, 8
      %s106 = scalar_lea.vmem %s1, %s105
      %p107 = scmp.lt.s32.totalorder %s12, 1
      %s108 = scalar_select %p107, %s12, 1
      %s109 = smul.addr %s108, 4
      %s110 = smul.addr %s109, 8
      %s111 = scalar_lea.vmem %s0, %s110
      %p112 = scmp.lt.s32.totalorder %s12, 1
      %s113 = scalar_select %p112, %s12, 1
      %s114 = smul.addr %s113, 2
      %s115 = smul.addr %s114, 8
      %s116 = scalar_lea.vmem %s1, %s115
      %v117 = vld [vmem:[%s111] sm:$0xff]
      %v118 = vld [vmem:[%s111 + $0x8] sm:$0xff]
      %v119 = vld [vmem:[%s111 + $0x10] sm:$0xff]
      %v120 = vld [vmem:[%s111 + $0x18] sm:$0xff]
      %121 = vrot.lane.b32.xlu0 %v117, 127
      %v122 = vpop.permute.xlu0 %121
      %123 = vrot.lane.b32.xlu0 %v119, 127
      %v124 = vpop.permute.xlu0 %123
      %125 = vrot.lane.b32.xlu0 %v118, 127
      %v126 = vpop.permute.xlu0 %125
      %127 = vrot.lane.b32.xlu0 %v120, 127
      %v128 = vpop.permute.xlu0 %127
      %v129 = vlaneseq
      %v130 = vand.u32 %v129, 127
      %vm131 = vcmp.lt.s32.totalorder %v130, 127
      %v132 = vsel %vm131, %v122, %v126
      %v133 = vsel %vm131, %v124, %v128
      %v134 = vsel %vm131, %v126, %v122
      %v135 = vsel %vm131, %v128, %v124
      %v136 = vmax.f32 %v117, %v132
      %v137 = vmax.f32 %v118, %v134
      %v138 = vmax.f32 %v119, %v133
      %v139 = vmax.f32 %v120, %v135
      %140 = vrot.lane.b32.xlu0 %v136, 112
      %v141 = vpop.permute.xlu0 %140
      %142 = vrot.lane.b32.xlu0 %v138, 112
      %v143 = vpop.permute.xlu0 %142
      %144 = vrot.lane.b32.xlu0 %v137, 112
      %v145 = vpop.permute.xlu0 %144
      %146 = vrot.lane.b32.xlu0 %v139, 112
      %v147 = vpop.permute.xlu0 %146
      %vm148 = vcmp.lt.s32.totalorder %v130, 112
      %v149 = vsel %vm148, %v141, %v145
      %v150 = vsel %vm148, %v143, %v147
      %v151 = vsel %vm148, %v145, %v141
      %v152 = vsel %vm148, %v147, %v143
      %v153 = vmax.f32 %v136, %v149
      %v154 = vmax.f32 %v137, %v151
      %v155 = vmax.f32 %v138, %v150
      %v156 = vmax.f32 %v139, %v152
      %v157 = vlaneseq
      %v158 = vshrl.u32 %v157, 7
      %v159 = vadd.s32 %v158, 8
      %v160 = vadd.s32 %v158, 16
      %v161 = vadd.s32 %v158, 24
      %v162 = vadd.s32 %v158, 32
      %v163 = vadd.s32 %v158, 40
      %v164 = vadd.s32 %v158, 48
      %v165 = vadd.s32 %v158, 56
      %v166 = vadd.s32 %v158, 64
      %v167 = vadd.s32 %v158, 72
      %v168 = vadd.s32 %v158, 80
      %v169 = vadd.s32 %v158, 88
      %v170 = vadd.s32 %v158, 96
      %v171 = vadd.s32 %v158, 104
      %v172 = vadd.s32 %v158, 112
      %v173 = vadd.s32 %v158, 120
      %v174 = vadd.s32 %v158, 128
      %v175 = vadd.s32 %v158, 136
      %v176 = vadd.s32 %v158, 144
      %v177 = vadd.s32 %v158, 152
      %v178 = vadd.s32 %v158, 160
      %v179 = vadd.s32 %v158, 168
      %v180 = vadd.s32 %v158, 176
      %v181 = vadd.s32 %v158, 184
      %v182 = vadd.s32 %v158, 192
      %v183 = vadd.s32 %v158, 200
      %v184 = vadd.s32 %v158, 208
      %v185 = vadd.s32 %v158, 216
      %v186 = vadd.s32 %v158, 224
      %v187 = vadd.s32 %v158, 232
      %v188 = vadd.s32 %v158, 240
      %v189 = vadd.s32 %v158, 248
      %v190 = vshra.s32 %v130, 3
      %v191 = vmul.u32 %v190, 2
      %v192 = vmul.u32 %v191, 16
      %v193 = vand.u32 %v130, 7
      %v194 = vmul.u32 %v193, 2
      %v195 = vadd.s32 %v192, %v194
      %vm196 = vcmp.eq.s32.totalorder %v158, %v195
      %vm197 = vcmp.eq.s32.totalorder %v159, %v195
      %vm198 = vcmp.eq.s32.totalorder %v160, %v195
      %vm199 = vcmp.eq.s32.totalorder %v161, %v195
      %vm200 = vcmp.eq.s32.totalorder %v162, %v195
      %vm201 = vcmp.eq.s32.totalorder %v163, %v195
      %vm202 = vcmp.eq.s32.totalorder %v164, %v195
      %vm203 = vcmp.eq.s32.totalorder %v165, %v195
      %vm204 = vcmp.eq.s32.totalorder %v166, %v195
      %vm205 = vcmp.eq.s32.totalorder %v167, %v195
      %vm206 = vcmp.eq.s32.totalorder %v168, %v195
      %vm207 = vcmp.eq.s32.totalorder %v169, %v195
      %vm208 = vcmp.eq.s32.totalorder %v170, %v195
      %vm209 = vcmp.eq.s32.totalorder %v171, %v195
      %vm210 = vcmp.eq.s32.totalorder %v172, %v195
      %vm211 = vcmp.eq.s32.totalorder %v173, %v195
      %vm212 = vcmp.eq.s32.totalorder %v174, %v195
      %vm213 = vcmp.eq.s32.totalorder %v175, %v195
      %vm214 = vcmp.eq.s32.totalorder %v176, %v195
      %vm215 = vcmp.eq.s32.totalorder %v177, %v195
      %vm216 = vcmp.eq.s32.totalorder %v178, %v195
      %vm217 = vcmp.eq.s32.totalorder %v179, %v195
      %vm218 = vcmp.eq.s32.totalorder %v180, %v195
      %vm219 = vcmp.eq.s32.totalorder %v181, %v195
      %vm220 = vcmp.eq.s32.totalorder %v182, %v195
      %vm221 = vcmp.eq.s32.totalorder %v183, %v195
      %vm222 = vcmp.eq.s32.totalorder %v184, %v195
      %vm223 = vcmp.eq.s32.totalorder %v185, %v195
      %vm224 = vcmp.eq.s32.totalorder %v186, %v195
      %vm225 = vcmp.eq.s32.totalorder %v187, %v195
      %vm226 = vcmp.eq.s32.totalorder %v188, %v195
      %vm227 = vcmp.eq.s32.totalorder %v189, %v195
      %v228 = vsel %vm196, 1, 0
      %v229 = vsel %vm197, 1, 0
      %v230 = vsel %vm198, 1, 0
      %v231 = vsel %vm199, 1, 0
      %v232 = vsel %vm200, 1, 0
      %v233 = vsel %vm201, 1, 0
      %v234 = vsel %vm202, 1, 0
      %v235 = vsel %vm203, 1, 0
      %v236 = vsel %vm204, 1, 0
      %v237 = vsel %vm205, 1, 0
      %v238 = vsel %vm206, 1, 0
      %v239 = vsel %vm207, 1, 0
      %v240 = vsel %vm208, 1, 0
      %v241 = vsel %vm209, 1, 0
      %v242 = vsel %vm210, 1, 0
      %v243 = vsel %vm211, 1, 0
      %v244 = vsel %vm212, 1, 0
      %v245 = vsel %vm213, 1, 0
      %v246 = vsel %vm214, 1, 0
      %v247 = vsel %vm215, 1, 0
      %v248 = vsel %vm216, 1, 0
      %v249 = vsel %vm217, 1, 0
      %v250 = vsel %vm218, 1, 0
      %v251 = vsel %vm219, 1, 0
      %v252 = vsel %vm220, 1, 0
      %v253 = vsel %vm221, 1, 0
      %v254 = vsel %vm222, 1, 0
      %v255 = vsel %vm223, 1, 0
      %v256 = vsel %vm224, 1, 0
      %v257 = vsel %vm225, 1, 0
      %v258 = vsel %vm226, 1, 0
      %v259 = vsel %vm227, 1, 0
      %v260 = vcvt.s32.f32 %v228
      %v261 = vcvt.s32.f32 %v229
      %v262 = vcvt.s32.f32 %v230
      %v263 = vcvt.s32.f32 %v231
      %v264 = vcvt.s32.f32 %v232
      %v265 = vcvt.s32.f32 %v233
      %v266 = vcvt.s32.f32 %v234
      %v267 = vcvt.s32.f32 %v235
      %v268 = vcvt.s32.f32 %v236
      %v269 = vcvt.s32.f32 %v237
      %v270 = vcvt.s32.f32 %v238
      %v271 = vcvt.s32.f32 %v239
      %v272 = vcvt.s32.f32 %v240
      %v273 = vcvt.s32.f32 %v241
      %v274 = vcvt.s32.f32 %v242
      %v275 = vcvt.s32.f32 %v243
      %v276 = vcvt.s32.f32 %v244
      %v277 = vcvt.s32.f32 %v245
      %v278 = vcvt.s32.f32 %v246
      %v279 = vcvt.s32.f32 %v247
      %v280 = vcvt.s32.f32 %v248
      %v281 = vcvt.s32.f32 %v249
      %v282 = vcvt.s32.f32 %v250
      %v283 = vcvt.s32.f32 %v251
      %v284 = vcvt.s32.f32 %v252
      %v285 = vcvt.s32.f32 %v253
      %v286 = vcvt.s32.f32 %v254
      %v287 = vcvt.s32.f32 %v255
      %v288 = vcvt.s32.f32 %v256
      %v289 = vcvt.s32.f32 %v257
      %v290 = vcvt.s32.f32 %v258
      %v291 = vcvt.s32.f32 %v259
      %292 = vmatpush.msra.mxu0 %v275
      %293 = vmatpush.msra.mxu0 %v274
      %294 = vmatpush.msra.mxu0 %v273
      %295 = vmatpush.msra.mxu0 %v272
      %296 = vmatpush.msra.mxu0 %v271
      %297 = vmatpush.msra.mxu0 %v270
      %298 = vmatpush.msra.mxu0 %v269
      %299 = vmatpush.msra.mxu0 %v268
      %300 = vmatpush.msra.mxu0 %v267
      %301 = vmatpush.msra.mxu0 %v266
      %302 = vmatpush.msra.mxu0 %v265
      %303 = vmatpush.msra.mxu0 %v264
      %304 = vmatpush.msra.mxu0 %v263
      %305 = vmatpush.msra.mxu0 %v262
      %306 = vmatpush.msra.mxu0 %v261
      %307 = vmatpush.msra.mxu0 %v260
      %308 = vmatmul.f32.gmra.mxu0 %v153
      %v309 = vpop.f32.mrf.mxu0
      %v310 = vadd.f32 0.0, %v309
      %311 = vmatmul.f32.gmra.mxu0 %v155
      %v312 = vpop.f32.mrf.mxu0
      %v313 = vadd.f32 0.0, %v312
      %314 = vdwg.mxu0
      %315 = vmatpush.msra.mxu0 %v291
      %316 = vmatpush.msra.mxu0 %v290
      %317 = vmatpush.msra.mxu0 %v289
      %318 = vmatpush.msra.mxu0 %v288
      %319 = vmatpush.msra.mxu0 %v287
      %320 = vmatpush.msra.mxu0 %v286
      %321 = vmatpush.msra.mxu0 %v285
      %322 = vmatpush.msra.mxu0 %v284
      %323 = vmatpush.msra.mxu0 %v283
      %324 = vmatpush.msra.mxu0 %v282
      %325 = vmatpush.msra.mxu0 %v281
      %326 = vmatpush.msra.mxu0 %v280
      %327 = vmatpush.msra.mxu0 %v279
      %328 = vmatpush.msra.mxu0 %v278
      %329 = vmatpush.msra.mxu0 %v277
      %330 = vmatpush.msra.mxu0 %v276
      %331 = vmatmul.f32.gmra.mxu0 %v154
      %v332 = vpop.f32.mrf.mxu0
      %v333 = vadd.f32 %v310, %v332
      %334 = vmatmul.f32.gmra.mxu0 %v156
      %v335 = vpop.f32.mrf.mxu0
      %v336 = vadd.f32 %v313, %v335
      %337 = vdwg.mxu0
      %vm338 = vcmask 523264
      %339 = vst.msk [vmem:[%s116] sm:$0xff] %vm338, %v333
      %340 = vst.msk [vmem:[%s116 + $0x8] sm:$0xff] %vm338, %v336
      %p341 = scmp.lt.s32.totalorder %s12, 1
      %s342 = scalar_select %p341, %s12, 1
      %s343 = smul.addr %s342, 2
      %s344 = smul.addr %s343, 8
      %s345 = scalar_lea.vmem %s1, %s344
      // Predicated region
      $region25: #{_lambda_.15} parent=23 // pred_check
        %p346 = pneg %p56
      $region26: #{_lambda_.15} parent=23 // pred_check_branch
        %348 = sbr.rel (%p346) target = $region28
      $region27: #{_lambda_.15} parent=23 // pred_region
        _
      $region28: #{_lambda_.15} parent=23 // pred_fallthru
        _
    $region24: #{_lambda_.15} parent=5 // pred_fallthru
      _
    %p349 = scmp.le.s32.totalorder 2, %s7
    // Predicated region
    $region29: #{_lambda_.15} parent=5 // pred_check
      %p350 = pneg %p349
    $region30: #{_lambda_.15} parent=5 // pred_check_branch
      %352 = sbr.rel (%p350) target = $region32
    $region31: #{_lambda_.15} parent=5 // pred_region
      %s353 = ssub.s32 %s7, 2
      // Predicated region
      $region33: #{_lambda_.15} parent=31 // pred_check
        %p354 = pneg %p62
      $region34: #{_lambda_.15} parent=31 // pred_check_branch
        %356 = sbr.rel (%p354) target = $region36
      $region35: #{_lambda_.15} parent=31 // pred_region
        %p357 = scmp.lt.s32.totalorder %s13, 1
        %s358 = scalar_select %p357, %s13, 1
        %s359 = smul.addr %s358, 2
        %s360 = smul.addr %s359, 8
        %s361 = scalar_lea.vmem %s1, %s360
      $region36: #{_lambda_.15} parent=31 // pred_fallthru
        _
    $region32: #{_lambda_.15} parent=5 // pred_fallthru
      _
  $region6: #{_lambda_.15} parent=0 // loop_footer
    %s11 = sadd.s32 1, %s7
  $region7: #{_lambda_.15} parent=0 // loop_footer_branch
    %6 = sbr.rel target = $region3
  $region8: #{_lambda_.15} parent=0 // loop_exit
    _

// kernel: _lambda_.13
$region0: #{_lambda_.13}
  #allocation0 [shape = 'u32[]', space=smem, size = 0x4, offset = 0x4, fixed_abs, tag = 'smem constant byte address 0x4 - core index']
  #allocation1 [shape = 'u32[72,128]{1,0:T(1,128)}', space=vmem, size = 0x9000, scoped, tag = 'internal scratch']
  %s0 = inlined_call_operand.vmem [shape: f32[2,16,256], index: 0, kind: input, shape index: {}]
  %s1 = inlined_call_operand.vmem [shape: f32[16,1], index: 1, kind: input, shape index: {}]
  %s2 = inlined_call_operand.vmem [shape: f32[16,1], index: 2, kind: input, shape index: {}]
  %s3 = inlined_call_operand.vmem [shape: f32[8,16], index: 3, kind: input, shape index: {}]
  %s4 = inlined_call_operand.vmem [shape: f32[8,1], index: 4, kind: input, shape index: {}]
  %s5 = inlined_call_operand.vmem [shape: f32[8,1], index: 5, kind: input, shape index: {}]
  %s6 = inlined_call_operand.vmem [shape: f32[8,1], index: 6, kind: input, shape index: {}]
  %s7 = inlined_call_operand.vmem [shape: f32[8,72], index: 7, kind: input, shape index: {}]
  %s8 = inlined_call_operand.vmem [shape: f32[8,1], index: 8, kind: input, shape index: {}]
  %s9 = inlined_call_operand.vmem [shape: f32[8,1], index: 9, kind: input, shape index: {}]
  %s10 = inlined_call_operand.vmem [shape: f32[8,1], index: 10, kind: input, shape index: {}]
  %s11 = inlined_call_operand.vmem [shape: f32[16,8], index: 11, kind: input, shape index: {}]
  %s12 = inlined_call_operand.vmem [shape: f32[16,1], index: 12, kind: input, shape index: {}]
  %s13 = inlined_call_operand.vmem [shape: f32[2,16,256], index: 13, kind: output, shape index: {}]
  %s14 = sld [smem:[#allocation0]]
  $region85: #{_lambda_.13} parent=0
    _
  %s16 = ssub.s32 1, %s14
  %s17 = scalar_select 0, %s16, %s14
  loop: start=0, step=1, limit=4
  $region2: #{_lambda_.13} parent=0 // loop_pre_header
    _
  $region3: #{_lambda_.13} parent=0 // loop_header
    %s19 = sphi 0, %s23
    %p20 = scmp.ge.s32.totalorder %s19, 4
    %s29 = sphi 0, %s31
    %s32 = sphi 0, %s29
    %s33 = sphi 0, %s32
    %s49 = sphi 0, %s33
    %s53 = sphi 0, %s53
    %s55 = sphi 0, %s53
    %s56 = sphi 0, %s55
    %s70 = sphi 0, %s56
    %s74 = sphi 0, %s74
    %s76 = sphi 0, %s74
    %s77 = sphi 0, %s76
    %s91 = sphi 0, %s77
    %s95 = sphi 0, %s95
    %s97 = sphi 0, %s95
    %s98 = sphi 0, %s97
    %s112 = sphi 0, %s98
    %s116 = sphi 0, %s116
    %s118 = sphi 0, %s116
    %s119 = sphi 0, %s118
    %s133 = sphi 0, %s119
    %s137 = sphi 0, %s137
    %s139 = sphi 0, %s137
    %s140 = sphi 0, %s139
    %s154 = sphi 0, %s140
    %s158 = sphi 0, %s158
    %s160 = sphi 0, %s158
    %s161 = sphi 0, %s160
    %s175 = sphi 0, %s161
    %s179 = sphi 0, %s179
    %s181 = sphi 0, %s179
    %s182 = sphi 0, %s181
    %s196 = sphi 0, %s182
    %s200 = sphi 0, %s200
    %s202 = sphi 0, %s200
    %s203 = sphi 0, %s202
    %s217 = sphi 0, %s203
    %s221 = sphi 0, %s221
    %s223 = sphi 0, %s221
    %s224 = sphi 0, %s223
    %s238 = sphi 0, %s224
    %s242 = sphi 0, %s242
    %s244 = sphi 0, %s242
    %s245 = sphi 0, %s244
    %s259 = sphi 0, %s245
    %s263 = sphi 0, %s263
    %s265 = sphi 0, %s263
    %s266 = sphi 0, %s265
    %s280 = sphi 0, %s266
    %s284 = sphi 0, %s284
    %s286 = sphi 0, %s284
    %s287 = sphi 0, %s286
    %s301 = sphi 0, %s287
    %s307 = sphi 0, %s309
    %s310 = sphi 0, %s307
    %s311 = sphi 0, %s310
    %s327 = sphi 0, %s311
  $region4: #{_lambda_.13} parent=0 // loop_header_branch
    %22 = sbr.rel (%p20) target = $region8
  $region5: #{_lambda_.13} parent=0 // loop_body
    %s24 = ssub.s32 %s19, 1
    %s25 = ssub.s32 %s19, 2
    %s26 = sadd.s32 %s19, 1
    %s27 = ssub.s32 %s19, %s26
    %p28 = scmp.eq.s32.totalorder %s27, 0
    %s30 = sadd.s32 %s29, 1
    %s31 = scalar_select %p28, %s29, %s30
    %p34 = pneg %p28
    %p35 = scmp.eq.s32.totalorder %s19, 1
    %p36 = por %p34, %p35
    %p37 = scmp.ne.s32.totalorder %s29, %s32
    %p38 = scmp.eq.s32.totalorder %s19, 0
    %p39 = por %p37, %p38
    %p40 = scmp.ne.s32.totalorder %s29, %s32
    %p41 = scmp.eq.s32.totalorder %s24, 1
    %p42 = por %p40, %p41
    %p43 = scmp.ne.s32.totalorder %s32, %s33
    %p44 = scmp.eq.s32.totalorder %s24, 0
    %p45 = por %p43, %p44
    %p46 = scmp.ne.s32.totalorder %s32, %s33
    %p47 = scmp.eq.s32.totalorder %s25, 1
    %p48 = por %p46, %p47
    %p50 = scmp.ne.s32.totalorder %s33, %s49
    %p51 = scmp.eq.s32.totalorder %s25, 0
    %p52 = por %p50, %p51
    %s54 = sadd.s32 %s53, 1
    %p57 = scmp.eq.s32.totalorder %s19, 1
    %p58 = scmp.ne.s32.totalorder %s53, %s55
    %p59 = scmp.eq.s32.totalorder %s19, 0
    %p60 = por %p58, %p59
    %p61 = scmp.ne.s32.totalorder %s53, %s55
    %p62 = scmp.eq.s32.totalorder %s24, 1
    %p63 = por %p61, %p62
    %p64 = scmp.ne.s32.totalorder %s55, %s56
    %p65 = scmp.eq.s32.totalorder %s24, 0
    %p66 = por %p64, %p65
    %p67 = scmp.ne.s32.totalorder %s55, %s56
    %p68 = scmp.eq.s32.totalorder %s25, 1
    %p69 = por %p67, %p68
    %p71 = scmp.ne.s32.totalorder %s56, %s70
    %p72 = scmp.eq.s32.totalorder %s25, 0
    %p73 = por %p71, %p72
    %s75 = sadd.s32 %s74, 1
    %p78 = scmp.eq.s32.totalorder %s19, 1
    %p79 = scmp.ne.s32.totalorder %s74, %s76
    %p80 = scmp.eq.s32.totalorder %s19, 0
    %p81 = por %p79, %p80
    %p82 = scmp.ne.s32.totalorder %s74, %s76
    %p83 = scmp.eq.s32.totalorder %s24, 1
    %p84 = por %p82, %p83
    %p85 = scmp.ne.s32.totalorder %s76, %s77
    %p86 = scmp.eq.s32.totalorder %s24, 0
    %p87 = por %p85, %p86
    %p88 = scmp.ne.s32.totalorder %s76, %s77
    %p89 = scmp.eq.s32.totalorder %s25, 1
    %p90 = por %p88, %p89
    %p92 = scmp.ne.s32.totalorder %s77, %s91
    %p93 = scmp.eq.s32.totalorder %s25, 0
    %p94 = por %p92, %p93
    %s96 = sadd.s32 %s95, 1
    %p99 = scmp.eq.s32.totalorder %s19, 1
    %p100 = scmp.ne.s32.totalorder %s95, %s97
    %p101 = scmp.eq.s32.totalorder %s19, 0
    %p102 = por %p100, %p101
    %p103 = scmp.ne.s32.totalorder %s95, %s97
    %p104 = scmp.eq.s32.totalorder %s24, 1
    %p105 = por %p103, %p104
    %p106 = scmp.ne.s32.totalorder %s97, %s98
    %p107 = scmp.eq.s32.totalorder %s24, 0
    %p108 = por %p106, %p107
    %p109 = scmp.ne.s32.totalorder %s97, %s98
    %p110 = scmp.eq.s32.totalorder %s25, 1
    %p111 = por %p109, %p110
    %p113 = scmp.ne.s32.totalorder %s98, %s112
    %p114 = scmp.eq.s32.totalorder %s25, 0
    %p115 = por %p113, %p114
    %s117 = sadd.s32 %s116, 1
    %p120 = scmp.eq.s32.totalorder %s19, 1
    %p121 = scmp.ne.s32.totalorder %s116, %s118
    %p122 = scmp.eq.s32.totalorder %s19, 0
    %p123 = por %p121, %p122
    %p124 = scmp.ne.s32.totalorder %s116, %s118
    %p125 = scmp.eq.s32.totalorder %s24, 1
    %p126 = por %p124, %p125
    %p127 = scmp.ne.s32.totalorder %s118, %s119
    %p128 = scmp.eq.s32.totalorder %s24, 0
    %p129 = por %p127, %p128
    %p130 = scmp.ne.s32.totalorder %s118, %s119
    %p131 = scmp.eq.s32.totalorder %s25, 1
    %p132 = por %p130, %p131
    %p134 = scmp.ne.s32.totalorder %s119, %s133
    %p135 = scmp.eq.s32.totalorder %s25, 0
    %p136 = por %p134, %p135
    %s138 = sadd.s32 %s137, 1
    %p141 = scmp.eq.s32.totalorder %s19, 1
    %p142 = scmp.ne.s32.totalorder %s137, %s139
    %p143 = scmp.eq.s32.totalorder %s19, 0
    %p144 = por %p142, %p143
    %p145 = scmp.ne.s32.totalorder %s137, %s139
    %p146 = scmp.eq.s32.totalorder %s24, 1
    %p147 = por %p145, %p146
    %p148 = scmp.ne.s32.totalorder %s139, %s140
    %p149 = scmp.eq.s32.totalorder %s24, 0
    %p150 = por %p148, %p149
    %p151 = scmp.ne.s32.totalorder %s139, %s140
    %p152 = scmp.eq.s32.totalorder %s25, 1
    %p153 = por %p151, %p152
    %p155 = scmp.ne.s32.totalorder %s140, %s154
    %p156 = scmp.eq.s32.totalorder %s25, 0
    %p157 = por %p155, %p156
    %s159 = sadd.s32 %s158, 1
    %p162 = scmp.eq.s32.totalorder %s19, 1
    %p163 = scmp.ne.s32.totalorder %s158, %s160
    %p164 = scmp.eq.s32.totalorder %s19, 0
    %p165 = por %p163, %p164
    %p166 = scmp.ne.s32.totalorder %s158, %s160
    %p167 = scmp.eq.s32.totalorder %s24, 1
    %p168 = por %p166, %p167
    %p169 = scmp.ne.s32.totalorder %s160, %s161
    %p170 = scmp.eq.s32.totalorder %s24, 0
    %p171 = por %p169, %p170
    %p172 = scmp.ne.s32.totalorder %s160, %s161
    %p173 = scmp.eq.s32.totalorder %s25, 1
    %p174 = por %p172, %p173
    %p176 = scmp.ne.s32.totalorder %s161, %s175
    %p177 = scmp.eq.s32.totalorder %s25, 0
    %p178 = por %p176, %p177
    %s180 = sadd.s32 %s179, 1
    %p183 = scmp.eq.s32.totalorder %s19, 1
    %p184 = scmp.ne.s32.totalorder %s179, %s181
    %p185 = scmp.eq.s32.totalorder %s19, 0
    %p186 = por %p184, %p185
    %p187 = scmp.ne.s32.totalorder %s179, %s181
    %p188 = scmp.eq.s32.totalorder %s24, 1
    %p189 = por %p187, %p188
    %p190 = scmp.ne.s32.totalorder %s181, %s182
    %p191 = scmp.eq.s32.totalorder %s24, 0
    %p192 = por %p190, %p191
    %p193 = scmp.ne.s32.totalorder %s181, %s182
    %p194 = scmp.eq.s32.totalorder %s25, 1
    %p195 = por %p193, %p194
    %p197 = scmp.ne.s32.totalorder %s182, %s196
    %p198 = scmp.eq.s32.totalorder %s25, 0
    %p199 = por %p197, %p198
    %s201 = sadd.s32 %s200, 1
    %p204 = scmp.eq.s32.totalorder %s19, 1
    %p205 = scmp.ne.s32.totalorder %s200, %s202
    %p206 = scmp.eq.s32.totalorder %s19, 0
    %p207 = por %p205, %p206
    %p208 = scmp.ne.s32.totalorder %s200, %s202
    %p209 = scmp.eq.s32.totalorder %s24, 1
    %p210 = por %p208, %p209
    %p211 = scmp.ne.s32.totalorder %s202, %s203
    %p212 = scmp.eq.s32.totalorder %s24, 0
    %p213 = por %p211, %p212
    %p214 = scmp.ne.s32.totalorder %s202, %s203
    %p215 = scmp.eq.s32.totalorder %s25, 1
    %p216 = por %p214, %p215
    %p218 = scmp.ne.s32.totalorder %s203, %s217
    %p219 = scmp.eq.s32.totalorder %s25, 0
    %p220 = por %p218, %p219
    %s222 = sadd.s32 %s221, 1
    %p225 = scmp.eq.s32.totalorder %s19, 1
    %p226 = scmp.ne.s32.totalorder %s221, %s223
    %p227 = scmp.eq.s32.totalorder %s19, 0
    %p228 = por %p226, %p227
    %p229 = scmp.ne.s32.totalorder %s221, %s223
    %p230 = scmp.eq.s32.totalorder %s24, 1
    %p231 = por %p229, %p230
    %p232 = scmp.ne.s32.totalorder %s223, %s224
    %p233 = scmp.eq.s32.totalorder %s24, 0
    %p234 = por %p232, %p233
    %p235 = scmp.ne.s32.totalorder %s223, %s224
    %p236 = scmp.eq.s32.totalorder %s25, 1
    %p237 = por %p235, %p236
    %p239 = scmp.ne.s32.totalorder %s224, %s238
    %p240 = scmp.eq.s32.totalorder %s25, 0
    %p241 = por %p239, %p240
    %s243 = sadd.s32 %s242, 1
    %p246 = scmp.eq.s32.totalorder %s19, 1
    %p247 = scmp.ne.s32.totalorder %s242, %s244
    %p248 = scmp.eq.s32.totalorder %s19, 0
    %p249 = por %p247, %p248
    %p250 = scmp.ne.s32.totalorder %s242, %s244
    %p251 = scmp.eq.s32.totalorder %s24, 1
    %p252 = por %p250, %p251
    %p253 = scmp.ne.s32.totalorder %s244, %s245
    %p254 = scmp.eq.s32.totalorder %s24, 0
    %p255 = por %p253, %p254
    %p256 = scmp.ne.s32.totalorder %s244, %s245
    %p257 = scmp.eq.s32.totalorder %s25, 1
    %p258 = por %p256, %p257
    %p260 = scmp.ne.s32.totalorder %s245, %s259
    %p261 = scmp.eq.s32.totalorder %s25, 0
    %p262 = por %p260, %p261
    %s264 = sadd.s32 %s263, 1
    %p267 = scmp.eq.s32.totalorder %s19, 1
    %p268 = scmp.ne.s32.totalorder %s263, %s265
    %p269 = scmp.eq.s32.totalorder %s19, 0
    %p270 = por %p268, %p269
    %p271 = scmp.ne.s32.totalorder %s263, %s265
    %p272 = scmp.eq.s32.totalorder %s24, 1
    %p273 = por %p271, %p272
    %p274 = scmp.ne.s32.totalorder %s265, %s266
    %p275 = scmp.eq.s32.totalorder %s24, 0
    %p276 = por %p274, %p275
    %p277 = scmp.ne.s32.totalorder %s265, %s266
    %p278 = scmp.eq.s32.totalorder %s25, 1
    %p279 = por %p277, %p278
    %p281 = scmp.ne.s32.totalorder %s266, %s280
    %p282 = scmp.eq.s32.totalorder %s25, 0
    %p283 = por %p281, %p282
    %s285 = sadd.s32 %s284, 1
    %p288 = scmp.eq.s32.totalorder %s19, 1
    %p289 = scmp.ne.s32.totalorder %s284, %s286
    %p290 = scmp.eq.s32.totalorder %s19, 0
    %p291 = por %p289, %p290
    %p292 = scmp.ne.s32.totalorder %s284, %s286
    %p293 = scmp.eq.s32.totalorder %s24, 1
    %p294 = por %p292, %p293
    %p295 = scmp.ne.s32.totalorder %s286, %s287
    %p296 = scmp.eq.s32.totalorder %s24, 0
    %p297 = por %p295, %p296
    %p298 = scmp.ne.s32.totalorder %s286, %s287
    %p299 = scmp.eq.s32.totalorder %s25, 1
    %p300 = por %p298, %p299
    %p302 = scmp.ne.s32.totalorder %s287, %s301
    %p303 = scmp.eq.s32.totalorder %s25, 0
    %p304 = por %p302, %p303
    %s305 = ssub.s32 %s19, %s26
    %p306 = scmp.eq.s32.totalorder %s305, 0
    %s308 = sadd.s32 %s307, 1
    %s309 = scalar_select %p306, %s307, %s308
    %p312 = pneg %p306
    %p313 = scmp.eq.s32.totalorder %s19, 1
    %p314 = por %p312, %p313
    %p315 = scmp.ne.s32.totalorder %s307, %s310
    %p316 = scmp.eq.s32.totalorder %s19, 0
    %p317 = por %p315, %p316
    %p318 = scmp.ne.s32.totalorder %s307, %s310
    %p319 = scmp.eq.s32.totalorder %s24, 1
    %p320 = por %p318, %p319
    %p321 = scmp.ne.s32.totalorder %s310, %s311
    %p322 = scmp.eq.s32.totalorder %s24, 0
    %p323 = por %p321, %p322
    %p324 = scmp.ne.s32.totalorder %s310, %s311
    %p325 = scmp.eq.s32.totalorder %s25, 1
    %p326 = por %p324, %p325
    %p328 = scmp.ne.s32.totalorder %s311, %s327
    %p329 = scmp.eq.s32.totalorder %s25, 0
    %p330 = por %p328, %p329
    %p331 = scmp.le.s32.totalorder 1, %s19
    %p332 = scmp.lt.s32.totalorder %s19, 3
    %p333 = pnand %p331, %p332
    %p334 = pneg %p333
    // Predicated region
    $region9: #{_lambda_.13} parent=5 // pred_check
      _
    $region10: #{_lambda_.13} parent=5 // pred_check_branch
      %336 = sbr.rel (%p333) target = $region12
    $region11: #{_lambda_.13} parent=5 // pred_region
      %s337 = ssub.s32 %s19, 1
      // Predicated region
      $region13: #{_lambda_.13} parent=11 // pred_check
        %p338 = pneg %p66
      $region14: #{_lambda_.13} parent=11 // pred_check_branch
        %340 = sbr.rel (%p338) target = $region16
      $region15: #{_lambda_.13} parent=11 // pred_region
        _
      $region16: #{_lambda_.13} parent=11 // pred_fallthru
        _
      // Predicated region
      $region17: #{_lambda_.13} parent=11 // pred_check
        %p341 = pneg %p87
      $region18: #{_lambda_.13} parent=11 // pred_check_branch
        %343 = sbr.rel (%p341) target = $region20
      $region19: #{_lambda_.13} parent=11 // pred_region
        _
      $region20: #{_lambda_.13} parent=11 // pred_fallthru
        _
      // Predicated region
      $region21: #{_lambda_.13} parent=11 // pred_check
        %p344 = pneg %p108
      $region22: #{_lambda_.13} parent=11 // pred_check_branch
        %346 = sbr.rel (%p344) target = $region24
      $region23: #{_lambda_.13} parent=11 // pred_region
        _
      $region24: #{_lambda_.13} parent=11 // pred_fallthru
        _
      // Predicated region
      $region25: #{_lambda_.13} parent=11 // pred_check
        %p347 = pneg %p129
      $region26: #{_lambda_.13} parent=11 // pred_check_branch
        %349 = sbr.rel (%p347) target = $region28
      $region27: #{_lambda_.13} parent=11 // pred_region
        _
      $region28: #{_lambda_.13} parent=11 // pred_fallthru
        _
      // Predicated region
      $region29: #{_lambda_.13} parent=11 // pred_check
        %p350 = pneg %p150
      $region30: #{_lambda_.13} parent=11 // pred_check_branch
        %352 = sbr.rel (%p350) target = $region32
      $region31: #{_lambda_.13} parent=11 // pred_region
        _
      $region32: #{_lambda_.13} parent=11 // pred_fallthru
        _
      // Predicated region
      $region33: #{_lambda_.13} parent=11 // pred_check
        %p353 = pneg %p171
      $region34: #{_lambda_.13} parent=11 // pred_check_branch
        %355 = sbr.rel (%p353) target = $region36
      $region35: #{_lambda_.13} parent=11 // pred_region
        _
      $region36: #{_lambda_.13} parent=11 // pred_fallthru
        _
      // Predicated region
      $region37: #{_lambda_.13} parent=11 // pred_check
        %p356 = pneg %p192
      $region38: #{_lambda_.13} parent=11 // pred_check_branch
        %358 = sbr.rel (%p356) target = $region40
      $region39: #{_lambda_.13} parent=11 // pred_region
        _
      $region40: #{_lambda_.13} parent=11 // pred_fallthru
        _
      // Predicated region
      $region41: #{_lambda_.13} parent=11 // pred_check
        %p359 = pneg %p213
      $region42: #{_lambda_.13} parent=11 // pred_check_branch
        %361 = sbr.rel (%p359) target = $region44
      $region43: #{_lambda_.13} parent=11 // pred_region
        _
      $region44: #{_lambda_.13} parent=11 // pred_fallthru
        _
      // Predicated region
      $region45: #{_lambda_.13} parent=11 // pred_check
        %p362 = pneg %p234
      $region46: #{_lambda_.13} parent=11 // pred_check_branch
        %364 = sbr.rel (%p362) target = $region48
      $region47: #{_lambda_.13} parent=11 // pred_region
        _
      $region48: #{_lambda_.13} parent=11 // pred_fallthru
        _
      // Predicated region
      $region49: #{_lambda_.13} parent=11 // pred_check
        %p365 = pneg %p255
      $region50: #{_lambda_.13} parent=11 // pred_check_branch
        %367 = sbr.rel (%p365) target = $region52
      $region51: #{_lambda_.13} parent=11 // pred_region
        _
      $region52: #{_lambda_.13} parent=11 // pred_fallthru
        _
      // Predicated region
      $region53: #{_lambda_.13} parent=11 // pred_check
        %p368 = pneg %p276
      $region54: #{_lambda_.13} parent=11 // pred_check_branch
        %370 = sbr.rel (%p368) target = $region56
      $region55: #{_lambda_.13} parent=11 // pred_region
        _
      $region56: #{_lambda_.13} parent=11 // pred_fallthru
        _
      // Predicated region
      $region57: #{_lambda_.13} parent=11 // pred_check
        %p371 = pneg %p297
      $region58: #{_lambda_.13} parent=11 // pred_check_branch
        %373 = sbr.rel (%p371) target = $region60
      $region59: #{_lambda_.13} parent=11 // pred_region
        _
      $region60: #{_lambda_.13} parent=11 // pred_fallthru
        _
    $region12: #{_lambda_.13} parent=5 // pred_fallthru
      _
    %p374 = scmp.lt.s32.totalorder %s19, 2
    // Predicated region
    $region61: #{_lambda_.13} parent=5 // pred_check
      %p375 = pneg %p374
    $region62: #{_lambda_.13} parent=5 // pred_check_branch
      %377 = sbr.rel (%p375) target = $region64
    $region63: #{_lambda_.13} parent=5 // pred_region
      // Predicated region
      $region65: #{_lambda_.13} parent=63 // pred_check
        %p378 = pneg %p39
      $region66: #{_lambda_.13} parent=63 // pred_check_branch
        %380 = sbr.rel (%p378) target = $region68
      $region67: #{_lambda_.13} parent=63 // pred_region
        %p381 = scmp.lt.s32.totalorder %s19, 1
        %s382 = scalar_select %p381, %s19, 1
        %s383 = smul.addr %s382, 4
        %s384 = smul.addr %s383, 8
        %s385 = scalar_lea.vmem %s0, %s384
      $region68: #{_lambda_.13} parent=63 // pred_fallthru
        _
    $region64: #{_lambda_.13} parent=5 // pred_fallthru
      _
    %p386 = scmp.le.s32.totalorder 1, %s19
    %p387 = scmp.lt.s32.totalorder %s19, 3
    %p388 = pnand %p386, %p387
    %p389 = pneg %p388
    // Predicated region
    $region69: #{_lambda_.13} parent=5 // pred_check
      _
    $region70: #{_lambda_.13} parent=5 // pred_check_branch
      %391 = sbr.rel (%p388) target = $region72
    $region71: #{_lambda_.13} parent=5 // pred_region
      %s392 = ssub.s32 %s19, 1
      %p393 = scmp.lt.s32.totalorder %s24, 1
      %s394 = scalar_select %p393, %s24, 1
      %s395 = smul.addr %s394, 4
      %s396 = smul.addr %s395, 8
      %s397 = scalar_lea.vmem %s0, %s396
      %p398 = pneg %p45
      %p399 = pneg %p42
      %p400 = pneg %p66
      %p401 = pneg %p63
      %p402 = pneg %p87
      %p403 = pneg %p84
      %p404 = pneg %p108
      %p405 = pneg %p105
      %p406 = pneg %p129
      %p407 = pneg %p126
      %p408 = pneg %p150
      %p409 = pneg %p147
      %p410 = pneg %p171
      %p411 = pneg %p168
      %p412 = pneg %p192
      %p413 = pneg %p189
      %p414 = pneg %p213
      %p415 = pneg %p210
      %p416 = pneg %p234
      %p417 = pneg %p231
      %p418 = pneg %p255
      %p419 = pneg %p252
      %p420 = pneg %p276
      %p421 = pneg %p273
      %p422 = pneg %p297
      %p423 = pneg %p294
      %p424 = pneg %p323
      %p425 = pneg %p320
      %p426 = scmp.lt.s32.totalorder %s24, 1
      %s427 = scalar_select %p426, %s24, 1
      %s428 = smul.addr %s427, 4
      %s429 = smul.addr %s428, 8
      %s430 = scalar_lea.vmem %s13, %s429
      %p431 = scmp.lt.s32.totalorder %s24, 1
      %s432 = scalar_select %p431, %s24, 1
      %s433 = smul.addr %s432, 4
      %s434 = smul.addr %s433, 8
      %s435 = scalar_lea.vmem %s0, %s434
      %p436 = scmp.lt.s32.totalorder %s24, 1
      %s437 = scalar_select %p436, %s24, 1
      %s438 = smul.addr %s437, 4
      %s439 = smul.addr %s438, 8
      %s440 = scalar_lea.vmem %s13, %s439
      %v442 = vld [vmem:[%s435] sm:$0xff]
      %v443 = vld [vmem:[%s435 + $0x8] sm:$0xff]
      %v444 = vld [vmem:[%s435 + $0x10] sm:$0xff]
      %v445 = vld [vmem:[%s435 + $0x18] sm:$0xff]
      %v446 = vld [vmem:[%s1] sm:$0xff]
      %v447 = vld [vmem:[%s1 + $0x8] sm:$0xff]
      %449 = vset.pattern.permute.xlu0 0
      %450 = vperm.xlu0 %449, %v446
      %v451 = vpop.permute.xlu0 %450
      %454 = vset.pattern.permute.xlu0 0
      %455 = vperm.xlu0 %454, %v447
      %v456 = vpop.permute.xlu0 %455
      %v458 = vmul.f32 %v442, %v451
      %v459 = vmul.f32 %v443, %v451
      %v460 = vmul.f32 %v444, %v456
      %v461 = vmul.f32 %v445, %v456
      %v462 = vld [vmem:[%s2] sm:$0xff]
      %v463 = vld [vmem:[%s2 + $0x8] sm:$0xff]
      %465 = vset.pattern.permute.xlu0 0
      %466 = vperm.xlu0 %465, %v462
      %v467 = vpop.permute.xlu0 %466
      %470 = vset.pattern.permute.xlu0 0
      %471 = vperm.xlu0 %470, %v463
      %v472 = vpop.permute.xlu0 %471
      %v474 = vadd.f32 %v458, %v467
      %v475 = vadd.f32 %v459, %v467
      %v476 = vadd.f32 %v460, %v472
      %v477 = vadd.f32 %v461, %v472
      %v478 = vmax.f32 %v474, 0.0
      %v479 = vmax.f32 %v475, 0.0
      %v480 = vmax.f32 %v476, 0.0
      %v481 = vmax.f32 %v477, 0.0
      %v482 = vld [vmem:[%s3] sm:$0xff]
      %v483 = vpack.c.bf16 %v482, %v482
      %v484 = vpack.c.bf16 %v480, %v478
      %v485 = vpack.c.bf16 %v481, %v479
      %v486 = vld [vmem:[%s4] sm:$0xff]
      %488 = vset.pattern.permute.xlu0 0
      %489 = vperm.xlu0 %488, %v486
      %v490 = vpop.permute.xlu0 %489
      %vm492 = vcmask 130048
      %v494 = vsel %vm492, %v483, 0
      %496 = vmatpush.bf16.msra.mxu0 0
      %497 = vmatpush.bf16.msra.mxu0 0
      %498 = vmatpush.bf16.msra.mxu0 0
      %499 = vmatpush.bf16.msra.mxu0 0
      %500 = vmatpush.bf16.msra.mxu0 0
      %501 = vmatpush.bf16.msra.mxu0 0
      %502 = vmatpush.bf16.msra.mxu0 0
      %503 = vmatpush.bf16.msra.mxu0 %v484
      %504 = vmatmul.bf16.gmra.mxu0 %v494
      %v505 = vpop.f32.mrf.mxu0
      %v506 = vadd.f32 %v490, %v505
      %v507 = vpop.f32.mrf.mxu0
      %508 = vdwg.mxu0
      %509 = vmatpush.bf16.msra.mxu0 0
      %510 = vmatpush.bf16.msra.mxu0 0
      %511 = vmatpush.bf16.msra.mxu0 0
      %512 = vmatpush.bf16.msra.mxu0 0
      %513 = vmatpush.bf16.msra.mxu0 0
      %514 = vmatpush.bf16.msra.mxu0 0
      %515 = vmatpush.bf16.msra.mxu0 0
      %516 = vmatpush.bf16.msra.mxu0 %v485
      %517 = vmatmul.bf16.gmra.mxu0 %v494
      %v518 = vpop.f32.mrf.mxu0
      %v519 = vadd.f32 %v490, %v518
      %v520 = vpop.f32.mrf.mxu0
      %521 = vdwg.mxu0
      %v522 = vld [vmem:[%s5] sm:$0xff]
      %524 = vset.pattern.permute.xlu0 0
      %525 = vperm.xlu0 %524, %v522
      %v526 = vpop.permute.xlu0 %525
      %v528 = vmul.f32 %v506, %v526
      %v529 = vmul.f32 %v519, %v526
      %v530 = vld [vmem:[%s6] sm:$0xff]
      %532 = vset.pattern.permute.xlu0 0
      %533 = vperm.xlu0 %532, %v530
      %v534 = vpop.permute.xlu0 %533
      %v536 = vadd.f32 %v528, %v534
      %v537 = vadd.f32 %v529, %v534
      %v538 = vmax.f32 %v536, 0.0
      %v539 = vmax.f32 %v537, 0.0
      %v540 = vlaneseq
      %v541 = vand.u32 %v540, 127
      %v542 = vadd.s32 %v541, 128
      %v543 = vshra.s32 %v541, 4
      %v544 = vshra.s32 %v542, 4
      %v545 = vand.u32 %v541, 15
      %v546 = vand.u32 %v542, 15
      %547 = vrot.lane.b32.xlu0 %v538, 17
      %v548 = vpop.permute.xlu0 %547
      %549 = vrot.lane.b32.xlu0 %v539, 17
      %v550 = vpop.permute.xlu0 %549
      %vm551 = vcmp.lt.s32.totalorder %v541, 17
      %v552 = vsel %vm551, %v548, %v550
      %v553 = vsel %vm551, %v550, %v548
      %v554 = vadd.s32 %v543, 4294967295
      %v555 = vadd.s32 %v544, 4294967295
      %vm556 = vcmp.ge.s32.totalorder %v554, 0
      %vm557 = vcmp.ge.s32.totalorder %v555, 0
      %vm558 = vcmp.lt.s32.totalorder %v554, 16
      %vm559 = vcmp.lt.s32.totalorder %v555, 16
      %vm560 = vmand %vm556, %vm558
      %vm561 = vmand %vm557, %vm559
      %v562 = vadd.s32 %v545, 4294967295
      %v563 = vadd.s32 %v546, 4294967295
      %vm564 = vcmp.ge.s32.totalorder %v562, 0
      %vm565 = vcmp.ge.s32.totalorder %v563, 0
      %vm566 = vmand %vm560, %vm564
      %vm567 = vmand %vm561, %vm565
      %vm568 = vcmp.lt.s32.totalorder %v562, 16
      %vm569 = vcmp.lt.s32.totalorder %v563, 16
      %vm570 = vmand %vm566, %vm568
      %vm571 = vmand %vm567, %vm569
      %v572 = vsel %vm570, %v553, 0.0
      %v573 = vsel %vm571, %v552, 0.0
      %574 = vrot.lane.b32.xlu0 %v538, 16
      %v575 = vpop.permute.xlu0 %574
      %576 = vrot.lane.b32.xlu0 %v539, 16
      %v577 = vpop.permute.xlu0 %576
      %vm578 = vcmp.lt.s32.totalorder %v541, 16
      %v579 = vsel %vm578, %v575, %v577
      %v580 = vsel %vm578, %v577, %v575
      %vm581 = vcmp.ge.s32.totalorder %v545, 0
      %vm582 = vcmp.ge.s32.totalorder %v546, 0
      %vm583 = vmand %vm560, %vm581
      %vm584 = vmand %vm561, %vm582
      %vm585 = vcmp.lt.s32.totalorder %v545, 16
      %vm586 = vcmp.lt.s32.totalorder %v546, 16
      %vm587 = vmand %vm583, %vm585
      %vm588 = vmand %vm584, %vm586
      %v589 = vsel %vm587, %v580, 0.0
      %v590 = vsel %vm588, %v579, 0.0
      %591 = vrot.lane.b32.xlu0 %v538, 15
      %v592 = vpop.permute.xlu0 %591
      %593 = vrot.lane.b32.xlu0 %v539, 15
      %v594 = vpop.permute.xlu0 %593
      %vm595 = vcmp.lt.s32.totalorder %v541, 15
      %v596 = vsel %vm595, %v592, %v594
      %v597 = vsel %vm595, %v594, %v592
      %v598 = vadd.s32 %v545, 1
      %v599 = vadd.s32 %v546, 1
      %vm600 = vcmp.ge.s32.totalorder %v598, 0
      %vm601 = vcmp.ge.s32.totalorder %v599, 0
      %vm602 = vmand %vm560, %vm600
      %vm603 = vmand %vm561, %vm601
      %vm604 = vcmp.lt.s32.totalorder %v598, 16
      %vm605 = vcmp.lt.s32.totalorder %v599, 16
      %vm606 = vmand %vm602, %vm604
      %vm607 = vmand %vm603, %vm605
      %v608 = vsel %vm606, %v597, 0.0
      %v609 = vsel %vm607, %v596, 0.0
      %610 = vrot.lane.b32.xlu0 %v538, 1
      %v611 = vpop.permute.xlu0 %610
      %612 = vrot.lane.b32.xlu0 %v539, 1
      %v613 = vpop.permute.xlu0 %612
      %vm614 = vcmp.lt.s32.totalorder %v541, 1
      %v615 = vsel %vm614, %v611, %v613
      %v616 = vsel %vm614, %v613, %v611
      %vm617 = vcmp.ge.s32.totalorder %v543, 0
      %vm618 = vcmp.ge.s32.totalorder %v544, 0
      %vm619 = vcmp.lt.s32.totalorder %v543, 16
      %vm620 = vcmp.lt.s32.totalorder %v544, 16
      %vm621 = vmand %vm617, %vm619
      %vm622 = vmand %vm618, %vm620
      %vm623 = vmand %vm621, %vm564
      %vm624 = vmand %vm622, %vm565
      %vm625 = vmand %vm623, %vm568
      %vm626 = vmand %vm624, %vm569
      %v627 = vsel %vm625, %v616, 0.0
      %v628 = vsel %vm626, %v615, 0.0
      %629 = vrot.lane.b32.xlu0 %v538, 127
      %v630 = vpop.permute.xlu0 %629
      %631 = vrot.lane.b32.xlu0 %v539, 127
      %v632 = vpop.permute.xlu0 %631
      %vm633 = vcmp.lt.s32.totalorder %v541, 127
      %v634 = vsel %vm633, %v630, %v632
      %v635 = vsel %vm633, %v632, %v630
      %vm636 = vmand %vm621, %vm600
      %vm637 = vmand %vm622, %vm601
      %vm638 = vmand %vm636, %vm604
      %vm639 = vmand %vm637, %vm605
      %v640 = vsel %vm638, %v634, 0.0
      %v641 = vsel %vm639, %v635, 0.0
      %642 = vrot.lane.b32.xlu0 %v538, 113
      %v643 = vpop.permute.xlu0 %642
      %644 = vrot.lane.b32.xlu0 %v539, 113
      %v645 = vpop.permute.xlu0 %644
      %vm646 = vcmp.lt.s32.totalorder %v541, 113
      %v647 = vsel %vm646, %v643, %v645
      %v648 = vsel %vm646, %v645, %v643
      %v649 = vadd.s32 %v543, 1
      %v650 = vadd.s32 %v544, 1
      %vm651 = vcmp.ge.s32.totalorder %v649, 0
      %vm652 = vcmp.ge.s32.totalorder %v650, 0
      %vm653 = vcmp.lt.s32.totalorder %v649, 16
      %vm654 = vcmp.lt.s32.totalorder %v650, 16
      %vm655 = vmand %vm651, %vm653
      %vm656 = vmand %vm652, %vm654
      %vm657 = vmand %vm655, %vm564
      %vm658 = vmand %vm656, %vm565
      %vm659 = vmand %vm657, %vm568
      %vm660 = vmand %vm658, %vm569
      %v661 = vsel %vm659, %v647, 0.0
      %v662 = vsel %vm660, %v648, 0.0
      %663 = vrot.lane.b32.xlu0 %v538, 112
      %v664 = vpop.permute.xlu0 %663
      %665 = vrot.lane.b32.xlu0 %v539, 112
      %v666 = vpop.permute.xlu0 %665
      %vm667 = vcmp.lt.s32.totalorder %v541, 112
      %v668 = vsel %vm667, %v664, %v666
      %v669 = vsel %vm667, %v666, %v664
      %vm670 = vmand %vm655, %vm581
      %vm671 = vmand %vm656, %vm582
      %vm672 = vmand %vm670, %vm585
      %vm673 = vmand %vm671, %vm586
      %v674 = vsel %vm672, %v668, 0.0
      %v675 = vsel %vm673, %v669, 0.0
      %676 = vrot.lane.b32.xlu0 %v538, 111
      %v677 = vpop.permute.xlu0 %676
      %678 = vrot.lane.b32.xlu0 %v539, 111
      %v679 = vpop.permute.xlu0 %678
      %vm680 = vcmp.lt.s32.totalorder %v541, 111
      %v681 = vsel %vm680, %v677, %v679
      %v682 = vsel %vm680, %v679, %v677
      %vm683 = vmand %vm655, %vm600
      %vm684 = vmand %vm656, %vm601
      %vm685 = vmand %vm683, %vm604
      %vm686 = vmand %vm684, %vm605
      %v687 = vsel %vm685, %v681, 0.0
      %v688 = vsel %vm686, %v682, 0.0
      %v689 = vpack.c.bf16 %v589, %v572
      %v690 = vpack.c.bf16 %v590, %v573
      %v691 = vpack.c.bf16 %v627, %v608
      %v692 = vpack.c.bf16 %v628, %v609
      %v693 = vpack.c.bf16 %v640, %v538
      %v694 = vpack.c.bf16 %v641, %v539
      %v695 = vpack.c.bf16 %v674, %v661
      %v696 = vpack.c.bf16 %v675, %v662
      %v697 = vpack.c.bf16 %v687, %v687
      %v698 = vpack.c.bf16 %v688, %v688
      %v699 = vld [vmem:[%s7] sm:$0xff]
      %v700 = vpack.c.bf16 %v699, %v699
      %v701 = vld [vmem:[%s8] sm:$0xff]
      %703 = vset.pattern.permute.xlu0 0
      %704 = vperm.xlu0 %703, %v701
      %v705 = vpop.permute.xlu0 %704
      %vm707 = vcmask 588800
      %v709 = vsel %vm707, %v700, 0
      %vm711 = vcmask 1043456
      %v713 = vsel %vm711, %v697, 0
      %v716 = vsel %vm711, %v698, 0
      %718 = vmatpush.bf16.msra.mxu0 0
      %719 = vmatpush.bf16.msra.mxu0 0
      %720 = vmatpush.bf16.msra.mxu0 0
      %721 = vmatpush.bf16.msra.mxu0 %v713
      %722 = vmatpush.bf16.msra.mxu0 %v695
      %723 = vmatpush.bf16.msra.mxu0 %v693
      %724 = vmatpush.bf16.msra.mxu0 %v691
      %725 = vmatpush.bf16.msra.mxu0 %v689
      %726 = vmatmul.bf16.gmra.mxu0 %v709
      %v727 = vpop.f32.mrf.mxu0
      %v728 = vadd.f32 %v705, %v727
      %v729 = vpop.f32.mrf.mxu0
      %730 = vdwg.mxu0
      %731 = vmatpush.bf16.msra.mxu0 0
      %732 = vmatpush.bf16.msra.mxu0 0
      %733 = vmatpush.bf16.msra.mxu0 0
      %734 = vmatpush.bf16.msra.mxu0 %v716
      %735 = vmatpush.bf16.msra.mxu0 %v696
      %736 = vmatpush.bf16.msra.mxu0 %v694
      %737 = vmatpush.bf16.msra.mxu0 %v692
      %738 = vmatpush.bf16.msra.mxu0 %v690
      %739 = vmatmul.bf16.gmra.mxu0 %v709
      %v740 = vpop.f32.mrf.mxu0
      %v741 = vadd.f32 %v705, %v740
      %v742 = vpop.f32.mrf.mxu0
      %743 = vdwg.mxu0
      %v744 = vld [vmem:[%s9] sm:$0xff]
      %746 = vset.pattern.permute.xlu0 0
      %747 = vperm.xlu0 %746, %v744
      %v748 = vpop.permute.xlu0 %747
      %v750 = vmul.f32 %v728, %v748
      %v751 = vmul.f32 %v741, %v748
      %v752 = vld [vmem:[%s10] sm:$0xff]
      %754 = vset.pattern.permute.xlu0 0
      %755 = vperm.xlu0 %754, %v752
      %v756 = vpop.permute.xlu0 %755
      %v758 = vadd.f32 %v750, %v756
      %v759 = vadd.f32 %v751, %v756
      %v760 = vmax.f32 %v758, 0.0
      %v761 = vmax.f32 %v759, 0.0
      %v762 = vld [vmem:[%s11] sm:$0xff]
      %v763 = vld [vmem:[%s11 + $0x8] sm:$0xff]
      %v764 = vpack.c.bf16 %v763, %v762
      %v765 = vpack.c.bf16 %v760, %v760
      %v766 = vpack.c.bf16 %v761, %v761
      %v767 = vld [vmem:[%s12] sm:$0xff]
      %v768 = vld [vmem:[%s12 + $0x8] sm:$0xff]
      %770 = vset.pattern.permute.xlu0 0
      %771 = vperm.xlu0 %770, %v767
      %v772 = vpop.permute.xlu0 %771
      %775 = vset.pattern.permute.xlu0 0
      %776 = vperm.xlu0 %775, %v768
      %v777 = vpop.permute.xlu0 %776
      %vm779 = vcmask 64512
      %v781 = vsel %vm779, %v764, 0
      %v784 = vsel %vm711, %v765, 0
      %v787 = vsel %vm711, %v766, 0
      %789 = vmatpush.bf16.msra.mxu0 0
      %790 = vmatpush.bf16.msra.mxu0 0
      %791 = vmatpush.bf16.msra.mxu0 0
      %792 = vmatpush.bf16.msra.mxu0 0
      %793 = vmatpush.bf16.msra.mxu0 0
      %794 = vmatpush.bf16.msra.mxu0 0
      %795 = vmatpush.bf16.msra.mxu0 0
      %796 = vmatpush.bf16.msra.mxu0 %v784
      %797 = vmatmul.bf16.gmra.mxu0 %v781
      %v798 = vpop.f32.mrf.mxu0
      %v799 = vadd.f32 %v772, %v798
      %v800 = vpop.f32.mrf.mxu0
      %v801 = vadd.f32 %v777, %v800
      %802 = vdwg.mxu0
      %803 = vmatpush.bf16.msra.mxu0 0
      %804 = vmatpush.bf16.msra.mxu0 0
      %805 = vmatpush.bf16.msra.mxu0 0
      %806 = vmatpush.bf16.msra.mxu0 0
      %807 = vmatpush.bf16.msra.mxu0 0
      %808 = vmatpush.bf16.msra.mxu0 0
      %809 = vmatpush.bf16.msra.mxu0 0
      %810 = vmatpush.bf16.msra.mxu0 %v787
      %811 = vmatmul.bf16.gmra.mxu0 %v781
      %v812 = vpop.f32.mrf.mxu0
      %v813 = vadd.f32 %v772, %v812
      %v814 = vpop.f32.mrf.mxu0
      %v815 = vadd.f32 %v777, %v814
      %816 = vdwg.mxu0
      %v817 = vadd.f32 %v799, %v442
      %v818 = vadd.f32 %v813, %v443
      %v819 = vadd.f32 %v801, %v444
      %v820 = vadd.f32 %v815, %v445
      %821 = vst [vmem:[%s440] sm:$0xff] %v817
      %822 = vst [vmem:[%s440 + $0x8] sm:$0xff] %v818
      %823 = vst [vmem:[%s440 + $0x10] sm:$0xff] %v819
      %824 = vst [vmem:[%s440 + $0x18] sm:$0xff] %v820
      %p825 = scmp.lt.s32.totalorder %s24, 1
      %s826 = scalar_select %p825, %s24, 1
      %s827 = smul.addr %s826, 4
      %s828 = smul.addr %s827, 8
      %s829 = scalar_lea.vmem %s13, %s828
      // Predicated region
      $region73: #{_lambda_.13} parent=71 // pred_check
        %p830 = pneg %p320
      $region74: #{_lambda_.13} parent=71 // pred_check_branch
        %832 = sbr.rel (%p830) target = $region76
      $region75: #{_lambda_.13} parent=71 // pred_region
        _
      $region76: #{_lambda_.13} parent=71 // pred_fallthru
        _
    $region72: #{_lambda_.13} parent=5 // pred_fallthru
      _
    %p833 = scmp.le.s32.totalorder 2, %s19
    // Predicated region
    $region77: #{_lambda_.13} parent=5 // pred_check
      %p834 = pneg %p833
    $region78: #{_lambda_.13} parent=5 // pred_check_branch
      %836 = sbr.rel (%p834) target = $region80
    $region79: #{_lambda_.13} parent=5 // pred_region
      %s837 = ssub.s32 %s19, 2
      // Predicated region
      $region81: #{_lambda_.13} parent=79 // pred_check
        %p838 = pneg %p326
      $region82: #{_lambda_.13} parent=79 // pred_check_branch
        %840 = sbr.rel (%p838) target = $region84
      $region83: #{_lambda_.13} parent=79 // pred_region
        %p841 = scmp.lt.s32.totalorder %s25, 1
        %s842 = scalar_select %p841, %s25, 1
        %s843 = smul.addr %s842, 4
        %s844 = smul.addr %s843, 8
        %s845 = scalar_lea.vmem %s13, %s844
      $region84: #{_lambda_.13} parent=79 // pred_fallthru
        _
    $region80: #{_lambda_.13} parent=5 // pred_fallthru
      _
  $region6: #{_lambda_.13} parent=0 // loop_footer
    %s23 = sadd.s32 1, %s19
  $region7: #{_lambda_.13} parent=0 // loop_footer_branch
    %18 = sbr.rel target = $region3
  $region8: #{_lambda_.13} parent=0 // loop_exit
    _

// kernel: _lambda_.19
$region0: #{_lambda_.19}
  #allocation0 [shape = 'u32[]', space=smem, size = 0x4, offset = 0x4, fixed_abs, tag = 'smem constant byte address 0x4 - core index']
  #allocation1 [shape = 'u32[72,128]{1,0:T(1,128)}', space=vmem, size = 0x9000, scoped, tag = 'internal scratch']
  %s0 = inlined_call_operand.vmem [shape: f32[2,16,256], index: 0, kind: input, shape index: {}]
  %s1 = inlined_call_operand.vmem [shape: f32[2,16,64], index: 1, kind: input, shape index: {}]
  %s2 = inlined_call_operand.vmem [shape: f32[2,16,256], index: 2, kind: output, shape index: {}]
  %s3 = sld [smem:[#allocation0]]
  $region41: #{_lambda_.19} parent=0
    _
  %s5 = ssub.s32 1, %s3
  %s6 = scalar_select 0, %s5, %s3
  loop: start=0, step=1, limit=4
  $region2: #{_lambda_.19} parent=0 // loop_pre_header
    _
  $region3: #{_lambda_.19} parent=0 // loop_header
    %s8 = sphi 0, %s12
    %p9 = scmp.ge.s32.totalorder %s8, 4
    %s18 = sphi 0, %s20
    %s21 = sphi 0, %s18
    %s22 = sphi 0, %s21
    %s38 = sphi 0, %s22
    %s44 = sphi 0, %s46
    %s47 = sphi 0, %s44
    %s48 = sphi 0, %s47
    %s64 = sphi 0, %s48
    %s70 = sphi 0, %s72
    %s73 = sphi 0, %s70
    %s74 = sphi 0, %s73
    %s90 = sphi 0, %s74
  $region4: #{_lambda_.19} parent=0 // loop_header_branch
    %11 = sbr.rel (%p9) target = $region8
  $region5: #{_lambda_.19} parent=0 // loop_body
    %s13 = ssub.s32 %s8, 1
    %s14 = ssub.s32 %s8, 2
    %s15 = sadd.s32 %s8, 1
    %s16 = ssub.s32 %s8, %s15
    %p17 = scmp.eq.s32.totalorder %s16, 0
    %s19 = sadd.s32 %s18, 1
    %s20 = scalar_select %p17, %s18, %s19
    %p23 = pneg %p17
    %p24 = scmp.eq.s32.totalorder %s8, 1
    %p25 = por %p23, %p24
    %p26 = scmp.ne.s32.totalorder %s18, %s21
    %p27 = scmp.eq.s32.totalorder %s8, 0
    %p28 = por %p26, %p27
    %p29 = scmp.ne.s32.totalorder %s18, %s21
    %p30 = scmp.eq.s32.totalorder %s13, 1
    %p31 = por %p29, %p30
    %p32 = scmp.ne.s32.totalorder %s21, %s22
    %p33 = scmp.eq.s32.totalorder %s13, 0
    %p34 = por %p32, %p33
    %p35 = scmp.ne.s32.totalorder %s21, %s22
    %p36 = scmp.eq.s32.totalorder %s14, 1
    %p37 = por %p35, %p36
    %p39 = scmp.ne.s32.totalorder %s22, %s38
    %p40 = scmp.eq.s32.totalorder %s14, 0
    %p41 = por %p39, %p40
    %s42 = ssub.s32 %s8, %s15
    %p43 = scmp.eq.s32.totalorder %s42, 0
    %s45 = sadd.s32 %s44, 1
    %s46 = scalar_select %p43, %s44, %s45
    %p49 = pneg %p43
    %p50 = scmp.eq.s32.totalorder %s8, 1
    %p51 = por %p49, %p50
    %p52 = scmp.ne.s32.totalorder %s44, %s47
    %p53 = scmp.eq.s32.totalorder %s8, 0
    %p54 = por %p52, %p53
    %p55 = scmp.ne.s32.totalorder %s44, %s47
    %p56 = scmp.eq.s32.totalorder %s13, 1
    %p57 = por %p55, %p56
    %p58 = scmp.ne.s32.totalorder %s47, %s48
    %p59 = scmp.eq.s32.totalorder %s13, 0
    %p60 = por %p58, %p59
    %p61 = scmp.ne.s32.totalorder %s47, %s48
    %p62 = scmp.eq.s32.totalorder %s14, 1
    %p63 = por %p61, %p62
    %p65 = scmp.ne.s32.totalorder %s48, %s64
    %p66 = scmp.eq.s32.totalorder %s14, 0
    %p67 = por %p65, %p66
    %s68 = ssub.s32 %s8, %s15
    %p69 = scmp.eq.s32.totalorder %s68, 0
    %s71 = sadd.s32 %s70, 1
    %s72 = scalar_select %p69, %s70, %s71
    %p75 = pneg %p69
    %p76 = scmp.eq.s32.totalorder %s8, 1
    %p77 = por %p75, %p76
    %p78 = scmp.ne.s32.totalorder %s70, %s73
    %p79 = scmp.eq.s32.totalorder %s8, 0
    %p80 = por %p78, %p79
    %p81 = scmp.ne.s32.totalorder %s70, %s73
    %p82 = scmp.eq.s32.totalorder %s13, 1
    %p83 = por %p81, %p82
    %p84 = scmp.ne.s32.totalorder %s73, %s74
    %p85 = scmp.eq.s32.totalorder %s13, 0
    %p86 = por %p84, %p85
    %p87 = scmp.ne.s32.totalorder %s73, %s74
    %p88 = scmp.eq.s32.totalorder %s14, 1
    %p89 = por %p87, %p88
    %p91 = scmp.ne.s32.totalorder %s74, %s90
    %p92 = scmp.eq.s32.totalorder %s14, 0
    %p93 = por %p91, %p92
    %p94 = scmp.le.s32.totalorder 1, %s8
    %p95 = scmp.lt.s32.totalorder %s8, 3
    %p96 = pnand %p94, %p95
    %p97 = pneg %p96
    // Predicated region
    $region9: #{_lambda_.19} parent=5 // pred_check
      _
    $region10: #{_lambda_.19} parent=5 // pred_check_branch
      %99 = sbr.rel (%p96) target = $region12
    $region11: #{_lambda_.19} parent=5 // pred_region
      %s100 = ssub.s32 %s8, 1
    $region12: #{_lambda_.19} parent=5 // pred_fallthru
      _
    %p101 = scmp.lt.s32.totalorder %s8, 2
    // Predicated region
    $region13: #{_lambda_.19} parent=5 // pred_check
      %p102 = pneg %p101
    $region14: #{_lambda_.19} parent=5 // pred_check_branch
      %104 = sbr.rel (%p102) target = $region16
    $region15: #{_lambda_.19} parent=5 // pred_region
      // Predicated region
      $region17: #{_lambda_.19} parent=15 // pred_check
        %p105 = pneg %p28
      $region18: #{_lambda_.19} parent=15 // pred_check_branch
        %107 = sbr.rel (%p105) target = $region20
      $region19: #{_lambda_.19} parent=15 // pred_region
        %p108 = scmp.lt.s32.totalorder %s8, 1
        %s109 = scalar_select %p108, %s8, 1
        %s110 = smul.addr %s109, 4
        %s111 = smul.addr %s110, 8
        %s112 = scalar_lea.vmem %s0, %s111
      $region20: #{_lambda_.19} parent=15 // pred_fallthru
        _
      // Predicated region
      $region21: #{_lambda_.19} parent=15 // pred_check
        %p113 = pneg %p54
      $region22: #{_lambda_.19} parent=15 // pred_check_branch
        %115 = sbr.rel (%p113) target = $region24
      $region23: #{_lambda_.19} parent=15 // pred_region
        %p116 = scmp.lt.s32.totalorder %s8, 1
        %s117 = scalar_select %p116, %s8, 1
        %s118 = smul.addr %s117, 2
        %s119 = smul.addr %s118, 8
        %s120 = scalar_lea.vmem %s1, %s119
      $region24: #{_lambda_.19} parent=15 // pred_fallthru
        _
    $region16: #{_lambda_.19} parent=5 // pred_fallthru
      _
    %p121 = scmp.le.s32.totalorder 1, %s8
    %p122 = scmp.lt.s32.totalorder %s8, 3
    %p123 = pnand %p121, %p122
    %p124 = pneg %p123
    // Predicated region
    $region25: #{_lambda_.19} parent=5 // pred_check
      _
    $region26: #{_lambda_.19} parent=5 // pred_check_branch
      %126 = sbr.rel (%p123) target = $region28
    $region27: #{_lambda_.19} parent=5 // pred_region
      %s127 = ssub.s32 %s8, 1
      %p128 = scmp.lt.s32.totalorder %s13, 1
      %s129 = scalar_select %p128, %s13, 1
      %s130 = smul.addr %s129, 4
      %s131 = smul.addr %s130, 8
      %s132 = scalar_lea.vmem %s0, %s131
      %p133 = pneg %p34
      %p134 = pneg %p31
      %p135 = scmp.lt.s32.totalorder %s13, 1
      %s136 = scalar_select %p135, %s13, 1
      %s137 = smul.addr %s136, 2
      %s138 = smul.addr %s137, 8
      %s139 = scalar_lea.vmem %s1, %s138
      %p140 = pneg %p60
      %p141 = pneg %p57
      %p142 = pneg %p86
      %p143 = pneg %p83
      %p144 = scmp.lt.s32.totalorder %s13, 1
      %s145 = scalar_select %p144, %s13, 1
      %s146 = smul.addr %s145, 4
      %s147 = smul.addr %s146, 8
      %s148 = scalar_lea.vmem %s2, %s147
      %p149 = scmp.lt.s32.totalorder %s13, 1
      %s150 = scalar_select %p149, %s13, 1
      %s151 = smul.addr %s150, 4
      %s152 = smul.addr %s151, 8
      %s153 = scalar_lea.vmem %s0, %s152
      %p154 = scmp.lt.s32.totalorder %s13, 1
      %s155 = scalar_select %p154, %s13, 1
      %s156 = smul.addr %s155, 2
      %s157 = smul.addr %s156, 8
      %s158 = scalar_lea.vmem %s1, %s157
      %p159 = scmp.lt.s32.totalorder %s13, 1
      %s160 = scalar_select %p159, %s13, 1
      %s161 = smul.addr %s160, 4
      %s162 = smul.addr %s161, 8
      %s163 = scalar_lea.vmem %s2, %s162
      %v164 = vld [vmem:[%s158] sm:$0xff]
      %v165 = vld [vmem:[%s158 + $0x8] sm:$0xff]
      %v166 = vlaneseq
      %v167 = vshrl.u32 %v166, 7
      %v168 = vadd.s32 %v167, 8
      %v169 = vadd.s32 %v167, 16
      %v170 = vadd.s32 %v167, 24
      %v171 = vadd.s32 %v167, 32
      %v172 = vadd.s32 %v167, 40
      %v173 = vadd.s32 %v167, 48
      %v174 = vadd.s32 %v167, 56
      %v175 = vlaneseq
      %v176 = vand.u32 %v175, 127
      %v177 = vadd.s32 %v176, 128
      %v178 = vshra.s32 %v176, 4
      %v179 = vshra.s32 %v177, 4
      %v180 = vshra.s32 %v178, 1
      %v181 = vshra.s32 %v179, 1
      %v182 = vmul.u32 %v180, 8
      %v183 = vmul.u32 %v181, 8
      %v184 = vand.u32 %v176, 15
      %v185 = vand.u32 %v177, 15
      %v186 = vshra.s32 %v184, 1
      %v187 = vshra.s32 %v185, 1
      %v188 = vadd.s32 %v182, %v186
      %v189 = vadd.s32 %v183, %v187
      %vm190 = vcmp.eq.s32.totalorder %v167, %v188
      %vm191 = vcmp.eq.s32.totalorder %v167, %v189
      %vm192 = vcmp.eq.s32.totalorder %v168, %v188
      %vm193 = vcmp.eq.s32.totalorder %v168, %v189
      %vm194 = vcmp.eq.s32.totalorder %v169, %v188
      %vm195 = vcmp.eq.s32.totalorder %v169, %v189
      %vm196 = vcmp.eq.s32.totalorder %v170, %v188
      %vm197 = vcmp.eq.s32.totalorder %v170, %v189
      %vm198 = vcmp.eq.s32.totalorder %v171, %v188
      %vm199 = vcmp.eq.s32.totalorder %v171, %v189
      %vm200 = vcmp.eq.s32.totalorder %v172, %v188
      %vm201 = vcmp.eq.s32.totalorder %v172, %v189
      %vm202 = vcmp.eq.s32.totalorder %v173, %v188
      %vm203 = vcmp.eq.s32.totalorder %v173, %v189
      %vm204 = vcmp.eq.s32.totalorder %v174, %v188
      %vm205 = vcmp.eq.s32.totalorder %v174, %v189
      %v206 = vsel %vm190, 1, 0
      %v207 = vsel %vm191, 1, 0
      %v208 = vsel %vm192, 1, 0
      %v209 = vsel %vm193, 1, 0
      %v210 = vsel %vm194, 1, 0
      %v211 = vsel %vm195, 1, 0
      %v212 = vsel %vm196, 1, 0
      %v213 = vsel %vm197, 1, 0
      %v214 = vsel %vm198, 1, 0
      %v215 = vsel %vm199, 1, 0
      %v216 = vsel %vm200, 1, 0
      %v217 = vsel %vm201, 1, 0
      %v218 = vsel %vm202, 1, 0
      %v219 = vsel %vm203, 1, 0
      %v220 = vsel %vm204, 1, 0
      %v221 = vsel %vm205, 1, 0
      %v222 = vcvt.s32.f32 %v206
      %v223 = vcvt.s32.f32 %v207
      %v224 = vcvt.s32.f32 %v208
      %v225 = vcvt.s32.f32 %v209
      %v226 = vcvt.s32.f32 %v210
      %v227 = vcvt.s32.f32 %v211
      %v228 = vcvt.s32.f32 %v212
      %v229 = vcvt.s32.f32 %v213
      %v230 = vcvt.s32.f32 %v214
      %v231 = vcvt.s32.f32 %v215
      %v232 = vcvt.s32.f32 %v216
      %v233 = vcvt.s32.f32 %v217
      %v234 = vcvt.s32.f32 %v218
      %v235 = vcvt.s32.f32 %v219
      %v236 = vcvt.s32.f32 %v220
      %v237 = vcvt.s32.f32 %v221
      %v238 = vld [vmem:[%s153] sm:$0xff]
      %v239 = vld [vmem:[%s153 + $0x8] sm:$0xff]
      %v240 = vld [vmem:[%s153 + $0x10] sm:$0xff]
      %v241 = vld [vmem:[%s153 + $0x18] sm:$0xff]
      %vm242 = vcmask 523264
      %v244 = vsel %vm242, %v164, 0
      %v247 = vsel %vm242, %v165, 0
      %249 = vmatpush.msra.mxu0 0.0
      %250 = vmatpush.msra.mxu0 0.0
      %251 = vmatpush.msra.mxu0 0.0
      %252 = vmatpush.msra.mxu0 0.0
      %253 = vmatpush.msra.mxu0 0.0
      %254 = vmatpush.msra.mxu0 0.0
      %255 = vmatpush.msra.mxu0 0.0
      %256 = vmatpush.msra.mxu0 0.0
      %257 = vmatpush.msra.mxu0 %v236
      %258 = vmatpush.msra.mxu0 %v234
      %259 = vmatpush.msra.mxu0 %v232
      %260 = vmatpush.msra.mxu0 %v230
      %261 = vmatpush.msra.mxu0 %v228
      %262 = vmatpush.msra.mxu0 %v226
      %263 = vmatpush.msra.mxu0 %v224
      %264 = vmatpush.msra.mxu0 %v222
      %265 = vmatmul.f32.gmra.mxu0 %v244
      %v266 = vpop.f32.mrf.mxu0
      %v267 = vadd.f32 0.0, %v266
      %268 = vmatmul.f32.gmra.mxu0 %v247
      %v269 = vpop.f32.mrf.mxu0
      %v270 = vadd.f32 0.0, %v269
      %271 = vdwg.mxu0
      %272 = vmatpush.msra.mxu0 0.0
      %273 = vmatpush.msra.mxu0 0.0
      %274 = vmatpush.msra.mxu0 0.0
      %275 = vmatpush.msra.mxu0 0.0
      %276 = vmatpush.msra.mxu0 0.0
      %277 = vmatpush.msra.mxu0 0.0
      %278 = vmatpush.msra.mxu0 0.0
      %279 = vmatpush.msra.mxu0 0.0
      %280 = vmatpush.msra.mxu0 %v237
      %281 = vmatpush.msra.mxu0 %v235
      %282 = vmatpush.msra.mxu0 %v233
      %283 = vmatpush.msra.mxu0 %v231
      %284 = vmatpush.msra.mxu0 %v229
      %285 = vmatpush.msra.mxu0 %v227
      %286 = vmatpush.msra.mxu0 %v225
      %287 = vmatpush.msra.mxu0 %v223
      %288 = vmatmul.f32.gmra.mxu0 %v244
      %v289 = vpop.f32.mrf.mxu0
      %v290 = vadd.f32 0.0, %v289
      %291 = vmatmul.f32.gmra.mxu0 %v247
      %v292 = vpop.f32.mrf.mxu0
      %v293 = vadd.f32 0.0, %v292
      %294 = vdwg.mxu0
      %v295 = vadd.f32 %v238, %v267
      %v296 = vadd.f32 %v239, %v290
      %v297 = vadd.f32 %v240, %v270
      %v298 = vadd.f32 %v241, %v293
      %299 = vst [vmem:[%s163] sm:$0xff] %v295
      %300 = vst [vmem:[%s163 + $0x8] sm:$0xff] %v296
      %301 = vst [vmem:[%s163 + $0x10] sm:$0xff] %v297
      %302 = vst [vmem:[%s163 + $0x18] sm:$0xff] %v298
      %p303 = scmp.lt.s32.totalorder %s13, 1
      %s304 = scalar_select %p303, %s13, 1
      %s305 = smul.addr %s304, 4
      %s306 = smul.addr %s305, 8
      %s307 = scalar_lea.vmem %s2, %s306
      // Predicated region
      $region29: #{_lambda_.19} parent=27 // pred_check
        %p308 = pneg %p83
      $region30: #{_lambda_.19} parent=27 // pred_check_branch
        %310 = sbr.rel (%p308) target = $region32
      $region31: #{_lambda_.19} parent=27 // pred_region
        _
      $region32: #{_lambda_.19} parent=27 // pred_fallthru
        _
    $region28: #{_lambda_.19} parent=5 // pred_fallthru
      _
    %p311 = scmp.le.s32.totalorder 2, %s8
    // Predicated region
    $region33: #{_lambda_.19} parent=5 // pred_check
      %p312 = pneg %p311
    $region34: #{_lambda_.19} parent=5 // pred_check_branch
      %314 = sbr.rel (%p312) target = $region36
    $region35: #{_lambda_.19} parent=5 // pred_region
      %s315 = ssub.s32 %s8, 2
      // Predicated region
      $region37: #{_lambda_.19} parent=35 // pred_check
        %p316 = pneg %p89
      $region38: #{_lambda_.19} parent=35 // pred_check_branch
        %318 = sbr.rel (%p316) target = $region40
      $region39: #{_lambda_.19} parent=35 // pred_region
        %p319 = scmp.lt.s32.totalorder %s14, 1
        %s320 = scalar_select %p319, %s14, 1
        %s321 = smul.addr %s320, 4
        %s322 = smul.addr %s321, 8
        %s323 = scalar_lea.vmem %s2, %s322
      $region40: #{_lambda_.19} parent=35 // pred_fallthru
        _
    $region36: #{_lambda_.19} parent=5 // pred_fallthru
      _
  $region6: #{_lambda_.19} parent=0 // loop_footer
    %s12 = sadd.s32 1, %s8
  $region7: #{_lambda_.19} parent=0 // loop_footer_branch
    %7 = sbr.rel target = $region3
  $region8: #{_lambda_.19} parent=0 // loop_exit
    _

// kernel: _lambda_.16
$region0: #{_lambda_.16}
  #allocation0 [shape = 'u32[]', space=smem, size = 0x4, offset = 0x4, fixed_abs, tag = 'smem constant byte address 0x4 - core index']
  #allocation1 [shape = 'u32[72,128]{1,0:T(1,128)}', space=vmem, size = 0x9000, scoped, tag = 'internal scratch']
  %s0 = inlined_call_operand.vmem [shape: f32[2,16,64], index: 0, kind: input, shape index: {}]
  %s1 = inlined_call_operand.vmem [shape: f32[16,1], index: 1, kind: input, shape index: {}]
  %s2 = inlined_call_operand.vmem [shape: f32[16,1], index: 2, kind: input, shape index: {}]
  %s3 = inlined_call_operand.vmem [shape: f32[8,16], index: 3, kind: input, shape index: {}]
  %s4 = inlined_call_operand.vmem [shape: f32[8,1], index: 4, kind: input, shape index: {}]
  %s5 = inlined_call_operand.vmem [shape: f32[8,1], index: 5, kind: input, shape index: {}]
  %s6 = inlined_call_operand.vmem [shape: f32[8,1], index: 6, kind: input, shape index: {}]
  %s7 = inlined_call_operand.vmem [shape: f32[8,72], index: 7, kind: input, shape index: {}]
  %s8 = inlined_call_operand.vmem [shape: f32[8,1], index: 8, kind: input, shape index: {}]
  %s9 = inlined_call_operand.vmem [shape: f32[8,1], index: 9, kind: input, shape index: {}]
  %s10 = inlined_call_operand.vmem [shape: f32[8,1], index: 10, kind: input, shape index: {}]
  %s11 = inlined_call_operand.vmem [shape: f32[16,8], index: 11, kind: input, shape index: {}]
  %s12 = inlined_call_operand.vmem [shape: f32[16,1], index: 12, kind: input, shape index: {}]
  %s13 = inlined_call_operand.vmem [shape: f32[2,16,64], index: 13, kind: output, shape index: {}]
  %s14 = sld [smem:[#allocation0]]
  $region85: #{_lambda_.16} parent=0
    _
  %s16 = ssub.s32 1, %s14
  %s17 = scalar_select 0, %s16, %s14
  loop: start=0, step=1, limit=4
  $region2: #{_lambda_.16} parent=0 // loop_pre_header
    _
  $region3: #{_lambda_.16} parent=0 // loop_header
    %s19 = sphi 0, %s23
    %p20 = scmp.ge.s32.totalorder %s19, 4
    %s29 = sphi 0, %s31
    %s32 = sphi 0, %s29
    %s33 = sphi 0, %s32
    %s49 = sphi 0, %s33
    %s53 = sphi 0, %s53
    %s55 = sphi 0, %s53
    %s56 = sphi 0, %s55
    %s70 = sphi 0, %s56
    %s74 = sphi 0, %s74
    %s76 = sphi 0, %s74
    %s77 = sphi 0, %s76
    %s91 = sphi 0, %s77
    %s95 = sphi 0, %s95
    %s97 = sphi 0, %s95
    %s98 = sphi 0, %s97
    %s112 = sphi 0, %s98
    %s116 = sphi 0, %s116
    %s118 = sphi 0, %s116
    %s119 = sphi 0, %s118
    %s133 = sphi 0, %s119
    %s137 = sphi 0, %s137
    %s139 = sphi 0, %s137
    %s140 = sphi 0, %s139
    %s154 = sphi 0, %s140
    %s158 = sphi 0, %s158
    %s160 = sphi 0, %s158
    %s161 = sphi 0, %s160
    %s175 = sphi 0, %s161
    %s179 = sphi 0, %s179
    %s181 = sphi 0, %s179
    %s182 = sphi 0, %s181
    %s196 = sphi 0, %s182
    %s200 = sphi 0, %s200
    %s202 = sphi 0, %s200
    %s203 = sphi 0, %s202
    %s217 = sphi 0, %s203
    %s221 = sphi 0, %s221
    %s223 = sphi 0, %s221
    %s224 = sphi 0, %s223
    %s238 = sphi 0, %s224
    %s242 = sphi 0, %s242
    %s244 = sphi 0, %s242
    %s245 = sphi 0, %s244
    %s259 = sphi 0, %s245
    %s263 = sphi 0, %s263
    %s265 = sphi 0, %s263
    %s266 = sphi 0, %s265
    %s280 = sphi 0, %s266
    %s284 = sphi 0, %s284
    %s286 = sphi 0, %s284
    %s287 = sphi 0, %s286
    %s301 = sphi 0, %s287
    %s307 = sphi 0, %s309
    %s310 = sphi 0, %s307
    %s311 = sphi 0, %s310
    %s327 = sphi 0, %s311
  $region4: #{_lambda_.16} parent=0 // loop_header_branch
    %22 = sbr.rel (%p20) target = $region8
  $region5: #{_lambda_.16} parent=0 // loop_body
    %s24 = ssub.s32 %s19, 1
    %s25 = ssub.s32 %s19, 2
    %s26 = sadd.s32 %s19, 1
    %s27 = ssub.s32 %s19, %s26
    %p28 = scmp.eq.s32.totalorder %s27, 0
    %s30 = sadd.s32 %s29, 1
    %s31 = scalar_select %p28, %s29, %s30
    %p34 = pneg %p28
    %p35 = scmp.eq.s32.totalorder %s19, 1
    %p36 = por %p34, %p35
    %p37 = scmp.ne.s32.totalorder %s29, %s32
    %p38 = scmp.eq.s32.totalorder %s19, 0
    %p39 = por %p37, %p38
    %p40 = scmp.ne.s32.totalorder %s29, %s32
    %p41 = scmp.eq.s32.totalorder %s24, 1
    %p42 = por %p40, %p41
    %p43 = scmp.ne.s32.totalorder %s32, %s33
    %p44 = scmp.eq.s32.totalorder %s24, 0
    %p45 = por %p43, %p44
    %p46 = scmp.ne.s32.totalorder %s32, %s33
    %p47 = scmp.eq.s32.totalorder %s25, 1
    %p48 = por %p46, %p47
    %p50 = scmp.ne.s32.totalorder %s33, %s49
    %p51 = scmp.eq.s32.totalorder %s25, 0
    %p52 = por %p50, %p51
    %s54 = sadd.s32 %s53, 1
    %p57 = scmp.eq.s32.totalorder %s19, 1
    %p58 = scmp.ne.s32.totalorder %s53, %s55
    %p59 = scmp.eq.s32.totalorder %s19, 0
    %p60 = por %p58, %p59
    %p61 = scmp.ne.s32.totalorder %s53, %s55
    %p62 = scmp.eq.s32.totalorder %s24, 1
    %p63 = por %p61, %p62
    %p64 = scmp.ne.s32.totalorder %s55, %s56
    %p65 = scmp.eq.s32.totalorder %s24, 0
    %p66 = por %p64, %p65
    %p67 = scmp.ne.s32.totalorder %s55, %s56
    %p68 = scmp.eq.s32.totalorder %s25, 1
    %p69 = por %p67, %p68
    %p71 = scmp.ne.s32.totalorder %s56, %s70
    %p72 = scmp.eq.s32.totalorder %s25, 0
    %p73 = por %p71, %p72
    %s75 = sadd.s32 %s74, 1
    %p78 = scmp.eq.s32.totalorder %s19, 1
    %p79 = scmp.ne.s32.totalorder %s74, %s76
    %p80 = scmp.eq.s32.totalorder %s19, 0
    %p81 = por %p79, %p80
    %p82 = scmp.ne.s32.totalorder %s74, %s76
    %p83 = scmp.eq.s32.totalorder %s24, 1
    %p84 = por %p82, %p83
    %p85 = scmp.ne.s32.totalorder %s76, %s77
    %p86 = scmp.eq.s32.totalorder %s24, 0
    %p87 = por %p85, %p86
    %p88 = scmp.ne.s32.totalorder %s76, %s77
    %p89 = scmp.eq.s32.totalorder %s25, 1
    %p90 = por %p88, %p89
    %p92 = scmp.ne.s32.totalorder %s77, %s91
    %p93 = scmp.eq.s32.totalorder %s25, 0
    %p94 = por %p92, %p93
    %s96 = sadd.s32 %s95, 1
    %p99 = scmp.eq.s32.totalorder %s19, 1
    %p100 = scmp.ne.s32.totalorder %s95, %s97
    %p101 = scmp.eq.s32.totalorder %s19, 0
    %p102 = por %p100, %p101
    %p103 = scmp.ne.s32.totalorder %s95, %s97
    %p104 = scmp.eq.s32.totalorder %s24, 1
    %p105 = por %p103, %p104
    %p106 = scmp.ne.s32.totalorder %s97, %s98
    %p107 = scmp.eq.s32.totalorder %s24, 0
    %p108 = por %p106, %p107
    %p109 = scmp.ne.s32.totalorder %s97, %s98
    %p110 = scmp.eq.s32.totalorder %s25, 1
    %p111 = por %p109, %p110
    %p113 = scmp.ne.s32.totalorder %s98, %s112
    %p114 = scmp.eq.s32.totalorder %s25, 0
    %p115 = por %p113, %p114
    %s117 = sadd.s32 %s116, 1
    %p120 = scmp.eq.s32.totalorder %s19, 1
    %p121 = scmp.ne.s32.totalorder %s116, %s118
    %p122 = scmp.eq.s32.totalorder %s19, 0
    %p123 = por %p121, %p122
    %p124 = scmp.ne.s32.totalorder %s116, %s118
    %p125 = scmp.eq.s32.totalorder %s24, 1
    %p126 = por %p124, %p125
    %p127 = scmp.ne.s32.totalorder %s118, %s119
    %p128 = scmp.eq.s32.totalorder %s24, 0
    %p129 = por %p127, %p128
    %p130 = scmp.ne.s32.totalorder %s118, %s119
    %p131 = scmp.eq.s32.totalorder %s25, 1
    %p132 = por %p130, %p131
    %p134 = scmp.ne.s32.totalorder %s119, %s133
    %p135 = scmp.eq.s32.totalorder %s25, 0
    %p136 = por %p134, %p135
    %s138 = sadd.s32 %s137, 1
    %p141 = scmp.eq.s32.totalorder %s19, 1
    %p142 = scmp.ne.s32.totalorder %s137, %s139
    %p143 = scmp.eq.s32.totalorder %s19, 0
    %p144 = por %p142, %p143
    %p145 = scmp.ne.s32.totalorder %s137, %s139
    %p146 = scmp.eq.s32.totalorder %s24, 1
    %p147 = por %p145, %p146
    %p148 = scmp.ne.s32.totalorder %s139, %s140
    %p149 = scmp.eq.s32.totalorder %s24, 0
    %p150 = por %p148, %p149
    %p151 = scmp.ne.s32.totalorder %s139, %s140
    %p152 = scmp.eq.s32.totalorder %s25, 1
    %p153 = por %p151, %p152
    %p155 = scmp.ne.s32.totalorder %s140, %s154
    %p156 = scmp.eq.s32.totalorder %s25, 0
    %p157 = por %p155, %p156
    %s159 = sadd.s32 %s158, 1
    %p162 = scmp.eq.s32.totalorder %s19, 1
    %p163 = scmp.ne.s32.totalorder %s158, %s160
    %p164 = scmp.eq.s32.totalorder %s19, 0
    %p165 = por %p163, %p164
    %p166 = scmp.ne.s32.totalorder %s158, %s160
    %p167 = scmp.eq.s32.totalorder %s24, 1
    %p168 = por %p166, %p167
    %p169 = scmp.ne.s32.totalorder %s160, %s161
    %p170 = scmp.eq.s32.totalorder %s24, 0
    %p171 = por %p169, %p170
    %p172 = scmp.ne.s32.totalorder %s160, %s161
    %p173 = scmp.eq.s32.totalorder %s25, 1
    %p174 = por %p172, %p173
    %p176 = scmp.ne.s32.totalorder %s161, %s175
    %p177 = scmp.eq.s32.totalorder %s25, 0
    %p178 = por %p176, %p177
    %s180 = sadd.s32 %s179, 1
    %p183 = scmp.eq.s32.totalorder %s19, 1
    %p184 = scmp.ne.s32.totalorder %s179, %s181
    %p185 = scmp.eq.s32.totalorder %s19, 0
    %p186 = por %p184, %p185
    %p187 = scmp.ne.s32.totalorder %s179, %s181
    %p188 = scmp.eq.s32.totalorder %s24, 1
    %p189 = por %p187, %p188
    %p190 = scmp.ne.s32.totalorder %s181, %s182
    %p191 = scmp.eq.s32.totalorder %s24, 0
    %p192 = por %p190, %p191
    %p193 = scmp.ne.s32.totalorder %s181, %s182
    %p194 = scmp.eq.s32.totalorder %s25, 1
    %p195 = por %p193, %p194
    %p197 = scmp.ne.s32.totalorder %s182, %s196
    %p198 = scmp.eq.s32.totalorder %s25, 0
    %p199 = por %p197, %p198
    %s201 = sadd.s32 %s200, 1
    %p204 = scmp.eq.s32.totalorder %s19, 1
    %p205 = scmp.ne.s32.totalorder %s200, %s202
    %p206 = scmp.eq.s32.totalorder %s19, 0
    %p207 = por %p205, %p206
    %p208 = scmp.ne.s32.totalorder %s200, %s202
    %p209 = scmp.eq.s32.totalorder %s24, 1
    %p210 = por %p208, %p209
    %p211 = scmp.ne.s32.totalorder %s202, %s203
    %p212 = scmp.eq.s32.totalorder %s24, 0
    %p213 = por %p211, %p212
    %p214 = scmp.ne.s32.totalorder %s202, %s203
    %p215 = scmp.eq.s32.totalorder %s25, 1
    %p216 = por %p214, %p215
    %p218 = scmp.ne.s32.totalorder %s203, %s217
    %p219 = scmp.eq.s32.totalorder %s25, 0
    %p220 = por %p218, %p219
    %s222 = sadd.s32 %s221, 1
    %p225 = scmp.eq.s32.totalorder %s19, 1
    %p226 = scmp.ne.s32.totalorder %s221, %s223
    %p227 = scmp.eq.s32.totalorder %s19, 0
    %p228 = por %p226, %p227
    %p229 = scmp.ne.s32.totalorder %s221, %s223
    %p230 = scmp.eq.s32.totalorder %s24, 1
    %p231 = por %p229, %p230
    %p232 = scmp.ne.s32.totalorder %s223, %s224
    %p233 = scmp.eq.s32.totalorder %s24, 0
    %p234 = por %p232, %p233
    %p235 = scmp.ne.s32.totalorder %s223, %s224
    %p236 = scmp.eq.s32.totalorder %s25, 1
    %p237 = por %p235, %p236
    %p239 = scmp.ne.s32.totalorder %s224, %s238
    %p240 = scmp.eq.s32.totalorder %s25, 0
    %p241 = por %p239, %p240
    %s243 = sadd.s32 %s242, 1
    %p246 = scmp.eq.s32.totalorder %s19, 1
    %p247 = scmp.ne.s32.totalorder %s242, %s244
    %p248 = scmp.eq.s32.totalorder %s19, 0
    %p249 = por %p247, %p248
    %p250 = scmp.ne.s32.totalorder %s242, %s244
    %p251 = scmp.eq.s32.totalorder %s24, 1
    %p252 = por %p250, %p251
    %p253 = scmp.ne.s32.totalorder %s244, %s245
    %p254 = scmp.eq.s32.totalorder %s24, 0
    %p255 = por %p253, %p254
    %p256 = scmp.ne.s32.totalorder %s244, %s245
    %p257 = scmp.eq.s32.totalorder %s25, 1
    %p258 = por %p256, %p257
    %p260 = scmp.ne.s32.totalorder %s245, %s259
    %p261 = scmp.eq.s32.totalorder %s25, 0
    %p262 = por %p260, %p261
    %s264 = sadd.s32 %s263, 1
    %p267 = scmp.eq.s32.totalorder %s19, 1
    %p268 = scmp.ne.s32.totalorder %s263, %s265
    %p269 = scmp.eq.s32.totalorder %s19, 0
    %p270 = por %p268, %p269
    %p271 = scmp.ne.s32.totalorder %s263, %s265
    %p272 = scmp.eq.s32.totalorder %s24, 1
    %p273 = por %p271, %p272
    %p274 = scmp.ne.s32.totalorder %s265, %s266
    %p275 = scmp.eq.s32.totalorder %s24, 0
    %p276 = por %p274, %p275
    %p277 = scmp.ne.s32.totalorder %s265, %s266
    %p278 = scmp.eq.s32.totalorder %s25, 1
    %p279 = por %p277, %p278
    %p281 = scmp.ne.s32.totalorder %s266, %s280
    %p282 = scmp.eq.s32.totalorder %s25, 0
    %p283 = por %p281, %p282
    %s285 = sadd.s32 %s284, 1
    %p288 = scmp.eq.s32.totalorder %s19, 1
    %p289 = scmp.ne.s32.totalorder %s284, %s286
    %p290 = scmp.eq.s32.totalorder %s19, 0
    %p291 = por %p289, %p290
    %p292 = scmp.ne.s32.totalorder %s284, %s286
    %p293 = scmp.eq.s32.totalorder %s24, 1
    %p294 = por %p292, %p293
    %p295 = scmp.ne.s32.totalorder %s286, %s287
    %p296 = scmp.eq.s32.totalorder %s24, 0
    %p297 = por %p295, %p296
    %p298 = scmp.ne.s32.totalorder %s286, %s287
    %p299 = scmp.eq.s32.totalorder %s25, 1
    %p300 = por %p298, %p299
    %p302 = scmp.ne.s32.totalorder %s287, %s301
    %p303 = scmp.eq.s32.totalorder %s25, 0
    %p304 = por %p302, %p303
    %s305 = ssub.s32 %s19, %s26
    %p306 = scmp.eq.s32.totalorder %s305, 0
    %s308 = sadd.s32 %s307, 1
    %s309 = scalar_select %p306, %s307, %s308
    %p312 = pneg %p306
    %p313 = scmp.eq.s32.totalorder %s19, 1
    %p314 = por %p312, %p313
    %p315 = scmp.ne.s32.totalorder %s307, %s310
    %p316 = scmp.eq.s32.totalorder %s19, 0
    %p317 = por %p315, %p316
    %p318 = scmp.ne.s32.totalorder %s307, %s310
    %p319 = scmp.eq.s32.totalorder %s24, 1
    %p320 = por %p318, %p319
    %p321 = scmp.ne.s32.totalorder %s310, %s311
    %p322 = scmp.eq.s32.totalorder %s24, 0
    %p323 = por %p321, %p322
    %p324 = scmp.ne.s32.totalorder %s310, %s311
    %p325 = scmp.eq.s32.totalorder %s25, 1
    %p326 = por %p324, %p325
    %p328 = scmp.ne.s32.totalorder %s311, %s327
    %p329 = scmp.eq.s32.totalorder %s25, 0
    %p330 = por %p328, %p329
    %p331 = scmp.le.s32.totalorder 1, %s19
    %p332 = scmp.lt.s32.totalorder %s19, 3
    %p333 = pnand %p331, %p332
    %p334 = pneg %p333
    // Predicated region
    $region9: #{_lambda_.16} parent=5 // pred_check
      _
    $region10: #{_lambda_.16} parent=5 // pred_check_branch
      %336 = sbr.rel (%p333) target = $region12
    $region11: #{_lambda_.16} parent=5 // pred_region
      %s337 = ssub.s32 %s19, 1
      // Predicated region
      $region13: #{_lambda_.16} parent=11 // pred_check
        %p338 = pneg %p66
      $region14: #{_lambda_.16} parent=11 // pred_check_branch
        %340 = sbr.rel (%p338) target = $region16
      $region15: #{_lambda_.16} parent=11 // pred_region
        _
      $region16: #{_lambda_.16} parent=11 // pred_fallthru
        _
      // Predicated region
      $region17: #{_lambda_.16} parent=11 // pred_check
        %p341 = pneg %p87
      $region18: #{_lambda_.16} parent=11 // pred_check_branch
        %343 = sbr.rel (%p341) target = $region20
      $region19: #{_lambda_.16} parent=11 // pred_region
        _
      $region20: #{_lambda_.16} parent=11 // pred_fallthru
        _
      // Predicated region
      $region21: #{_lambda_.16} parent=11 // pred_check
        %p344 = pneg %p108
      $region22: #{_lambda_.16} parent=11 // pred_check_branch
        %346 = sbr.rel (%p344) target = $region24
      $region23: #{_lambda_.16} parent=11 // pred_region
        _
      $region24: #{_lambda_.16} parent=11 // pred_fallthru
        _
      // Predicated region
      $region25: #{_lambda_.16} parent=11 // pred_check
        %p347 = pneg %p129
      $region26: #{_lambda_.16} parent=11 // pred_check_branch
        %349 = sbr.rel (%p347) target = $region28
      $region27: #{_lambda_.16} parent=11 // pred_region
        _
      $region28: #{_lambda_.16} parent=11 // pred_fallthru
        _
      // Predicated region
      $region29: #{_lambda_.16} parent=11 // pred_check
        %p350 = pneg %p150
      $region30: #{_lambda_.16} parent=11 // pred_check_branch
        %352 = sbr.rel (%p350) target = $region32
      $region31: #{_lambda_.16} parent=11 // pred_region
        _
      $region32: #{_lambda_.16} parent=11 // pred_fallthru
        _
      // Predicated region
      $region33: #{_lambda_.16} parent=11 // pred_check
        %p353 = pneg %p171
      $region34: #{_lambda_.16} parent=11 // pred_check_branch
        %355 = sbr.rel (%p353) target = $region36
      $region35: #{_lambda_.16} parent=11 // pred_region
        _
      $region36: #{_lambda_.16} parent=11 // pred_fallthru
        _
      // Predicated region
      $region37: #{_lambda_.16} parent=11 // pred_check
        %p356 = pneg %p192
      $region38: #{_lambda_.16} parent=11 // pred_check_branch
        %358 = sbr.rel (%p356) target = $region40
      $region39: #{_lambda_.16} parent=11 // pred_region
        _
      $region40: #{_lambda_.16} parent=11 // pred_fallthru
        _
      // Predicated region
      $region41: #{_lambda_.16} parent=11 // pred_check
        %p359 = pneg %p213
      $region42: #{_lambda_.16} parent=11 // pred_check_branch
        %361 = sbr.rel (%p359) target = $region44
      $region43: #{_lambda_.16} parent=11 // pred_region
        _
      $region44: #{_lambda_.16} parent=11 // pred_fallthru
        _
      // Predicated region
      $region45: #{_lambda_.16} parent=11 // pred_check
        %p362 = pneg %p234
      $region46: #{_lambda_.16} parent=11 // pred_check_branch
        %364 = sbr.rel (%p362) target = $region48
      $region47: #{_lambda_.16} parent=11 // pred_region
        _
      $region48: #{_lambda_.16} parent=11 // pred_fallthru
        _
      // Predicated region
      $region49: #{_lambda_.16} parent=11 // pred_check
        %p365 = pneg %p255
      $region50: #{_lambda_.16} parent=11 // pred_check_branch
        %367 = sbr.rel (%p365) target = $region52
      $region51: #{_lambda_.16} parent=11 // pred_region
        _
      $region52: #{_lambda_.16} parent=11 // pred_fallthru
        _
      // Predicated region
      $region53: #{_lambda_.16} parent=11 // pred_check
        %p368 = pneg %p276
      $region54: #{_lambda_.16} parent=11 // pred_check_branch
        %370 = sbr.rel (%p368) target = $region56
      $region55: #{_lambda_.16} parent=11 // pred_region
        _
      $region56: #{_lambda_.16} parent=11 // pred_fallthru
        _
      // Predicated region
      $region57: #{_lambda_.16} parent=11 // pred_check
        %p371 = pneg %p297
      $region58: #{_lambda_.16} parent=11 // pred_check_branch
        %373 = sbr.rel (%p371) target = $region60
      $region59: #{_lambda_.16} parent=11 // pred_region
        _
      $region60: #{_lambda_.16} parent=11 // pred_fallthru
        _
    $region12: #{_lambda_.16} parent=5 // pred_fallthru
      _
    %p374 = scmp.lt.s32.totalorder %s19, 2
    // Predicated region
    $region61: #{_lambda_.16} parent=5 // pred_check
      %p375 = pneg %p374
    $region62: #{_lambda_.16} parent=5 // pred_check_branch
      %377 = sbr.rel (%p375) target = $region64
    $region63: #{_lambda_.16} parent=5 // pred_region
      // Predicated region
      $region65: #{_lambda_.16} parent=63 // pred_check
        %p378 = pneg %p39
      $region66: #{_lambda_.16} parent=63 // pred_check_branch
        %380 = sbr.rel (%p378) target = $region68
      $region67: #{_lambda_.16} parent=63 // pred_region
        %p381 = scmp.lt.s32.totalorder %s19, 1
        %s382 = scalar_select %p381, %s19, 1
        %s383 = smul.addr %s382, 2
        %s384 = smul.addr %s383, 8
        %s385 = scalar_lea.vmem %s0, %s384
      $region68: #{_lambda_.16} parent=63 // pred_fallthru
        _
    $region64: #{_lambda_.16} parent=5 // pred_fallthru
      _
    %p386 = scmp.le.s32.totalorder 1, %s19
    %p387 = scmp.lt.s32.totalorder %s19, 3
    %p388 = pnand %p386, %p387
    %p389 = pneg %p388
    // Predicated region
    $region69: #{_lambda_.16} parent=5 // pred_check
      _
    $region70: #{_lambda_.16} parent=5 // pred_check_branch
      %391 = sbr.rel (%p388) target = $region72
    $region71: #{_lambda_.16} parent=5 // pred_region
      %s392 = ssub.s32 %s19, 1
      %p393 = scmp.lt.s32.totalorder %s24, 1
      %s394 = scalar_select %p393, %s24, 1
      %s395 = smul.addr %s394, 2
      %s396 = smul.addr %s395, 8
      %s397 = scalar_lea.vmem %s0, %s396
      %p398 = pneg %p45
      %p399 = pneg %p42
      %p400 = pneg %p66
      %p401 = pneg %p63
      %p402 = pneg %p87
      %p403 = pneg %p84
      %p404 = pneg %p108
      %p405 = pneg %p105
      %p406 = pneg %p129
      %p407 = pneg %p126
      %p408 = pneg %p150
      %p409 = pneg %p147
      %p410 = pneg %p171
      %p411 = pneg %p168
      %p412 = pneg %p192
      %p413 = pneg %p189
      %p414 = pneg %p213
      %p415 = pneg %p210
      %p416 = pneg %p234
      %p417 = pneg %p231
      %p418 = pneg %p255
      %p419 = pneg %p252
      %p420 = pneg %p276
      %p421 = pneg %p273
      %p422 = pneg %p297
      %p423 = pneg %p294
      %p424 = pneg %p323
      %p425 = pneg %p320
      %p426 = scmp.lt.s32.totalorder %s24, 1
      %s427 = scalar_select %p426, %s24, 1
      %s428 = smul.addr %s427, 2
      %s429 = smul.addr %s428, 8
      %s430 = scalar_lea.vmem %s13, %s429
      %p431 = scmp.lt.s32.totalorder %s24, 1
      %s432 = scalar_select %p431, %s24, 1
      %s433 = smul.addr %s432, 2
      %s434 = smul.addr %s433, 8
      %s435 = scalar_lea.vmem %s0, %s434
      %p436 = scmp.lt.s32.totalorder %s24, 1
      %s437 = scalar_select %p436, %s24, 1
      %s438 = smul.addr %s437, 2
      %s439 = smul.addr %s438, 8
      %s440 = scalar_lea.vmem %s13, %s439
      %v442 = vld [vmem:[%s435] sm:$0xff]
      %v443 = vld [vmem:[%s435 + $0x8] sm:$0xff]
      %v444 = vld [vmem:[%s1] sm:$0xff]
      %v445 = vld [vmem:[%s1 + $0x8] sm:$0xff]
      %447 = vset.pattern.permute.xlu0 0
      %448 = vperm.xlu0 %447, %v444
      %v449 = vpop.permute.xlu0 %448
      %452 = vset.pattern.permute.xlu0 0
      %453 = vperm.xlu0 %452, %v445
      %v454 = vpop.permute.xlu0 %453
      %v456 = vmul.f32 %v442, %v449
      %v457 = vmul.f32 %v443, %v454
      %v458 = vld [vmem:[%s2] sm:$0xff]
      %v459 = vld [vmem:[%s2 + $0x8] sm:$0xff]
      %461 = vset.pattern.permute.xlu0 0
      %462 = vperm.xlu0 %461, %v458
      %v463 = vpop.permute.xlu0 %462
      %466 = vset.pattern.permute.xlu0 0
      %467 = vperm.xlu0 %466, %v459
      %v468 = vpop.permute.xlu0 %467
      %v470 = vadd.f32 %v456, %v463
      %v471 = vadd.f32 %v457, %v468
      %v472 = vmax.f32 %v470, 0.0
      %v473 = vmax.f32 %v471, 0.0
      %v474 = vld [vmem:[%s3] sm:$0xff]
      %v475 = vpack.c.bf16 %v474, %v474
      %v476 = vpack.c.bf16 %v473, %v472
      %v477 = vld [vmem:[%s4] sm:$0xff]
      %479 = vset.pattern.permute.xlu0 0
      %480 = vperm.xlu0 %479, %v477
      %v481 = vpop.permute.xlu0 %480
      %vm483 = vcmask 130048
      %v485 = vsel %vm483, %v475, 0
      %487 = vmatpush.bf16.msra.mxu0 0
      %488 = vmatpush.bf16.msra.mxu0 0
      %489 = vmatpush.bf16.msra.mxu0 0
      %490 = vmatpush.bf16.msra.mxu0 0
      %491 = vmatpush.bf16.msra.mxu0 0
      %492 = vmatpush.bf16.msra.mxu0 0
      %493 = vmatpush.bf16.msra.mxu0 0
      %494 = vmatpush.bf16.msra.mxu0 %v476
      %495 = vmatmul.bf16.gmra.mxu0 %v485
      %v496 = vpop.f32.mrf.mxu0
      %v497 = vadd.f32 %v481, %v496
      %v498 = vpop.f32.mrf.mxu0
      %499 = vdwg.mxu0
      %v500 = vld [vmem:[%s5] sm:$0xff]
      %502 = vset.pattern.permute.xlu0 0
      %503 = vperm.xlu0 %502, %v500
      %v504 = vpop.permute.xlu0 %503
      %v506 = vmul.f32 %v497, %v504
      %v507 = vld [vmem:[%s6] sm:$0xff]
      %509 = vset.pattern.permute.xlu0 0
      %510 = vperm.xlu0 %509, %v507
      %v511 = vpop.permute.xlu0 %510
      %v513 = vadd.f32 %v506, %v511
      %v514 = vmax.f32 %v513, 0.0
      %v515 = vlaneseq
      %v516 = vshrl.u32 %v515, 7
      %v517 = vadd.s32 %v516, 8
      %v518 = vadd.s32 %v516, 16
      %v519 = vadd.s32 %v516, 24
      %v520 = vadd.s32 %v516, 32
      %v521 = vadd.s32 %v516, 40
      %v522 = vadd.s32 %v516, 48
      %v523 = vadd.s32 %v516, 56
      %v524 = vlaneseq
      %v525 = vand.u32 %v524, 127
      %v526 = vshra.s32 %v525, 3
      %v527 = vand.u32 %v525, 7
      %v528 = vadd.s32 %v526, 4294967295
      %vm529 = vcmp.ge.s32.totalorder %v528, 0
      %vm530 = vcmp.lt.s32.totalorder %v528, 8
      %vm531 = vmand %vm529, %vm530
      %v532 = vadd.s32 %v527, 4294967295
      %vm533 = vcmp.ge.s32.totalorder %v532, 0
      %vm534 = vmand %vm531, %vm533
      %vm535 = vcmp.lt.s32.totalorder %v532, 8
      %vm536 = vmand %vm534, %vm535
      %v537 = vadd.s32 %v525, 4294967288
      %v538 = vadd.s32 %v537, 4294967295
      %vm539 = vcmp.eq.s32.totalorder %v516, %v538
      %vm540 = vcmp.eq.s32.totalorder %v517, %v538
      %vm541 = vcmp.eq.s32.totalorder %v518, %v538
      %vm542 = vcmp.eq.s32.totalorder %v519, %v538
      %vm543 = vcmp.eq.s32.totalorder %v520, %v538
      %vm544 = vcmp.eq.s32.totalorder %v521, %v538
      %vm545 = vcmp.eq.s32.totalorder %v522, %v538
      %vm546 = vcmp.eq.s32.totalorder %v523, %v538
      %vm547 = vmand %vm539, %vm536
      %vm548 = vmand %vm540, %vm536
      %vm549 = vmand %vm541, %vm536
      %vm550 = vmand %vm542, %vm536
      %vm551 = vmand %vm543, %vm536
      %vm552 = vmand %vm544, %vm536
      %vm553 = vmand %vm545, %vm536
      %vm554 = vmand %vm546, %vm536
      %v555 = vsel %vm547, 1, 0
      %v556 = vsel %vm548, 1, 0
      %v557 = vsel %vm549, 1, 0
      %v558 = vsel %vm550, 1, 0
      %v559 = vsel %vm551, 1, 0
      %v560 = vsel %vm552, 1, 0
      %v561 = vsel %vm553, 1, 0
      %v562 = vsel %vm554, 1, 0
      %v563 = vcvt.s32.f32 %v555
      %v564 = vcvt.s32.f32 %v556
      %v565 = vcvt.s32.f32 %v557
      %v566 = vcvt.s32.f32 %v558
      %v567 = vcvt.s32.f32 %v559
      %v568 = vcvt.s32.f32 %v560
      %v569 = vcvt.s32.f32 %v561
      %v570 = vcvt.s32.f32 %v562
      %vm571 = vcmask 523264
      %v573 = vsel %vm571, %v514, 0
      %575 = vmatpush.msra.mxu0 0.0
      %576 = vmatpush.msra.mxu0 0.0
      %577 = vmatpush.msra.mxu0 0.0
      %578 = vmatpush.msra.mxu0 0.0
      %579 = vmatpush.msra.mxu0 0.0
      %580 = vmatpush.msra.mxu0 0.0
      %581 = vmatpush.msra.mxu0 0.0
      %582 = vmatpush.msra.mxu0 0.0
      %583 = vmatpush.msra.mxu0 %v570
      %584 = vmatpush.msra.mxu0 %v569
      %585 = vmatpush.msra.mxu0 %v568
      %586 = vmatpush.msra.mxu0 %v567
      %587 = vmatpush.msra.mxu0 %v566
      %588 = vmatpush.msra.mxu0 %v565
      %589 = vmatpush.msra.mxu0 %v564
      %590 = vmatpush.msra.mxu0 %v563
      %591 = vmatmul.f32.gmra.mxu0 %v573
      %v592 = vpop.f32.mrf.mxu0
      %v593 = vadd.f32 0.0, %v592
      %594 = vdwg.mxu0
      %vm595 = vcmp.ge.s32.totalorder %v527, 0
      %vm596 = vmand %vm531, %vm595
      %vm597 = vcmp.lt.s32.totalorder %v527, 8
      %vm598 = vmand %vm596, %vm597
      %vm599 = vcmp.eq.s32.totalorder %v516, %v537
      %vm600 = vcmp.eq.s32.totalorder %v517, %v537
      %vm601 = vcmp.eq.s32.totalorder %v518, %v537
      %vm602 = vcmp.eq.s32.totalorder %v519, %v537
      %vm603 = vcmp.eq.s32.totalorder %v520, %v537
      %vm604 = vcmp.eq.s32.totalorder %v521, %v537
      %vm605 = vcmp.eq.s32.totalorder %v522, %v537
      %vm606 = vcmp.eq.s32.totalorder %v523, %v537
      %vm607 = vmand %vm599, %vm598
      %vm608 = vmand %vm600, %vm598
      %vm609 = vmand %vm601, %vm598
      %vm610 = vmand %vm602, %vm598
      %vm611 = vmand %vm603, %vm598
      %vm612 = vmand %vm604, %vm598
      %vm613 = vmand %vm605, %vm598
      %vm614 = vmand %vm606, %vm598
      %v615 = vsel %vm607, 1, 0
      %v616 = vsel %vm608, 1, 0
      %v617 = vsel %vm609, 1, 0
      %v618 = vsel %vm610, 1, 0
      %v619 = vsel %vm611, 1, 0
      %v620 = vsel %vm612, 1, 0
      %v621 = vsel %vm613, 1, 0
      %v622 = vsel %vm614, 1, 0
      %v623 = vcvt.s32.f32 %v615
      %v624 = vcvt.s32.f32 %v616
      %v625 = vcvt.s32.f32 %v617
      %v626 = vcvt.s32.f32 %v618
      %v627 = vcvt.s32.f32 %v619
      %v628 = vcvt.s32.f32 %v620
      %v629 = vcvt.s32.f32 %v621
      %v630 = vcvt.s32.f32 %v622
      %631 = vmatpush.msra.mxu0 0.0
      %632 = vmatpush.msra.mxu0 0.0
      %633 = vmatpush.msra.mxu0 0.0
      %634 = vmatpush.msra.mxu0 0.0
      %635 = vmatpush.msra.mxu0 0.0
      %636 = vmatpush.msra.mxu0 0.0
      %637 = vmatpush.msra.mxu0 0.0
      %638 = vmatpush.msra.mxu0 0.0
      %639 = vmatpush.msra.mxu0 %v630
      %640 = vmatpush.msra.mxu0 %v629
      %641 = vmatpush.msra.mxu0 %v628
      %642 = vmatpush.msra.mxu0 %v627
      %643 = vmatpush.msra.mxu0 %v626
      %644 = vmatpush.msra.mxu0 %v625
      %645 = vmatpush.msra.mxu0 %v624
      %646 = vmatpush.msra.mxu0 %v623
      %647 = vmatmul.f32.gmra.mxu0 %v573
      %v648 = vpop.f32.mrf.mxu0
      %v649 = vadd.f32 0.0, %v648
      %650 = vdwg.mxu0
      %v651 = vadd.s32 %v527, 1
      %vm652 = vcmp.ge.s32.totalorder %v651, 0
      %vm653 = vmand %vm531, %vm652
      %vm654 = vcmp.lt.s32.totalorder %v651, 8
      %vm655 = vmand %vm653, %vm654
      %v656 = vadd.s32 %v537, 1
      %vm657 = vcmp.eq.s32.totalorder %v516, %v656
      %vm658 = vcmp.eq.s32.totalorder %v517, %v656
      %vm659 = vcmp.eq.s32.totalorder %v518, %v656
      %vm660 = vcmp.eq.s32.totalorder %v519, %v656
      %vm661 = vcmp.eq.s32.totalorder %v520, %v656
      %vm662 = vcmp.eq.s32.totalorder %v521, %v656
      %vm663 = vcmp.eq.s32.totalorder %v522, %v656
      %vm664 = vcmp.eq.s32.totalorder %v523, %v656
      %vm665 = vmand %vm657, %vm655
      %vm666 = vmand %vm658, %vm655
      %vm667 = vmand %vm659, %vm655
      %vm668 = vmand %vm660, %vm655
      %vm669 = vmand %vm661, %vm655
      %vm670 = vmand %vm662, %vm655
      %vm671 = vmand %vm663, %vm655
      %vm672 = vmand %vm664, %vm655
      %v673 = vsel %vm665, 1, 0
      %v674 = vsel %vm666, 1, 0
      %v675 = vsel %vm667, 1, 0
      %v676 = vsel %vm668, 1, 0
      %v677 = vsel %vm669, 1, 0
      %v678 = vsel %vm670, 1, 0
      %v679 = vsel %vm671, 1, 0
      %v680 = vsel %vm672, 1, 0
      %v681 = vcvt.s32.f32 %v673
      %v682 = vcvt.s32.f32 %v674
      %v683 = vcvt.s32.f32 %v675
      %v684 = vcvt.s32.f32 %v676
      %v685 = vcvt.s32.f32 %v677
      %v686 = vcvt.s32.f32 %v678
      %v687 = vcvt.s32.f32 %v679
      %v688 = vcvt.s32.f32 %v680
      %689 = vmatpush.msra.mxu0 0.0
      %690 = vmatpush.msra.mxu0 0.0
      %691 = vmatpush.msra.mxu0 0.0
      %692 = vmatpush.msra.mxu0 0.0
      %693 = vmatpush.msra.mxu0 0.0
      %694 = vmatpush.msra.mxu0 0.0
      %695 = vmatpush.msra.mxu0 0.0
      %696 = vmatpush.msra.mxu0 0.0
      %697 = vmatpush.msra.mxu0 %v688
      %698 = vmatpush.msra.mxu0 %v687
      %699 = vmatpush.msra.mxu0 %v686
      %700 = vmatpush.msra.mxu0 %v685
      %701 = vmatpush.msra.mxu0 %v684
      %702 = vmatpush.msra.mxu0 %v683
      %703 = vmatpush.msra.mxu0 %v682
      %704 = vmatpush.msra.mxu0 %v681
      %705 = vmatmul.f32.gmra.mxu0 %v573
      %v706 = vpop.f32.mrf.mxu0
      %v707 = vadd.f32 0.0, %v706
      %708 = vdwg.mxu0
      %vm709 = vcmp.ge.s32.totalorder %v526, 0
      %vm710 = vcmp.lt.s32.totalorder %v526, 8
      %vm711 = vmand %vm709, %vm710
      %vm712 = vmand %vm711, %vm533
      %vm713 = vmand %vm712, %vm535
      %v714 = vadd.s32 %v525, 4294967295
      %vm715 = vcmp.eq.s32.totalorder %v516, %v714
      %vm716 = vcmp.eq.s32.totalorder %v517, %v714
      %vm717 = vcmp.eq.s32.totalorder %v518, %v714
      %vm718 = vcmp.eq.s32.totalorder %v519, %v714
      %vm719 = vcmp.eq.s32.totalorder %v520, %v714
      %vm720 = vcmp.eq.s32.totalorder %v521, %v714
      %vm721 = vcmp.eq.s32.totalorder %v522, %v714
      %vm722 = vcmp.eq.s32.totalorder %v523, %v714
      %vm723 = vmand %vm715, %vm713
      %vm724 = vmand %vm716, %vm713
      %vm725 = vmand %vm717, %vm713
      %vm726 = vmand %vm718, %vm713
      %vm727 = vmand %vm719, %vm713
      %vm728 = vmand %vm720, %vm713
      %vm729 = vmand %vm721, %vm713
      %vm730 = vmand %vm722, %vm713
      %v731 = vsel %vm723, 1, 0
      %v732 = vsel %vm724, 1, 0
      %v733 = vsel %vm725, 1, 0
      %v734 = vsel %vm726, 1, 0
      %v735 = vsel %vm727, 1, 0
      %v736 = vsel %vm728, 1, 0
      %v737 = vsel %vm729, 1, 0
      %v738 = vsel %vm730, 1, 0
      %v739 = vcvt.s32.f32 %v731
      %v740 = vcvt.s32.f32 %v732
      %v741 = vcvt.s32.f32 %v733
      %v742 = vcvt.s32.f32 %v734
      %v743 = vcvt.s32.f32 %v735
      %v744 = vcvt.s32.f32 %v736
      %v745 = vcvt.s32.f32 %v737
      %v746 = vcvt.s32.f32 %v738
      %747 = vmatpush.msra.mxu0 0.0
      %748 = vmatpush.msra.mxu0 0.0
      %749 = vmatpush.msra.mxu0 0.0
      %750 = vmatpush.msra.mxu0 0.0
      %751 = vmatpush.msra.mxu0 0.0
      %752 = vmatpush.msra.mxu0 0.0
      %753 = vmatpush.msra.mxu0 0.0
      %754 = vmatpush.msra.mxu0 0.0
      %755 = vmatpush.msra.mxu0 %v746
      %756 = vmatpush.msra.mxu0 %v745
      %757 = vmatpush.msra.mxu0 %v744
      %758 = vmatpush.msra.mxu0 %v743
      %759 = vmatpush.msra.mxu0 %v742
      %760 = vmatpush.msra.mxu0 %v741
      %761 = vmatpush.msra.mxu0 %v740
      %762 = vmatpush.msra.mxu0 %v739
      %763 = vmatmul.f32.gmra.mxu0 %v573
      %v764 = vpop.f32.mrf.mxu0
      %v765 = vadd.f32 0.0, %v764
      %766 = vdwg.mxu0
      %vm767 = vmand %vm711, %vm652
      %vm768 = vmand %vm767, %vm654
      %v769 = vadd.s32 %v525, 1
      %vm770 = vcmp.eq.s32.totalorder %v516, %v769
      %vm771 = vcmp.eq.s32.totalorder %v517, %v769
      %vm772 = vcmp.eq.s32.totalorder %v518, %v769
      %vm773 = vcmp.eq.s32.totalorder %v519, %v769
      %vm774 = vcmp.eq.s32.totalorder %v520, %v769
      %vm775 = vcmp.eq.s32.totalorder %v521, %v769
      %vm776 = vcmp.eq.s32.totalorder %v522, %v769
      %vm777 = vcmp.eq.s32.totalorder %v523, %v769
      %vm778 = vmand %vm770, %vm768
      %vm779 = vmand %vm771, %vm768
      %vm780 = vmand %vm772, %vm768
      %vm781 = vmand %vm773, %vm768
      %vm782 = vmand %vm774, %vm768
      %vm783 = vmand %vm775, %vm768
      %vm784 = vmand %vm776, %vm768
      %vm785 = vmand %vm777, %vm768
      %v786 = vsel %vm778, 1, 0
      %v787 = vsel %vm779, 1, 0
      %v788 = vsel %vm780, 1, 0
      %v789 = vsel %vm781, 1, 0
      %v790 = vsel %vm782, 1, 0
      %v791 = vsel %vm783, 1, 0
      %v792 = vsel %vm784, 1, 0
      %v793 = vsel %vm785, 1, 0
      %v794 = vcvt.s32.f32 %v786
      %v795 = vcvt.s32.f32 %v787
      %v796 = vcvt.s32.f32 %v788
      %v797 = vcvt.s32.f32 %v789
      %v798 = vcvt.s32.f32 %v790
      %v799 = vcvt.s32.f32 %v791
      %v800 = vcvt.s32.f32 %v792
      %v801 = vcvt.s32.f32 %v793
      %802 = vmatpush.msra.mxu0 0.0
      %803 = vmatpush.msra.mxu0 0.0
      %804 = vmatpush.msra.mxu0 0.0
      %805 = vmatpush.msra.mxu0 0.0
      %806 = vmatpush.msra.mxu0 0.0
      %807 = vmatpush.msra.mxu0 0.0
      %808 = vmatpush.msra.mxu0 0.0
      %809 = vmatpush.msra.mxu0 0.0
      %810 = vmatpush.msra.mxu0 %v801
      %811 = vmatpush.msra.mxu0 %v800
      %812 = vmatpush.msra.mxu0 %v799
      %813 = vmatpush.msra.mxu0 %v798
      %814 = vmatpush.msra.mxu0 %v797
      %815 = vmatpush.msra.mxu0 %v796
      %816 = vmatpush.msra.mxu0 %v795
      %817 = vmatpush.msra.mxu0 %v794
      %818 = vmatmul.f32.gmra.mxu0 %v573
      %v819 = vpop.f32.mrf.mxu0
      %v820 = vadd.f32 0.0, %v819
      %821 = vdwg.mxu0
      %v822 = vadd.s32 %v526, 1
      %vm823 = vcmp.ge.s32.totalorder %v822, 0
      %vm824 = vcmp.lt.s32.totalorder %v822, 8
      %vm825 = vmand %vm823, %vm824
      %vm826 = vmand %vm825, %vm533
      %vm827 = vmand %vm826, %vm535
      %v828 = vadd.s32 %v525, 8
      %v829 = vadd.s32 %v828, 4294967295
      %vm830 = vcmp.eq.s32.totalorder %v516, %v829
      %vm831 = vcmp.eq.s32.totalorder %v517, %v829
      %vm832 = vcmp.eq.s32.totalorder %v518, %v829
      %vm833 = vcmp.eq.s32.totalorder %v519, %v829
      %vm834 = vcmp.eq.s32.totalorder %v520, %v829
      %vm835 = vcmp.eq.s32.totalorder %v521, %v829
      %vm836 = vcmp.eq.s32.totalorder %v522, %v829
      %vm837 = vcmp.eq.s32.totalorder %v523, %v829
      %vm838 = vmand %vm830, %vm827
      %vm839 = vmand %vm831, %vm827
      %vm840 = vmand %vm832, %vm827
      %vm841 = vmand %vm833, %vm827
      %vm842 = vmand %vm834, %vm827
      %vm843 = vmand %vm835, %vm827
      %vm844 = vmand %vm836, %vm827
      %vm845 = vmand %vm837, %vm827
      %v846 = vsel %vm838, 1, 0
      %v847 = vsel %vm839, 1, 0
      %v848 = vsel %vm840, 1, 0
      %v849 = vsel %vm841, 1, 0
      %v850 = vsel %vm842, 1, 0
      %v851 = vsel %vm843, 1, 0
      %v852 = vsel %vm844, 1, 0
      %v853 = vsel %vm845, 1, 0
      %v854 = vcvt.s32.f32 %v846
      %v855 = vcvt.s32.f32 %v847
      %v856 = vcvt.s32.f32 %v848
      %v857 = vcvt.s32.f32 %v849
      %v858 = vcvt.s32.f32 %v850
      %v859 = vcvt.s32.f32 %v851
      %v860 = vcvt.s32.f32 %v852
      %v861 = vcvt.s32.f32 %v853
      %862 = vmatpush.msra.mxu0 0.0
      %863 = vmatpush.msra.mxu0 0.0
      %864 = vmatpush.msra.mxu0 0.0
      %865 = vmatpush.msra.mxu0 0.0
      %866 = vmatpush.msra.mxu0 0.0
      %867 = vmatpush.msra.mxu0 0.0
      %868 = vmatpush.msra.mxu0 0.0
      %869 = vmatpush.msra.mxu0 0.0
      %870 = vmatpush.msra.mxu0 %v861
      %871 = vmatpush.msra.mxu0 %v860
      %872 = vmatpush.msra.mxu0 %v859
      %873 = vmatpush.msra.mxu0 %v858
      %874 = vmatpush.msra.mxu0 %v857
      %875 = vmatpush.msra.mxu0 %v856
      %876 = vmatpush.msra.mxu0 %v855
      %877 = vmatpush.msra.mxu0 %v854
      %878 = vmatmul.f32.gmra.mxu0 %v573
      %v879 = vpop.f32.mrf.mxu0
      %v880 = vadd.f32 0.0, %v879
      %881 = vdwg.mxu0
      %vm882 = vmand %vm825, %vm595
      %vm883 = vmand %vm882, %vm597
      %vm884 = vcmp.eq.s32.totalorder %v516, %v828
      %vm885 = vcmp.eq.s32.totalorder %v517, %v828
      %vm886 = vcmp.eq.s32.totalorder %v518, %v828
      %vm887 = vcmp.eq.s32.totalorder %v519, %v828
      %vm888 = vcmp.eq.s32.totalorder %v520, %v828
      %vm889 = vcmp.eq.s32.totalorder %v521, %v828
      %vm890 = vcmp.eq.s32.totalorder %v522, %v828
      %vm891 = vcmp.eq.s32.totalorder %v523, %v828
      %vm892 = vmand %vm884, %vm883
      %vm893 = vmand %vm885, %vm883
      %vm894 = vmand %vm886, %vm883
      %vm895 = vmand %vm887, %vm883
      %vm896 = vmand %vm888, %vm883
      %vm897 = vmand %vm889, %vm883
      %vm898 = vmand %vm890, %vm883
      %vm899 = vmand %vm891, %vm883
      %v900 = vsel %vm892, 1, 0
      %v901 = vsel %vm893, 1, 0
      %v902 = vsel %vm894, 1, 0
      %v903 = vsel %vm895, 1, 0
      %v904 = vsel %vm896, 1, 0
      %v905 = vsel %vm897, 1, 0
      %v906 = vsel %vm898, 1, 0
      %v907 = vsel %vm899, 1, 0
      %v908 = vcvt.s32.f32 %v900
      %v909 = vcvt.s32.f32 %v901
      %v910 = vcvt.s32.f32 %v902
      %v911 = vcvt.s32.f32 %v903
      %v912 = vcvt.s32.f32 %v904
      %v913 = vcvt.s32.f32 %v905
      %v914 = vcvt.s32.f32 %v906
      %v915 = vcvt.s32.f32 %v907
      %916 = vmatpush.msra.mxu0 0.0
      %917 = vmatpush.msra.mxu0 0.0
      %918 = vmatpush.msra.mxu0 0.0
      %919 = vmatpush.msra.mxu0 0.0
      %920 = vmatpush.msra.mxu0 0.0
      %921 = vmatpush.msra.mxu0 0.0
      %922 = vmatpush.msra.mxu0 0.0
      %923 = vmatpush.msra.mxu0 0.0
      %924 = vmatpush.msra.mxu0 %v915
      %925 = vmatpush.msra.mxu0 %v914
      %926 = vmatpush.msra.mxu0 %v913
      %927 = vmatpush.msra.mxu0 %v912
      %928 = vmatpush.msra.mxu0 %v911
      %929 = vmatpush.msra.mxu0 %v910
      %930 = vmatpush.msra.mxu0 %v909
      %931 = vmatpush.msra.mxu0 %v908
      %932 = vmatmul.f32.gmra.mxu0 %v573
      %v933 = vpop.f32.mrf.mxu0
      %v934 = vadd.f32 0.0, %v933
      %935 = vdwg.mxu0
      %vm936 = vmand %vm825, %vm652
      %vm937 = vmand %vm936, %vm654
      %v938 = vadd.s32 %v828, 1
      %vm939 = vcmp.eq.s32.totalorder %v516, %v938
      %vm940 = vcmp.eq.s32.totalorder %v517, %v938
      %vm941 = vcmp.eq.s32.totalorder %v518, %v938
      %vm942 = vcmp.eq.s32.totalorder %v519, %v938
      %vm943 = vcmp.eq.s32.totalorder %v520, %v938
      %vm944 = vcmp.eq.s32.totalorder %v521, %v938
      %vm945 = vcmp.eq.s32.totalorder %v522, %v938
      %vm946 = vcmp.eq.s32.totalorder %v523, %v938
      %vm947 = vmand %vm939, %vm937
      %vm948 = vmand %vm940, %vm937
      %vm949 = vmand %vm941, %vm937
      %vm950 = vmand %vm942, %vm937
      %vm951 = vmand %vm943, %vm937
      %vm952 = vmand %vm944, %vm937
      %vm953 = vmand %vm945, %vm937
      %vm954 = vmand %vm946, %vm937
      %v955 = vsel %vm947, 1, 0
      %v956 = vsel %vm948, 1, 0
      %v957 = vsel %vm949, 1, 0
      %v958 = vsel %vm950, 1, 0
      %v959 = vsel %vm951, 1, 0
      %v960 = vsel %vm952, 1, 0
      %v961 = vsel %vm953, 1, 0
      %v962 = vsel %vm954, 1, 0
      %v963 = vcvt.s32.f32 %v955
      %v964 = vcvt.s32.f32 %v956
      %v965 = vcvt.s32.f32 %v957
      %v966 = vcvt.s32.f32 %v958
      %v967 = vcvt.s32.f32 %v959
      %v968 = vcvt.s32.f32 %v960
      %v969 = vcvt.s32.f32 %v961
      %v970 = vcvt.s32.f32 %v962
      %971 = vmatpush.msra.mxu0 0.0
      %972 = vmatpush.msra.mxu0 0.0
      %973 = vmatpush.msra.mxu0 0.0
      %974 = vmatpush.msra.mxu0 0.0
      %975 = vmatpush.msra.mxu0 0.0
      %976 = vmatpush.msra.mxu0 0.0
      %977 = vmatpush.msra.mxu0 0.0
      %978 = vmatpush.msra.mxu0 0.0
      %979 = vmatpush.msra.mxu0 %v970
      %980 = vmatpush.msra.mxu0 %v969
      %981 = vmatpush.msra.mxu0 %v968
      %982 = vmatpush.msra.mxu0 %v967
      %983 = vmatpush.msra.mxu0 %v966
      %984 = vmatpush.msra.mxu0 %v965
      %985 = vmatpush.msra.mxu0 %v964
      %986 = vmatpush.msra.mxu0 %v963
      %987 = vmatmul.f32.gmra.mxu0 %v573
      %v988 = vpop.f32.mrf.mxu0
      %v989 = vadd.f32 0.0, %v988
      %990 = vdwg.mxu0
      %v991 = vpack.c.bf16 %v649, %v593
      %v992 = vpack.c.bf16 %v765, %v707
      %v993 = vpack.c.bf16 %v820, %v514
      %v994 = vpack.c.bf16 %v934, %v880
      %v995 = vpack.c.bf16 %v989, %v989
      %v996 = vld [vmem:[%s7] sm:$0xff]
      %v997 = vpack.c.bf16 %v996, %v996
      %v998 = vld [vmem:[%s8] sm:$0xff]
      %1000 = vset.pattern.permute.xlu0 0
      %1001 = vperm.xlu0 %1000, %v998
      %v1002 = vpop.permute.xlu0 %1001
      %vm1004 = vcmask 588800
      %v1006 = vsel %vm1004, %v997, 0
      %vm1008 = vcmask 1043456
      %v1010 = vsel %vm1008, %v995, 0
      %1012 = vmatpush.bf16.msra.mxu0 0
      %1013 = vmatpush.bf16.msra.mxu0 0
      %1014 = vmatpush.bf16.msra.mxu0 0
      %1015 = vmatpush.bf16.msra.mxu0 %v1010
      %1016 = vmatpush.bf16.msra.mxu0 %v994
      %1017 = vmatpush.bf16.msra.mxu0 %v993
      %1018 = vmatpush.bf16.msra.mxu0 %v992
      %1019 = vmatpush.bf16.msra.mxu0 %v991
      %1020 = vmatmul.bf16.gmra.mxu0 %v1006
      %v1021 = vpop.f32.mrf.mxu0
      %v1022 = vadd.f32 %v1002, %v1021
      %v1023 = vpop.f32.mrf.mxu0
      %1024 = vdwg.mxu0
      %v1025 = vld [vmem:[%s9] sm:$0xff]
      %1027 = vset.pattern.permute.xlu0 0
      %1028 = vperm.xlu0 %1027, %v1025
      %v1029 = vpop.permute.xlu0 %1028
      %v1031 = vmul.f32 %v1022, %v1029
      %v1032 = vld [vmem:[%s10] sm:$0xff]
      %1034 = vset.pattern.permute.xlu0 0
      %1035 = vperm.xlu0 %1034, %v1032
      %v1036 = vpop.permute.xlu0 %1035
      %v1038 = vadd.f32 %v1031, %v1036
      %v1039 = vmax.f32 %v1038, 0.0
      %v1040 = vld [vmem:[%s11] sm:$0xff]
      %v1041 = vld [vmem:[%s11 + $0x8] sm:$0xff]
      %v1042 = vpack.c.bf16 %v1041, %v1040
      %v1043 = vpack.c.bf16 %v1039, %v1039
      %v1044 = vld [vmem:[%s12] sm:$0xff]
      %v1045 = vld [vmem:[%s12 + $0x8] sm:$0xff]
      %1047 = vset.pattern.permute.xlu0 0
      %1048 = vperm.xlu0 %1047, %v1044
      %v1049 = vpop.permute.xlu0 %1048
      %1052 = vset.pattern.permute.xlu0 0
      %1053 = vperm.xlu0 %1052, %v1045
      %v1054 = vpop.permute.xlu0 %1053
      %vm1056 = vcmask 64512
      %v1058 = vsel %vm1056, %v1042, 0
      %v1061 = vsel %vm1008, %v1043, 0
      %1063 = vmatpush.bf16.msra.mxu0 0
      %1064 = vmatpush.bf16.msra.mxu0 0
      %1065 = vmatpush.bf16.msra.mxu0 0
      %1066 = vmatpush.bf16.msra.mxu0 0
      %1067 = vmatpush.bf16.msra.mxu0 0
      %1068 = vmatpush.bf16.msra.mxu0 0
      %1069 = vmatpush.bf16.msra.mxu0 0
      %1070 = vmatpush.bf16.msra.mxu0 %v1061
      %1071 = vmatmul.bf16.gmra.mxu0 %v1058
      %v1072 = vpop.f32.mrf.mxu0
      %v1073 = vadd.f32 %v1049, %v1072
      %v1074 = vpop.f32.mrf.mxu0
      %v1075 = vadd.f32 %v1054, %v1074
      %1076 = vdwg.mxu0
      %v1077 = vadd.f32 %v1073, %v442
      %v1078 = vadd.f32 %v1075, %v443
      %1079 = vst.msk [vmem:[%s440] sm:$0xff] %vm571, %v1077
      %1080 = vst.msk [vmem:[%s440 + $0x8] sm:$0xff] %vm571, %v1078
      %p1081 = scmp.lt.s32.totalorder %s24, 1
      %s1082 = scalar_select %p1081, %s24, 1
      %s1083 = smul.addr %s1082, 2
      %s1084 = smul.addr %s1083, 8
      %s1085 = scalar_lea.vmem %s13, %s1084
      // Predicated region
      $region73: #{_lambda_.16} parent=71 // pred_check
        %p1086 = pneg %p320
      $region74: #{_lambda_.16} parent=71 // pred_check_branch
        %1088 = sbr.rel (%p1086) target = $region76
      $region75: #{_lambda_.16} parent=71 // pred_region
        _
      $region76: #{_lambda_.16} parent=71 // pred_fallthru
        _
    $region72: #{_lambda_.16} parent=5 // pred_fallthru
      _
    %p1089 = scmp.le.s32.totalorder 2, %s19
    // Predicated region
    $region77: #{_lambda_.16} parent=5 // pred_check
      %p1090 = pneg %p1089
    $region78: #{_lambda_.16} parent=5 // pred_check_branch
      %1092 = sbr.rel (%p1090) target = $region80
    $region79: #{_lambda_.16} parent=5 // pred_region
      %s1093 = ssub.s32 %s19, 2
      // Predicated region
      $region81: #{_lambda_.16} parent=79 // pred_check
        %p1094 = pneg %p326
      $region82: #{_lambda_.16} parent=79 // pred_check_branch
        %1096 = sbr.rel (%p1094) target = $region84
      $region83: #{_lambda_.16} parent=79 // pred_region
        %p1097 = scmp.lt.s32.totalorder %s25, 1
        %s1098 = scalar_select %p1097, %s25, 1
        %s1099 = smul.addr %s1098, 2
        %s1100 = smul.addr %s1099, 8
        %s1101 = scalar_lea.vmem %s13, %s1100
      $region84: #{_lambda_.16} parent=79 // pred_fallthru
        _
    $region80: #{_lambda_.16} parent=5 // pred_fallthru
      _
  $region6: #{_lambda_.16} parent=0 // loop_footer
    %s23 = sadd.s32 1, %s19
  $region7: #{_lambda_.16} parent=0 // loop_footer_branch
    %18 = sbr.rel target = $region3
  $region8: #{_lambda_.16} parent=0 // loop_exit
    _

// kernel: _lambda_.11
$region0: #{_lambda_.11}
  #allocation0 [shape = 'u32[]', space=smem, size = 0x4, offset = 0x4, fixed_abs, tag = 'smem constant byte address 0x4 - core index']
  #allocation1 [shape = 'u32[72,128]{1,0:T(1,128)}', space=vmem, size = 0x9000, scoped, tag = 'internal scratch']
  %s0 = inlined_call_operand.vmem [shape: f32[2,16,1024], index: 0, kind: input, shape index: {}]
  %s1 = inlined_call_operand.vmem [shape: f32[16,1], index: 1, kind: input, shape index: {}]
  %s2 = inlined_call_operand.vmem [shape: f32[16,1], index: 2, kind: input, shape index: {}]
  %s3 = inlined_call_operand.vmem [shape: f32[8,16], index: 3, kind: input, shape index: {}]
  %s4 = inlined_call_operand.vmem [shape: f32[8,1], index: 4, kind: input, shape index: {}]
  %s5 = inlined_call_operand.vmem [shape: f32[8,1], index: 5, kind: input, shape index: {}]
  %s6 = inlined_call_operand.vmem [shape: f32[8,1], index: 6, kind: input, shape index: {}]
  %s7 = inlined_call_operand.vmem [shape: f32[8,72], index: 7, kind: input, shape index: {}]
  %s8 = inlined_call_operand.vmem [shape: f32[8,1], index: 8, kind: input, shape index: {}]
  %s9 = inlined_call_operand.vmem [shape: f32[8,1], index: 9, kind: input, shape index: {}]
  %s10 = inlined_call_operand.vmem [shape: f32[8,1], index: 10, kind: input, shape index: {}]
  %s11 = inlined_call_operand.vmem [shape: f32[16,8], index: 11, kind: input, shape index: {}]
  %s12 = inlined_call_operand.vmem [shape: f32[16,1], index: 12, kind: input, shape index: {}]
  %s13 = inlined_call_operand.vmem [shape: f32[2,16,1024], index: 13, kind: output, shape index: {}]
  %s14 = sld [smem:[#allocation0]]
  $region85: #{_lambda_.11} parent=0
    _
  %s16 = ssub.s32 1, %s14
  %s17 = scalar_select 0, %s16, %s14
  loop: start=0, step=1, limit=4
  $region2: #{_lambda_.11} parent=0 // loop_pre_header
    _
  $region3: #{_lambda_.11} parent=0 // loop_header
    %s19 = sphi 0, %s23
    %p20 = scmp.ge.s32.totalorder %s19, 4
    %s29 = sphi 0, %s31
    %s32 = sphi 0, %s29
    %s33 = sphi 0, %s32
    %s49 = sphi 0, %s33
    %s53 = sphi 0, %s53
    %s55 = sphi 0, %s53
    %s56 = sphi 0, %s55
    %s70 = sphi 0, %s56
    %s74 = sphi 0, %s74
    %s76 = sphi 0, %s74
    %s77 = sphi 0, %s76
    %s91 = sphi 0, %s77
    %s95 = sphi 0, %s95
    %s97 = sphi 0, %s95
    %s98 = sphi 0, %s97
    %s112 = sphi 0, %s98
    %s116 = sphi 0, %s116
    %s118 = sphi 0, %s116
    %s119 = sphi 0, %s118
    %s133 = sphi 0, %s119
    %s137 = sphi 0, %s137
    %s139 = sphi 0, %s137
    %s140 = sphi 0, %s139
    %s154 = sphi 0, %s140
    %s158 = sphi 0, %s158
    %s160 = sphi 0, %s158
    %s161 = sphi 0, %s160
    %s175 = sphi 0, %s161
    %s179 = sphi 0, %s179
    %s181 = sphi 0, %s179
    %s182 = sphi 0, %s181
    %s196 = sphi 0, %s182
    %s200 = sphi 0, %s200
    %s202 = sphi 0, %s200
    %s203 = sphi 0, %s202
    %s217 = sphi 0, %s203
    %s221 = sphi 0, %s221
    %s223 = sphi 0, %s221
    %s224 = sphi 0, %s223
    %s238 = sphi 0, %s224
    %s242 = sphi 0, %s242
    %s244 = sphi 0, %s242
    %s245 = sphi 0, %s244
    %s259 = sphi 0, %s245
    %s263 = sphi 0, %s263
    %s265 = sphi 0, %s263
    %s266 = sphi 0, %s265
    %s280 = sphi 0, %s266
    %s284 = sphi 0, %s284
    %s286 = sphi 0, %s284
    %s287 = sphi 0, %s286
    %s301 = sphi 0, %s287
    %s307 = sphi 0, %s309
    %s310 = sphi 0, %s307
    %s311 = sphi 0, %s310
    %s327 = sphi 0, %s311
  $region4: #{_lambda_.11} parent=0 // loop_header_branch
    %22 = sbr.rel (%p20) target = $region8
  $region5: #{_lambda_.11} parent=0 // loop_body
    %s24 = ssub.s32 %s19, 1
    %s25 = ssub.s32 %s19, 2
    %s26 = sadd.s32 %s19, 1
    %s27 = ssub.s32 %s19, %s26
    %p28 = scmp.eq.s32.totalorder %s27, 0
    %s30 = sadd.s32 %s29, 1
    %s31 = scalar_select %p28, %s29, %s30
    %p34 = pneg %p28
    %p35 = scmp.eq.s32.totalorder %s19, 1
    %p36 = por %p34, %p35
    %p37 = scmp.ne.s32.totalorder %s29, %s32
    %p38 = scmp.eq.s32.totalorder %s19, 0
    %p39 = por %p37, %p38
    %p40 = scmp.ne.s32.totalorder %s29, %s32
    %p41 = scmp.eq.s32.totalorder %s24, 1
    %p42 = por %p40, %p41
    %p43 = scmp.ne.s32.totalorder %s32, %s33
    %p44 = scmp.eq.s32.totalorder %s24, 0
    %p45 = por %p43, %p44
    %p46 = scmp.ne.s32.totalorder %s32, %s33
    %p47 = scmp.eq.s32.totalorder %s25, 1
    %p48 = por %p46, %p47
    %p50 = scmp.ne.s32.totalorder %s33, %s49
    %p51 = scmp.eq.s32.totalorder %s25, 0
    %p52 = por %p50, %p51
    %s54 = sadd.s32 %s53, 1
    %p57 = scmp.eq.s32.totalorder %s19, 1
    %p58 = scmp.ne.s32.totalorder %s53, %s55
    %p59 = scmp.eq.s32.totalorder %s19, 0
    %p60 = por %p58, %p59
    %p61 = scmp.ne.s32.totalorder %s53, %s55
    %p62 = scmp.eq.s32.totalorder %s24, 1
    %p63 = por %p61, %p62
    %p64 = scmp.ne.s32.totalorder %s55, %s56
    %p65 = scmp.eq.s32.totalorder %s24, 0
    %p66 = por %p64, %p65
    %p67 = scmp.ne.s32.totalorder %s55, %s56
    %p68 = scmp.eq.s32.totalorder %s25, 1
    %p69 = por %p67, %p68
    %p71 = scmp.ne.s32.totalorder %s56, %s70
    %p72 = scmp.eq.s32.totalorder %s25, 0
    %p73 = por %p71, %p72
    %s75 = sadd.s32 %s74, 1
    %p78 = scmp.eq.s32.totalorder %s19, 1
    %p79 = scmp.ne.s32.totalorder %s74, %s76
    %p80 = scmp.eq.s32.totalorder %s19, 0
    %p81 = por %p79, %p80
    %p82 = scmp.ne.s32.totalorder %s74, %s76
    %p83 = scmp.eq.s32.totalorder %s24, 1
    %p84 = por %p82, %p83
    %p85 = scmp.ne.s32.totalorder %s76, %s77
    %p86 = scmp.eq.s32.totalorder %s24, 0
    %p87 = por %p85, %p86
    %p88 = scmp.ne.s32.totalorder %s76, %s77
    %p89 = scmp.eq.s32.totalorder %s25, 1
    %p90 = por %p88, %p89
    %p92 = scmp.ne.s32.totalorder %s77, %s91
    %p93 = scmp.eq.s32.totalorder %s25, 0
    %p94 = por %p92, %p93
    %s96 = sadd.s32 %s95, 1
    %p99 = scmp.eq.s32.totalorder %s19, 1
    %p100 = scmp.ne.s32.totalorder %s95, %s97
    %p101 = scmp.eq.s32.totalorder %s19, 0
    %p102 = por %p100, %p101
    %p103 = scmp.ne.s32.totalorder %s95, %s97
    %p104 = scmp.eq.s32.totalorder %s24, 1
    %p105 = por %p103, %p104
    %p106 = scmp.ne.s32.totalorder %s97, %s98
    %p107 = scmp.eq.s32.totalorder %s24, 0
    %p108 = por %p106, %p107
    %p109 = scmp.ne.s32.totalorder %s97, %s98
    %p110 = scmp.eq.s32.totalorder %s25, 1
    %p111 = por %p109, %p110
    %p113 = scmp.ne.s32.totalorder %s98, %s112
    %p114 = scmp.eq.s32.totalorder %s25, 0
    %p115 = por %p113, %p114
    %s117 = sadd.s32 %s116, 1
    %p120 = scmp.eq.s32.totalorder %s19, 1
    %p121 = scmp.ne.s32.totalorder %s116, %s118
    %p122 = scmp.eq.s32.totalorder %s19, 0
    %p123 = por %p121, %p122
    %p124 = scmp.ne.s32.totalorder %s116, %s118
    %p125 = scmp.eq.s32.totalorder %s24, 1
    %p126 = por %p124, %p125
    %p127 = scmp.ne.s32.totalorder %s118, %s119
    %p128 = scmp.eq.s32.totalorder %s24, 0
    %p129 = por %p127, %p128
    %p130 = scmp.ne.s32.totalorder %s118, %s119
    %p131 = scmp.eq.s32.totalorder %s25, 1
    %p132 = por %p130, %p131
    %p134 = scmp.ne.s32.totalorder %s119, %s133
    %p135 = scmp.eq.s32.totalorder %s25, 0
    %p136 = por %p134, %p135
    %s138 = sadd.s32 %s137, 1
    %p141 = scmp.eq.s32.totalorder %s19, 1
    %p142 = scmp.ne.s32.totalorder %s137, %s139
    %p143 = scmp.eq.s32.totalorder %s19, 0
    %p144 = por %p142, %p143
    %p145 = scmp.ne.s32.totalorder %s137, %s139
    %p146 = scmp.eq.s32.totalorder %s24, 1
    %p147 = por %p145, %p146
    %p148 = scmp.ne.s32.totalorder %s139, %s140
    %p149 = scmp.eq.s32.totalorder %s24, 0
    %p150 = por %p148, %p149
    %p151 = scmp.ne.s32.totalorder %s139, %s140
    %p152 = scmp.eq.s32.totalorder %s25, 1
    %p153 = por %p151, %p152
    %p155 = scmp.ne.s32.totalorder %s140, %s154
    %p156 = scmp.eq.s32.totalorder %s25, 0
    %p157 = por %p155, %p156
    %s159 = sadd.s32 %s158, 1
    %p162 = scmp.eq.s32.totalorder %s19, 1
    %p163 = scmp.ne.s32.totalorder %s158, %s160
    %p164 = scmp.eq.s32.totalorder %s19, 0
    %p165 = por %p163, %p164
    %p166 = scmp.ne.s32.totalorder %s158, %s160
    %p167 = scmp.eq.s32.totalorder %s24, 1
    %p168 = por %p166, %p167
    %p169 = scmp.ne.s32.totalorder %s160, %s161
    %p170 = scmp.eq.s32.totalorder %s24, 0
    %p171 = por %p169, %p170
    %p172 = scmp.ne.s32.totalorder %s160, %s161
    %p173 = scmp.eq.s32.totalorder %s25, 1
    %p174 = por %p172, %p173
    %p176 = scmp.ne.s32.totalorder %s161, %s175
    %p177 = scmp.eq.s32.totalorder %s25, 0
    %p178 = por %p176, %p177
    %s180 = sadd.s32 %s179, 1
    %p183 = scmp.eq.s32.totalorder %s19, 1
    %p184 = scmp.ne.s32.totalorder %s179, %s181
    %p185 = scmp.eq.s32.totalorder %s19, 0
    %p186 = por %p184, %p185
    %p187 = scmp.ne.s32.totalorder %s179, %s181
    %p188 = scmp.eq.s32.totalorder %s24, 1
    %p189 = por %p187, %p188
    %p190 = scmp.ne.s32.totalorder %s181, %s182
    %p191 = scmp.eq.s32.totalorder %s24, 0
    %p192 = por %p190, %p191
    %p193 = scmp.ne.s32.totalorder %s181, %s182
    %p194 = scmp.eq.s32.totalorder %s25, 1
    %p195 = por %p193, %p194
    %p197 = scmp.ne.s32.totalorder %s182, %s196
    %p198 = scmp.eq.s32.totalorder %s25, 0
    %p199 = por %p197, %p198
    %s201 = sadd.s32 %s200, 1
    %p204 = scmp.eq.s32.totalorder %s19, 1
    %p205 = scmp.ne.s32.totalorder %s200, %s202
    %p206 = scmp.eq.s32.totalorder %s19, 0
    %p207 = por %p205, %p206
    %p208 = scmp.ne.s32.totalorder %s200, %s202
    %p209 = scmp.eq.s32.totalorder %s24, 1
    %p210 = por %p208, %p209
    %p211 = scmp.ne.s32.totalorder %s202, %s203
    %p212 = scmp.eq.s32.totalorder %s24, 0
    %p213 = por %p211, %p212
    %p214 = scmp.ne.s32.totalorder %s202, %s203
    %p215 = scmp.eq.s32.totalorder %s25, 1
    %p216 = por %p214, %p215
    %p218 = scmp.ne.s32.totalorder %s203, %s217
    %p219 = scmp.eq.s32.totalorder %s25, 0
    %p220 = por %p218, %p219
    %s222 = sadd.s32 %s221, 1
    %p225 = scmp.eq.s32.totalorder %s19, 1
    %p226 = scmp.ne.s32.totalorder %s221, %s223
    %p227 = scmp.eq.s32.totalorder %s19, 0
    %p228 = por %p226, %p227
    %p229 = scmp.ne.s32.totalorder %s221, %s223
    %p230 = scmp.eq.s32.totalorder %s24, 1
    %p231 = por %p229, %p230
    %p232 = scmp.ne.s32.totalorder %s223, %s224
    %p233 = scmp.eq.s32.totalorder %s24, 0
    %p234 = por %p232, %p233
    %p235 = scmp.ne.s32.totalorder %s223, %s224
    %p236 = scmp.eq.s32.totalorder %s25, 1
    %p237 = por %p235, %p236
    %p239 = scmp.ne.s32.totalorder %s224, %s238
    %p240 = scmp.eq.s32.totalorder %s25, 0
    %p241 = por %p239, %p240
    %s243 = sadd.s32 %s242, 1
    %p246 = scmp.eq.s32.totalorder %s19, 1
    %p247 = scmp.ne.s32.totalorder %s242, %s244
    %p248 = scmp.eq.s32.totalorder %s19, 0
    %p249 = por %p247, %p248
    %p250 = scmp.ne.s32.totalorder %s242, %s244
    %p251 = scmp.eq.s32.totalorder %s24, 1
    %p252 = por %p250, %p251
    %p253 = scmp.ne.s32.totalorder %s244, %s245
    %p254 = scmp.eq.s32.totalorder %s24, 0
    %p255 = por %p253, %p254
    %p256 = scmp.ne.s32.totalorder %s244, %s245
    %p257 = scmp.eq.s32.totalorder %s25, 1
    %p258 = por %p256, %p257
    %p260 = scmp.ne.s32.totalorder %s245, %s259
    %p261 = scmp.eq.s32.totalorder %s25, 0
    %p262 = por %p260, %p261
    %s264 = sadd.s32 %s263, 1
    %p267 = scmp.eq.s32.totalorder %s19, 1
    %p268 = scmp.ne.s32.totalorder %s263, %s265
    %p269 = scmp.eq.s32.totalorder %s19, 0
    %p270 = por %p268, %p269
    %p271 = scmp.ne.s32.totalorder %s263, %s265
    %p272 = scmp.eq.s32.totalorder %s24, 1
    %p273 = por %p271, %p272
    %p274 = scmp.ne.s32.totalorder %s265, %s266
    %p275 = scmp.eq.s32.totalorder %s24, 0
    %p276 = por %p274, %p275
    %p277 = scmp.ne.s32.totalorder %s265, %s266
    %p278 = scmp.eq.s32.totalorder %s25, 1
    %p279 = por %p277, %p278
    %p281 = scmp.ne.s32.totalorder %s266, %s280
    %p282 = scmp.eq.s32.totalorder %s25, 0
    %p283 = por %p281, %p282
    %s285 = sadd.s32 %s284, 1
    %p288 = scmp.eq.s32.totalorder %s19, 1
    %p289 = scmp.ne.s32.totalorder %s284, %s286
    %p290 = scmp.eq.s32.totalorder %s19, 0
    %p291 = por %p289, %p290
    %p292 = scmp.ne.s32.totalorder %s284, %s286
    %p293 = scmp.eq.s32.totalorder %s24, 1
    %p294 = por %p292, %p293
    %p295 = scmp.ne.s32.totalorder %s286, %s287
    %p296 = scmp.eq.s32.totalorder %s24, 0
    %p297 = por %p295, %p296
    %p298 = scmp.ne.s32.totalorder %s286, %s287
    %p299 = scmp.eq.s32.totalorder %s25, 1
    %p300 = por %p298, %p299
    %p302 = scmp.ne.s32.totalorder %s287, %s301
    %p303 = scmp.eq.s32.totalorder %s25, 0
    %p304 = por %p302, %p303
    %s305 = ssub.s32 %s19, %s26
    %p306 = scmp.eq.s32.totalorder %s305, 0
    %s308 = sadd.s32 %s307, 1
    %s309 = scalar_select %p306, %s307, %s308
    %p312 = pneg %p306
    %p313 = scmp.eq.s32.totalorder %s19, 1
    %p314 = por %p312, %p313
    %p315 = scmp.ne.s32.totalorder %s307, %s310
    %p316 = scmp.eq.s32.totalorder %s19, 0
    %p317 = por %p315, %p316
    %p318 = scmp.ne.s32.totalorder %s307, %s310
    %p319 = scmp.eq.s32.totalorder %s24, 1
    %p320 = por %p318, %p319
    %p321 = scmp.ne.s32.totalorder %s310, %s311
    %p322 = scmp.eq.s32.totalorder %s24, 0
    %p323 = por %p321, %p322
    %p324 = scmp.ne.s32.totalorder %s310, %s311
    %p325 = scmp.eq.s32.totalorder %s25, 1
    %p326 = por %p324, %p325
    %p328 = scmp.ne.s32.totalorder %s311, %s327
    %p329 = scmp.eq.s32.totalorder %s25, 0
    %p330 = por %p328, %p329
    %p331 = scmp.le.s32.totalorder 1, %s19
    %p332 = scmp.lt.s32.totalorder %s19, 3
    %p333 = pnand %p331, %p332
    %p334 = pneg %p333
    // Predicated region
    $region9: #{_lambda_.11} parent=5 // pred_check
      _
    $region10: #{_lambda_.11} parent=5 // pred_check_branch
      %336 = sbr.rel (%p333) target = $region12
    $region11: #{_lambda_.11} parent=5 // pred_region
      %s337 = ssub.s32 %s19, 1
      // Predicated region
      $region13: #{_lambda_.11} parent=11 // pred_check
        %p338 = pneg %p66
      $region14: #{_lambda_.11} parent=11 // pred_check_branch
        %340 = sbr.rel (%p338) target = $region16
      $region15: #{_lambda_.11} parent=11 // pred_region
        _
      $region16: #{_lambda_.11} parent=11 // pred_fallthru
        _
      // Predicated region
      $region17: #{_lambda_.11} parent=11 // pred_check
        %p341 = pneg %p87
      $region18: #{_lambda_.11} parent=11 // pred_check_branch
        %343 = sbr.rel (%p341) target = $region20
      $region19: #{_lambda_.11} parent=11 // pred_region
        _
      $region20: #{_lambda_.11} parent=11 // pred_fallthru
        _
      // Predicated region
      $region21: #{_lambda_.11} parent=11 // pred_check
        %p344 = pneg %p108
      $region22: #{_lambda_.11} parent=11 // pred_check_branch
        %346 = sbr.rel (%p344) target = $region24
      $region23: #{_lambda_.11} parent=11 // pred_region
        _
      $region24: #{_lambda_.11} parent=11 // pred_fallthru
        _
      // Predicated region
      $region25: #{_lambda_.11} parent=11 // pred_check
        %p347 = pneg %p129
      $region26: #{_lambda_.11} parent=11 // pred_check_branch
        %349 = sbr.rel (%p347) target = $region28
      $region27: #{_lambda_.11} parent=11 // pred_region
        _
      $region28: #{_lambda_.11} parent=11 // pred_fallthru
        _
      // Predicated region
      $region29: #{_lambda_.11} parent=11 // pred_check
        %p350 = pneg %p150
      $region30: #{_lambda_.11} parent=11 // pred_check_branch
        %352 = sbr.rel (%p350) target = $region32
      $region31: #{_lambda_.11} parent=11 // pred_region
        _
      $region32: #{_lambda_.11} parent=11 // pred_fallthru
        _
      // Predicated region
      $region33: #{_lambda_.11} parent=11 // pred_check
        %p353 = pneg %p171
      $region34: #{_lambda_.11} parent=11 // pred_check_branch
        %355 = sbr.rel (%p353) target = $region36
      $region35: #{_lambda_.11} parent=11 // pred_region
        _
      $region36: #{_lambda_.11} parent=11 // pred_fallthru
        _
      // Predicated region
      $region37: #{_lambda_.11} parent=11 // pred_check
        %p356 = pneg %p192
      $region38: #{_lambda_.11} parent=11 // pred_check_branch
        %358 = sbr.rel (%p356) target = $region40
      $region39: #{_lambda_.11} parent=11 // pred_region
        _
      $region40: #{_lambda_.11} parent=11 // pred_fallthru
        _
      // Predicated region
      $region41: #{_lambda_.11} parent=11 // pred_check
        %p359 = pneg %p213
      $region42: #{_lambda_.11} parent=11 // pred_check_branch
        %361 = sbr.rel (%p359) target = $region44
      $region43: #{_lambda_.11} parent=11 // pred_region
        _
      $region44: #{_lambda_.11} parent=11 // pred_fallthru
        _
      // Predicated region
      $region45: #{_lambda_.11} parent=11 // pred_check
        %p362 = pneg %p234
      $region46: #{_lambda_.11} parent=11 // pred_check_branch
        %364 = sbr.rel (%p362) target = $region48
      $region47: #{_lambda_.11} parent=11 // pred_region
        _
      $region48: #{_lambda_.11} parent=11 // pred_fallthru
        _
      // Predicated region
      $region49: #{_lambda_.11} parent=11 // pred_check
        %p365 = pneg %p255
      $region50: #{_lambda_.11} parent=11 // pred_check_branch
        %367 = sbr.rel (%p365) target = $region52
      $region51: #{_lambda_.11} parent=11 // pred_region
        _
      $region52: #{_lambda_.11} parent=11 // pred_fallthru
        _
      // Predicated region
      $region53: #{_lambda_.11} parent=11 // pred_check
        %p368 = pneg %p276
      $region54: #{_lambda_.11} parent=11 // pred_check_branch
        %370 = sbr.rel (%p368) target = $region56
      $region55: #{_lambda_.11} parent=11 // pred_region
        _
      $region56: #{_lambda_.11} parent=11 // pred_fallthru
        _
      // Predicated region
      $region57: #{_lambda_.11} parent=11 // pred_check
        %p371 = pneg %p297
      $region58: #{_lambda_.11} parent=11 // pred_check_branch
        %373 = sbr.rel (%p371) target = $region60
      $region59: #{_lambda_.11} parent=11 // pred_region
        _
      $region60: #{_lambda_.11} parent=11 // pred_fallthru
        _
    $region12: #{_lambda_.11} parent=5 // pred_fallthru
      _
    %p374 = scmp.lt.s32.totalorder %s19, 2
    // Predicated region
    $region61: #{_lambda_.11} parent=5 // pred_check
      %p375 = pneg %p374
    $region62: #{_lambda_.11} parent=5 // pred_check_branch
      %377 = sbr.rel (%p375) target = $region64
    $region63: #{_lambda_.11} parent=5 // pred_region
      // Predicated region
      $region65: #{_lambda_.11} parent=63 // pred_check
        %p378 = pneg %p39
      $region66: #{_lambda_.11} parent=63 // pred_check_branch
        %380 = sbr.rel (%p378) target = $region68
      $region67: #{_lambda_.11} parent=63 // pred_region
        %p381 = scmp.lt.s32.totalorder %s19, 1
        %s382 = scalar_select %p381, %s19, 1
        %s383 = smul.addr %s382, 16
        %s384 = smul.addr %s383, 8
        %s385 = scalar_lea.vmem %s0, %s384
      $region68: #{_lambda_.11} parent=63 // pred_fallthru
        _
    $region64: #{_lambda_.11} parent=5 // pred_fallthru
      _
    %p386 = scmp.le.s32.totalorder 1, %s19
    %p387 = scmp.lt.s32.totalorder %s19, 3
    %p388 = pnand %p386, %p387
    %p389 = pneg %p388
    // Predicated region
    $region69: #{_lambda_.11} parent=5 // pred_check
      _
    $region70: #{_lambda_.11} parent=5 // pred_check_branch
      %391 = sbr.rel (%p388) target = $region72
    $region71: #{_lambda_.11} parent=5 // pred_region
      %s392 = ssub.s32 %s19, 1
      %p393 = scmp.lt.s32.totalorder %s24, 1
      %s394 = scalar_select %p393, %s24, 1
      %s395 = smul.addr %s394, 16
      %s396 = smul.addr %s395, 8
      %s397 = scalar_lea.vmem %s0, %s396
      %p398 = pneg %p45
      %p399 = pneg %p42
      %p400 = pneg %p66
      %p401 = pneg %p63
      %p402 = pneg %p87
      %p403 = pneg %p84
      %p404 = pneg %p108
      %p405 = pneg %p105
      %p406 = pneg %p129
      %p407 = pneg %p126
      %p408 = pneg %p150
      %p409 = pneg %p147
      %p410 = pneg %p171
      %p411 = pneg %p168
      %p412 = pneg %p192
      %p413 = pneg %p189
      %p414 = pneg %p213
      %p415 = pneg %p210
      %p416 = pneg %p234
      %p417 = pneg %p231
      %p418 = pneg %p255
      %p419 = pneg %p252
      %p420 = pneg %p276
      %p421 = pneg %p273
      %p422 = pneg %p297
      %p423 = pneg %p294
      %p424 = pneg %p323
      %p425 = pneg %p320
      %p426 = scmp.lt.s32.totalorder %s24, 1
      %s427 = scalar_select %p426, %s24, 1
      %s428 = smul.addr %s427, 16
      %s429 = smul.addr %s428, 8
      %s430 = scalar_lea.vmem %s13, %s429
      %p431 = scmp.lt.s32.totalorder %s24, 1
      %s432 = scalar_select %p431, %s24, 1
      %s433 = smul.addr %s432, 16
      %s434 = smul.addr %s433, 8
      %s435 = scalar_lea.vmem %s0, %s434
      %p436 = scmp.lt.s32.totalorder %s24, 1
      %s437 = scalar_select %p436, %s24, 1
      %s438 = smul.addr %s437, 16
      %s439 = smul.addr %s438, 8
      %s440 = scalar_lea.vmem %s13, %s439
      %v442 = vld [vmem:[%s435] sm:$0xff]
      %v443 = vld [vmem:[%s435 + $0x8] sm:$0xff]
      %v444 = vld [vmem:[%s435 + $0x10] sm:$0xff]
      %v445 = vld [vmem:[%s435 + $0x18] sm:$0xff]
      %v446 = vld [vmem:[%s435 + $0x20] sm:$0xff]
      %v447 = vld [vmem:[%s435 + $0x28] sm:$0xff]
      %v448 = vld [vmem:[%s435 + $0x30] sm:$0xff]
      %v449 = vld [vmem:[%s435 + $0x38] sm:$0xff]
      %v450 = vld [vmem:[%s435 + $0x40] sm:$0xff]
      %v451 = vld [vmem:[%s435 + $0x48] sm:$0xff]
      %v452 = vld [vmem:[%s435 + $0x50] sm:$0xff]
      %v453 = vld [vmem:[%s435 + $0x58] sm:$0xff]
      %v454 = vld [vmem:[%s435 + $0x60] sm:$0xff]
      %v455 = vld [vmem:[%s435 + $0x68] sm:$0xff]
      %v456 = vld [vmem:[%s435 + $0x70] sm:$0xff]
      %v457 = vld [vmem:[%s435 + $0x78] sm:$0xff]
      %v458 = vld [vmem:[%s1] sm:$0xff]
      %v459 = vld [vmem:[%s1 + $0x8] sm:$0xff]
      %461 = vset.pattern.permute.xlu0 0
      %462 = vperm.xlu0 %461, %v458
      %v463 = vpop.permute.xlu0 %462
      %466 = vset.pattern.permute.xlu0 0
      %467 = vperm.xlu0 %466, %v459
      %v468 = vpop.permute.xlu0 %467
      %v470 = vmul.f32 %v442, %v463
      %v471 = vmul.f32 %v443, %v463
      %v472 = vmul.f32 %v444, %v463
      %v473 = vmul.f32 %v445, %v463
      %v474 = vmul.f32 %v446, %v463
      %v475 = vmul.f32 %v447, %v463
      %v476 = vmul.f32 %v448, %v463
      %v477 = vmul.f32 %v449, %v463
      %v478 = vmul.f32 %v450, %v468
      %v479 = vmul.f32 %v451, %v468
      %v480 = vmul.f32 %v452, %v468
      %v481 = vmul.f32 %v453, %v468
      %v482 = vmul.f32 %v454, %v468
      %v483 = vmul.f32 %v455, %v468
      %v484 = vmul.f32 %v456, %v468
      %v485 = vmul.f32 %v457, %v468
      %v486 = vld [vmem:[%s2] sm:$0xff]
      %v487 = vld [vmem:[%s2 + $0x8] sm:$0xff]
      %489 = vset.pattern.permute.xlu0 0
      %490 = vperm.xlu0 %489, %v486
      %v491 = vpop.permute.xlu0 %490
      %494 = vset.pattern.permute.xlu0 0
      %495 = vperm.xlu0 %494, %v487
      %v496 = vpop.permute.xlu0 %495
      %v498 = vadd.f32 %v470, %v491
      %v499 = vadd.f32 %v471, %v491
      %v500 = vadd.f32 %v472, %v491
      %v501 = vadd.f32 %v473, %v491
      %v502 = vadd.f32 %v474, %v491
      %v503 = vadd.f32 %v475, %v491
      %v504 = vadd.f32 %v476, %v491
      %v505 = vadd.f32 %v477, %v491
      %v506 = vadd.f32 %v478, %v496
      %v507 = vadd.f32 %v479, %v496
      %v508 = vadd.f32 %v480, %v496
      %v509 = vadd.f32 %v481, %v496
      %v510 = vadd.f32 %v482, %v496
      %v511 = vadd.f32 %v483, %v496
      %v512 = vadd.f32 %v484, %v496
      %v513 = vadd.f32 %v485, %v496
      %v514 = vmax.f32 %v498, 0.0
      %v515 = vmax.f32 %v499, 0.0
      %v516 = vmax.f32 %v500, 0.0
      %v517 = vmax.f32 %v501, 0.0
      %v518 = vmax.f32 %v502, 0.0
      %v519 = vmax.f32 %v503, 0.0
      %v520 = vmax.f32 %v504, 0.0
      %v521 = vmax.f32 %v505, 0.0
      %v522 = vmax.f32 %v506, 0.0
      %v523 = vmax.f32 %v507, 0.0
      %v524 = vmax.f32 %v508, 0.0
      %v525 = vmax.f32 %v509, 0.0
      %v526 = vmax.f32 %v510, 0.0
      %v527 = vmax.f32 %v511, 0.0
      %v528 = vmax.f32 %v512, 0.0
      %v529 = vmax.f32 %v513, 0.0
      %v530 = vld [vmem:[%s3] sm:$0xff]
      %v531 = vpack.c.bf16 %v530, %v530
      %v532 = vpack.c.bf16 %v522, %v514
      %v533 = vpack.c.bf16 %v523, %v515
      %v534 = vpack.c.bf16 %v524, %v516
      %v535 = vpack.c.bf16 %v525, %v517
      %v536 = vpack.c.bf16 %v526, %v518
      %v537 = vpack.c.bf16 %v527, %v519
      %v538 = vpack.c.bf16 %v528, %v520
      %v539 = vpack.c.bf16 %v529, %v521
      %v540 = vld [vmem:[%s4] sm:$0xff]
      %542 = vset.pattern.permute.xlu0 0
      %543 = vperm.xlu0 %542, %v540
      %v544 = vpop.permute.xlu0 %543
      %vm546 = vcmask 130048
      %v548 = vsel %vm546, %v531, 0
      %550 = vmatpush.bf16.msra.mxu0 0
      %551 = vmatpush.bf16.msra.mxu0 0
      %552 = vmatpush.bf16.msra.mxu0 0
      %553 = vmatpush.bf16.msra.mxu0 0
      %554 = vmatpush.bf16.msra.mxu0 0
      %555 = vmatpush.bf16.msra.mxu0 0
      %556 = vmatpush.bf16.msra.mxu0 0
      %557 = vmatpush.bf16.msra.mxu0 %v532
      %558 = vmatmul.bf16.gmra.mxu0 %v548
      %v559 = vpop.f32.mrf.mxu0
      %v560 = vadd.f32 %v544, %v559
      %v561 = vpop.f32.mrf.mxu0
      %562 = vdwg.mxu0
      %563 = vmatpush.bf16.msra.mxu0 0
      %564 = vmatpush.bf16.msra.mxu0 0
      %565 = vmatpush.bf16.msra.mxu0 0
      %566 = vmatpush.bf16.msra.mxu0 0
      %567 = vmatpush.bf16.msra.mxu0 0
      %568 = vmatpush.bf16.msra.mxu0 0
      %569 = vmatpush.bf16.msra.mxu0 0
      %570 = vmatpush.bf16.msra.mxu0 %v533
      %571 = vmatmul.bf16.gmra.mxu0 %v548
      %v572 = vpop.f32.mrf.mxu0
      %v573 = vadd.f32 %v544, %v572
      %v574 = vpop.f32.mrf.mxu0
      %575 = vdwg.mxu0
      %576 = vmatpush.bf16.msra.mxu0 0
      %577 = vmatpush.bf16.msra.mxu0 0
      %578 = vmatpush.bf16.msra.mxu0 0
      %579 = vmatpush.bf16.msra.mxu0 0
      %580 = vmatpush.bf16.msra.mxu0 0
      %581 = vmatpush.bf16.msra.mxu0 0
      %582 = vmatpush.bf16.msra.mxu0 0
      %583 = vmatpush.bf16.msra.mxu0 %v534
      %584 = vmatmul.bf16.gmra.mxu0 %v548
      %v585 = vpop.f32.mrf.mxu0
      %v586 = vadd.f32 %v544, %v585
      %v587 = vpop.f32.mrf.mxu0
      %588 = vdwg.mxu0
      %589 = vmatpush.bf16.msra.mxu0 0
      %590 = vmatpush.bf16.msra.mxu0 0
      %591 = vmatpush.bf16.msra.mxu0 0
      %592 = vmatpush.bf16.msra.mxu0 0
      %593 = vmatpush.bf16.msra.mxu0 0
      %594 = vmatpush.bf16.msra.mxu0 0
      %595 = vmatpush.bf16.msra.mxu0 0
      %596 = vmatpush.bf16.msra.mxu0 %v535
      %597 = vmatmul.bf16.gmra.mxu0 %v548
      %v598 = vpop.f32.mrf.mxu0
      %v599 = vadd.f32 %v544, %v598
      %v600 = vpop.f32.mrf.mxu0
      %601 = vdwg.mxu0
      %602 = vmatpush.bf16.msra.mxu0 0
      %603 = vmatpush.bf16.msra.mxu0 0
      %604 = vmatpush.bf16.msra.mxu0 0
      %605 = vmatpush.bf16.msra.mxu0 0
      %606 = vmatpush.bf16.msra.mxu0 0
      %607 = vmatpush.bf16.msra.mxu0 0
      %608 = vmatpush.bf16.msra.mxu0 0
      %609 = vmatpush.bf16.msra.mxu0 %v536
      %610 = vmatmul.bf16.gmra.mxu0 %v548
      %v611 = vpop.f32.mrf.mxu0
      %v612 = vadd.f32 %v544, %v611
      %v613 = vpop.f32.mrf.mxu0
      %614 = vdwg.mxu0
      %615 = vmatpush.bf16.msra.mxu0 0
      %616 = vmatpush.bf16.msra.mxu0 0
      %617 = vmatpush.bf16.msra.mxu0 0
      %618 = vmatpush.bf16.msra.mxu0 0
      %619 = vmatpush.bf16.msra.mxu0 0
      %620 = vmatpush.bf16.msra.mxu0 0
      %621 = vmatpush.bf16.msra.mxu0 0
      %622 = vmatpush.bf16.msra.mxu0 %v537
      %623 = vmatmul.bf16.gmra.mxu0 %v548
      %v624 = vpop.f32.mrf.mxu0
      %v625 = vadd.f32 %v544, %v624
      %v626 = vpop.f32.mrf.mxu0
      %627 = vdwg.mxu0
      %628 = vmatpush.bf16.msra.mxu0 0
      %629 = vmatpush.bf16.msra.mxu0 0
      %630 = vmatpush.bf16.msra.mxu0 0
      %631 = vmatpush.bf16.msra.mxu0 0
      %632 = vmatpush.bf16.msra.mxu0 0
      %633 = vmatpush.bf16.msra.mxu0 0
      %634 = vmatpush.bf16.msra.mxu0 0
      %635 = vmatpush.bf16.msra.mxu0 %v538
      %636 = vmatmul.bf16.gmra.mxu0 %v548
      %v637 = vpop.f32.mrf.mxu0
      %v638 = vadd.f32 %v544, %v637
      %v639 = vpop.f32.mrf.mxu0
      %640 = vdwg.mxu0
      %641 = vmatpush.bf16.msra.mxu0 0
      %642 = vmatpush.bf16.msra.mxu0 0
      %643 = vmatpush.bf16.msra.mxu0 0
      %644 = vmatpush.bf16.msra.mxu0 0
      %645 = vmatpush.bf16.msra.mxu0 0
      %646 = vmatpush.bf16.msra.mxu0 0
      %647 = vmatpush.bf16.msra.mxu0 0
      %648 = vmatpush.bf16.msra.mxu0 %v539
      %649 = vmatmul.bf16.gmra.mxu0 %v548
      %v650 = vpop.f32.mrf.mxu0
      %v651 = vadd.f32 %v544, %v650
      %v652 = vpop.f32.mrf.mxu0
      %653 = vdwg.mxu0
      %v654 = vld [vmem:[%s5] sm:$0xff]
      %656 = vset.pattern.permute.xlu0 0
      %657 = vperm.xlu0 %656, %v654
      %v658 = vpop.permute.xlu0 %657
      %v660 = vmul.f32 %v560, %v658
      %v661 = vmul.f32 %v573, %v658
      %v662 = vmul.f32 %v586, %v658
      %v663 = vmul.f32 %v599, %v658
      %v664 = vmul.f32 %v612, %v658
      %v665 = vmul.f32 %v625, %v658
      %v666 = vmul.f32 %v638, %v658
      %v667 = vmul.f32 %v651, %v658
      %v668 = vld [vmem:[%s6] sm:$0xff]
      %670 = vset.pattern.permute.xlu0 0
      %671 = vperm.xlu0 %670, %v668
      %v672 = vpop.permute.xlu0 %671
      %v674 = vadd.f32 %v660, %v672
      %v675 = vadd.f32 %v661, %v672
      %v676 = vadd.f32 %v662, %v672
      %v677 = vadd.f32 %v663, %v672
      %v678 = vadd.f32 %v664, %v672
      %v679 = vadd.f32 %v665, %v672
      %v680 = vadd.f32 %v666, %v672
      %v681 = vadd.f32 %v667, %v672
      %v682 = vmax.f32 %v674, 0.0
      %v683 = vmax.f32 %v675, 0.0
      %v684 = vmax.f32 %v676, 0.0
      %v685 = vmax.f32 %v677, 0.0
      %v686 = vmax.f32 %v678, 0.0
      %v687 = vmax.f32 %v679, 0.0
      %v688 = vmax.f32 %v680, 0.0
      %v689 = vmax.f32 %v681, 0.0
      %v690 = vlaneseq
      %v691 = vand.u32 %v690, 127
      %v692 = vadd.s32 %v691, 128
      %v693 = vadd.s32 %v691, 256
      %v694 = vadd.s32 %v691, 384
      %v695 = vadd.s32 %v691, 512
      %v696 = vadd.s32 %v691, 640
      %v697 = vadd.s32 %v691, 768
      %v698 = vadd.s32 %v691, 896
      %v699 = vshra.s32 %v691, 5
      %v700 = vshra.s32 %v692, 5
      %v701 = vshra.s32 %v693, 5
      %v702 = vshra.s32 %v694, 5
      %v703 = vshra.s32 %v695, 5
      %v704 = vshra.s32 %v696, 5
      %v705 = vshra.s32 %v697, 5
      %v706 = vshra.s32 %v698, 5
      %v707 = vand.u32 %v691, 31
      %v708 = vand.u32 %v692, 31
      %v709 = vand.u32 %v693, 31
      %v710 = vand.u32 %v694, 31
      %v711 = vand.u32 %v695, 31
      %v712 = vand.u32 %v696, 31
      %v713 = vand.u32 %v697, 31
      %v714 = vand.u32 %v698, 31
      %715 = vrot.lane.b32.xlu0 %v682, 33
      %v716 = vpop.permute.xlu0 %715
      %717 = vrot.lane.b32.xlu0 %v683, 33
      %v718 = vpop.permute.xlu0 %717
      %719 = vrot.lane.b32.xlu0 %v684, 33
      %v720 = vpop.permute.xlu0 %719
      %721 = vrot.lane.b32.xlu0 %v685, 33
      %v722 = vpop.permute.xlu0 %721
      %723 = vrot.lane.b32.xlu0 %v686, 33
      %v724 = vpop.permute.xlu0 %723
      %725 = vrot.lane.b32.xlu0 %v687, 33
      %v726 = vpop.permute.xlu0 %725
      %727 = vrot.lane.b32.xlu0 %v688, 33
      %v728 = vpop.permute.xlu0 %727
      %729 = vrot.lane.b32.xlu0 %v689, 33
      %v730 = vpop.permute.xlu0 %729
      %vm731 = vcmp.lt.s32.totalorder %v691, 33
      %v732 = vsel %vm731, %v728, %v730
      %v733 = vsel %vm731, %v726, %v728
      %v734 = vsel %vm731, %v724, %v726
      %v735 = vsel %vm731, %v722, %v724
      %v736 = vsel %vm731, %v720, %v722
      %v737 = vsel %vm731, %v718, %v720
      %v738 = vsel %vm731, %v716, %v718
      %v739 = vsel %vm731, %v730, %v716
      %v740 = vadd.s32 %v699, 4294967295
      %v741 = vadd.s32 %v700, 4294967295
      %v742 = vadd.s32 %v701, 4294967295
      %v743 = vadd.s32 %v702, 4294967295
      %v744 = vadd.s32 %v703, 4294967295
      %v745 = vadd.s32 %v704, 4294967295
      %v746 = vadd.s32 %v705, 4294967295
      %v747 = vadd.s32 %v706, 4294967295
      %vm748 = vcmp.ge.s32.totalorder %v740, 0
      %vm749 = vcmp.ge.s32.totalorder %v741, 0
      %vm750 = vcmp.ge.s32.totalorder %v742, 0
      %vm751 = vcmp.ge.s32.totalorder %v743, 0
      %vm752 = vcmp.ge.s32.totalorder %v744, 0
      %vm753 = vcmp.ge.s32.totalorder %v745, 0
      %vm754 = vcmp.ge.s32.totalorder %v746, 0
      %vm755 = vcmp.ge.s32.totalorder %v747, 0
      %vm756 = vcmp.lt.s32.totalorder %v740, 32
      %vm757 = vcmp.lt.s32.totalorder %v741, 32
      %vm758 = vcmp.lt.s32.totalorder %v742, 32
      %vm759 = vcmp.lt.s32.totalorder %v743, 32
      %vm760 = vcmp.lt.s32.totalorder %v744, 32
      %vm761 = vcmp.lt.s32.totalorder %v745, 32
      %vm762 = vcmp.lt.s32.totalorder %v746, 32
      %vm763 = vcmp.lt.s32.totalorder %v747, 32
      %vm764 = vmand %vm748, %vm756
      %vm765 = vmand %vm749, %vm757
      %vm766 = vmand %vm750, %vm758
      %vm767 = vmand %vm751, %vm759
      %vm768 = vmand %vm752, %vm760
      %vm769 = vmand %vm753, %vm761
      %vm770 = vmand %vm754, %vm762
      %vm771 = vmand %vm755, %vm763
      %v772 = vadd.s32 %v707, 4294967295
      %v773 = vadd.s32 %v708, 4294967295
      %v774 = vadd.s32 %v709, 4294967295
      %v775 = vadd.s32 %v710, 4294967295
      %v776 = vadd.s32 %v711, 4294967295
      %v777 = vadd.s32 %v712, 4294967295
      %v778 = vadd.s32 %v713, 4294967295
      %v779 = vadd.s32 %v714, 4294967295
      %vm780 = vcmp.ge.s32.totalorder %v772, 0
      %vm781 = vcmp.ge.s32.totalorder %v773, 0
      %vm782 = vcmp.ge.s32.totalorder %v774, 0
      %vm783 = vcmp.ge.s32.totalorder %v775, 0
      %vm784 = vcmp.ge.s32.totalorder %v776, 0
      %vm785 = vcmp.ge.s32.totalorder %v777, 0
      %vm786 = vcmp.ge.s32.totalorder %v778, 0
      %vm787 = vcmp.ge.s32.totalorder %v779, 0
      %vm788 = vmand %vm764, %vm780
      %vm789 = vmand %vm765, %vm781
      %vm790 = vmand %vm766, %vm782
      %vm791 = vmand %vm767, %vm783
      %vm792 = vmand %vm768, %vm784
      %vm793 = vmand %vm769, %vm785
      %vm794 = vmand %vm770, %vm786
      %vm795 = vmand %vm771, %vm787
      %vm796 = vcmp.lt.s32.totalorder %v772, 32
      %vm797 = vcmp.lt.s32.totalorder %v773, 32
      %vm798 = vcmp.lt.s32.totalorder %v774, 32
      %vm799 = vcmp.lt.s32.totalorder %v775, 32
      %vm800 = vcmp.lt.s32.totalorder %v776, 32
      %vm801 = vcmp.lt.s32.totalorder %v777, 32
      %vm802 = vcmp.lt.s32.totalorder %v778, 32
      %vm803 = vcmp.lt.s32.totalorder %v779, 32
      %vm804 = vmand %vm788, %vm796
      %vm805 = vmand %vm789, %vm797
      %vm806 = vmand %vm790, %vm798
      %vm807 = vmand %vm791, %vm799
      %vm808 = vmand %vm792, %vm800
      %vm809 = vmand %vm793, %vm801
      %vm810 = vmand %vm794, %vm802
      %vm811 = vmand %vm795, %vm803
      %v812 = vsel %vm804, %v739, 0.0
      %v813 = vsel %vm805, %v738, 0.0
      %v814 = vsel %vm806, %v737, 0.0
      %v815 = vsel %vm807, %v736, 0.0
      %v816 = vsel %vm808, %v735, 0.0
      %v817 = vsel %vm809, %v734, 0.0
      %v818 = vsel %vm810, %v733, 0.0
      %v819 = vsel %vm811, %v732, 0.0
      %820 = vrot.lane.b32.xlu0 %v682, 32
      %v821 = vpop.permute.xlu0 %820
      %822 = vrot.lane.b32.xlu0 %v683, 32
      %v823 = vpop.permute.xlu0 %822
      %824 = vrot.lane.b32.xlu0 %v684, 32
      %v825 = vpop.permute.xlu0 %824
      %826 = vrot.lane.b32.xlu0 %v685, 32
      %v827 = vpop.permute.xlu0 %826
      %828 = vrot.lane.b32.xlu0 %v686, 32
      %v829 = vpop.permute.xlu0 %828
      %830 = vrot.lane.b32.xlu0 %v687, 32
      %v831 = vpop.permute.xlu0 %830
      %832 = vrot.lane.b32.xlu0 %v688, 32
      %v833 = vpop.permute.xlu0 %832
      %834 = vrot.lane.b32.xlu0 %v689, 32
      %v835 = vpop.permute.xlu0 %834
      %vm836 = vcmp.lt.s32.totalorder %v691, 32
      %v837 = vsel %vm836, %v833, %v835
      %v838 = vsel %vm836, %v831, %v833
      %v839 = vsel %vm836, %v829, %v831
      %v840 = vsel %vm836, %v827, %v829
      %v841 = vsel %vm836, %v825, %v827
      %v842 = vsel %vm836, %v823, %v825
      %v843 = vsel %vm836, %v821, %v823
      %v844 = vsel %vm836, %v835, %v821
      %vm845 = vcmp.ge.s32.totalorder %v707, 0
      %vm846 = vcmp.ge.s32.totalorder %v708, 0
      %vm847 = vcmp.ge.s32.totalorder %v709, 0
      %vm848 = vcmp.ge.s32.totalorder %v710, 0
      %vm849 = vcmp.ge.s32.totalorder %v711, 0
      %vm850 = vcmp.ge.s32.totalorder %v712, 0
      %vm851 = vcmp.ge.s32.totalorder %v713, 0
      %vm852 = vcmp.ge.s32.totalorder %v714, 0
      %vm853 = vmand %vm764, %vm845
      %vm854 = vmand %vm765, %vm846
      %vm855 = vmand %vm766, %vm847
      %vm856 = vmand %vm767, %vm848
      %vm857 = vmand %vm768, %vm849
      %vm858 = vmand %vm769, %vm850
      %vm859 = vmand %vm770, %vm851
      %vm860 = vmand %vm771, %vm852
      %vm861 = vcmp.lt.s32.totalorder %v707, 32
      %vm862 = vcmp.lt.s32.totalorder %v708, 32
      %vm863 = vcmp.lt.s32.totalorder %v709, 32
      %vm864 = vcmp.lt.s32.totalorder %v710, 32
      %vm865 = vcmp.lt.s32.totalorder %v711, 32
      %vm866 = vcmp.lt.s32.totalorder %v712, 32
      %vm867 = vcmp.lt.s32.totalorder %v713, 32
      %vm868 = vcmp.lt.s32.totalorder %v714, 32
      %vm869 = vmand %vm853, %vm861
      %vm870 = vmand %vm854, %vm862
      %vm871 = vmand %vm855, %vm863
      %vm872 = vmand %vm856, %vm864
      %vm873 = vmand %vm857, %vm865
      %vm874 = vmand %vm858, %vm866
      %vm875 = vmand %vm859, %vm867
      %vm876 = vmand %vm860, %vm868
      %v877 = vsel %vm869, %v844, 0.0
      %v878 = vsel %vm870, %v843, 0.0
      %v879 = vsel %vm871, %v842, 0.0
      %v880 = vsel %vm872, %v841, 0.0
      %v881 = vsel %vm873, %v840, 0.0
      %v882 = vsel %vm874, %v839, 0.0
      %v883 = vsel %vm875, %v838, 0.0
      %v884 = vsel %vm876, %v837, 0.0
      %885 = vrot.lane.b32.xlu0 %v682, 31
      %v886 = vpop.permute.xlu0 %885
      %887 = vrot.lane.b32.xlu0 %v683, 31
      %v888 = vpop.permute.xlu0 %887
      %889 = vrot.lane.b32.xlu0 %v684, 31
      %v890 = vpop.permute.xlu0 %889
      %891 = vrot.lane.b32.xlu0 %v685, 31
      %v892 = vpop.permute.xlu0 %891
      %893 = vrot.lane.b32.xlu0 %v686, 31
      %v894 = vpop.permute.xlu0 %893
      %895 = vrot.lane.b32.xlu0 %v687, 31
      %v896 = vpop.permute.xlu0 %895
      %897 = vrot.lane.b32.xlu0 %v688, 31
      %v898 = vpop.permute.xlu0 %897
      %899 = vrot.lane.b32.xlu0 %v689, 31
      %v900 = vpop.permute.xlu0 %899
      %vm901 = vcmp.lt.s32.totalorder %v691, 31
      %v902 = vsel %vm901, %v898, %v900
      %v903 = vsel %vm901, %v896, %v898
      %v904 = vsel %vm901, %v894, %v896
      %v905 = vsel %vm901, %v892, %v894
      %v906 = vsel %vm901, %v890, %v892
      %v907 = vsel %vm901, %v888, %v890
      %v908 = vsel %vm901, %v886, %v888
      %v909 = vsel %vm901, %v900, %v886
      %v910 = vadd.s32 %v707, 1
      %v911 = vadd.s32 %v708, 1
      %v912 = vadd.s32 %v709, 1
      %v913 = vadd.s32 %v710, 1
      %v914 = vadd.s32 %v711, 1
      %v915 = vadd.s32 %v712, 1
      %v916 = vadd.s32 %v713, 1
      %v917 = vadd.s32 %v714, 1
      %vm918 = vcmp.ge.s32.totalorder %v910, 0
      %vm919 = vcmp.ge.s32.totalorder %v911, 0
      %vm920 = vcmp.ge.s32.totalorder %v912, 0
      %vm921 = vcmp.ge.s32.totalorder %v913, 0
      %vm922 = vcmp.ge.s32.totalorder %v914, 0
      %vm923 = vcmp.ge.s32.totalorder %v915, 0
      %vm924 = vcmp.ge.s32.totalorder %v916, 0
      %vm925 = vcmp.ge.s32.totalorder %v917, 0
      %vm926 = vmand %vm764, %vm918
      %vm927 = vmand %vm765, %vm919
      %vm928 = vmand %vm766, %vm920
      %vm929 = vmand %vm767, %vm921
      %vm930 = vmand %vm768, %vm922
      %vm931 = vmand %vm769, %vm923
      %vm932 = vmand %vm770, %vm924
      %vm933 = vmand %vm771, %vm925
      %vm934 = vcmp.lt.s32.totalorder %v910, 32
      %vm935 = vcmp.lt.s32.totalorder %v911, 32
      %vm936 = vcmp.lt.s32.totalorder %v912, 32
      %vm937 = vcmp.lt.s32.totalorder %v913, 32
      %vm938 = vcmp.lt.s32.totalorder %v914, 32
      %vm939 = vcmp.lt.s32.totalorder %v915, 32
      %vm940 = vcmp.lt.s32.totalorder %v916, 32
      %vm941 = vcmp.lt.s32.totalorder %v917, 32
      %vm942 = vmand %vm926, %vm934
      %vm943 = vmand %vm927, %vm935
      %vm944 = vmand %vm928, %vm936
      %vm945 = vmand %vm929, %vm937
      %vm946 = vmand %vm930, %vm938
      %vm947 = vmand %vm931, %vm939
      %vm948 = vmand %vm932, %vm940
      %vm949 = vmand %vm933, %vm941
      %v950 = vsel %vm942, %v909, 0.0
      %v951 = vsel %vm943, %v908, 0.0
      %v952 = vsel %vm944, %v907, 0.0
      %v953 = vsel %vm945, %v906, 0.0
      %v954 = vsel %vm946, %v905, 0.0
      %v955 = vsel %vm947, %v904, 0.0
      %v956 = vsel %vm948, %v903, 0.0
      %v957 = vsel %vm949, %v902, 0.0
      %958 = vrot.lane.b32.xlu0 %v682, 1
      %v959 = vpop.permute.xlu0 %958
      %960 = vrot.lane.b32.xlu0 %v683, 1
      %v961 = vpop.permute.xlu0 %960
      %962 = vrot.lane.b32.xlu0 %v684, 1
      %v963 = vpop.permute.xlu0 %962
      %964 = vrot.lane.b32.xlu0 %v685, 1
      %v965 = vpop.permute.xlu0 %964
      %966 = vrot.lane.b32.xlu0 %v686, 1
      %v967 = vpop.permute.xlu0 %966
      %968 = vrot.lane.b32.xlu0 %v687, 1
      %v969 = vpop.permute.xlu0 %968
      %970 = vrot.lane.b32.xlu0 %v688, 1
      %v971 = vpop.permute.xlu0 %970
      %972 = vrot.lane.b32.xlu0 %v689, 1
      %v973 = vpop.permute.xlu0 %972
      %vm974 = vcmp.lt.s32.totalorder %v691, 1
      %v975 = vsel %vm974, %v971, %v973
      %v976 = vsel %vm974, %v969, %v971
      %v977 = vsel %vm974, %v967, %v969
      %v978 = vsel %vm974, %v965, %v967
      %v979 = vsel %vm974, %v963, %v965
      %v980 = vsel %vm974, %v961, %v963
      %v981 = vsel %vm974, %v959, %v961
      %v982 = vsel %vm974, %v973, %v959
      %vm983 = vcmp.ge.s32.totalorder %v699, 0
      %vm984 = vcmp.ge.s32.totalorder %v700, 0
      %vm985 = vcmp.ge.s32.totalorder %v701, 0
      %vm986 = vcmp.ge.s32.totalorder %v702, 0
      %vm987 = vcmp.ge.s32.totalorder %v703, 0
      %vm988 = vcmp.ge.s32.totalorder %v704, 0
      %vm989 = vcmp.ge.s32.totalorder %v705, 0
      %vm990 = vcmp.ge.s32.totalorder %v706, 0
      %vm991 = vcmp.lt.s32.totalorder %v699, 32
      %vm992 = vcmp.lt.s32.totalorder %v700, 32
      %vm993 = vcmp.lt.s32.totalorder %v701, 32
      %vm994 = vcmp.lt.s32.totalorder %v702, 32
      %vm995 = vcmp.lt.s32.totalorder %v703, 32
      %vm996 = vcmp.lt.s32.totalorder %v704, 32
      %vm997 = vcmp.lt.s32.totalorder %v705, 32
      %vm998 = vcmp.lt.s32.totalorder %v706, 32
      %vm999 = vmand %vm983, %vm991
      %vm1000 = vmand %vm984, %vm992
      %vm1001 = vmand %vm985, %vm993
      %vm1002 = vmand %vm986, %vm994
      %vm1003 = vmand %vm987, %vm995
      %vm1004 = vmand %vm988, %vm996
      %vm1005 = vmand %vm989, %vm997
      %vm1006 = vmand %vm990, %vm998
      %vm1007 = vmand %vm999, %vm780
      %vm1008 = vmand %vm1000, %vm781
      %vm1009 = vmand %vm1001, %vm782
      %vm1010 = vmand %vm1002, %vm783
      %vm1011 = vmand %vm1003, %vm784
      %vm1012 = vmand %vm1004, %vm785
      %vm1013 = vmand %vm1005, %vm786
      %vm1014 = vmand %vm1006, %vm787
      %vm1015 = vmand %vm1007, %vm796
      %vm1016 = vmand %vm1008, %vm797
      %vm1017 = vmand %vm1009, %vm798
      %vm1018 = vmand %vm1010, %vm799
      %vm1019 = vmand %vm1011, %vm800
      %vm1020 = vmand %vm1012, %vm801
      %vm1021 = vmand %vm1013, %vm802
      %vm1022 = vmand %vm1014, %vm803
      %v1023 = vsel %vm1015, %v982, 0.0
      %v1024 = vsel %vm1016, %v981, 0.0
      %v1025 = vsel %vm1017, %v980, 0.0
      %v1026 = vsel %vm1018, %v979, 0.0
      %v1027 = vsel %vm1019, %v978, 0.0
      %v1028 = vsel %vm1020, %v977, 0.0
      %v1029 = vsel %vm1021, %v976, 0.0
      %v1030 = vsel %vm1022, %v975, 0.0
      %1031 = vrot.lane.b32.xlu0 %v682, 127
      %v1032 = vpop.permute.xlu0 %1031
      %1033 = vrot.lane.b32.xlu0 %v683, 127
      %v1034 = vpop.permute.xlu0 %1033
      %1035 = vrot.lane.b32.xlu0 %v684, 127
      %v1036 = vpop.permute.xlu0 %1035
      %1037 = vrot.lane.b32.xlu0 %v685, 127
      %v1038 = vpop.permute.xlu0 %1037
      %1039 = vrot.lane.b32.xlu0 %v686, 127
      %v1040 = vpop.permute.xlu0 %1039
      %1041 = vrot.lane.b32.xlu0 %v687, 127
      %v1042 = vpop.permute.xlu0 %1041
      %1043 = vrot.lane.b32.xlu0 %v688, 127
      %v1044 = vpop.permute.xlu0 %1043
      %1045 = vrot.lane.b32.xlu0 %v689, 127
      %v1046 = vpop.permute.xlu0 %1045
      %vm1047 = vcmp.lt.s32.totalorder %v691, 127
      %v1048 = vsel %vm1047, %v1044, %v1046
      %v1049 = vsel %vm1047, %v1042, %v1044
      %v1050 = vsel %vm1047, %v1040, %v1042
      %v1051 = vsel %vm1047, %v1038, %v1040
      %v1052 = vsel %vm1047, %v1036, %v1038
      %v1053 = vsel %vm1047, %v1034, %v1036
      %v1054 = vsel %vm1047, %v1032, %v1034
      %v1055 = vsel %vm1047, %v1046, %v1032
      %vm1056 = vmand %vm999, %vm918
      %vm1057 = vmand %vm1000, %vm919
      %vm1058 = vmand %vm1001, %vm920
      %vm1059 = vmand %vm1002, %vm921
      %vm1060 = vmand %vm1003, %vm922
      %vm1061 = vmand %vm1004, %vm923
      %vm1062 = vmand %vm1005, %vm924
      %vm1063 = vmand %vm1006, %vm925
      %vm1064 = vmand %vm1056, %vm934
      %vm1065 = vmand %vm1057, %vm935
      %vm1066 = vmand %vm1058, %vm936
      %vm1067 = vmand %vm1059, %vm937
      %vm1068 = vmand %vm1060, %vm938
      %vm1069 = vmand %vm1061, %vm939
      %vm1070 = vmand %vm1062, %vm940
      %vm1071 = vmand %vm1063, %vm941
      %v1072 = vsel %vm1064, %v1054, 0.0
      %v1073 = vsel %vm1065, %v1053, 0.0
      %v1074 = vsel %vm1066, %v1052, 0.0
      %v1075 = vsel %vm1067, %v1051, 0.0
      %v1076 = vsel %vm1068, %v1050, 0.0
      %v1077 = vsel %vm1069, %v1049, 0.0
      %v1078 = vsel %vm1070, %v1048, 0.0
      %v1079 = vsel %vm1071, %v1055, 0.0
      %1080 = vrot.lane.b32.xlu0 %v682, 97
      %v1081 = vpop.permute.xlu0 %1080
      %1082 = vrot.lane.b32.xlu0 %v683, 97
      %v1083 = vpop.permute.xlu0 %1082
      %1084 = vrot.lane.b32.xlu0 %v684, 97
      %v1085 = vpop.permute.xlu0 %1084
      %1086 = vrot.lane.b32.xlu0 %v685, 97
      %v1087 = vpop.permute.xlu0 %1086
      %1088 = vrot.lane.b32.xlu0 %v686, 97
      %v1089 = vpop.permute.xlu0 %1088
      %1090 = vrot.lane.b32.xlu0 %v687, 97
      %v1091 = vpop.permute.xlu0 %1090
      %1092 = vrot.lane.b32.xlu0 %v688, 97
      %v1093 = vpop.permute.xlu0 %1092
      %1094 = vrot.lane.b32.xlu0 %v689, 97
      %v1095 = vpop.permute.xlu0 %1094
      %vm1096 = vcmp.lt.s32.totalorder %v691, 97
      %v1097 = vsel %vm1096, %v1093, %v1095
      %v1098 = vsel %vm1096, %v1091, %v1093
      %v1099 = vsel %vm1096, %v1089, %v1091
      %v1100 = vsel %vm1096, %v1087, %v1089
      %v1101 = vsel %vm1096, %v1085, %v1087
      %v1102 = vsel %vm1096, %v1083, %v1085
      %v1103 = vsel %vm1096, %v1081, %v1083
      %v1104 = vsel %vm1096, %v1095, %v1081
      %v1105 = vadd.s32 %v699, 1
      %v1106 = vadd.s32 %v700, 1
      %v1107 = vadd.s32 %v701, 1
      %v1108 = vadd.s32 %v702, 1
      %v1109 = vadd.s32 %v703, 1
      %v1110 = vadd.s32 %v704, 1
      %v1111 = vadd.s32 %v705, 1
      %v1112 = vadd.s32 %v706, 1
      %vm1113 = vcmp.ge.s32.totalorder %v1105, 0
      %vm1114 = vcmp.ge.s32.totalorder %v1106, 0
      %vm1115 = vcmp.ge.s32.totalorder %v1107, 0
      %vm1116 = vcmp.ge.s32.totalorder %v1108, 0
      %vm1117 = vcmp.ge.s32.totalorder %v1109, 0
      %vm1118 = vcmp.ge.s32.totalorder %v1110, 0
      %vm1119 = vcmp.ge.s32.totalorder %v1111, 0
      %vm1120 = vcmp.ge.s32.totalorder %v1112, 0
      %vm1121 = vcmp.lt.s32.totalorder %v1105, 32
      %vm1122 = vcmp.lt.s32.totalorder %v1106, 32
      %vm1123 = vcmp.lt.s32.totalorder %v1107, 32
      %vm1124 = vcmp.lt.s32.totalorder %v1108, 32
      %vm1125 = vcmp.lt.s32.totalorder %v1109, 32
      %vm1126 = vcmp.lt.s32.totalorder %v1110, 32
      %vm1127 = vcmp.lt.s32.totalorder %v1111, 32
      %vm1128 = vcmp.lt.s32.totalorder %v1112, 32
      %vm1129 = vmand %vm1113, %vm1121
      %vm1130 = vmand %vm1114, %vm1122
      %vm1131 = vmand %vm1115, %vm1123
      %vm1132 = vmand %vm1116, %vm1124
      %vm1133 = vmand %vm1117, %vm1125
      %vm1134 = vmand %vm1118, %vm1126
      %vm1135 = vmand %vm1119, %vm1127
      %vm1136 = vmand %vm1120, %vm1128
      %vm1137 = vmand %vm1129, %vm780
      %vm1138 = vmand %vm1130, %vm781
      %vm1139 = vmand %vm1131, %vm782
      %vm1140 = vmand %vm1132, %vm783
      %vm1141 = vmand %vm1133, %vm784
      %vm1142 = vmand %vm1134, %vm785
      %vm1143 = vmand %vm1135, %vm786
      %vm1144 = vmand %vm1136, %vm787
      %vm1145 = vmand %vm1137, %vm796
      %vm1146 = vmand %vm1138, %vm797
      %vm1147 = vmand %vm1139, %vm798
      %vm1148 = vmand %vm1140, %vm799
      %vm1149 = vmand %vm1141, %vm800
      %vm1150 = vmand %vm1142, %vm801
      %vm1151 = vmand %vm1143, %vm802
      %vm1152 = vmand %vm1144, %vm803
      %v1153 = vsel %vm1145, %v1103, 0.0
      %v1154 = vsel %vm1146, %v1102, 0.0
      %v1155 = vsel %vm1147, %v1101, 0.0
      %v1156 = vsel %vm1148, %v1100, 0.0
      %v1157 = vsel %vm1149, %v1099, 0.0
      %v1158 = vsel %vm1150, %v1098, 0.0
      %v1159 = vsel %vm1151, %v1097, 0.0
      %v1160 = vsel %vm1152, %v1104, 0.0
      %1161 = vrot.lane.b32.xlu0 %v682, 96
      %v1162 = vpop.permute.xlu0 %1161
      %1163 = vrot.lane.b32.xlu0 %v683, 96
      %v1164 = vpop.permute.xlu0 %1163
      %1165 = vrot.lane.b32.xlu0 %v684, 96
      %v1166 = vpop.permute.xlu0 %1165
      %1167 = vrot.lane.b32.xlu0 %v685, 96
      %v1168 = vpop.permute.xlu0 %1167
      %1169 = vrot.lane.b32.xlu0 %v686, 96
      %v1170 = vpop.permute.xlu0 %1169
      %1171 = vrot.lane.b32.xlu0 %v687, 96
      %v1172 = vpop.permute.xlu0 %1171
      %1173 = vrot.lane.b32.xlu0 %v688, 96
      %v1174 = vpop.permute.xlu0 %1173
      %1175 = vrot.lane.b32.xlu0 %v689, 96
      %v1176 = vpop.permute.xlu0 %1175
      %vm1177 = vcmp.lt.s32.totalorder %v691, 96
      %v1178 = vsel %vm1177, %v1174, %v1176
      %v1179 = vsel %vm1177, %v1172, %v1174
      %v1180 = vsel %vm1177, %v1170, %v1172
      %v1181 = vsel %vm1177, %v1168, %v1170
      %v1182 = vsel %vm1177, %v1166, %v1168
      %v1183 = vsel %vm1177, %v1164, %v1166
      %v1184 = vsel %vm1177, %v1162, %v1164
      %v1185 = vsel %vm1177, %v1176, %v1162
      %vm1186 = vmand %vm1129, %vm845
      %vm1187 = vmand %vm1130, %vm846
      %vm1188 = vmand %vm1131, %vm847
      %vm1189 = vmand %vm1132, %vm848
      %vm1190 = vmand %vm1133, %vm849
      %vm1191 = vmand %vm1134, %vm850
      %vm1192 = vmand %vm1135, %vm851
      %vm1193 = vmand %vm1136, %vm852
      %vm1194 = vmand %vm1186, %vm861
      %vm1195 = vmand %vm1187, %vm862
      %vm1196 = vmand %vm1188, %vm863
      %vm1197 = vmand %vm1189, %vm864
      %vm1198 = vmand %vm1190, %vm865
      %vm1199 = vmand %vm1191, %vm866
      %vm1200 = vmand %vm1192, %vm867
      %vm1201 = vmand %vm1193, %vm868
      %v1202 = vsel %vm1194, %v1184, 0.0
      %v1203 = vsel %vm1195, %v1183, 0.0
      %v1204 = vsel %vm1196, %v1182, 0.0
      %v1205 = vsel %vm1197, %v1181, 0.0
      %v1206 = vsel %vm1198, %v1180, 0.0
      %v1207 = vsel %vm1199, %v1179, 0.0
      %v1208 = vsel %vm1200, %v1178, 0.0
      %v1209 = vsel %vm1201, %v1185, 0.0
      %1210 = vrot.lane.b32.xlu0 %v682, 95
      %v1211 = vpop.permute.xlu0 %1210
      %1212 = vrot.lane.b32.xlu0 %v683, 95
      %v1213 = vpop.permute.xlu0 %1212
      %1214 = vrot.lane.b32.xlu0 %v684, 95
      %v1215 = vpop.permute.xlu0 %1214
      %1216 = vrot.lane.b32.xlu0 %v685, 95
      %v1217 = vpop.permute.xlu0 %1216
      %1218 = vrot.lane.b32.xlu0 %v686, 95
      %v1219 = vpop.permute.xlu0 %1218
      %1220 = vrot.lane.b32.xlu0 %v687, 95
      %v1221 = vpop.permute.xlu0 %1220
      %1222 = vrot.lane.b32.xlu0 %v688, 95
      %v1223 = vpop.permute.xlu0 %1222
      %1224 = vrot.lane.b32.xlu0 %v689, 95
      %v1225 = vpop.permute.xlu0 %1224
      %vm1226 = vcmp.lt.s32.totalorder %v691, 95
      %v1227 = vsel %vm1226, %v1223, %v1225
      %v1228 = vsel %vm1226, %v1221, %v1223
      %v1229 = vsel %vm1226, %v1219, %v1221
      %v1230 = vsel %vm1226, %v1217, %v1219
      %v1231 = vsel %vm1226, %v1215, %v1217
      %v1232 = vsel %vm1226, %v1213, %v1215
      %v1233 = vsel %vm1226, %v1211, %v1213
      %v1234 = vsel %vm1226, %v1225, %v1211
      %vm1235 = vmand %vm1129, %vm918
      %vm1236 = vmand %vm1130, %vm919
      %vm1237 = vmand %vm1131, %vm920
      %vm1238 = vmand %vm1132, %vm921
      %vm1239 = vmand %vm1133, %vm922
      %vm1240 = vmand %vm1134, %vm923
      %vm1241 = vmand %vm1135, %vm924
      %vm1242 = vmand %vm1136, %vm925
      %vm1243 = vmand %vm1235, %vm934
      %vm1244 = vmand %vm1236, %vm935
      %vm1245 = vmand %vm1237, %vm936
      %vm1246 = vmand %vm1238, %vm937
      %vm1247 = vmand %vm1239, %vm938
      %vm1248 = vmand %vm1240, %vm939
      %vm1249 = vmand %vm1241, %vm940
      %vm1250 = vmand %vm1242, %vm941
      %v1251 = vsel %vm1243, %v1233, 0.0
      %v1252 = vsel %vm1244, %v1232, 0.0
      %v1253 = vsel %vm1245, %v1231, 0.0
      %v1254 = vsel %vm1246, %v1230, 0.0
      %v1255 = vsel %vm1247, %v1229, 0.0
      %v1256 = vsel %vm1248, %v1228, 0.0
      %v1257 = vsel %vm1249, %v1227, 0.0
      %v1258 = vsel %vm1250, %v1234, 0.0
      %v1259 = vpack.c.bf16 %v877, %v812
      %v1260 = vpack.c.bf16 %v878, %v813
      %v1261 = vpack.c.bf16 %v879, %v814
      %v1262 = vpack.c.bf16 %v880, %v815
      %v1263 = vpack.c.bf16 %v881, %v816
      %v1264 = vpack.c.bf16 %v882, %v817
      %v1265 = vpack.c.bf16 %v883, %v818
      %v1266 = vpack.c.bf16 %v884, %v819
      %v1267 = vpack.c.bf16 %v1023, %v950
      %v1268 = vpack.c.bf16 %v1024, %v951
      %v1269 = vpack.c.bf16 %v1025, %v952
      %v1270 = vpack.c.bf16 %v1026, %v953
      %v1271 = vpack.c.bf16 %v1027, %v954
      %v1272 = vpack.c.bf16 %v1028, %v955
      %v1273 = vpack.c.bf16 %v1029, %v956
      %v1274 = vpack.c.bf16 %v1030, %v957
      %v1275 = vpack.c.bf16 %v1072, %v682
      %v1276 = vpack.c.bf16 %v1073, %v683
      %v1277 = vpack.c.bf16 %v1074, %v684
      %v1278 = vpack.c.bf16 %v1075, %v685
      %v1279 = vpack.c.bf16 %v1076, %v686
      %v1280 = vpack.c.bf16 %v1077, %v687
      %v1281 = vpack.c.bf16 %v1078, %v688
      %v1282 = vpack.c.bf16 %v1079, %v689
      %v1283 = vpack.c.bf16 %v1202, %v1153
      %v1284 = vpack.c.bf16 %v1203, %v1154
      %v1285 = vpack.c.bf16 %v1204, %v1155
      %v1286 = vpack.c.bf16 %v1205, %v1156
      %v1287 = vpack.c.bf16 %v1206, %v1157
      %v1288 = vpack.c.bf16 %v1207, %v1158
      %v1289 = vpack.c.bf16 %v1208, %v1159
      %v1290 = vpack.c.bf16 %v1209, %v1160
      %v1291 = vpack.c.bf16 %v1251, %v1251
      %v1292 = vpack.c.bf16 %v1252, %v1252
      %v1293 = vpack.c.bf16 %v1253, %v1253
      %v1294 = vpack.c.bf16 %v1254, %v1254
      %v1295 = vpack.c.bf16 %v1255, %v1255
      %v1296 = vpack.c.bf16 %v1256, %v1256
      %v1297 = vpack.c.bf16 %v1257, %v1257
      %v1298 = vpack.c.bf16 %v1258, %v1258
      %v1299 = vld [vmem:[%s7] sm:$0xff]
      %v1300 = vpack.c.bf16 %v1299, %v1299
      %v1301 = vld [vmem:[%s8] sm:$0xff]
      %1303 = vset.pattern.permute.xlu0 0
      %1304 = vperm.xlu0 %1303, %v1301
      %v1305 = vpop.permute.xlu0 %1304
      %vm1307 = vcmask 588800
      %v1309 = vsel %vm1307, %v1300, 0
      %vm1311 = vcmask 1043456
      %v1313 = vsel %vm1311, %v1291, 0
      %v1316 = vsel %vm1311, %v1292, 0
      %v1319 = vsel %vm1311, %v1293, 0
      %v1322 = vsel %vm1311, %v1294, 0
      %v1325 = vsel %vm1311, %v1295, 0
      %v1328 = vsel %vm1311, %v1296, 0
      %v1331 = vsel %vm1311, %v1297, 0
      %v1334 = vsel %vm1311, %v1298, 0
      %1336 = vmatpush.bf16.msra.mxu0 0
      %1337 = vmatpush.bf16.msra.mxu0 0
      %1338 = vmatpush.bf16.msra.mxu0 0
      %1339 = vmatpush.bf16.msra.mxu0 %v1313
      %1340 = vmatpush.bf16.msra.mxu0 %v1283
      %1341 = vmatpush.bf16.msra.mxu0 %v1275
      %1342 = vmatpush.bf16.msra.mxu0 %v1267
      %1343 = vmatpush.bf16.msra.mxu0 %v1259
      %1344 = vmatmul.bf16.gmra.mxu0 %v1309
      %v1345 = vpop.f32.mrf.mxu0
      %v1346 = vadd.f32 %v1305, %v1345
      %v1347 = vpop.f32.mrf.mxu0
      %1348 = vdwg.mxu0
      %1349 = vmatpush.bf16.msra.mxu0 0
      %1350 = vmatpush.bf16.msra.mxu0 0
      %1351 = vmatpush.bf16.msra.mxu0 0
      %1352 = vmatpush.bf16.msra.mxu0 %v1316
      %1353 = vmatpush.bf16.msra.mxu0 %v1284
      %1354 = vmatpush.bf16.msra.mxu0 %v1276
      %1355 = vmatpush.bf16.msra.mxu0 %v1268
      %1356 = vmatpush.bf16.msra.mxu0 %v1260
      %1357 = vmatmul.bf16.gmra.mxu0 %v1309
      %v1358 = vpop.f32.mrf.mxu0
      %v1359 = vadd.f32 %v1305, %v1358
      %v1360 = vpop.f32.mrf.mxu0
      %1361 = vdwg.mxu0
      %1362 = vmatpush.bf16.msra.mxu0 0
      %1363 = vmatpush.bf16.msra.mxu0 0
      %1364 = vmatpush.bf16.msra.mxu0 0
      %1365 = vmatpush.bf16.msra.mxu0 %v1319
      %1366 = vmatpush.bf16.msra.mxu0 %v1285
      %1367 = vmatpush.bf16.msra.mxu0 %v1277
      %1368 = vmatpush.bf16.msra.mxu0 %v1269
      %1369 = vmatpush.bf16.msra.mxu0 %v1261
      %1370 = vmatmul.bf16.gmra.mxu0 %v1309
      %v1371 = vpop.f32.mrf.mxu0
      %v1372 = vadd.f32 %v1305, %v1371
      %v1373 = vpop.f32.mrf.mxu0
      %1374 = vdwg.mxu0
      %1375 = vmatpush.bf16.msra.mxu0 0
      %1376 = vmatpush.bf16.msra.mxu0 0
      %1377 = vmatpush.bf16.msra.mxu0 0
      %1378 = vmatpush.bf16.msra.mxu0 %v1322
      %1379 = vmatpush.bf16.msra.mxu0 %v1286
      %1380 = vmatpush.bf16.msra.mxu0 %v1278
      %1381 = vmatpush.bf16.msra.mxu0 %v1270
      %1382 = vmatpush.bf16.msra.mxu0 %v1262
      %1383 = vmatmul.bf16.gmra.mxu0 %v1309
      %v1384 = vpop.f32.mrf.mxu0
      %v1385 = vadd.f32 %v1305, %v1384
      %v1386 = vpop.f32.mrf.mxu0
      %1387 = vdwg.mxu0
      %1388 = vmatpush.bf16.msra.mxu0 0
      %1389 = vmatpush.bf16.msra.mxu0 0
      %1390 = vmatpush.bf16.msra.mxu0 0
      %1391 = vmatpush.bf16.msra.mxu0 %v1325
      %1392 = vmatpush.bf16.msra.mxu0 %v1287
      %1393 = vmatpush.bf16.msra.mxu0 %v1279
      %1394 = vmatpush.bf16.msra.mxu0 %v1271
      %1395 = vmatpush.bf16.msra.mxu0 %v1263
      %1396 = vmatmul.bf16.gmra.mxu0 %v1309
      %v1397 = vpop.f32.mrf.mxu0
      %v1398 = vadd.f32 %v1305, %v1397
      %v1399 = vpop.f32.mrf.mxu0
      %1400 = vdwg.mxu0
      %1401 = vmatpush.bf16.msra.mxu0 0
      %1402 = vmatpush.bf16.msra.mxu0 0
      %1403 = vmatpush.bf16.msra.mxu0 0
      %1404 = vmatpush.bf16.msra.mxu0 %v1328
      %1405 = vmatpush.bf16.msra.mxu0 %v1288
      %1406 = vmatpush.bf16.msra.mxu0 %v1280
      %1407 = vmatpush.bf16.msra.mxu0 %v1272
      %1408 = vmatpush.bf16.msra.mxu0 %v1264
      %1409 = vmatmul.bf16.gmra.mxu0 %v1309
      %v1410 = vpop.f32.mrf.mxu0
      %v1411 = vadd.f32 %v1305, %v1410
      %v1412 = vpop.f32.mrf.mxu0
      %1413 = vdwg.mxu0
      %1414 = vmatpush.bf16.msra.mxu0 0
      %1415 = vmatpush.bf16.msra.mxu0 0
      %1416 = vmatpush.bf16.msra.mxu0 0
      %1417 = vmatpush.bf16.msra.mxu0 %v1331
      %1418 = vmatpush.bf16.msra.mxu0 %v1289
      %1419 = vmatpush.bf16.msra.mxu0 %v1281
      %1420 = vmatpush.bf16.msra.mxu0 %v1273
      %1421 = vmatpush.bf16.msra.mxu0 %v1265
      %1422 = vmatmul.bf16.gmra.mxu0 %v1309
      %v1423 = vpop.f32.mrf.mxu0
      %v1424 = vadd.f32 %v1305, %v1423
      %v1425 = vpop.f32.mrf.mxu0
      %1426 = vdwg.mxu0
      %1427 = vmatpush.bf16.msra.mxu0 0
      %1428 = vmatpush.bf16.msra.mxu0 0
      %1429 = vmatpush.bf16.msra.mxu0 0
      %1430 = vmatpush.bf16.msra.mxu0 %v1334
      %1431 = vmatpush.bf16.msra.mxu0 %v1290
      %1432 = vmatpush.bf16.msra.mxu0 %v1282
      %1433 = vmatpush.bf16.msra.mxu0 %v1274
      %1434 = vmatpush.bf16.msra.mxu0 %v1266
      %1435 = vmatmul.bf16.gmra.mxu0 %v1309
      %v1436 = vpop.f32.mrf.mxu0
      %v1437 = vadd.f32 %v1305, %v1436
      %v1438 = vpop.f32.mrf.mxu0
      %1439 = vdwg.mxu0
      %v1440 = vld [vmem:[%s9] sm:$0xff]
      %1442 = vset.pattern.permute.xlu0 0
      %1443 = vperm.xlu0 %1442, %v1440
      %v1444 = vpop.permute.xlu0 %1443
      %v1446 = vmul.f32 %v1346, %v1444
      %v1447 = vmul.f32 %v1359, %v1444
      %v1448 = vmul.f32 %v1372, %v1444
      %v1449 = vmul.f32 %v1385, %v1444
      %v1450 = vmul.f32 %v1398, %v1444
      %v1451 = vmul.f32 %v1411, %v1444
      %v1452 = vmul.f32 %v1424, %v1444
      %v1453 = vmul.f32 %v1437, %v1444
      %v1454 = vld [vmem:[%s10] sm:$0xff]
      %1456 = vset.pattern.permute.xlu0 0
      %1457 = vperm.xlu0 %1456, %v1454
      %v1458 = vpop.permute.xlu0 %1457
      %v1460 = vadd.f32 %v1446, %v1458
      %v1461 = vadd.f32 %v1447, %v1458
      %v1462 = vadd.f32 %v1448, %v1458
      %v1463 = vadd.f32 %v1449, %v1458
      %v1464 = vadd.f32 %v1450, %v1458
      %v1465 = vadd.f32 %v1451, %v1458
      %v1466 = vadd.f32 %v1452, %v1458
      %v1467 = vadd.f32 %v1453, %v1458
      %v1468 = vmax.f32 %v1460, 0.0
      %v1469 = vmax.f32 %v1461, 0.0
      %v1470 = vmax.f32 %v1462, 0.0
      %v1471 = vmax.f32 %v1463, 0.0
      %v1472 = vmax.f32 %v1464, 0.0
      %v1473 = vmax.f32 %v1465, 0.0
      %v1474 = vmax.f32 %v1466, 0.0
      %v1475 = vmax.f32 %v1467, 0.0
      %v1476 = vld [vmem:[%s11] sm:$0xff]
      %v1477 = vld [vmem:[%s11 + $0x8] sm:$0xff]
      %v1478 = vpack.c.bf16 %v1477, %v1476
      %v1479 = vpack.c.bf16 %v1468, %v1468
      %v1480 = vpack.c.bf16 %v1469, %v1469
      %v1481 = vpack.c.bf16 %v1470, %v1470
      %v1482 = vpack.c.bf16 %v1471, %v1471
      %v1483 = vpack.c.bf16 %v1472, %v1472
      %v1484 = vpack.c.bf16 %v1473, %v1473
      %v1485 = vpack.c.bf16 %v1474, %v1474
      %v1486 = vpack.c.bf16 %v1475, %v1475
      %v1487 = vld [vmem:[%s12] sm:$0xff]
      %v1488 = vld [vmem:[%s12 + $0x8] sm:$0xff]
      %1490 = vset.pattern.permute.xlu0 0
      %1491 = vperm.xlu0 %1490, %v1487
      %v1492 = vpop.permute.xlu0 %1491
      %1495 = vset.pattern.permute.xlu0 0
      %1496 = vperm.xlu0 %1495, %v1488
      %v1497 = vpop.permute.xlu0 %1496
      %vm1499 = vcmask 64512
      %v1501 = vsel %vm1499, %v1478, 0
      %v1504 = vsel %vm1311, %v1479, 0
      %v1507 = vsel %vm1311, %v1480, 0
      %v1510 = vsel %vm1311, %v1481, 0
      %v1513 = vsel %vm1311, %v1482, 0
      %v1516 = vsel %vm1311, %v1483, 0
      %v1519 = vsel %vm1311, %v1484, 0
      %v1522 = vsel %vm1311, %v1485, 0
      %v1525 = vsel %vm1311, %v1486, 0
      %1527 = vmatpush.bf16.msra.mxu0 0
      %1528 = vmatpush.bf16.msra.mxu0 0
      %1529 = vmatpush.bf16.msra.mxu0 0
      %1530 = vmatpush.bf16.msra.mxu0 0
      %1531 = vmatpush.bf16.msra.mxu0 0
      %1532 = vmatpush.bf16.msra.mxu0 0
      %1533 = vmatpush.bf16.msra.mxu0 0
      %1534 = vmatpush.bf16.msra.mxu0 %v1504
      %1535 = vmatmul.bf16.gmra.mxu0 %v1501
      %v1536 = vpop.f32.mrf.mxu0
      %v1537 = vadd.f32 %v1492, %v1536
      %v1538 = vpop.f32.mrf.mxu0
      %v1539 = vadd.f32 %v1497, %v1538
      %1540 = vdwg.mxu0
      %1541 = vmatpush.bf16.msra.mxu0 0
      %1542 = vmatpush.bf16.msra.mxu0 0
      %1543 = vmatpush.bf16.msra.mxu0 0
      %1544 = vmatpush.bf16.msra.mxu0 0
      %1545 = vmatpush.bf16.msra.mxu0 0
      %1546 = vmatpush.bf16.msra.mxu0 0
      %1547 = vmatpush.bf16.msra.mxu0 0
      %1548 = vmatpush.bf16.msra.mxu0 %v1507
      %1549 = vmatmul.bf16.gmra.mxu0 %v1501
      %v1550 = vpop.f32.mrf.mxu0
      %v1551 = vadd.f32 %v1492, %v1550
      %v1552 = vpop.f32.mrf.mxu0
      %v1553 = vadd.f32 %v1497, %v1552
      %1554 = vdwg.mxu0
      %1555 = vmatpush.bf16.msra.mxu0 0
      %1556 = vmatpush.bf16.msra.mxu0 0
      %1557 = vmatpush.bf16.msra.mxu0 0
      %1558 = vmatpush.bf16.msra.mxu0 0
      %1559 = vmatpush.bf16.msra.mxu0 0
      %1560 = vmatpush.bf16.msra.mxu0 0
      %1561 = vmatpush.bf16.msra.mxu0 0
      %1562 = vmatpush.bf16.msra.mxu0 %v1510
      %1563 = vmatmul.bf16.gmra.mxu0 %v1501
      %v1564 = vpop.f32.mrf.mxu0
      %v1565 = vadd.f32 %v1492, %v1564
      %v1566 = vpop.f32.mrf.mxu0
      %v1567 = vadd.f32 %v1497, %v1566
      %1568 = vdwg.mxu0
      %1569 = vmatpush.bf16.msra.mxu0 0
      %1570 = vmatpush.bf16.msra.mxu0 0
      %1571 = vmatpush.bf16.msra.mxu0 0
      %1572 = vmatpush.bf16.msra.mxu0 0
      %1573 = vmatpush.bf16.msra.mxu0 0
      %1574 = vmatpush.bf16.msra.mxu0 0
      %1575 = vmatpush.bf16.msra.mxu0 0
      %1576 = vmatpush.bf16.msra.mxu0 %v1513
      %1577 = vmatmul.bf16.gmra.mxu0 %v1501
      %v1578 = vpop.f32.mrf.mxu0
      %v1579 = vadd.f32 %v1492, %v1578
      %v1580 = vpop.f32.mrf.mxu0
      %v1581 = vadd.f32 %v1497, %v1580
      %1582 = vdwg.mxu0
      %1583 = vmatpush.bf16.msra.mxu0 0
      %1584 = vmatpush.bf16.msra.mxu0 0
      %1585 = vmatpush.bf16.msra.mxu0 0
      %1586 = vmatpush.bf16.msra.mxu0 0
      %1587 = vmatpush.bf16.msra.mxu0 0
      %1588 = vmatpush.bf16.msra.mxu0 0
      %1589 = vmatpush.bf16.msra.mxu0 0
      %1590 = vmatpush.bf16.msra.mxu0 %v1516
      %1591 = vmatmul.bf16.gmra.mxu0 %v1501
      %v1592 = vpop.f32.mrf.mxu0
      %v1593 = vadd.f32 %v1492, %v1592
      %v1594 = vpop.f32.mrf.mxu0
      %v1595 = vadd.f32 %v1497, %v1594
      %1596 = vdwg.mxu0
      %1597 = vmatpush.bf16.msra.mxu0 0
      %1598 = vmatpush.bf16.msra.mxu0 0
      %1599 = vmatpush.bf16.msra.mxu0 0
      %1600 = vmatpush.bf16.msra.mxu0 0
      %1601 = vmatpush.bf16.msra.mxu0 0
      %1602 = vmatpush.bf16.msra.mxu0 0
      %1603 = vmatpush.bf16.msra.mxu0 0
      %1604 = vmatpush.bf16.msra.mxu0 %v1519
      %1605 = vmatmul.bf16.gmra.mxu0 %v1501
      %v1606 = vpop.f32.mrf.mxu0
      %v1607 = vadd.f32 %v1492, %v1606
      %v1608 = vpop.f32.mrf.mxu0
      %v1609 = vadd.f32 %v1497, %v1608
      %1610 = vdwg.mxu0
      %1611 = vmatpush.bf16.msra.mxu0 0
      %1612 = vmatpush.bf16.msra.mxu0 0
      %1613 = vmatpush.bf16.msra.mxu0 0
      %1614 = vmatpush.bf16.msra.mxu0 0
      %1615 = vmatpush.bf16.msra.mxu0 0
      %1616 = vmatpush.bf16.msra.mxu0 0
      %1617 = vmatpush.bf16.msra.mxu0 0
      %1618 = vmatpush.bf16.msra.mxu0 %v1522
      %1619 = vmatmul.bf16.gmra.mxu0 %v1501
      %v1620 = vpop.f32.mrf.mxu0
      %v1621 = vadd.f32 %v1492, %v1620
      %v1622 = vpop.f32.mrf.mxu0
      %v1623 = vadd.f32 %v1497, %v1622
      %1624 = vdwg.mxu0
      %1625 = vmatpush.bf16.msra.mxu0 0
      %1626 = vmatpush.bf16.msra.mxu0 0
      %1627 = vmatpush.bf16.msra.mxu0 0
      %1628 = vmatpush.bf16.msra.mxu0 0
      %1629 = vmatpush.bf16.msra.mxu0 0
      %1630 = vmatpush.bf16.msra.mxu0 0
      %1631 = vmatpush.bf16.msra.mxu0 0
      %1632 = vmatpush.bf16.msra.mxu0 %v1525
      %1633 = vmatmul.bf16.gmra.mxu0 %v1501
      %v1634 = vpop.f32.mrf.mxu0
      %v1635 = vadd.f32 %v1492, %v1634
      %v1636 = vpop.f32.mrf.mxu0
      %v1637 = vadd.f32 %v1497, %v1636
      %1638 = vdwg.mxu0
      %v1639 = vadd.f32 %v1537, %v442
      %v1640 = vadd.f32 %v1551, %v443
      %v1641 = vadd.f32 %v1565, %v444
      %v1642 = vadd.f32 %v1579, %v445
      %v1643 = vadd.f32 %v1593, %v446
      %v1644 = vadd.f32 %v1607, %v447
      %v1645 = vadd.f32 %v1621, %v448
      %v1646 = vadd.f32 %v1635, %v449
      %v1647 = vadd.f32 %v1539, %v450
      %v1648 = vadd.f32 %v1553, %v451
      %v1649 = vadd.f32 %v1567, %v452
      %v1650 = vadd.f32 %v1581, %v453
      %v1651 = vadd.f32 %v1595, %v454
      %v1652 = vadd.f32 %v1609, %v455
      %v1653 = vadd.f32 %v1623, %v456
      %v1654 = vadd.f32 %v1637, %v457
      %1655 = vst [vmem:[%s440] sm:$0xff] %v1639
      %1656 = vst [vmem:[%s440 + $0x8] sm:$0xff] %v1640
      %1657 = vst [vmem:[%s440 + $0x10] sm:$0xff] %v1641
      %1658 = vst [vmem:[%s440 + $0x18] sm:$0xff] %v1642
      %1659 = vst [vmem:[%s440 + $0x20] sm:$0xff] %v1643
      %1660 = vst [vmem:[%s440 + $0x28] sm:$0xff] %v1644
      %1661 = vst [vmem:[%s440 + $0x30] sm:$0xff] %v1645
      %1662 = vst [vmem:[%s440 + $0x38] sm:$0xff] %v1646
      %1663 = vst [vmem:[%s440 + $0x40] sm:$0xff] %v1647
      %1664 = vst [vmem:[%s440 + $0x48] sm:$0xff] %v1648
      %1665 = vst [vmem:[%s440 + $0x50] sm:$0xff] %v1649
      %1666 = vst [vmem:[%s440 + $0x58] sm:$0xff] %v1650
      %1667 = vst [vmem:[%s440 + $0x60] sm:$0xff] %v1651
      %1668 = vst [vmem:[%s440 + $0x68] sm:$0xff] %v1652
      %1669 = vst [vmem:[%s440 + $0x70] sm:$0xff] %v1653
      %1670 = vst [vmem:[%s440 + $0x78] sm:$0xff] %v1654
      %p1671 = scmp.lt.s32.totalorder %s24, 1
      %s1672 = scalar_select %p1671, %s24, 1
      %s1673 = smul.addr %s1672, 16
      %s1674 = smul.addr %s1673, 8
      %s1675 = scalar_lea.vmem %s13, %s1674
      // Predicated region
      $region73: #{_lambda_.11} parent=71 // pred_check
        %p1676 = pneg %p320
      $region74: #{_lambda_.11} parent=71 // pred_check_branch
        %1678 = sbr.rel (%p1676) target = $region76
      $region75: #{_lambda_.11} parent=71 // pred_region
        _
      $region76: #{_lambda_.11} parent=71 // pred_fallthru
        _
    $region72: #{_lambda_.11} parent=5 // pred_fallthru
      _
    %p1679 = scmp.le.s32.totalorder 2, %s19
    // Predicated region
    $region77: #{_lambda_.11} parent=5 // pred_check
      %p1680 = pneg %p1679
    $region78: #{_lambda_.11} parent=5 // pred_check_branch
      %1682 = sbr.rel (%p1680) target = $region80
    $region79: #{_lambda_.11} parent=5 // pred_region
      %s1683 = ssub.s32 %s19, 2
      // Predicated region
      $region81: #{_lambda_.11} parent=79 // pred_check
        %p1684 = pneg %p326
      $region82: #{_lambda_.11} parent=79 // pred_check_branch
        %1686 = sbr.rel (%p1684) target = $region84
      $region83: #{_lambda_.11} parent=79 // pred_region
        %p1687 = scmp.lt.s32.totalorder %s25, 1
        %s1688 = scalar_select %p1687, %s25, 1
        %s1689 = smul.addr %s1688, 16
        %s1690 = smul.addr %s1689, 8
        %s1691 = scalar_lea.vmem %s13, %s1690
      $region84: #{_lambda_.11} parent=79 // pred_fallthru
        _
    $region80: #{_lambda_.11} parent=5 // pred_fallthru
      _
  $region6: #{_lambda_.11} parent=0 // loop_footer
    %s23 = sadd.s32 1, %s19
  $region7: #{_lambda_.11} parent=0 // loop_footer_branch
    %18 = sbr.rel target = $region3
  $region8: #{_lambda_.11} parent=0 // loop_exit
    _

// kernel: _lambda_.21
$region0: #{_lambda_.21}
  #allocation0 [shape = 'u32[]', space=smem, size = 0x4, offset = 0x4, fixed_abs, tag = 'smem constant byte address 0x4 - core index']
  #allocation1 [shape = 'u32[72,128]{1,0:T(1,128)}', space=vmem, size = 0x9000, scoped, tag = 'internal scratch']
  %s0 = inlined_call_operand.vmem [shape: f32[2,16,1024], index: 0, kind: input, shape index: {}]
  %s1 = inlined_call_operand.vmem [shape: f32[2,16,256], index: 1, kind: input, shape index: {}]
  %s2 = inlined_call_operand.vmem [shape: f32[2,16,1024], index: 2, kind: output, shape index: {}]
  %s3 = sld [smem:[#allocation0]]
  $region41: #{_lambda_.21} parent=0
    _
  %s5 = ssub.s32 1, %s3
  %s6 = scalar_select 0, %s5, %s3
  loop: start=0, step=1, limit=4
  $region2: #{_lambda_.21} parent=0 // loop_pre_header
    _
  $region3: #{_lambda_.21} parent=0 // loop_header
    %s8 = sphi 0, %s12
    %p9 = scmp.ge.s32.totalorder %s8, 4
    %s18 = sphi 0, %s20
    %s21 = sphi 0, %s18
    %s22 = sphi 0, %s21
    %s38 = sphi 0, %s22
    %s44 = sphi 0, %s46
    %s47 = sphi 0, %s44
    %s48 = sphi 0, %s47
    %s64 = sphi 0, %s48
    %s70 = sphi 0, %s72
    %s73 = sphi 0, %s70
    %s74 = sphi 0, %s73
    %s90 = sphi 0, %s74
  $region4: #{_lambda_.21} parent=0 // loop_header_branch
    %11 = sbr.rel (%p9) target = $region8
  $region5: #{_lambda_.21} parent=0 // loop_body
    %s13 = ssub.s32 %s8, 1
    %s14 = ssub.s32 %s8, 2
    %s15 = sadd.s32 %s8, 1
    %s16 = ssub.s32 %s8, %s15
    %p17 = scmp.eq.s32.totalorder %s16, 0
    %s19 = sadd.s32 %s18, 1
    %s20 = scalar_select %p17, %s18, %s19
    %p23 = pneg %p17
    %p24 = scmp.eq.s32.totalorder %s8, 1
    %p25 = por %p23, %p24
    %p26 = scmp.ne.s32.totalorder %s18, %s21
    %p27 = scmp.eq.s32.totalorder %s8, 0
    %p28 = por %p26, %p27
    %p29 = scmp.ne.s32.totalorder %s18, %s21
    %p30 = scmp.eq.s32.totalorder %s13, 1
    %p31 = por %p29, %p30
    %p32 = scmp.ne.s32.totalorder %s21, %s22
    %p33 = scmp.eq.s32.totalorder %s13, 0
    %p34 = por %p32, %p33
    %p35 = scmp.ne.s32.totalorder %s21, %s22
    %p36 = scmp.eq.s32.totalorder %s14, 1
    %p37 = por %p35, %p36
    %p39 = scmp.ne.s32.totalorder %s22, %s38
    %p40 = scmp.eq.s32.totalorder %s14, 0
    %p41 = por %p39, %p40
    %s42 = ssub.s32 %s8, %s15
    %p43 = scmp.eq.s32.totalorder %s42, 0
    %s45 = sadd.s32 %s44, 1
    %s46 = scalar_select %p43, %s44, %s45
    %p49 = pneg %p43
    %p50 = scmp.eq.s32.totalorder %s8, 1
    %p51 = por %p49, %p50
    %p52 = scmp.ne.s32.totalorder %s44, %s47
    %p53 = scmp.eq.s32.totalorder %s8, 0
    %p54 = por %p52, %p53
    %p55 = scmp.ne.s32.totalorder %s44, %s47
    %p56 = scmp.eq.s32.totalorder %s13, 1
    %p57 = por %p55, %p56
    %p58 = scmp.ne.s32.totalorder %s47, %s48
    %p59 = scmp.eq.s32.totalorder %s13, 0
    %p60 = por %p58, %p59
    %p61 = scmp.ne.s32.totalorder %s47, %s48
    %p62 = scmp.eq.s32.totalorder %s14, 1
    %p63 = por %p61, %p62
    %p65 = scmp.ne.s32.totalorder %s48, %s64
    %p66 = scmp.eq.s32.totalorder %s14, 0
    %p67 = por %p65, %p66
    %s68 = ssub.s32 %s8, %s15
    %p69 = scmp.eq.s32.totalorder %s68, 0
    %s71 = sadd.s32 %s70, 1
    %s72 = scalar_select %p69, %s70, %s71
    %p75 = pneg %p69
    %p76 = scmp.eq.s32.totalorder %s8, 1
    %p77 = por %p75, %p76
    %p78 = scmp.ne.s32.totalorder %s70, %s73
    %p79 = scmp.eq.s32.totalorder %s8, 0
    %p80 = por %p78, %p79
    %p81 = scmp.ne.s32.totalorder %s70, %s73
    %p82 = scmp.eq.s32.totalorder %s13, 1
    %p83 = por %p81, %p82
    %p84 = scmp.ne.s32.totalorder %s73, %s74
    %p85 = scmp.eq.s32.totalorder %s13, 0
    %p86 = por %p84, %p85
    %p87 = scmp.ne.s32.totalorder %s73, %s74
    %p88 = scmp.eq.s32.totalorder %s14, 1
    %p89 = por %p87, %p88
    %p91 = scmp.ne.s32.totalorder %s74, %s90
    %p92 = scmp.eq.s32.totalorder %s14, 0
    %p93 = por %p91, %p92
    %p94 = scmp.le.s32.totalorder 1, %s8
    %p95 = scmp.lt.s32.totalorder %s8, 3
    %p96 = pnand %p94, %p95
    %p97 = pneg %p96
    // Predicated region
    $region9: #{_lambda_.21} parent=5 // pred_check
      _
    $region10: #{_lambda_.21} parent=5 // pred_check_branch
      %99 = sbr.rel (%p96) target = $region12
    $region11: #{_lambda_.21} parent=5 // pred_region
      %s100 = ssub.s32 %s8, 1
    $region12: #{_lambda_.21} parent=5 // pred_fallthru
      _
    %p101 = scmp.lt.s32.totalorder %s8, 2
    // Predicated region
    $region13: #{_lambda_.21} parent=5 // pred_check
      %p102 = pneg %p101
    $region14: #{_lambda_.21} parent=5 // pred_check_branch
      %104 = sbr.rel (%p102) target = $region16
    $region15: #{_lambda_.21} parent=5 // pred_region
      // Predicated region
      $region17: #{_lambda_.21} parent=15 // pred_check
        %p105 = pneg %p28
      $region18: #{_lambda_.21} parent=15 // pred_check_branch
        %107 = sbr.rel (%p105) target = $region20
      $region19: #{_lambda_.21} parent=15 // pred_region
        %p108 = scmp.lt.s32.totalorder %s8, 1
        %s109 = scalar_select %p108, %s8, 1
        %s110 = smul.addr %s109, 16
        %s111 = smul.addr %s110, 8
        %s112 = scalar_lea.vmem %s0, %s111
      $region20: #{_lambda_.21} parent=15 // pred_fallthru
        _
      // Predicated region
      $region21: #{_lambda_.21} parent=15 // pred_check
        %p113 = pneg %p54
      $region22: #{_lambda_.21} parent=15 // pred_check_branch
        %115 = sbr.rel (%p113) target = $region24
      $region23: #{_lambda_.21} parent=15 // pred_region
        %p116 = scmp.lt.s32.totalorder %s8, 1
        %s117 = scalar_select %p116, %s8, 1
        %s118 = smul.addr %s117, 4
        %s119 = smul.addr %s118, 8
        %s120 = scalar_lea.vmem %s1, %s119
      $region24: #{_lambda_.21} parent=15 // pred_fallthru
        _
    $region16: #{_lambda_.21} parent=5 // pred_fallthru
      _
    %p121 = scmp.le.s32.totalorder 1, %s8
    %p122 = scmp.lt.s32.totalorder %s8, 3
    %p123 = pnand %p121, %p122
    %p124 = pneg %p123
    // Predicated region
    $region25: #{_lambda_.21} parent=5 // pred_check
      _
    $region26: #{_lambda_.21} parent=5 // pred_check_branch
      %126 = sbr.rel (%p123) target = $region28
    $region27: #{_lambda_.21} parent=5 // pred_region
      %s127 = ssub.s32 %s8, 1
      %p128 = scmp.lt.s32.totalorder %s13, 1
      %s129 = scalar_select %p128, %s13, 1
      %s130 = smul.addr %s129, 16
      %s131 = smul.addr %s130, 8
      %s132 = scalar_lea.vmem %s0, %s131
      %p133 = pneg %p34
      %p134 = pneg %p31
      %p135 = scmp.lt.s32.totalorder %s13, 1
      %s136 = scalar_select %p135, %s13, 1
      %s137 = smul.addr %s136, 4
      %s138 = smul.addr %s137, 8
      %s139 = scalar_lea.vmem %s1, %s138
      %p140 = pneg %p60
      %p141 = pneg %p57
      %p142 = pneg %p86
      %p143 = pneg %p83
      %p144 = scmp.lt.s32.totalorder %s13, 1
      %s145 = scalar_select %p144, %s13, 1
      %s146 = smul.addr %s145, 16
      %s147 = smul.addr %s146, 8
      %s148 = scalar_lea.vmem %s2, %s147
      %p149 = scmp.lt.s32.totalorder %s13, 1
      %s150 = scalar_select %p149, %s13, 1
      %s151 = smul.addr %s150, 16
      %s152 = smul.addr %s151, 8
      %s153 = scalar_lea.vmem %s0, %s152
      %p154 = scmp.lt.s32.totalorder %s13, 1
      %s155 = scalar_select %p154, %s13, 1
      %s156 = smul.addr %s155, 4
      %s157 = smul.addr %s156, 8
      %s158 = scalar_lea.vmem %s1, %s157
      %p159 = scmp.lt.s32.totalorder %s13, 1
      %s160 = scalar_select %p159, %s13, 1
      %s161 = smul.addr %s160, 16
      %s162 = smul.addr %s161, 8
      %s163 = scalar_lea.vmem %s2, %s162
      %v164 = vld [vmem:[%s158] sm:$0xff]
      %v165 = vld [vmem:[%s158 + $0x8] sm:$0xff]
      %v166 = vld [vmem:[%s158 + $0x10] sm:$0xff]
      %v167 = vld [vmem:[%s158 + $0x18] sm:$0xff]
      %v168 = vlaneseq
      %v169 = vshrl.u32 %v168, 7
      %v170 = vadd.s32 %v169, 8
      %v171 = vadd.s32 %v169, 16
      %v172 = vadd.s32 %v169, 24
      %v173 = vadd.s32 %v169, 32
      %v174 = vadd.s32 %v169, 40
      %v175 = vadd.s32 %v169, 48
      %v176 = vadd.s32 %v169, 56
      %v177 = vadd.s32 %v169, 64
      %v178 = vadd.s32 %v169, 72
      %v179 = vadd.s32 %v169, 80
      %v180 = vadd.s32 %v169, 88
      %v181 = vadd.s32 %v169, 96
      %v182 = vadd.s32 %v169, 104
      %v183 = vadd.s32 %v169, 112
      %v184 = vadd.s32 %v169, 120
      %v185 = vadd.s32 %v169, 128
      %v186 = vadd.s32 %v169, 136
      %v187 = vadd.s32 %v169, 144
      %v188 = vadd.s32 %v169, 152
      %v189 = vadd.s32 %v169, 160
      %v190 = vadd.s32 %v169, 168
      %v191 = vadd.s32 %v169, 176
      %v192 = vadd.s32 %v169, 184
      %v193 = vadd.s32 %v169, 192
      %v194 = vadd.s32 %v169, 200
      %v195 = vadd.s32 %v169, 208
      %v196 = vadd.s32 %v169, 216
      %v197 = vadd.s32 %v169, 224
      %v198 = vadd.s32 %v169, 232
      %v199 = vadd.s32 %v169, 240
      %v200 = vadd.s32 %v169, 248
      %v201 = vlaneseq
      %v202 = vand.u32 %v201, 127
      %v203 = vadd.s32 %v202, 128
      %v204 = vadd.s32 %v202, 256
      %v205 = vadd.s32 %v202, 384
      %v206 = vadd.s32 %v202, 512
      %v207 = vadd.s32 %v202, 640
      %v208 = vadd.s32 %v202, 768
      %v209 = vadd.s32 %v202, 896
      %v210 = vshra.s32 %v202, 5
      %v211 = vshra.s32 %v203, 5
      %v212 = vshra.s32 %v204, 5
      %v213 = vshra.s32 %v205, 5
      %v214 = vshra.s32 %v206, 5
      %v215 = vshra.s32 %v207, 5
      %v216 = vshra.s32 %v208, 5
      %v217 = vshra.s32 %v209, 5
      %v218 = vshra.s32 %v210, 1
      %v219 = vshra.s32 %v211, 1
      %v220 = vshra.s32 %v212, 1
      %v221 = vshra.s32 %v213, 1
      %v222 = vshra.s32 %v214, 1
      %v223 = vshra.s32 %v215, 1
      %v224 = vshra.s32 %v216, 1
      %v225 = vshra.s32 %v217, 1
      %v226 = vmul.u32 %v218, 16
      %v227 = vmul.u32 %v219, 16
      %v228 = vmul.u32 %v220, 16
      %v229 = vmul.u32 %v221, 16
      %v230 = vmul.u32 %v222, 16
      %v231 = vmul.u32 %v223, 16
      %v232 = vmul.u32 %v224, 16
      %v233 = vmul.u32 %v225, 16
      %v234 = vand.u32 %v202, 31
      %v235 = vand.u32 %v203, 31
      %v236 = vand.u32 %v204, 31
      %v237 = vand.u32 %v205, 31
      %v238 = vand.u32 %v206, 31
      %v239 = vand.u32 %v207, 31
      %v240 = vand.u32 %v208, 31
      %v241 = vand.u32 %v209, 31
      %v242 = vshra.s32 %v234, 1
      %v243 = vshra.s32 %v235, 1
      %v244 = vshra.s32 %v236, 1
      %v245 = vshra.s32 %v237, 1
      %v246 = vshra.s32 %v238, 1
      %v247 = vshra.s32 %v239, 1
      %v248 = vshra.s32 %v240, 1
      %v249 = vshra.s32 %v241, 1
      %v250 = vadd.s32 %v226, %v242
      %v251 = vadd.s32 %v227, %v243
      %v252 = vadd.s32 %v228, %v244
      %v253 = vadd.s32 %v229, %v245
      %v254 = vadd.s32 %v230, %v246
      %v255 = vadd.s32 %v231, %v247
      %v256 = vadd.s32 %v232, %v248
      %v257 = vadd.s32 %v233, %v249
      %vm258 = vcmp.eq.s32.totalorder %v169, %v250
      %vm259 = vcmp.eq.s32.totalorder %v169, %v251
      %vm260 = vcmp.eq.s32.totalorder %v169, %v252
      %vm261 = vcmp.eq.s32.totalorder %v169, %v253
      %vm262 = vcmp.eq.s32.totalorder %v169, %v254
      %vm263 = vcmp.eq.s32.totalorder %v169, %v255
      %vm264 = vcmp.eq.s32.totalorder %v169, %v256
      %vm265 = vcmp.eq.s32.totalorder %v169, %v257
      %vm266 = vcmp.eq.s32.totalorder %v170, %v250
      %vm267 = vcmp.eq.s32.totalorder %v170, %v251
      %vm268 = vcmp.eq.s32.totalorder %v170, %v252
      %vm269 = vcmp.eq.s32.totalorder %v170, %v253
      %vm270 = vcmp.eq.s32.totalorder %v170, %v254
      %vm271 = vcmp.eq.s32.totalorder %v170, %v255
      %vm272 = vcmp.eq.s32.totalorder %v170, %v256
      %vm273 = vcmp.eq.s32.totalorder %v170, %v257
      %vm274 = vcmp.eq.s32.totalorder %v171, %v250
      %vm275 = vcmp.eq.s32.totalorder %v171, %v251
      %vm276 = vcmp.eq.s32.totalorder %v171, %v252
      %vm277 = vcmp.eq.s32.totalorder %v171, %v253
      %vm278 = vcmp.eq.s32.totalorder %v171, %v254
      %vm279 = vcmp.eq.s32.totalorder %v171, %v255
      %vm280 = vcmp.eq.s32.totalorder %v171, %v256
      %vm281 = vcmp.eq.s32.totalorder %v171, %v257
      %vm282 = vcmp.eq.s32.totalorder %v172, %v250
      %vm283 = vcmp.eq.s32.totalorder %v172, %v251
      %vm284 = vcmp.eq.s32.totalorder %v172, %v252
      %vm285 = vcmp.eq.s32.totalorder %v172, %v253
      %vm286 = vcmp.eq.s32.totalorder %v172, %v254
      %vm287 = vcmp.eq.s32.totalorder %v172, %v255
      %vm288 = vcmp.eq.s32.totalorder %v172, %v256
      %vm289 = vcmp.eq.s32.totalorder %v172, %v257
      %vm290 = vcmp.eq.s32.totalorder %v173, %v250
      %vm291 = vcmp.eq.s32.totalorder %v173, %v251
      %vm292 = vcmp.eq.s32.totalorder %v173, %v252
      %vm293 = vcmp.eq.s32.totalorder %v173, %v253
      %vm294 = vcmp.eq.s32.totalorder %v173, %v254
      %vm295 = vcmp.eq.s32.totalorder %v173, %v255
      %vm296 = vcmp.eq.s32.totalorder %v173, %v256
      %vm297 = vcmp.eq.s32.totalorder %v173, %v257
      %vm298 = vcmp.eq.s32.totalorder %v174, %v250
      %vm299 = vcmp.eq.s32.totalorder %v174, %v251
      %vm300 = vcmp.eq.s32.totalorder %v174, %v252
      %vm301 = vcmp.eq.s32.totalorder %v174, %v253
      %vm302 = vcmp.eq.s32.totalorder %v174, %v254
      %vm303 = vcmp.eq.s32.totalorder %v174, %v255
      %vm304 = vcmp.eq.s32.totalorder %v174, %v256
      %vm305 = vcmp.eq.s32.totalorder %v174, %v257
      %vm306 = vcmp.eq.s32.totalorder %v175, %v250
      %vm307 = vcmp.eq.s32.totalorder %v175, %v251
      %vm308 = vcmp.eq.s32.totalorder %v175, %v252
      %vm309 = vcmp.eq.s32.totalorder %v175, %v253
      %vm310 = vcmp.eq.s32.totalorder %v175, %v254
      %vm311 = vcmp.eq.s32.totalorder %v175, %v255
      %vm312 = vcmp.eq.s32.totalorder %v175, %v256
      %vm313 = vcmp.eq.s32.totalorder %v175, %v257
      %vm314 = vcmp.eq.s32.totalorder %v176, %v250
      %vm315 = vcmp.eq.s32.totalorder %v176, %v251
      %vm316 = vcmp.eq.s32.totalorder %v176, %v252
      %vm317 = vcmp.eq.s32.totalorder %v176, %v253
      %vm318 = vcmp.eq.s32.totalorder %v176, %v254
      %vm319 = vcmp.eq.s32.totalorder %v176, %v255
      %vm320 = vcmp.eq.s32.totalorder %v176, %v256
      %vm321 = vcmp.eq.s32.totalorder %v176, %v257
      %vm322 = vcmp.eq.s32.totalorder %v177, %v250
      %vm323 = vcmp.eq.s32.totalorder %v177, %v251
      %vm324 = vcmp.eq.s32.totalorder %v177, %v252
      %vm325 = vcmp.eq.s32.totalorder %v177, %v253
      %vm326 = vcmp.eq.s32.totalorder %v177, %v254
      %vm327 = vcmp.eq.s32.totalorder %v177, %v255
      %vm328 = vcmp.eq.s32.totalorder %v177, %v256
      %vm329 = vcmp.eq.s32.totalorder %v177, %v257
      %vm330 = vcmp.eq.s32.totalorder %v178, %v250
      %vm331 = vcmp.eq.s32.totalorder %v178, %v251
      %vm332 = vcmp.eq.s32.totalorder %v178, %v252
      %vm333 = vcmp.eq.s32.totalorder %v178, %v253
      %vm334 = vcmp.eq.s32.totalorder %v178, %v254
      %vm335 = vcmp.eq.s32.totalorder %v178, %v255
      %vm336 = vcmp.eq.s32.totalorder %v178, %v256
      %vm337 = vcmp.eq.s32.totalorder %v178, %v257
      %vm338 = vcmp.eq.s32.totalorder %v179, %v250
      %vm339 = vcmp.eq.s32.totalorder %v179, %v251
      %vm340 = vcmp.eq.s32.totalorder %v179, %v252
      %vm341 = vcmp.eq.s32.totalorder %v179, %v253
      %vm342 = vcmp.eq.s32.totalorder %v179, %v254
      %vm343 = vcmp.eq.s32.totalorder %v179, %v255
      %vm344 = vcmp.eq.s32.totalorder %v179, %v256
      %vm345 = vcmp.eq.s32.totalorder %v179, %v257
      %vm346 = vcmp.eq.s32.totalorder %v180, %v250
      %vm347 = vcmp.eq.s32.totalorder %v180, %v251
      %vm348 = vcmp.eq.s32.totalorder %v180, %v252
      %vm349 = vcmp.eq.s32.totalorder %v180, %v253
      %vm350 = vcmp.eq.s32.totalorder %v180, %v254
      %vm351 = vcmp.eq.s32.totalorder %v180, %v255
      %vm352 = vcmp.eq.s32.totalorder %v180, %v256
      %vm353 = vcmp.eq.s32.totalorder %v180, %v257
      %vm354 = vcmp.eq.s32.totalorder %v181, %v250
      %vm355 = vcmp.eq.s32.totalorder %v181, %v251
      %vm356 = vcmp.eq.s32.totalorder %v181, %v252
      %vm357 = vcmp.eq.s32.totalorder %v181, %v253
      %vm358 = vcmp.eq.s32.totalorder %v181, %v254
      %vm359 = vcmp.eq.s32.totalorder %v181, %v255
      %vm360 = vcmp.eq.s32.totalorder %v181, %v256
      %vm361 = vcmp.eq.s32.totalorder %v181, %v257
      %vm362 = vcmp.eq.s32.totalorder %v182, %v250
      %vm363 = vcmp.eq.s32.totalorder %v182, %v251
      %vm364 = vcmp.eq.s32.totalorder %v182, %v252
      %vm365 = vcmp.eq.s32.totalorder %v182, %v253
      %vm366 = vcmp.eq.s32.totalorder %v182, %v254
      %vm367 = vcmp.eq.s32.totalorder %v182, %v255
      %vm368 = vcmp.eq.s32.totalorder %v182, %v256
      %vm369 = vcmp.eq.s32.totalorder %v182, %v257
      %vm370 = vcmp.eq.s32.totalorder %v183, %v250
      %vm371 = vcmp.eq.s32.totalorder %v183, %v251
      %vm372 = vcmp.eq.s32.totalorder %v183, %v252
      %vm373 = vcmp.eq.s32.totalorder %v183, %v253
      %vm374 = vcmp.eq.s32.totalorder %v183, %v254
      %vm375 = vcmp.eq.s32.totalorder %v183, %v255
      %vm376 = vcmp.eq.s32.totalorder %v183, %v256
      %vm377 = vcmp.eq.s32.totalorder %v183, %v257
      %vm378 = vcmp.eq.s32.totalorder %v184, %v250
      %vm379 = vcmp.eq.s32.totalorder %v184, %v251
      %vm380 = vcmp.eq.s32.totalorder %v184, %v252
      %vm381 = vcmp.eq.s32.totalorder %v184, %v253
      %vm382 = vcmp.eq.s32.totalorder %v184, %v254
      %vm383 = vcmp.eq.s32.totalorder %v184, %v255
      %vm384 = vcmp.eq.s32.totalorder %v184, %v256
      %vm385 = vcmp.eq.s32.totalorder %v184, %v257
      %vm386 = vcmp.eq.s32.totalorder %v185, %v250
      %vm387 = vcmp.eq.s32.totalorder %v185, %v251
      %vm388 = vcmp.eq.s32.totalorder %v185, %v252
      %vm389 = vcmp.eq.s32.totalorder %v185, %v253
      %vm390 = vcmp.eq.s32.totalorder %v185, %v254
      %vm391 = vcmp.eq.s32.totalorder %v185, %v255
      %vm392 = vcmp.eq.s32.totalorder %v185, %v256
      %vm393 = vcmp.eq.s32.totalorder %v185, %v257
      %vm394 = vcmp.eq.s32.totalorder %v186, %v250
      %vm395 = vcmp.eq.s32.totalorder %v186, %v251
      %vm396 = vcmp.eq.s32.totalorder %v186, %v252
      %vm397 = vcmp.eq.s32.totalorder %v186, %v253
      %vm398 = vcmp.eq.s32.totalorder %v186, %v254
      %vm399 = vcmp.eq.s32.totalorder %v186, %v255
      %vm400 = vcmp.eq.s32.totalorder %v186, %v256
      %vm401 = vcmp.eq.s32.totalorder %v186, %v257
      %vm402 = vcmp.eq.s32.totalorder %v187, %v250
      %vm403 = vcmp.eq.s32.totalorder %v187, %v251
      %vm404 = vcmp.eq.s32.totalorder %v187, %v252
      %vm405 = vcmp.eq.s32.totalorder %v187, %v253
      %vm406 = vcmp.eq.s32.totalorder %v187, %v254
      %vm407 = vcmp.eq.s32.totalorder %v187, %v255
      %vm408 = vcmp.eq.s32.totalorder %v187, %v256
      %vm409 = vcmp.eq.s32.totalorder %v187, %v257
      %vm410 = vcmp.eq.s32.totalorder %v188, %v250
      %vm411 = vcmp.eq.s32.totalorder %v188, %v251
      %vm412 = vcmp.eq.s32.totalorder %v188, %v252
      %vm413 = vcmp.eq.s32.totalorder %v188, %v253
      %vm414 = vcmp.eq.s32.totalorder %v188, %v254
      %vm415 = vcmp.eq.s32.totalorder %v188, %v255
      %vm416 = vcmp.eq.s32.totalorder %v188, %v256
      %vm417 = vcmp.eq.s32.totalorder %v188, %v257
      %vm418 = vcmp.eq.s32.totalorder %v189, %v250
      %vm419 = vcmp.eq.s32.totalorder %v189, %v251
      %vm420 = vcmp.eq.s32.totalorder %v189, %v252
      %vm421 = vcmp.eq.s32.totalorder %v189, %v253
      %vm422 = vcmp.eq.s32.totalorder %v189, %v254
      %vm423 = vcmp.eq.s32.totalorder %v189, %v255
      %vm424 = vcmp.eq.s32.totalorder %v189, %v256
      %vm425 = vcmp.eq.s32.totalorder %v189, %v257
      %vm426 = vcmp.eq.s32.totalorder %v190, %v250
      %vm427 = vcmp.eq.s32.totalorder %v190, %v251
      %vm428 = vcmp.eq.s32.totalorder %v190, %v252
      %vm429 = vcmp.eq.s32.totalorder %v190, %v253
      %vm430 = vcmp.eq.s32.totalorder %v190, %v254
      %vm431 = vcmp.eq.s32.totalorder %v190, %v255
      %vm432 = vcmp.eq.s32.totalorder %v190, %v256
      %vm433 = vcmp.eq.s32.totalorder %v190, %v257
      %vm434 = vcmp.eq.s32.totalorder %v191, %v250
      %vm435 = vcmp.eq.s32.totalorder %v191, %v251
      %vm436 = vcmp.eq.s32.totalorder %v191, %v252
      %vm437 = vcmp.eq.s32.totalorder %v191, %v253
      %vm438 = vcmp.eq.s32.totalorder %v191, %v254
      %vm439 = vcmp.eq.s32.totalorder %v191, %v255
      %vm440 = vcmp.eq.s32.totalorder %v191, %v256
      %vm441 = vcmp.eq.s32.totalorder %v191, %v257
      %vm442 = vcmp.eq.s32.totalorder %v192, %v250
      %vm443 = vcmp.eq.s32.totalorder %v192, %v251
      %vm444 = vcmp.eq.s32.totalorder %v192, %v252
      %vm445 = vcmp.eq.s32.totalorder %v192, %v253
      %vm446 = vcmp.eq.s32.totalorder %v192, %v254
      %vm447 = vcmp.eq.s32.totalorder %v192, %v255
      %vm448 = vcmp.eq.s32.totalorder %v192, %v256
      %vm449 = vcmp.eq.s32.totalorder %v192, %v257
      %vm450 = vcmp.eq.s32.totalorder %v193, %v250
      %vm451 = vcmp.eq.s32.totalorder %v193, %v251
      %vm452 = vcmp.eq.s32.totalorder %v193, %v252
      %vm453 = vcmp.eq.s32.totalorder %v193, %v253
      %vm454 = vcmp.eq.s32.totalorder %v193, %v254
      %vm455 = vcmp.eq.s32.totalorder %v193, %v255
      %vm456 = vcmp.eq.s32.totalorder %v193, %v256
      %vm457 = vcmp.eq.s32.totalorder %v193, %v257
      %vm458 = vcmp.eq.s32.totalorder %v194, %v250
      %vm459 = vcmp.eq.s32.totalorder %v194, %v251
      %vm460 = vcmp.eq.s32.totalorder %v194, %v252
      %vm461 = vcmp.eq.s32.totalorder %v194, %v253
      %vm462 = vcmp.eq.s32.totalorder %v194, %v254
      %vm463 = vcmp.eq.s32.totalorder %v194, %v255
      %vm464 = vcmp.eq.s32.totalorder %v194, %v256
      %vm465 = vcmp.eq.s32.totalorder %v194, %v257
      %vm466 = vcmp.eq.s32.totalorder %v195, %v250
      %vm467 = vcmp.eq.s32.totalorder %v195, %v251
      %vm468 = vcmp.eq.s32.totalorder %v195, %v252
      %vm469 = vcmp.eq.s32.totalorder %v195, %v253
      %vm470 = vcmp.eq.s32.totalorder %v195, %v254
      %vm471 = vcmp.eq.s32.totalorder %v195, %v255
      %vm472 = vcmp.eq.s32.totalorder %v195, %v256
      %vm473 = vcmp.eq.s32.totalorder %v195, %v257
      %vm474 = vcmp.eq.s32.totalorder %v196, %v250
      %vm475 = vcmp.eq.s32.totalorder %v196, %v251
      %vm476 = vcmp.eq.s32.totalorder %v196, %v252
      %vm477 = vcmp.eq.s32.totalorder %v196, %v253
      %vm478 = vcmp.eq.s32.totalorder %v196, %v254
      %vm479 = vcmp.eq.s32.totalorder %v196, %v255
      %vm480 = vcmp.eq.s32.totalorder %v196, %v256
      %vm481 = vcmp.eq.s32.totalorder %v196, %v257
      %vm482 = vcmp.eq.s32.totalorder %v197, %v250
      %vm483 = vcmp.eq.s32.totalorder %v197, %v251
      %vm484 = vcmp.eq.s32.totalorder %v197, %v252
      %vm485 = vcmp.eq.s32.totalorder %v197, %v253
      %vm486 = vcmp.eq.s32.totalorder %v197, %v254
      %vm487 = vcmp.eq.s32.totalorder %v197, %v255
      %vm488 = vcmp.eq.s32.totalorder %v197, %v256
      %vm489 = vcmp.eq.s32.totalorder %v197, %v257
      %vm490 = vcmp.eq.s32.totalorder %v198, %v250
      %vm491 = vcmp.eq.s32.totalorder %v198, %v251
      %vm492 = vcmp.eq.s32.totalorder %v198, %v252
      %vm493 = vcmp.eq.s32.totalorder %v198, %v253
      %vm494 = vcmp.eq.s32.totalorder %v198, %v254
      %vm495 = vcmp.eq.s32.totalorder %v198, %v255
      %vm496 = vcmp.eq.s32.totalorder %v198, %v256
      %vm497 = vcmp.eq.s32.totalorder %v198, %v257
      %vm498 = vcmp.eq.s32.totalorder %v199, %v250
      %vm499 = vcmp.eq.s32.totalorder %v199, %v251
      %vm500 = vcmp.eq.s32.totalorder %v199, %v252
      %vm501 = vcmp.eq.s32.totalorder %v199, %v253
      %vm502 = vcmp.eq.s32.totalorder %v199, %v254
      %vm503 = vcmp.eq.s32.totalorder %v199, %v255
      %vm504 = vcmp.eq.s32.totalorder %v199, %v256
      %vm505 = vcmp.eq.s32.totalorder %v199, %v257
      %vm506 = vcmp.eq.s32.totalorder %v200, %v250
      %vm507 = vcmp.eq.s32.totalorder %v200, %v251
      %vm508 = vcmp.eq.s32.totalorder %v200, %v252
      %vm509 = vcmp.eq.s32.totalorder %v200, %v253
      %vm510 = vcmp.eq.s32.totalorder %v200, %v254
      %vm511 = vcmp.eq.s32.totalorder %v200, %v255
      %vm512 = vcmp.eq.s32.totalorder %v200, %v256
      %vm513 = vcmp.eq.s32.totalorder %v200, %v257
      %v514 = vsel %vm258, 1, 0
      %v515 = vsel %vm259, 1, 0
      %v516 = vsel %vm260, 1, 0
      %v517 = vsel %vm261, 1, 0
      %v518 = vsel %vm262, 1, 0
      %v519 = vsel %vm263, 1, 0
      %v520 = vsel %vm264, 1, 0
      %v521 = vsel %vm265, 1, 0
      %v522 = vsel %vm266, 1, 0
      %v523 = vsel %vm267, 1, 0
      %v524 = vsel %vm268, 1, 0
      %v525 = vsel %vm269, 1, 0
      %v526 = vsel %vm270, 1, 0
      %v527 = vsel %vm271, 1, 0
      %v528 = vsel %vm272, 1, 0
      %v529 = vsel %vm273, 1, 0
      %v530 = vsel %vm274, 1, 0
      %v531 = vsel %vm275, 1, 0
      %v532 = vsel %vm276, 1, 0
      %v533 = vsel %vm277, 1, 0
      %v534 = vsel %vm278, 1, 0
      %v535 = vsel %vm279, 1, 0
      %v536 = vsel %vm280, 1, 0
      %v537 = vsel %vm281, 1, 0
      %v538 = vsel %vm282, 1, 0
      %v539 = vsel %vm283, 1, 0
      %v540 = vsel %vm284, 1, 0
      %v541 = vsel %vm285, 1, 0
      %v542 = vsel %vm286, 1, 0
      %v543 = vsel %vm287, 1, 0
      %v544 = vsel %vm288, 1, 0
      %v545 = vsel %vm289, 1, 0
      %v546 = vsel %vm290, 1, 0
      %v547 = vsel %vm291, 1, 0
      %v548 = vsel %vm292, 1, 0
      %v549 = vsel %vm293, 1, 0
      %v550 = vsel %vm294, 1, 0
      %v551 = vsel %vm295, 1, 0
      %v552 = vsel %vm296, 1, 0
      %v553 = vsel %vm297, 1, 0
      %v554 = vsel %vm298, 1, 0
      %v555 = vsel %vm299, 1, 0
      %v556 = vsel %vm300, 1, 0
      %v557 = vsel %vm301, 1, 0
      %v558 = vsel %vm302, 1, 0
      %v559 = vsel %vm303, 1, 0
      %v560 = vsel %vm304, 1, 0
      %v561 = vsel %vm305, 1, 0
      %v562 = vsel %vm306, 1, 0
      %v563 = vsel %vm307, 1, 0
      %v564 = vsel %vm308, 1, 0
      %v565 = vsel %vm309, 1, 0
      %v566 = vsel %vm310, 1, 0
      %v567 = vsel %vm311, 1, 0
      %v568 = vsel %vm312, 1, 0
      %v569 = vsel %vm313, 1, 0
      %v570 = vsel %vm314, 1, 0
      %v571 = vsel %vm315, 1, 0
      %v572 = vsel %vm316, 1, 0
      %v573 = vsel %vm317, 1, 0
      %v574 = vsel %vm318, 1, 0
      %v575 = vsel %vm319, 1, 0
      %v576 = vsel %vm320, 1, 0
      %v577 = vsel %vm321, 1, 0
      %v578 = vsel %vm322, 1, 0
      %v579 = vsel %vm323, 1, 0
      %v580 = vsel %vm324, 1, 0
      %v581 = vsel %vm325, 1, 0
      %v582 = vsel %vm326, 1, 0
      %v583 = vsel %vm327, 1, 0
      %v584 = vsel %vm328, 1, 0
      %v585 = vsel %vm329, 1, 0
      %v586 = vsel %vm330, 1, 0
      %v587 = vsel %vm331, 1, 0
      %v588 = vsel %vm332, 1, 0
      %v589 = vsel %vm333, 1, 0
      %v590 = vsel %vm334, 1, 0
      %v591 = vsel %vm335, 1, 0
      %v592 = vsel %vm336, 1, 0
      %v593 = vsel %vm337, 1, 0
      %v594 = vsel %vm338, 1, 0
      %v595 = vsel %vm339, 1, 0
      %v596 = vsel %vm340, 1, 0
      %v597 = vsel %vm341, 1, 0
      %v598 = vsel %vm342, 1, 0
      %v599 = vsel %vm343, 1, 0
      %v600 = vsel %vm344, 1, 0
      %v601 = vsel %vm345, 1, 0
      %v602 = vsel %vm346, 1, 0
      %v603 = vsel %vm347, 1, 0
      %v604 = vsel %vm348, 1, 0
      %v605 = vsel %vm349, 1, 0
      %v606 = vsel %vm350, 1, 0
      %v607 = vsel %vm351, 1, 0
      %v608 = vsel %vm352, 1, 0
      %v609 = vsel %vm353, 1, 0
      %v610 = vsel %vm354, 1, 0
      %v611 = vsel %vm355, 1, 0
      %v612 = vsel %vm356, 1, 0
      %v613 = vsel %vm357, 1, 0
      %v614 = vsel %vm358, 1, 0
      %v615 = vsel %vm359, 1, 0
      %v616 = vsel %vm360, 1, 0
      %v617 = vsel %vm361, 1, 0
      %v618 = vsel %vm362, 1, 0
      %v619 = vsel %vm363, 1, 0
      %v620 = vsel %vm364, 1, 0
      %v621 = vsel %vm365, 1, 0
      %v622 = vsel %vm366, 1, 0
      %v623 = vsel %vm367, 1, 0
      %v624 = vsel %vm368, 1, 0
      %v625 = vsel %vm369, 1, 0
      %v626 = vsel %vm370, 1, 0
      %v627 = vsel %vm371, 1, 0
      %v628 = vsel %vm372, 1, 0
      %v629 = vsel %vm373, 1, 0
      %v630 = vsel %vm374, 1, 0
      %v631 = vsel %vm375, 1, 0
      %v632 = vsel %vm376, 1, 0
      %v633 = vsel %vm377, 1, 0
      %v634 = vsel %vm378, 1, 0
      %v635 = vsel %vm379, 1, 0
      %v636 = vsel %vm380, 1, 0
      %v637 = vsel %vm381, 1, 0
      %v638 = vsel %vm382, 1, 0
      %v639 = vsel %vm383, 1, 0
      %v640 = vsel %vm384, 1, 0
      %v641 = vsel %vm385, 1, 0
      %v642 = vsel %vm386, 1, 0
      %v643 = vsel %vm387, 1, 0
      %v644 = vsel %vm388, 1, 0
      %v645 = vsel %vm389, 1, 0
      %v646 = vsel %vm390, 1, 0
      %v647 = vsel %vm391, 1, 0
      %v648 = vsel %vm392, 1, 0
      %v649 = vsel %vm393, 1, 0
      %v650 = vsel %vm394, 1, 0
      %v651 = vsel %vm395, 1, 0
      %v652 = vsel %vm396, 1, 0
      %v653 = vsel %vm397, 1, 0
      %v654 = vsel %vm398, 1, 0
      %v655 = vsel %vm399, 1, 0
      %v656 = vsel %vm400, 1, 0
      %v657 = vsel %vm401, 1, 0
      %v658 = vsel %vm402, 1, 0
      %v659 = vsel %vm403, 1, 0
      %v660 = vsel %vm404, 1, 0
      %v661 = vsel %vm405, 1, 0
      %v662 = vsel %vm406, 1, 0
      %v663 = vsel %vm407, 1, 0
      %v664 = vsel %vm408, 1, 0
      %v665 = vsel %vm409, 1, 0
      %v666 = vsel %vm410, 1, 0
      %v667 = vsel %vm411, 1, 0
      %v668 = vsel %vm412, 1, 0
      %v669 = vsel %vm413, 1, 0
      %v670 = vsel %vm414, 1, 0
      %v671 = vsel %vm415, 1, 0
      %v672 = vsel %vm416, 1, 0
      %v673 = vsel %vm417, 1, 0
      %v674 = vsel %vm418, 1, 0
      %v675 = vsel %vm419, 1, 0
      %v676 = vsel %vm420, 1, 0
      %v677 = vsel %vm421, 1, 0
      %v678 = vsel %vm422, 1, 0
      %v679 = vsel %vm423, 1, 0
      %v680 = vsel %vm424, 1, 0
      %v681 = vsel %vm425, 1, 0
      %v682 = vsel %vm426, 1, 0
      %v683 = vsel %vm427, 1, 0
      %v684 = vsel %vm428, 1, 0
      %v685 = vsel %vm429, 1, 0
      %v686 = vsel %vm430, 1, 0
      %v687 = vsel %vm431, 1, 0
      %v688 = vsel %vm432, 1, 0
      %v689 = vsel %vm433, 1, 0
      %v690 = vsel %vm434, 1, 0
      %v691 = vsel %vm435, 1, 0
      %v692 = vsel %vm436, 1, 0
      %v693 = vsel %vm437, 1, 0
      %v694 = vsel %vm438, 1, 0
      %v695 = vsel %vm439, 1, 0
      %v696 = vsel %vm440, 1, 0
      %v697 = vsel %vm441, 1, 0
      %v698 = vsel %vm442, 1, 0
      %v699 = vsel %vm443, 1, 0
      %v700 = vsel %vm444, 1, 0
      %v701 = vsel %vm445, 1, 0
      %v702 = vsel %vm446, 1, 0
      %v703 = vsel %vm447, 1, 0
      %v704 = vsel %vm448, 1, 0
      %v705 = vsel %vm449, 1, 0
      %v706 = vsel %vm450, 1, 0
      %v707 = vsel %vm451, 1, 0
      %v708 = vsel %vm452, 1, 0
      %v709 = vsel %vm453, 1, 0
      %v710 = vsel %vm454, 1, 0
      %v711 = vsel %vm455, 1, 0
      %v712 = vsel %vm456, 1, 0
      %v713 = vsel %vm457, 1, 0
      %v714 = vsel %vm458, 1, 0
      %v715 = vsel %vm459, 1, 0
      %v716 = vsel %vm460, 1, 0
      %v717 = vsel %vm461, 1, 0
      %v718 = vsel %vm462, 1, 0
      %v719 = vsel %vm463, 1, 0
      %v720 = vsel %vm464, 1, 0
      %v721 = vsel %vm465, 1, 0
      %v722 = vsel %vm466, 1, 0
      %v723 = vsel %vm467, 1, 0
      %v724 = vsel %vm468, 1, 0
      %v725 = vsel %vm469, 1, 0
      %v726 = vsel %vm470, 1, 0
      %v727 = vsel %vm471, 1, 0
      %v728 = vsel %vm472, 1, 0
      %v729 = vsel %vm473, 1, 0
      %v730 = vsel %vm474, 1, 0
      %v731 = vsel %vm475, 1, 0
      %v732 = vsel %vm476, 1, 0
      %v733 = vsel %vm477, 1, 0
      %v734 = vsel %vm478, 1, 0
      %v735 = vsel %vm479, 1, 0
      %v736 = vsel %vm480, 1, 0
      %v737 = vsel %vm481, 1, 0
      %v738 = vsel %vm482, 1, 0
      %v739 = vsel %vm483, 1, 0
      %v740 = vsel %vm484, 1, 0
      %v741 = vsel %vm485, 1, 0
      %v742 = vsel %vm486, 1, 0
      %v743 = vsel %vm487, 1, 0
      %v744 = vsel %vm488, 1, 0
      %v745 = vsel %vm489, 1, 0
      %v746 = vsel %vm490, 1, 0
      %v747 = vsel %vm491, 1, 0
      %v748 = vsel %vm492, 1, 0
      %v749 = vsel %vm493, 1, 0
      %v750 = vsel %vm494, 1, 0
      %v751 = vsel %vm495, 1, 0
      %v752 = vsel %vm496, 1, 0
      %v753 = vsel %vm497, 1, 0
      %v754 = vsel %vm498, 1, 0
      %v755 = vsel %vm499, 1, 0
      %v756 = vsel %vm500, 1, 0
      %v757 = vsel %vm501, 1, 0
      %v758 = vsel %vm502, 1, 0
      %v759 = vsel %vm503, 1, 0
      %v760 = vsel %vm504, 1, 0
      %v761 = vsel %vm505, 1, 0
      %v762 = vsel %vm506, 1, 0
      %v763 = vsel %vm507, 1, 0
      %v764 = vsel %vm508, 1, 0
      %v765 = vsel %vm509, 1, 0
      %v766 = vsel %vm510, 1, 0
      %v767 = vsel %vm511, 1, 0
      %v768 = vsel %vm512, 1, 0
      %v769 = vsel %vm513, 1, 0
      %v770 = vcvt.s32.f32 %v514
      %v771 = vcvt.s32.f32 %v515
      %v772 = vcvt.s32.f32 %v516
      %v773 = vcvt.s32.f32 %v517
      %v774 = vcvt.s32.f32 %v518
      %v775 = vcvt.s32.f32 %v519
      %v776 = vcvt.s32.f32 %v520
      %v777 = vcvt.s32.f32 %v521
      %v778 = vcvt.s32.f32 %v522
      %v779 = vcvt.s32.f32 %v523
      %v780 = vcvt.s32.f32 %v524
      %v781 = vcvt.s32.f32 %v525
      %v782 = vcvt.s32.f32 %v526
      %v783 = vcvt.s32.f32 %v527
      %v784 = vcvt.s32.f32 %v528
      %v785 = vcvt.s32.f32 %v529
      %v786 = vcvt.s32.f32 %v530
      %v787 = vcvt.s32.f32 %v531
      %v788 = vcvt.s32.f32 %v532
      %v789 = vcvt.s32.f32 %v533
      %v790 = vcvt.s32.f32 %v534
      %v791 = vcvt.s32.f32 %v535
      %v792 = vcvt.s32.f32 %v536
      %v793 = vcvt.s32.f32 %v537
      %v794 = vcvt.s32.f32 %v538
      %v795 = vcvt.s32.f32 %v539
      %v796 = vcvt.s32.f32 %v540
      %v797 = vcvt.s32.f32 %v541
      %v798 = vcvt.s32.f32 %v542
      %v799 = vcvt.s32.f32 %v543
      %v800 = vcvt.s32.f32 %v544
      %v801 = vcvt.s32.f32 %v545
      %v802 = vcvt.s32.f32 %v546
      %v803 = vcvt.s32.f32 %v547
      %v804 = vcvt.s32.f32 %v548
      %v805 = vcvt.s32.f32 %v549
      %v806 = vcvt.s32.f32 %v550
      %v807 = vcvt.s32.f32 %v551
      %v808 = vcvt.s32.f32 %v552
      %v809 = vcvt.s32.f32 %v553
      %v810 = vcvt.s32.f32 %v554
      %v811 = vcvt.s32.f32 %v555
      %v812 = vcvt.s32.f32 %v556
      %v813 = vcvt.s32.f32 %v557
      %v814 = vcvt.s32.f32 %v558
      %v815 = vcvt.s32.f32 %v559
      %v816 = vcvt.s32.f32 %v560
      %v817 = vcvt.s32.f32 %v561
      %v818 = vcvt.s32.f32 %v562
      %v819 = vcvt.s32.f32 %v563
      %v820 = vcvt.s32.f32 %v564
      %v821 = vcvt.s32.f32 %v565
      %v822 = vcvt.s32.f32 %v566
      %v823 = vcvt.s32.f32 %v567
      %v824 = vcvt.s32.f32 %v568
      %v825 = vcvt.s32.f32 %v569
      %v826 = vcvt.s32.f32 %v570
      %v827 = vcvt.s32.f32 %v571
      %v828 = vcvt.s32.f32 %v572
      %v829 = vcvt.s32.f32 %v573
      %v830 = vcvt.s32.f32 %v574
      %v831 = vcvt.s32.f32 %v575
      %v832 = vcvt.s32.f32 %v576
      %v833 = vcvt.s32.f32 %v577
      %v834 = vcvt.s32.f32 %v578
      %v835 = vcvt.s32.f32 %v579
      %v836 = vcvt.s32.f32 %v580
      %v837 = vcvt.s32.f32 %v581
      %v838 = vcvt.s32.f32 %v582
      %v839 = vcvt.s32.f32 %v583
      %v840 = vcvt.s32.f32 %v584
      %v841 = vcvt.s32.f32 %v585
      %v842 = vcvt.s32.f32 %v586
      %v843 = vcvt.s32.f32 %v587
      %v844 = vcvt.s32.f32 %v588
      %v845 = vcvt.s32.f32 %v589
      %v846 = vcvt.s32.f32 %v590
      %v847 = vcvt.s32.f32 %v591
      %v848 = vcvt.s32.f32 %v592
      %v849 = vcvt.s32.f32 %v593
      %v850 = vcvt.s32.f32 %v594
      %v851 = vcvt.s32.f32 %v595
      %v852 = vcvt.s32.f32 %v596
      %v853 = vcvt.s32.f32 %v597
      %v854 = vcvt.s32.f32 %v598
      %v855 = vcvt.s32.f32 %v599
      %v856 = vcvt.s32.f32 %v600
      %v857 = vcvt.s32.f32 %v601
      %v858 = vcvt.s32.f32 %v602
      %v859 = vcvt.s32.f32 %v603
      %v860 = vcvt.s32.f32 %v604
      %v861 = vcvt.s32.f32 %v605
      %v862 = vcvt.s32.f32 %v606
      %v863 = vcvt.s32.f32 %v607
      %v864 = vcvt.s32.f32 %v608
      %v865 = vcvt.s32.f32 %v609
      %v866 = vcvt.s32.f32 %v610
      %v867 = vcvt.s32.f32 %v611
      %v868 = vcvt.s32.f32 %v612
      %v869 = vcvt.s32.f32 %v613
      %v870 = vcvt.s32.f32 %v614
      %v871 = vcvt.s32.f32 %v615
      %v872 = vcvt.s32.f32 %v616
      %v873 = vcvt.s32.f32 %v617
      %v874 = vcvt.s32.f32 %v618
      %v875 = vcvt.s32.f32 %v619
      %v876 = vcvt.s32.f32 %v620
      %v877 = vcvt.s32.f32 %v621
      %v878 = vcvt.s32.f32 %v622
      %v879 = vcvt.s32.f32 %v623
      %v880 = vcvt.s32.f32 %v624
      %v881 = vcvt.s32.f32 %v625
      %v882 = vcvt.s32.f32 %v626
      %v883 = vcvt.s32.f32 %v627
      %v884 = vcvt.s32.f32 %v628
      %v885 = vcvt.s32.f32 %v629
      %v886 = vcvt.s32.f32 %v630
      %v887 = vcvt.s32.f32 %v631
      %v888 = vcvt.s32.f32 %v632
      %v889 = vcvt.s32.f32 %v633
      %v890 = vcvt.s32.f32 %v634
      %v891 = vcvt.s32.f32 %v635
      %v892 = vcvt.s32.f32 %v636
      %v893 = vcvt.s32.f32 %v637
      %v894 = vcvt.s32.f32 %v638
      %v895 = vcvt.s32.f32 %v639
      %v896 = vcvt.s32.f32 %v640
      %v897 = vcvt.s32.f32 %v641
      %v898 = vcvt.s32.f32 %v642
      %v899 = vcvt.s32.f32 %v643
      %v900 = vcvt.s32.f32 %v644
      %v901 = vcvt.s32.f32 %v645
      %v902 = vcvt.s32.f32 %v646
      %v903 = vcvt.s32.f32 %v647
      %v904 = vcvt.s32.f32 %v648
      %v905 = vcvt.s32.f32 %v649
      %v906 = vcvt.s32.f32 %v650
      %v907 = vcvt.s32.f32 %v651
      %v908 = vcvt.s32.f32 %v652
      %v909 = vcvt.s32.f32 %v653
      %v910 = vcvt.s32.f32 %v654
      %v911 = vcvt.s32.f32 %v655
      %v912 = vcvt.s32.f32 %v656
      %v913 = vcvt.s32.f32 %v657
      %v914 = vcvt.s32.f32 %v658
      %v915 = vcvt.s32.f32 %v659
      %v916 = vcvt.s32.f32 %v660
      %v917 = vcvt.s32.f32 %v661
      %v918 = vcvt.s32.f32 %v662
      %v919 = vcvt.s32.f32 %v663
      %v920 = vcvt.s32.f32 %v664
      %v921 = vcvt.s32.f32 %v665
      %v922 = vcvt.s32.f32 %v666
      %v923 = vcvt.s32.f32 %v667
      %v924 = vcvt.s32.f32 %v668
      %v925 = vcvt.s32.f32 %v669
      %v926 = vcvt.s32.f32 %v670
      %v927 = vcvt.s32.f32 %v671
      %v928 = vcvt.s32.f32 %v672
      %v929 = vcvt.s32.f32 %v673
      %v930 = vcvt.s32.f32 %v674
      %v931 = vcvt.s32.f32 %v675
      %v932 = vcvt.s32.f32 %v676
      %v933 = vcvt.s32.f32 %v677
      %v934 = vcvt.s32.f32 %v678
      %v935 = vcvt.s32.f32 %v679
      %v936 = vcvt.s32.f32 %v680
      %v937 = vcvt.s32.f32 %v681
      %v938 = vcvt.s32.f32 %v682
      %v939 = vcvt.s32.f32 %v683
      %v940 = vcvt.s32.f32 %v684
      %v941 = vcvt.s32.f32 %v685
      %v942 = vcvt.s32.f32 %v686
      %v943 = vcvt.s32.f32 %v687
      %v944 = vcvt.s32.f32 %v688
      %v945 = vcvt.s32.f32 %v689
      %v946 = vcvt.s32.f32 %v690
      %v947 = vcvt.s32.f32 %v691
      %v948 = vcvt.s32.f32 %v692
      %v949 = vcvt.s32.f32 %v693
      %v950 = vcvt.s32.f32 %v694
      %v951 = vcvt.s32.f32 %v695
      %v952 = vcvt.s32.f32 %v696
      %v953 = vcvt.s32.f32 %v697
      %v954 = vcvt.s32.f32 %v698
      %v955 = vcvt.s32.f32 %v699
      %v956 = vcvt.s32.f32 %v700
      %v957 = vcvt.s32.f32 %v701
      %v958 = vcvt.s32.f32 %v702
      %v959 = vcvt.s32.f32 %v703
      %v960 = vcvt.s32.f32 %v704
      %v961 = vcvt.s32.f32 %v705
      %v962 = vcvt.s32.f32 %v706
      %v963 = vcvt.s32.f32 %v707
      %v964 = vcvt.s32.f32 %v708
      %v965 = vcvt.s32.f32 %v709
      %v966 = vcvt.s32.f32 %v710
      %v967 = vcvt.s32.f32 %v711
      %v968 = vcvt.s32.f32 %v712
      %v969 = vcvt.s32.f32 %v713
      %v970 = vcvt.s32.f32 %v714
      %v971 = vcvt.s32.f32 %v715
      %v972 = vcvt.s32.f32 %v716
      %v973 = vcvt.s32.f32 %v717
      %v974 = vcvt.s32.f32 %v718
      %v975 = vcvt.s32.f32 %v719
      %v976 = vcvt.s32.f32 %v720
      %v977 = vcvt.s32.f32 %v721
      %v978 = vcvt.s32.f32 %v722
      %v979 = vcvt.s32.f32 %v723
      %v980 = vcvt.s32.f32 %v724
      %v981 = vcvt.s32.f32 %v725
      %v982 = vcvt.s32.f32 %v726
      %v983 = vcvt.s32.f32 %v727
      %v984 = vcvt.s32.f32 %v728
      %v985 = vcvt.s32.f32 %v729
      %v986 = vcvt.s32.f32 %v730
      %v987 = vcvt.s32.f32 %v731
      %v988 = vcvt.s32.f32 %v732
      %v989 = vcvt.s32.f32 %v733
      %v990 = vcvt.s32.f32 %v734
      %v991 = vcvt.s32.f32 %v735
      %v992 = vcvt.s32.f32 %v736
      %v993 = vcvt.s32.f32 %v737
      %v994 = vcvt.s32.f32 %v738
      %v995 = vcvt.s32.f32 %v739
      %v996 = vcvt.s32.f32 %v740
      %v997 = vcvt.s32.f32 %v741
      %v998 = vcvt.s32.f32 %v742
      %v999 = vcvt.s32.f32 %v743
      %v1000 = vcvt.s32.f32 %v744
      %v1001 = vcvt.s32.f32 %v745
      %v1002 = vcvt.s32.f32 %v746
      %v1003 = vcvt.s32.f32 %v747
      %v1004 = vcvt.s32.f32 %v748
      %v1005 = vcvt.s32.f32 %v749
      %v1006 = vcvt.s32.f32 %v750
      %v1007 = vcvt.s32.f32 %v751
      %v1008 = vcvt.s32.f32 %v752
      %v1009 = vcvt.s32.f32 %v753
      %v1010 = vcvt.s32.f32 %v754
      %v1011 = vcvt.s32.f32 %v755
      %v1012 = vcvt.s32.f32 %v756
      %v1013 = vcvt.s32.f32 %v757
      %v1014 = vcvt.s32.f32 %v758
      %v1015 = vcvt.s32.f32 %v759
      %v1016 = vcvt.s32.f32 %v760
      %v1017 = vcvt.s32.f32 %v761
      %v1018 = vcvt.s32.f32 %v762
      %v1019 = vcvt.s32.f32 %v763
      %v1020 = vcvt.s32.f32 %v764
      %v1021 = vcvt.s32.f32 %v765
      %v1022 = vcvt.s32.f32 %v766
      %v1023 = vcvt.s32.f32 %v767
      %v1024 = vcvt.s32.f32 %v768
      %v1025 = vcvt.s32.f32 %v769
      %v1026 = vld [vmem:[%s153] sm:$0xff]
      %v1027 = vld [vmem:[%s153 + $0x8] sm:$0xff]
      %v1028 = vld [vmem:[%s153 + $0x10] sm:$0xff]
      %v1029 = vld [vmem:[%s153 + $0x18] sm:$0xff]
      %v1030 = vld [vmem:[%s153 + $0x20] sm:$0xff]
      %v1031 = vld [vmem:[%s153 + $0x28] sm:$0xff]
      %v1032 = vld [vmem:[%s153 + $0x30] sm:$0xff]
      %v1033 = vld [vmem:[%s153 + $0x38] sm:$0xff]
      %v1034 = vld [vmem:[%s153 + $0x40] sm:$0xff]
      %v1035 = vld [vmem:[%s153 + $0x48] sm:$0xff]
      %v1036 = vld [vmem:[%s153 + $0x50] sm:$0xff]
      %v1037 = vld [vmem:[%s153 + $0x58] sm:$0xff]
      %v1038 = vld [vmem:[%s153 + $0x60] sm:$0xff]
      %v1039 = vld [vmem:[%s153 + $0x68] sm:$0xff]
      %v1040 = vld [vmem:[%s153 + $0x70] sm:$0xff]
      %v1041 = vld [vmem:[%s153 + $0x78] sm:$0xff]
      %1042 = vmatpush.msra.mxu0 %v890
      %1043 = vmatpush.msra.mxu0 %v882
      %1044 = vmatpush.msra.mxu0 %v874
      %1045 = vmatpush.msra.mxu0 %v866
      %1046 = vmatpush.msra.mxu0 %v858
      %1047 = vmatpush.msra.mxu0 %v850
      %1048 = vmatpush.msra.mxu0 %v842
      %1049 = vmatpush.msra.mxu0 %v834
      %1050 = vmatpush.msra.mxu0 %v826
      %1051 = vmatpush.msra.mxu0 %v818
      %1052 = vmatpush.msra.mxu0 %v810
      %1053 = vmatpush.msra.mxu0 %v802
      %1054 = vmatpush.msra.mxu0 %v794
      %1055 = vmatpush.msra.mxu0 %v786
      %1056 = vmatpush.msra.mxu0 %v778
      %1057 = vmatpush.msra.mxu0 %v770
      %1058 = vmatmul.f32.gmra.mxu0 %v164
      %v1059 = vpop.f32.mrf.mxu0
      %v1060 = vadd.f32 0.0, %v1059
      %1061 = vmatmul.f32.gmra.mxu0 %v166
      %v1062 = vpop.f32.mrf.mxu0
      %v1063 = vadd.f32 0.0, %v1062
      %1064 = vdwg.mxu0
      %1065 = vmatpush.msra.mxu0 %v1018
      %1066 = vmatpush.msra.mxu0 %v1010
      %1067 = vmatpush.msra.mxu0 %v1002
      %1068 = vmatpush.msra.mxu0 %v994
      %1069 = vmatpush.msra.mxu0 %v986
      %1070 = vmatpush.msra.mxu0 %v978
      %1071 = vmatpush.msra.mxu0 %v970
      %1072 = vmatpush.msra.mxu0 %v962
      %1073 = vmatpush.msra.mxu0 %v954
      %1074 = vmatpush.msra.mxu0 %v946
      %1075 = vmatpush.msra.mxu0 %v938
      %1076 = vmatpush.msra.mxu0 %v930
      %1077 = vmatpush.msra.mxu0 %v922
      %1078 = vmatpush.msra.mxu0 %v914
      %1079 = vmatpush.msra.mxu0 %v906
      %1080 = vmatpush.msra.mxu0 %v898
      %1081 = vmatmul.f32.gmra.mxu0 %v165
      %v1082 = vpop.f32.mrf.mxu0
      %v1083 = vadd.f32 %v1060, %v1082
      %1084 = vmatmul.f32.gmra.mxu0 %v167
      %v1085 = vpop.f32.mrf.mxu0
      %v1086 = vadd.f32 %v1063, %v1085
      %1087 = vdwg.mxu0
      %1088 = vmatpush.msra.mxu0 %v891
      %1089 = vmatpush.msra.mxu0 %v883
      %1090 = vmatpush.msra.mxu0 %v875
      %1091 = vmatpush.msra.mxu0 %v867
      %1092 = vmatpush.msra.mxu0 %v859
      %1093 = vmatpush.msra.mxu0 %v851
      %1094 = vmatpush.msra.mxu0 %v843
      %1095 = vmatpush.msra.mxu0 %v835
      %1096 = vmatpush.msra.mxu0 %v827
      %1097 = vmatpush.msra.mxu0 %v819
      %1098 = vmatpush.msra.mxu0 %v811
      %1099 = vmatpush.msra.mxu0 %v803
      %1100 = vmatpush.msra.mxu0 %v795
      %1101 = vmatpush.msra.mxu0 %v787
      %1102 = vmatpush.msra.mxu0 %v779
      %1103 = vmatpush.msra.mxu0 %v771
      %1104 = vmatmul.f32.gmra.mxu0 %v164
      %v1105 = vpop.f32.mrf.mxu0
      %v1106 = vadd.f32 0.0, %v1105
      %1107 = vmatmul.f32.gmra.mxu0 %v166
      %v1108 = vpop.f32.mrf.mxu0
      %v1109 = vadd.f32 0.0, %v1108
      %1110 = vdwg.mxu0
      %1111 = vmatpush.msra.mxu0 %v1019
      %1112 = vmatpush.msra.mxu0 %v1011
      %1113 = vmatpush.msra.mxu0 %v1003
      %1114 = vmatpush.msra.mxu0 %v995
      %1115 = vmatpush.msra.mxu0 %v987
      %1116 = vmatpush.msra.mxu0 %v979
      %1117 = vmatpush.msra.mxu0 %v971
      %1118 = vmatpush.msra.mxu0 %v963
      %1119 = vmatpush.msra.mxu0 %v955
      %1120 = vmatpush.msra.mxu0 %v947
      %1121 = vmatpush.msra.mxu0 %v939
      %1122 = vmatpush.msra.mxu0 %v931
      %1123 = vmatpush.msra.mxu0 %v923
      %1124 = vmatpush.msra.mxu0 %v915
      %1125 = vmatpush.msra.mxu0 %v907
      %1126 = vmatpush.msra.mxu0 %v899
      %1127 = vmatmul.f32.gmra.mxu0 %v165
      %v1128 = vpop.f32.mrf.mxu0
      %v1129 = vadd.f32 %v1106, %v1128
      %1130 = vmatmul.f32.gmra.mxu0 %v167
      %v1131 = vpop.f32.mrf.mxu0
      %v1132 = vadd.f32 %v1109, %v1131
      %1133 = vdwg.mxu0
      %1134 = vmatpush.msra.mxu0 %v892
      %1135 = vmatpush.msra.mxu0 %v884
      %1136 = vmatpush.msra.mxu0 %v876
      %1137 = vmatpush.msra.mxu0 %v868
      %1138 = vmatpush.msra.mxu0 %v860
      %1139 = vmatpush.msra.mxu0 %v852
      %1140 = vmatpush.msra.mxu0 %v844
      %1141 = vmatpush.msra.mxu0 %v836
      %1142 = vmatpush.msra.mxu0 %v828
      %1143 = vmatpush.msra.mxu0 %v820
      %1144 = vmatpush.msra.mxu0 %v812
      %1145 = vmatpush.msra.mxu0 %v804
      %1146 = vmatpush.msra.mxu0 %v796
      %1147 = vmatpush.msra.mxu0 %v788
      %1148 = vmatpush.msra.mxu0 %v780
      %1149 = vmatpush.msra.mxu0 %v772
      %1150 = vmatmul.f32.gmra.mxu0 %v164
      %v1151 = vpop.f32.mrf.mxu0
      %v1152 = vadd.f32 0.0, %v1151
      %1153 = vmatmul.f32.gmra.mxu0 %v166
      %v1154 = vpop.f32.mrf.mxu0
      %v1155 = vadd.f32 0.0, %v1154
      %1156 = vdwg.mxu0
      %1157 = vmatpush.msra.mxu0 %v1020
      %1158 = vmatpush.msra.mxu0 %v1012
      %1159 = vmatpush.msra.mxu0 %v1004
      %1160 = vmatpush.msra.mxu0 %v996
      %1161 = vmatpush.msra.mxu0 %v988
      %1162 = vmatpush.msra.mxu0 %v980
      %1163 = vmatpush.msra.mxu0 %v972
      %1164 = vmatpush.msra.mxu0 %v964
      %1165 = vmatpush.msra.mxu0 %v956
      %1166 = vmatpush.msra.mxu0 %v948
      %1167 = vmatpush.msra.mxu0 %v940
      %1168 = vmatpush.msra.mxu0 %v932
      %1169 = vmatpush.msra.mxu0 %v924
      %1170 = vmatpush.msra.mxu0 %v916
      %1171 = vmatpush.msra.mxu0 %v908
      %1172 = vmatpush.msra.mxu0 %v900
      %1173 = vmatmul.f32.gmra.mxu0 %v165
      %v1174 = vpop.f32.mrf.mxu0
      %v1175 = vadd.f32 %v1152, %v1174
      %1176 = vmatmul.f32.gmra.mxu0 %v167
      %v1177 = vpop.f32.mrf.mxu0
      %v1178 = vadd.f32 %v1155, %v1177
      %1179 = vdwg.mxu0
      %1180 = vmatpush.msra.mxu0 %v893
      %1181 = vmatpush.msra.mxu0 %v885
      %1182 = vmatpush.msra.mxu0 %v877
      %1183 = vmatpush.msra.mxu0 %v869
      %1184 = vmatpush.msra.mxu0 %v861
      %1185 = vmatpush.msra.mxu0 %v853
      %1186 = vmatpush.msra.mxu0 %v845
      %1187 = vmatpush.msra.mxu0 %v837
      %1188 = vmatpush.msra.mxu0 %v829
      %1189 = vmatpush.msra.mxu0 %v821
      %1190 = vmatpush.msra.mxu0 %v813
      %1191 = vmatpush.msra.mxu0 %v805
      %1192 = vmatpush.msra.mxu0 %v797
      %1193 = vmatpush.msra.mxu0 %v789
      %1194 = vmatpush.msra.mxu0 %v781
      %1195 = vmatpush.msra.mxu0 %v773
      %1196 = vmatmul.f32.gmra.mxu0 %v164
      %v1197 = vpop.f32.mrf.mxu0
      %v1198 = vadd.f32 0.0, %v1197
      %1199 = vmatmul.f32.gmra.mxu0 %v166
      %v1200 = vpop.f32.mrf.mxu0
      %v1201 = vadd.f32 0.0, %v1200
      %1202 = vdwg.mxu0
      %1203 = vmatpush.msra.mxu0 %v1021
      %1204 = vmatpush.msra.mxu0 %v1013
      %1205 = vmatpush.msra.mxu0 %v1005
      %1206 = vmatpush.msra.mxu0 %v997
      %1207 = vmatpush.msra.mxu0 %v989
      %1208 = vmatpush.msra.mxu0 %v981
      %1209 = vmatpush.msra.mxu0 %v973
      %1210 = vmatpush.msra.mxu0 %v965
      %1211 = vmatpush.msra.mxu0 %v957
      %1212 = vmatpush.msra.mxu0 %v949
      %1213 = vmatpush.msra.mxu0 %v941
      %1214 = vmatpush.msra.mxu0 %v933
      %1215 = vmatpush.msra.mxu0 %v925
      %1216 = vmatpush.msra.mxu0 %v917
      %1217 = vmatpush.msra.mxu0 %v909
      %1218 = vmatpush.msra.mxu0 %v901
      %1219 = vmatmul.f32.gmra.mxu0 %v165
      %v1220 = vpop.f32.mrf.mxu0
      %v1221 = vadd.f32 %v1198, %v1220
      %1222 = vmatmul.f32.gmra.mxu0 %v167
      %v1223 = vpop.f32.mrf.mxu0
      %v1224 = vadd.f32 %v1201, %v1223
      %1225 = vdwg.mxu0
      %1226 = vmatpush.msra.mxu0 %v894
      %1227 = vmatpush.msra.mxu0 %v886
      %1228 = vmatpush.msra.mxu0 %v878
      %1229 = vmatpush.msra.mxu0 %v870
      %1230 = vmatpush.msra.mxu0 %v862
      %1231 = vmatpush.msra.mxu0 %v854
      %1232 = vmatpush.msra.mxu0 %v846
      %1233 = vmatpush.msra.mxu0 %v838
      %1234 = vmatpush.msra.mxu0 %v830
      %1235 = vmatpush.msra.mxu0 %v822
      %1236 = vmatpush.msra.mxu0 %v814
      %1237 = vmatpush.msra.mxu0 %v806
      %1238 = vmatpush.msra.mxu0 %v798
      %1239 = vmatpush.msra.mxu0 %v790
      %1240 = vmatpush.msra.mxu0 %v782
      %1241 = vmatpush.msra.mxu0 %v774
      %1242 = vmatmul.f32.gmra.mxu0 %v164
      %v1243 = vpop.f32.mrf.mxu0
      %v1244 = vadd.f32 0.0, %v1243
      %1245 = vmatmul.f32.gmra.mxu0 %v166
      %v1246 = vpop.f32.mrf.mxu0
      %v1247 = vadd.f32 0.0, %v1246
      %1248 = vdwg.mxu0
      %1249 = vmatpush.msra.mxu0 %v1022
      %1250 = vmatpush.msra.mxu0 %v1014
      %1251 = vmatpush.msra.mxu0 %v1006
      %1252 = vmatpush.msra.mxu0 %v998
      %1253 = vmatpush.msra.mxu0 %v990
      %1254 = vmatpush.msra.mxu0 %v982
      %1255 = vmatpush.msra.mxu0 %v974
      %1256 = vmatpush.msra.mxu0 %v966
      %1257 = vmatpush.msra.mxu0 %v958
      %1258 = vmatpush.msra.mxu0 %v950
      %1259 = vmatpush.msra.mxu0 %v942
      %1260 = vmatpush.msra.mxu0 %v934
      %1261 = vmatpush.msra.mxu0 %v926
      %1262 = vmatpush.msra.mxu0 %v918
      %1263 = vmatpush.msra.mxu0 %v910
      %1264 = vmatpush.msra.mxu0 %v902
      %1265 = vmatmul.f32.gmra.mxu0 %v165
      %v1266 = vpop.f32.mrf.mxu0
      %v1267 = vadd.f32 %v1244, %v1266
      %1268 = vmatmul.f32.gmra.mxu0 %v167
      %v1269 = vpop.f32.mrf.mxu0
      %v1270 = vadd.f32 %v1247, %v1269
      %1271 = vdwg.mxu0
      %1272 = vmatpush.msra.mxu0 %v895
      %1273 = vmatpush.msra.mxu0 %v887
      %1274 = vmatpush.msra.mxu0 %v879
      %1275 = vmatpush.msra.mxu0 %v871
      %1276 = vmatpush.msra.mxu0 %v863
      %1277 = vmatpush.msra.mxu0 %v855
      %1278 = vmatpush.msra.mxu0 %v847
      %1279 = vmatpush.msra.mxu0 %v839
      %1280 = vmatpush.msra.mxu0 %v831
      %1281 = vmatpush.msra.mxu0 %v823
      %1282 = vmatpush.msra.mxu0 %v815
      %1283 = vmatpush.msra.mxu0 %v807
      %1284 = vmatpush.msra.mxu0 %v799
      %1285 = vmatpush.msra.mxu0 %v791
      %1286 = vmatpush.msra.mxu0 %v783
      %1287 = vmatpush.msra.mxu0 %v775
      %1288 = vmatmul.f32.gmra.mxu0 %v164
      %v1289 = vpop.f32.mrf.mxu0
      %v1290 = vadd.f32 0.0, %v1289
      %1291 = vmatmul.f32.gmra.mxu0 %v166
      %v1292 = vpop.f32.mrf.mxu0
      %v1293 = vadd.f32 0.0, %v1292
      %1294 = vdwg.mxu0
      %1295 = vmatpush.msra.mxu0 %v1023
      %1296 = vmatpush.msra.mxu0 %v1015
      %1297 = vmatpush.msra.mxu0 %v1007
      %1298 = vmatpush.msra.mxu0 %v999
      %1299 = vmatpush.msra.mxu0 %v991
      %1300 = vmatpush.msra.mxu0 %v983
      %1301 = vmatpush.msra.mxu0 %v975
      %1302 = vmatpush.msra.mxu0 %v967
      %1303 = vmatpush.msra.mxu0 %v959
      %1304 = vmatpush.msra.mxu0 %v951
      %1305 = vmatpush.msra.mxu0 %v943
      %1306 = vmatpush.msra.mxu0 %v935
      %1307 = vmatpush.msra.mxu0 %v927
      %1308 = vmatpush.msra.mxu0 %v919
      %1309 = vmatpush.msra.mxu0 %v911
      %1310 = vmatpush.msra.mxu0 %v903
      %1311 = vmatmul.f32.gmra.mxu0 %v165
      %v1312 = vpop.f32.mrf.mxu0
      %v1313 = vadd.f32 %v1290, %v1312
      %1314 = vmatmul.f32.gmra.mxu0 %v167
      %v1315 = vpop.f32.mrf.mxu0
      %v1316 = vadd.f32 %v1293, %v1315
      %1317 = vdwg.mxu0
      %1318 = vmatpush.msra.mxu0 %v896
      %1319 = vmatpush.msra.mxu0 %v888
      %1320 = vmatpush.msra.mxu0 %v880
      %1321 = vmatpush.msra.mxu0 %v872
      %1322 = vmatpush.msra.mxu0 %v864
      %1323 = vmatpush.msra.mxu0 %v856
      %1324 = vmatpush.msra.mxu0 %v848
      %1325 = vmatpush.msra.mxu0 %v840
      %1326 = vmatpush.msra.mxu0 %v832
      %1327 = vmatpush.msra.mxu0 %v824
      %1328 = vmatpush.msra.mxu0 %v816
      %1329 = vmatpush.msra.mxu0 %v808
      %1330 = vmatpush.msra.mxu0 %v800
      %1331 = vmatpush.msra.mxu0 %v792
      %1332 = vmatpush.msra.mxu0 %v784
      %1333 = vmatpush.msra.mxu0 %v776
      %1334 = vmatmul.f32.gmra.mxu0 %v164
      %v1335 = vpop.f32.mrf.mxu0
      %v1336 = vadd.f32 0.0, %v1335
      %1337 = vmatmul.f32.gmra.mxu0 %v166
      %v1338 = vpop.f32.mrf.mxu0
      %v1339 = vadd.f32 0.0, %v1338
      %1340 = vdwg.mxu0
      %1341 = vmatpush.msra.mxu0 %v1024
      %1342 = vmatpush.msra.mxu0 %v1016
      %1343 = vmatpush.msra.mxu0 %v1008
      %1344 = vmatpush.msra.mxu0 %v1000
      %1345 = vmatpush.msra.mxu0 %v992
      %1346 = vmatpush.msra.mxu0 %v984
      %1347 = vmatpush.msra.mxu0 %v976
      %1348 = vmatpush.msra.mxu0 %v968
      %1349 = vmatpush.msra.mxu0 %v960
      %1350 = vmatpush.msra.mxu0 %v952
      %1351 = vmatpush.msra.mxu0 %v944
      %1352 = vmatpush.msra.mxu0 %v936
      %1353 = vmatpush.msra.mxu0 %v928
      %1354 = vmatpush.msra.mxu0 %v920
      %1355 = vmatpush.msra.mxu0 %v912
      %1356 = vmatpush.msra.mxu0 %v904
      %1357 = vmatmul.f32.gmra.mxu0 %v165
      %v1358 = vpop.f32.mrf.mxu0
      %v1359 = vadd.f32 %v1336, %v1358
      %1360 = vmatmul.f32.gmra.mxu0 %v167
      %v1361 = vpop.f32.mrf.mxu0
      %v1362 = vadd.f32 %v1339, %v1361
      %1363 = vdwg.mxu0
      %1364 = vmatpush.msra.mxu0 %v897
      %1365 = vmatpush.msra.mxu0 %v889
      %1366 = vmatpush.msra.mxu0 %v881
      %1367 = vmatpush.msra.mxu0 %v873
      %1368 = vmatpush.msra.mxu0 %v865
      %1369 = vmatpush.msra.mxu0 %v857
      %1370 = vmatpush.msra.mxu0 %v849
      %1371 = vmatpush.msra.mxu0 %v841
      %1372 = vmatpush.msra.mxu0 %v833
      %1373 = vmatpush.msra.mxu0 %v825
      %1374 = vmatpush.msra.mxu0 %v817
      %1375 = vmatpush.msra.mxu0 %v809
      %1376 = vmatpush.msra.mxu0 %v801
      %1377 = vmatpush.msra.mxu0 %v793
      %1378 = vmatpush.msra.mxu0 %v785
      %1379 = vmatpush.msra.mxu0 %v777
      %1380 = vmatmul.f32.gmra.mxu0 %v164
      %v1381 = vpop.f32.mrf.mxu0
      %v1382 = vadd.f32 0.0, %v1381
      %1383 = vmatmul.f32.gmra.mxu0 %v166
      %v1384 = vpop.f32.mrf.mxu0
      %v1385 = vadd.f32 0.0, %v1384
      %1386 = vdwg.mxu0
      %1387 = vmatpush.msra.mxu0 %v1025
      %1388 = vmatpush.msra.mxu0 %v1017
      %1389 = vmatpush.msra.mxu0 %v1009
      %1390 = vmatpush.msra.mxu0 %v1001
      %1391 = vmatpush.msra.mxu0 %v993
      %1392 = vmatpush.msra.mxu0 %v985
      %1393 = vmatpush.msra.mxu0 %v977
      %1394 = vmatpush.msra.mxu0 %v969
      %1395 = vmatpush.msra.mxu0 %v961
      %1396 = vmatpush.msra.mxu0 %v953
      %1397 = vmatpush.msra.mxu0 %v945
      %1398 = vmatpush.msra.mxu0 %v937
      %1399 = vmatpush.msra.mxu0 %v929
      %1400 = vmatpush.msra.mxu0 %v921
      %1401 = vmatpush.msra.mxu0 %v913
      %1402 = vmatpush.msra.mxu0 %v905
      %1403 = vmatmul.f32.gmra.mxu0 %v165
      %v1404 = vpop.f32.mrf.mxu0
      %v1405 = vadd.f32 %v1382, %v1404
      %1406 = vmatmul.f32.gmra.mxu0 %v167
      %v1407 = vpop.f32.mrf.mxu0
      %v1408 = vadd.f32 %v1385, %v1407
      %1409 = vdwg.mxu0
      %v1410 = vadd.f32 %v1026, %v1083
      %v1411 = vadd.f32 %v1027, %v1129
      %v1412 = vadd.f32 %v1028, %v1175
      %v1413 = vadd.f32 %v1029, %v1221
      %v1414 = vadd.f32 %v1030, %v1267
      %v1415 = vadd.f32 %v1031, %v1313
      %v1416 = vadd.f32 %v1032, %v1359
      %v1417 = vadd.f32 %v1033, %v1405
      %v1418 = vadd.f32 %v1034, %v1086
      %v1419 = vadd.f32 %v1035, %v1132
      %v1420 = vadd.f32 %v1036, %v1178
      %v1421 = vadd.f32 %v1037, %v1224
      %v1422 = vadd.f32 %v1038, %v1270
      %v1423 = vadd.f32 %v1039, %v1316
      %v1424 = vadd.f32 %v1040, %v1362
      %v1425 = vadd.f32 %v1041, %v1408
      %1426 = vst [vmem:[%s163] sm:$0xff] %v1410
      %1427 = vst [vmem:[%s163 + $0x8] sm:$0xff] %v1411
      %1428 = vst [vmem:[%s163 + $0x10] sm:$0xff] %v1412
      %1429 = vst [vmem:[%s163 + $0x18] sm:$0xff] %v1413
      %1430 = vst [vmem:[%s163 + $0x20] sm:$0xff] %v1414
      %1431 = vst [vmem:[%s163 + $0x28] sm:$0xff] %v1415
      %1432 = vst [vmem:[%s163 + $0x30] sm:$0xff] %v1416
      %1433 = vst [vmem:[%s163 + $0x38] sm:$0xff] %v1417
      %1434 = vst [vmem:[%s163 + $0x40] sm:$0xff] %v1418
      %1435 = vst [vmem:[%s163 + $0x48] sm:$0xff] %v1419
      %1436 = vst [vmem:[%s163 + $0x50] sm:$0xff] %v1420
      %1437 = vst [vmem:[%s163 + $0x58] sm:$0xff] %v1421
      %1438 = vst [vmem:[%s163 + $0x60] sm:$0xff] %v1422
      %1439 = vst [vmem:[%s163 + $0x68] sm:$0xff] %v1423
      %1440 = vst [vmem:[%s163 + $0x70] sm:$0xff] %v1424
      %1441 = vst [vmem:[%s163 + $0x78] sm:$0xff] %v1425
      %p1442 = scmp.lt.s32.totalorder %s13, 1
      %s1443 = scalar_select %p1442, %s13, 1
      %s1444 = smul.addr %s1443, 16
      %s1445 = smul.addr %s1444, 8
      %s1446 = scalar_lea.vmem %s2, %s1445
      // Predicated region
      $region29: #{_lambda_.21} parent=27 // pred_check
        %p1447 = pneg %p83
      $region30: #{_lambda_.21} parent=27 // pred_check_branch
        %1449 = sbr.rel (%p1447) target = $region32
      $region31: #{_lambda_.21} parent=27 // pred_region
        _
      $region32: #{_lambda_.21} parent=27 // pred_fallthru
        _
    $region28: #{_lambda_.21} parent=5 // pred_fallthru
      _
    %p1450 = scmp.le.s32.totalorder 2, %s8
    // Predicated region
    $region33: #{_lambda_.21} parent=5 // pred_check
      %p1451 = pneg %p1450
    $region34: #{_lambda_.21} parent=5 // pred_check_branch
      %1453 = sbr.rel (%p1451) target = $region36
    $region35: #{_lambda_.21} parent=5 // pred_region
      %s1454 = ssub.s32 %s8, 2
      // Predicated region
      $region37: #{_lambda_.21} parent=35 // pred_check
        %p1455 = pneg %p89
      $region38: #{_lambda_.21} parent=35 // pred_check_branch
        %1457 = sbr.rel (%p1455) target = $region40
      $region39: #{_lambda_.21} parent=35 // pred_region
        %p1458 = scmp.lt.s32.totalorder %s14, 1
        %s1459 = scalar_select %p1458, %s14, 1
        %s1460 = smul.addr %s1459, 16
        %s1461 = smul.addr %s1460, 8
        %s1462 = scalar_lea.vmem %s2, %s1461
      $region40: #{_lambda_.21} parent=35 // pred_fallthru
        _
    $region36: #{_lambda_.21} parent=5 // pred_fallthru
      _
  $region6: #{_lambda_.21} parent=0 // loop_footer
    %s12 = sadd.s32 1, %s8
  $region7: #{_lambda_.21} parent=0 // loop_footer_branch
    %7 = sbr.rel target = $region3
  $region8: #{_lambda_.21} parent=0 // loop_exit
    _

</llo_original>
